<compile_context>
chip_gen: v6e
topology: v6e:2x2x1
jax: 0.10.0
libtpu: 0.0.40
codegen_flags: <defaults>
</compile_context>

<pallas_src>
import functools
import math

import jax
import jax.numpy as jnp
from jax.experimental import pallas as pl
from jax.experimental.pallas import tpu as pltpu


_MASK_VALUE = float(-(2.0 ** 32) + 1.0)   # same padding constant the module uses


# ---------------------------------------------------------------------------
# helpers
# ---------------------------------------------------------------------------
def _round_up(x, m):
    return (x + m - 1) // m * m


def _choose_tile(n, requested, min_steps=2):
    """8-aligned row tile; guarantees >= min_steps grid steps when possible (v7x megacore)."""
    tm = min(_round_up(requested, 8), _round_up(n, 8))
    if n > 8:
        tm = min(tm, _round_up(-(-n // min_steps), 8))
    tm = max(tm, 8)
    return tm, _round_up(n, tm)


def _sigmoid_in_kernel(x):
    # exp (EUP) + exact reciprocal; avoids a VALU divide and any lowering surprises.
    return pl.reciprocal(1.0 + jnp.exp(-x), approx=False)


# ---------------------------------------------------------------------------
# Pallas kernel 1: batched single-layer GRU over short neighbor sequences
# ---------------------------------------------------------------------------
def _gru_kernel(x_ref, wi_ref, wh_ref, bi_ref, bh_ref, o_ref):
    # x_ref / o_ref: (T, TM, H) time-major row tile (per-timestep access = full slab).
    # wi_ref / wh_ref: (H, 3H) fused gate weights, gate order (r|z|n), x @ W layout.
    # bi_ref / bh_ref: (1, 3H).
    T, TM, H = x_ref.shape

    wi = wi_ref[...].astype(jnp.float32)
    wh = wh_ref[...].astype(jnp.float32)
    bi = bi_ref[...].astype(jnp.float32)
    bh = bh_ref[...].astype(jnp.float32)

    # Hoisted input projection: one (T*TM, H) @ (H, 3H) matmul for all timesteps.
    # (T, TM, H) -> (T*TM, H) is layout-preserving because TM is a multiple of 8.
    x_all = x_ref[...].astype(jnp.float32).reshape(T * TM, H)
    gx_all = jnp.dot(x_all, wi, preferred_element_type=jnp.float32) + bi   # (T*TM, 3H)

    h = jnp.zeros((TM, H), jnp.float32)
    for t in range(T):                     # short fixed trip count (T=10): static unroll
        gh = jnp.dot(h, wh, preferred_element_type=jnp.float32) + bh      # (TM, 3H)
        gx = gx_all[t * TM:(t + 1) * TM, :]                                # (TM, 3H)
        r = _sigmoid_in_kernel(gx[:, :H] + gh[:, :H])
        z = _sigmoid_in_kernel(gx[:, H:2 * H] + gh[:, H:2 * H])
        n = jnp.tanh(gx[:, 2 * H:] + r * gh[:, 2 * H:])
        h = (1.0 - z) * n + z * h
        o_ref[t] = h.astype(o_ref.dtype)   # unmasked (TM, H) slab store


def gru_pallas(x, w_ih, w_hh, b_ih, b_hh, *, tile_rows=256):
    """x: (N, T, H) f32.  w_*: (3, H, H) in x@W layout (gate order r,z,n), b_*: (3, H).
    Returns the full GRU output in time-major layout (T, N, H)."""
    N, T, H = x.shape
    tm, Np = _choose_tile(N, tile_rows)

    # time-major layout -> per-timestep slabs are dense; rows padded to the tile grid.
    xt = jnp.transpose(x, (1, 0, 2))
    if Np != N:
        xt = jnp.pad(xt, ((0, 0), (0, Np - N), (0, 0)))

    # fuse the three gate matrices into one (H, 3H) matmul per path
    wi = jnp.concatenate([w_ih[0], w_ih[1], w_ih[2]], axis=1)     # (H, 3H)
    wh = jnp.concatenate([w_hh[0], w_hh[1], w_hh[2]], axis=1)     # (H, 3H)
    bi = jnp.concatenate([b_ih[0], b_ih[1], b_ih[2]])[None, :]    # (1, 3H)
    bh = jnp.concatenate([b_hh[0], b_hh[1], b_hh[2]])[None, :]    # (1, 3H)

    cost = pl.CostEstimate(
        flops=2 * 2 * Np * T * H * 3 * H,
        transcendentals=3 * Np * T * H,
        bytes_accessed=4 * (2 * Np * T * H + 2 * H * 3 * H + 2 * 3 * H),
    )
    out = pl.pallas_call(
        _gru_kernel,
        out_shape=jax.ShapeDtypeStruct((T, Np, H), x.dtype),
        grid_spec=pltpu.PrefetchScalarGridSpec(
            num_scalar_prefetch=0,
            grid=(Np // tm,),
            in_specs=[
                pl.BlockSpec((T, tm, H), lambda i: (0, i, 0)),    # time-major row tile
                pl.BlockSpec((H, 3 * H), lambda i: (0, 0)),       # fused W_ih (resident)
                pl.BlockSpec((H, 3 * H), lambda i: (0, 0)),       # fused W_hh (resident)
                pl.BlockSpec((1, 3 * H), lambda i: (0, 0)),       # fused b_ih
                pl.BlockSpec((1, 3 * H), lambda i: (0, 0)),       # fused b_hh
            ],
            out_specs=pl.BlockSpec((T, tm, H), lambda i: (0, i, 0)),
        ),
        compiler_params=pltpu.CompilerParams(
            dimension_semantics=("parallel",),
            vmem_limit_bytes=48 * 1024 * 1024,                    # fits v7x's 64 MiB too
        ),
        cost_estimate=cost,
    )(xt, wi, wh, bi, bh)
    return out[:, :N, :]


def gru_reference(x, w_ih, w_hh, b_ih, b_hh):
    """Pure-JAX mirror (full-precision matmuls).  x: (N, T, H) -> (T, N, H)."""
    N, T, H = x.shape
    hp = jax.lax.Precision.HIGHEST
    h = jnp.zeros((N, H), jnp.float32)
    outs = []
    for t in range(T):
        xt = x[:, t, :]
        r = jax.nn.sigmoid(jnp.dot(xt, w_ih[0], precision=hp) + b_ih[0]
                           + jnp.dot(h, w_hh[0], precision=hp) + b_hh[0])
        z = jax.nn.sigmoid(jnp.dot(xt, w_ih[1], precision=hp) + b_ih[1]
                           + jnp.dot(h, w_hh[1], precision=hp) + b_hh[1])
        n = jnp.tanh(jnp.dot(xt, w_ih[2], precision=hp) + b_ih[2]
                     + r * (jnp.dot(h, w_hh[2], precision=hp) + b_hh[2]))
        h = (1.0 - z) * n + z * h
        outs.append(h)
    return jnp.stack(outs, axis=0)


# ---------------------------------------------------------------------------
# Pallas kernel 2: per-head neighbor attention, all heads folded into the lane axis
# ---------------------------------------------------------------------------
def _neigh_attn_kernel(q_ref, k_ref, m_ref, o_ref, *, scale, head_num, head_size):
    q = q_ref[...].astype(jnp.float32)                       # (TM, H)
    k = k_ref[...].astype(jnp.float32)                       # (TM, NN, H)
    m = m_ref[...]                                           # (TM, head_num) int32
    outs = []
    for h in range(head_num):                                # tiny static loop (head_num=2)
        lo = h * head_size
        qh = q[:, lo:lo + head_size]                         # (TM, Dh)
        kh = k[:, :, lo:lo + head_size]                      # (TM, NN, Dh)
        logits = jnp.sum(kh * qh[:, None, :], axis=-1) * scale          # (TM, NN)
        logits = jnp.where(m[:, h:h + 1] > 0, _MASK_VALUE, logits)      # replace, as in torch
        mx = jnp.max(logits, axis=-1, keepdims=True)
        e = jnp.exp(logits - mx)
        w = e * pl.reciprocal(jnp.sum(e, axis=-1, keepdims=True), approx=True)
        # dropout on the attention weights: identity (eval mode)
        outs.append(jnp.sum(w[:, :, None] * kh, axis=1))                # (TM, Dh)
    o_ref[...] = jnp.concatenate(outs, axis=-1).astype(o_ref.dtype)     # single lane-dense store


def neigh_attention_pallas(q_rows, k_rows, mask_rows, head_num, head_size, *, tile_rows=512):
    """q_rows: (R, H); k_rows: (R, NN, H); mask_rows: (R, head_num) int32.
    Returns (R, H) with head h's output in channels [h*head_size:(h+1)*head_size]."""
    R, NN, H = k_rows.shape
    tm, Rp = _choose_tile(R, tile_rows)

    if Rp != R:
        q_rows = jnp.pad(q_rows, ((0, Rp - R), (0, 0)))
        k_rows = jnp.pad(k_rows, ((0, Rp - R), (0, 0), (0, 0)))
        mask_rows = jnp.pad(mask_rows, ((0, Rp - R), (0, 0)))

    kernel = functools.partial(_neigh_attn_kernel, scale=1.0 / math.sqrt(head_size),
                               head_num=head_num, head_size=head_size)
    cost = pl.CostEstimate(
        flops=4 * Rp * NN * H,
        transcendentals=Rp * NN * head_num,
        bytes_accessed=4 * (2 * Rp * H + Rp * NN * H + Rp * head_num),
    )
    out = pl.pallas_call(
        kernel,
        out_shape=jax.ShapeDtypeStruct((Rp, H), q_rows.dtype),
        grid_spec=pltpu.PrefetchScalarGridSpec(
            num_scalar_prefetch=0,
            grid=(Rp // tm,),
            in_specs=[
                pl.BlockSpec((tm, H), lambda i: (i, 0)),          # queries (all heads)
                pl.BlockSpec((tm, NN, H), lambda i: (i, 0, 0)),   # neighbor vectors (all heads)
                pl.BlockSpec((tm, head_num), lambda i: (i, 0)),   # compact per-head mask
            ],
            out_specs=pl.BlockSpec((tm, H), lambda i: (i, 0)),
        ),
        compiler_params=pltpu.CompilerParams(
            dimension_semantics=("parallel",),
            vmem_limit_bytes=48 * 1024 * 1024,
        ),
        cost_estimate=cost,
    )(q_rows, k_rows, mask_rows)
    return out[:R]


def neigh_attention_reference(q_rows, k_rows, mask_rows, head_num, head_size):
    scale = 1.0 / math.sqrt(head_size)
    outs = []
    for h in range(head_num):
        lo = h * head_size
        qh = q_rows[:, lo:lo + head_size]
        kh = k_rows[:, :, lo:lo + head_size]
        logits = jnp.sum(kh * qh[:, None, :], axis=-1) * scale
        logits = jnp.where(mask_rows[:, h:h + 1] > 0, _MASK_VALUE, logits)
        mx = jnp.max(logits, axis=-1, keepdims=True)
        e = jnp.exp(logits - mx)
        w = e / jnp.sum(e, axis=-1, keepdims=True)
        outs.append(jnp.sum(w[:, :, None] * kh, axis=1))
    return jnp.concatenate(outs, axis=-1)


# ---------------------------------------------------------------------------
# Plain-JAX pieces shared by the Pallas path and the reference path
# ---------------------------------------------------------------------------
def _layer_norm(x, gamma, beta, eps=1e-8):
    mu = jnp.mean(x, axis=-1, keepdims=True)
    var = jnp.mean(jnp.square(x - mu), axis=-1, keepdims=True)
    return (x - mu) / jnp.sqrt(var + eps) * gamma + beta


def _mha_block(seqs, blk, num_heads, causal_mask):
    # TODO(synk): LayerNorm + MultiheadAttention blocks run as plain JAX (XLA) ops,
    # not a hand-written Pallas kernel.
    # seqs: (T, N, H) time-major (same layout torch's nn.MultiheadAttention uses).
    T, N, H = seqs.shape
    dh = H // num_heads
    qn = _layer_norm(seqs, blk["ln_g"], blk["ln_b"])
    q = (qn @ blk["wq"] + blk["bq"]).reshape(T, N, num_heads, dh)
    k = (seqs @ blk["wk"] + blk["bk"]).reshape(T, N, num_heads, dh)
    v = (seqs @ blk["wv"] + blk["bv"]).reshape(T, N, num_heads, dh)
    scores = jnp.einsum("qnhd,knhd->nhqk", q, k) / math.sqrt(dh)
    scores = jnp.where(causal_mask[None, None], -jnp.inf, scores)
    attn = jax.nn.softmax(scores, axis=-1)
    # TODO(synk): attention dropout is identity (eval mode).
    out = jnp.einsum("nhqk,knhd->qnhd", attn, v).reshape(T, N, H)
    out = out @ blk["wo"] + blk["bo"]
    return qn + out  # residual onto the layer-normed query, exactly as in the module


def neigh_attention_forward(params, queries, keys, neigh_mask, *,
                            head_num, num_heads, use_pallas=True):
    B, maxlen, n_neigh, short_len, H = keys.shape
    head_size = H // head_num
    N = B * maxlen * n_neigh

    # Rows in natural (batch, position, neighbor) order: pure reshape, no transpose.
    # (Row-independent GRU/attention => torch's (neighbor, position, batch) ordering
    #  is just a permutation that cancels when the neighbor matrix is reassembled.)
    x = keys.reshape(N, short_len, H)

    if use_pallas:
        gru_out = gru_pallas(x, params["gru_w_ih"], params["gru_w_hh"],
                             params["gru_b_ih"], params["gru_b_hh"])       # (T, N, H)
    else:
        gru_out = gru_reference(x, params["gru_w_ih"], params["gru_w_hh"],
                                params["gru_b_ih"], params["gru_b_hh"])    # (T, N, H)

    hidden = gru_out[-1]                                # final GRU hidden state, (N, H)

    tl = 10                                             # the module hard-codes 10 here
    seqs = gru_out[-tl:] + params["pos_emb"][:tl][:, None, :]   # (tl, N, H), time-major
    # TODO(synk): emb_dropout / dropout layers are identity (eval mode).

    causal_mask = ~jnp.tril(jnp.ones((tl, tl), dtype=bool))
    for blk in params["blocks"]:
        seqs = _mha_block(seqs, blk, num_heads, causal_mask)

    out_vec = jnp.sum(seqs, axis=0) + hidden            # (N, H)

    # reassemble per-(batch, position) neighbor matrix: pure reshape, no transpose
    newkeys = out_vec.reshape(B * maxlen, n_neigh, H)
    q2 = queries.reshape(B * maxlen, H)
    # mask[(head, batch), pos] -> (batch*maxlen + pos, head); tiny array, cheap transpose
    mask2 = jnp.transpose(neigh_mask.reshape(head_num, B, maxlen),
                          (1, 2, 0)).reshape(B * maxlen, head_num).astype(jnp.int32)

    if use_pallas:
        out_rows = neigh_attention_pallas(q2, newkeys, mask2, head_num, head_size)
    else:
        out_rows = neigh_attention_reference(q2, newkeys, mask2, head_num, head_size)

    # head h already occupies channels [h*head_size:(h+1)*head_size] -> direct reshape
    return out_rows.reshape(B, maxlen, H)


# ---------------------------------------------------------------------------
# demo / self-check
# ---------------------------------------------------------------------------
if __name__ == "__main__":
    # Small shapes consistent with the module: batch=2, maxlen=10, 10 neighbors,
    # neighbor-sequence length (short_length)=10, hidden=32, 2 heads, 2 blocks.
    B, maxlen, n_neigh, short_len = 2, 10, 10, 10
    H, head_num, num_heads, num_blocks = 32, 2, 2, 2

    key = jax.random.PRNGKey(0)
    ks = iter(jax.random.split(key, 32))

    def nrm(shape, s=0.1):
        return jax.random.normal(next(ks), shape, dtype=jnp.float32) * s

    queries = nrm((B, maxlen, H), 1.0)
    keys_in = nrm((B, maxlen, n_neigh, short_len, H), 1.0)
    neigh_mask = jax.random.bernoulli(next(ks), 0.3, (head_num * B, maxlen))

    params = {
        "gru_w_ih": nrm((3, H, H)),   # gate order (r, z, n); x @ W layout
        "gru_w_hh": nrm((3, H, H)),
        "gru_b_ih": nrm((3, H)),
        "gru_b_hh": nrm((3, H)),
        "pos_emb": nrm((maxlen, H)),
        "blocks": [
            {
                "ln_g": 1.0 + nrm((H,)),
                "ln_b": nrm((H,)),
                "wq": nrm((H, H)), "bq": nrm((H,)),
                "wk": nrm((H, H)), "bk": nrm((H,)),
                "wv": nrm((H, H)), "bv": nrm((H,)),
                "wo": nrm((H, H)), "bo": nrm((H,)),
            }
            for _ in range(num_blocks)
        ],
    }

    out = neigh_attention_forward(params, queries, keys_in, neigh_mask,
                                  head_num=head_num, num_heads=num_heads,
                                  use_pallas=True)
    out = jax.block_until_ready(out)

    ref = neigh_attention_forward(params, queries, keys_in, neigh_mask,
                                  head_num=head_num, num_heads=num_heads,
                                  use_pallas=False)
    assert out.shape == (B, maxlen, H)
    assert jnp.allclose(out, ref, atol=5e-3, rtol=5e-3), "mismatch vs pure-JAX reference"

    print("KERNEL_OK")
</pallas_src>

<mosaic_0001>
module attributes {stable_mosaic.version = 11 : i64} {
  func.func @_gru_kernel(%arg0: i32, %arg1: memref<10x104x32xf32, #tpu.memory_space<vmem>>, %arg2: memref<32x96xf32, #tpu.memory_space<vmem>>, %arg3: memref<32x96xf32, #tpu.memory_space<vmem>>, %arg4: memref<1x96xf32, #tpu.memory_space<vmem>>, %arg5: memref<1x96xf32, #tpu.memory_space<vmem>>, %arg6: memref<10x104x32xf32, #tpu.memory_space<vmem>>) attributes {dimension_semantics = [#tpu.dimension_semantics<parallel>], iteration_bounds = array<i64: 2>, scalar_prefetch = 0 : i64, scratch_operands = 0 : i64, tpu.core_type = #tpu.core_type<tc>, window_params = [{transform_indices = @transform_0, window_bounds = array<i64: 10, 104, 32>}, {pipeline_mode = #tpu.pipeline_mode<synchronous>, transform_indices = @transform_1, window_bounds = array<i64: 32, 96>}, {pipeline_mode = #tpu.pipeline_mode<synchronous>, transform_indices = @transform_2, window_bounds = array<i64: 32, 96>}, {pipeline_mode = #tpu.pipeline_mode<synchronous>, transform_indices = @transform_3, window_bounds = array<i64: 1, 96>}, {pipeline_mode = #tpu.pipeline_mode<synchronous>, transform_indices = @transform_4, window_bounds = array<i64: 1, 96>}, {transform_indices = @transform_5, window_bounds = array<i64: 10, 104, 32>}]} {
    %c0 = arith.constant 0 : index
    %c0_0 = arith.constant 0 : index
    %0 = vector.load %arg2[%c0, %c0_0] : memref<32x96xf32, #tpu.memory_space<vmem>>, vector<32x96xf32>
    %c0_1 = arith.constant 0 : index
    %c0_2 = arith.constant 0 : index
    %1 = vector.load %arg3[%c0_1, %c0_2] : memref<32x96xf32, #tpu.memory_space<vmem>>, vector<32x96xf32>
    %c0_3 = arith.constant 0 : index
    %c0_4 = arith.constant 0 : index
    %2 = vector.load %arg4[%c0_3, %c0_4] : memref<1x96xf32, #tpu.memory_space<vmem>>, vector<1x96xf32>
    %c0_5 = arith.constant 0 : index
    %c0_6 = arith.constant 0 : index
    %3 = vector.load %arg5[%c0_5, %c0_6] : memref<1x96xf32, #tpu.memory_space<vmem>>, vector<1x96xf32>
    %c0_7 = arith.constant 0 : index
    %c0_8 = arith.constant 0 : index
    %c0_9 = arith.constant 0 : index
    %4 = vector.load %arg1[%c0_7, %c0_8, %c0_9] : memref<10x104x32xf32, #tpu.memory_space<vmem>>, vector<10x104x32xf32>
    %5 = vector.shape_cast %4 : vector<10x104x32xf32> to vector<1040x32xf32>
    %cst = arith.constant dense<0.000000e+00> : vector<1040x96xf32>
    %6 = tpu.matmul %5, %0, %cst {dimension_numbers = #tpu.dot_dimension_numbers<[1], [0], [0], [1], [0, 0, 1, 1], [], []>} : vector<1040x32xf32>, vector<32x96xf32>, vector<1040x96xf32> -> vector<1040x96xf32>
    %7 = vector.broadcast %2 : vector<1x96xf32> to vector<1040x96xf32>
    %8 = arith.addf %6, %7 : vector<1040x96xf32>
    %cst_10 = arith.constant 0.000000e+00 : f32
    %9 = vector.broadcast %cst_10 : f32 to vector<104x32xf32>
    %cst_11 = arith.constant dense<0.000000e+00> : vector<104x96xf32>
    %10 = tpu.matmul %9, %1, %cst_11 {dimension_numbers = #tpu.dot_dimension_numbers<[1], [0], [0], [1], [0, 0, 1, 1], [], []>} : vector<104x32xf32>, vector<32x96xf32>, vector<104x96xf32> -> vector<104x96xf32>
    %11 = vector.broadcast %3 : vector<1x96xf32> to vector<104x96xf32>
    %12 = arith.addf %10, %11 : vector<104x96xf32>
    %13 = vector.extract_strided_slice %8 {offsets = [0, 0], sizes = [104, 96], strides = [1, 1]} : vector<1040x96xf32> to vector<104x96xf32>
    %14 = vector.extract_strided_slice %13 {offsets = [0, 0], sizes = [104, 32], strides = [1, 1]} : vector<104x96xf32> to vector<104x32xf32>
    %15 = vector.extract_strided_slice %12 {offsets = [0, 0], sizes = [104, 32], strides = [1, 1]} : vector<104x96xf32> to vector<104x32xf32>
    %16 = arith.addf %14, %15 : vector<104x32xf32>
    %cst_12 = arith.constant 0.000000e+00 : f32
    %17 = vector.broadcast %cst_12 : f32 to vector<104x32xf32>
    %18 = arith.subf %17, %16 : vector<104x32xf32>
    %19 = math.exp %18 : vector<104x32xf32>
    %cst_13 = arith.constant 1.000000e+00 : f32
    %20 = vector.broadcast %cst_13 : f32 to vector<104x32xf32>
    %21 = arith.addf %20, %19 : vector<104x32xf32>
    %22 = tpu.reciprocal %21 : vector<104x32xf32> -> vector<104x32xf32>
    %23 = vector.extract_strided_slice %13 {offsets = [0, 32], sizes = [104, 32], strides = [1, 1]} : vector<104x96xf32> to vector<104x32xf32>
    %24 = vector.extract_strided_slice %12 {offsets = [0, 32], sizes = [104, 32], strides = [1, 1]} : vector<104x96xf32> to vector<104x32xf32>
    %25 = arith.addf %23, %24 : vector<104x32xf32>
    %cst_14 = arith.constant 0.000000e+00 : f32
    %26 = vector.broadcast %cst_14 : f32 to vector<104x32xf32>
    %27 = arith.subf %26, %25 : vector<104x32xf32>
    %28 = math.exp %27 : vector<104x32xf32>
    %cst_15 = arith.constant 1.000000e+00 : f32
    %29 = vector.broadcast %cst_15 : f32 to vector<104x32xf32>
    %30 = arith.addf %29, %28 : vector<104x32xf32>
    %31 = tpu.reciprocal %30 : vector<104x32xf32> -> vector<104x32xf32>
    %32 = vector.extract_strided_slice %13 {offsets = [0, 64], sizes = [104, 32], strides = [1, 1]} : vector<104x96xf32> to vector<104x32xf32>
    %33 = vector.extract_strided_slice %12 {offsets = [0, 64], sizes = [104, 32], strides = [1, 1]} : vector<104x96xf32> to vector<104x32xf32>
    %34 = arith.mulf %22, %33 : vector<104x32xf32>
    %35 = arith.addf %32, %34 : vector<104x32xf32>
    %36 = math.tanh %35 : vector<104x32xf32>
    %cst_16 = arith.constant 1.000000e+00 : f32
    %37 = vector.broadcast %cst_16 : f32 to vector<104x32xf32>
    %38 = arith.subf %37, %31 : vector<104x32xf32>
    %39 = arith.mulf %38, %36 : vector<104x32xf32>
    %40 = arith.mulf %31, %9 : vector<104x32xf32>
    %41 = arith.addf %39, %40 : vector<104x32xf32>
    %c0_17 = arith.constant 0 : index
    %c0_18 = arith.constant 0 : index
    %c0_19 = arith.constant 0 : index
    %42 = vector.load %arg6[%c0_17, %c0_18, %c0_19] : memref<10x104x32xf32, #tpu.memory_space<vmem>>, vector<1x104x32xf32>
    %43 = vector.shape_cast %42 : vector<1x104x32xf32> to vector<104x32xf32>
    %44 = vector.shape_cast %41 : vector<104x32xf32> to vector<1x104x32xf32>
    tpu.vector_store %arg6[%c0_17, %c0_18, %c0_19], %44 {strides = array<i32>} : memref<10x104x32xf32, #tpu.memory_space<vmem>>, vector<1x104x32xf32>,
    %cst_20 = arith.constant dense<0.000000e+00> : vector<104x96xf32>
    %45 = tpu.matmul %41, %1, %cst_20 {dimension_numbers = #tpu.dot_dimension_numbers<[1], [0], [0], [1], [0, 0, 1, 1], [], []>} : vector<104x32xf32>, vector<32x96xf32>, vector<104x96xf32> -> vector<104x96xf32>
    %46 = vector.broadcast %3 : vector<1x96xf32> to vector<104x96xf32>
    %47 = arith.addf %45, %46 : vector<104x96xf32>
    %48 = vector.extract_strided_slice %8 {offsets = [104, 0], sizes = [104, 96], strides = [1, 1]} : vector<1040x96xf32> to vector<104x96xf32>
    %49 = vector.extract_strided_slice %48 {offsets = [0, 0], sizes = [104, 32], strides = [1, 1]} : vector<104x96xf32> to vector<104x32xf32>
    %50 = vector.extract_strided_slice %47 {offsets = [0, 0], sizes = [104, 32], strides = [1, 1]} : vector<104x96xf32> to vector<104x32xf32>
    %51 = arith.addf %49, %50 : vector<104x32xf32>
    %cst_21 = arith.constant 0.000000e+00 : f32
    %52 = vector.broadcast %cst_21 : f32 to vector<104x32xf32>
    %53 = arith.subf %52, %51 : vector<104x32xf32>
    %54 = math.exp %53 : vector<104x32xf32>
    %cst_22 = arith.constant 1.000000e+00 : f32
    %55 = vector.broadcast %cst_22 : f32 to vector<104x32xf32>
    %56 = arith.addf %55, %54 : vector<104x32xf32>
    %57 = tpu.reciprocal %56 : vector<104x32xf32> -> vector<104x32xf32>
    %58 = vector.extract_strided_slice %48 {offsets = [0, 32], sizes = [104, 32], strides = [1, 1]} : vector<104x96xf32> to vector<104x32xf32>
    %59 = vector.extract_strided_slice %47 {offsets = [0, 32], sizes = [104, 32], strides = [1, 1]} : vector<104x96xf32> to vector<104x32xf32>
    %60 = arith.addf %58, %59 : vector<104x32xf32>
    %cst_23 = arith.constant 0.000000e+00 : f32
    %61 = vector.broadcast %cst_23 : f32 to vector<104x32xf32>
    %62 = arith.subf %61, %60 : vector<104x32xf32>
    %63 = math.exp %62 : vector<104x32xf32>
    %cst_24 = arith.constant 1.000000e+00 : f32
    %64 = vector.broadcast %cst_24 : f32 to vector<104x32xf32>
    %65 = arith.addf %64, %63 : vector<104x32xf32>
    %66 = tpu.reciprocal %65 : vector<104x32xf32> -> vector<104x32xf32>
    %67 = vector.extract_strided_slice %48 {offsets = [0, 64], sizes = [104, 32], strides = [1, 1]} : vector<104x96xf32> to vector<104x32xf32>
    %68 = vector.extract_strided_slice %47 {offsets = [0, 64], sizes = [104, 32], strides = [1, 1]} : vector<104x96xf32> to vector<104x32xf32>
    %69 = arith.mulf %57, %68 : vector<104x32xf32>
    %70 = arith.addf %67, %69 : vector<104x32xf32>
    %71 = math.tanh %70 : vector<104x32xf32>
    %cst_25 = arith.constant 1.000000e+00 : f32
    %72 = vector.broadcast %cst_25 : f32 to vector<104x32xf32>
    %73 = arith.subf %72, %66 : vector<104x32xf32>
    %74 = arith.mulf %73, %71 : vector<104x32xf32>
    %75 = arith.mulf %66, %41 : vector<104x32xf32>
    %76 = arith.addf %74, %75 : vector<104x32xf32>
    %c1 = arith.constant 1 : index
    %c0_26 = arith.constant 0 : index
    %c0_27 = arith.constant 0 : index
    %77 = vector.load %arg6[%c1, %c0_26, %c0_27] : memref<10x104x32xf32, #tpu.memory_space<vmem>>, vector<1x104x32xf32>
    %78 = vector.shape_cast %77 : vector<1x104x32xf32> to vector<104x32xf32>
    %79 = vector.shape_cast %76 : vector<104x32xf32> to vector<1x104x32xf32>
    tpu.vector_store %arg6[%c1, %c0_26, %c0_27], %79 {strides = array<i32>} : memref<10x104x32xf32, #tpu.memory_space<vmem>>, vector<1x104x32xf32>,
    %cst_28 = arith.constant dense<0.000000e+00> : vector<104x96xf32>
    %80 = tpu.matmul %76, %1, %cst_28 {dimension_numbers = #tpu.dot_dimension_numbers<[1], [0], [0], [1], [0, 0, 1, 1], [], []>} : vector<104x32xf32>, vector<32x96xf32>, vector<104x96xf32> -> vector<104x96xf32>
    %81 = vector.broadcast %3 : vector<1x96xf32> to vector<104x96xf32>
    %82 = arith.addf %80, %81 : vector<104x96xf32>
    %83 = vector.extract_strided_slice %8 {offsets = [208, 0], sizes = [104, 96], strides = [1, 1]} : vector<1040x96xf32> to vector<104x96xf32>
    %84 = vector.extract_strided_slice %83 {offsets = [0, 0], sizes = [104, 32], strides = [1, 1]} : vector<104x96xf32> to vector<104x32xf32>
    %85 = vector.extract_strided_slice %82 {offsets = [0, 0], sizes = [104, 32], strides = [1, 1]} : vector<104x96xf32> to vector<104x32xf32>
    %86 = arith.addf %84, %85 : vector<104x32xf32>
    %cst_29 = arith.constant 0.000000e+00 : f32
    %87 = vector.broadcast %cst_29 : f32 to vector<104x32xf32>
    %88 = arith.subf %87, %86 : vector<104x32xf32>
    %89 = math.exp %88 : vector<104x32xf32>
    %cst_30 = arith.constant 1.000000e+00 : f32
    %90 = vector.broadcast %cst_30 : f32 to vector<104x32xf32>
    %91 = arith.addf %90, %89 : vector<104x32xf32>
    %92 = tpu.reciprocal %91 : vector<104x32xf32> -> vector<104x32xf32>
    %93 = vector.extract_strided_slice %83 {offsets = [0, 32], sizes = [104, 32], strides = [1, 1]} : vector<104x96xf32> to vector<104x32xf32>
    %94 = vector.extract_strided_slice %82 {offsets = [0, 32], sizes = [104, 32], strides = [1, 1]} : vector<104x96xf32> to vector<104x32xf32>
    %95 = arith.addf %93, %94 : vector<104x32xf32>
    %cst_31 = arith.constant 0.000000e+00 : f32
    %96 = vector.broadcast %cst_31 : f32 to vector<104x32xf32>
    %97 = arith.subf %96, %95 : vector<104x32xf32>
    %98 = math.exp %97 : vector<104x32xf32>
    %cst_32 = arith.constant 1.000000e+00 : f32
    %99 = vector.broadcast %cst_32 : f32 to vector<104x32xf32>
    %100 = arith.addf %99, %98 : vector<104x32xf32>
    %101 = tpu.reciprocal %100 : vector<104x32xf32> -> vector<104x32xf32>
    %102 = vector.extract_strided_slice %83 {offsets = [0, 64], sizes = [104, 32], strides = [1, 1]} : vector<104x96xf32> to vector<104x32xf32>
    %103 = vector.extract_strided_slice %82 {offsets = [0, 64], sizes = [104, 32], strides = [1, 1]} : vector<104x96xf32> to vector<104x32xf32>
    %104 = arith.mulf %92, %103 : vector<104x32xf32>
    %105 = arith.addf %102, %104 : vector<104x32xf32>
    %106 = math.tanh %105 : vector<104x32xf32>
    %cst_33 = arith.constant 1.000000e+00 : f32
    %107 = vector.broadcast %cst_33 : f32 to vector<104x32xf32>
    %108 = arith.subf %107, %101 : vector<104x32xf32>
    %109 = arith.mulf %108, %106 : vector<104x32xf32>
    %110 = arith.mulf %101, %76 : vector<104x32xf32>
    %111 = arith.addf %109, %110 : vector<104x32xf32>
    %c2 = arith.constant 2 : index
    %c0_34 = arith.constant 0 : index
    %c0_35 = arith.constant 0 : index
    %112 = vector.load %arg6[%c2, %c0_34, %c0_35] : memref<10x104x32xf32, #tpu.memory_space<vmem>>, vector<1x104x32xf32>
    %113 = vector.shape_cast %112 : vector<1x104x32xf32> to vector<104x32xf32>
    %114 = vector.shape_cast %111 : vector<104x32xf32> to vector<1x104x32xf32>
    tpu.vector_store %arg6[%c2, %c0_34, %c0_35], %114 {strides = array<i32>} : memref<10x104x32xf32, #tpu.memory_space<vmem>>, vector<1x104x32xf32>,
    %cst_36 = arith.constant dense<0.000000e+00> : vector<104x96xf32>
    %115 = tpu.matmul %111, %1, %cst_36 {dimension_numbers = #tpu.dot_dimension_numbers<[1], [0], [0], [1], [0, 0, 1, 1], [], []>} : vector<104x32xf32>, vector<32x96xf32>, vector<104x96xf32> -> vector<104x96xf32>
    %116 = vector.broadcast %3 : vector<1x96xf32> to vector<104x96xf32>
    %117 = arith.addf %115, %116 : vector<104x96xf32>
    %118 = vector.extract_strided_slice %8 {offsets = [312, 0], sizes = [104, 96], strides = [1, 1]} : vector<1040x96xf32> to vector<104x96xf32>
    %119 = vector.extract_strided_slice %118 {offsets = [0, 0], sizes = [104, 32], strides = [1, 1]} : vector<104x96xf32> to vector<104x32xf32>
    %120 = vector.extract_strided_slice %117 {offsets = [0, 0], sizes = [104, 32], strides = [1, 1]} : vector<104x96xf32> to vector<104x32xf32>
    %121 = arith.addf %119, %120 : vector<104x32xf32>
    %cst_37 = arith.constant 0.000000e+00 : f32
    %122 = vector.broadcast %cst_37 : f32 to vector<104x32xf32>
    %123 = arith.subf %122, %121 : vector<104x32xf32>
    %124 = math.exp %123 : vector<104x32xf32>
    %cst_38 = arith.constant 1.000000e+00 : f32
    %125 = vector.broadcast %cst_38 : f32 to vector<104x32xf32>
    %126 = arith.addf %125, %124 : vector<104x32xf32>
    %127 = tpu.reciprocal %126 : vector<104x32xf32> -> vector<104x32xf32>
    %128 = vector.extract_strided_slice %118 {offsets = [0, 32], sizes = [104, 32], strides = [1, 1]} : vector<104x96xf32> to vector<104x32xf32>
    %129 = vector.extract_strided_slice %117 {offsets = [0, 32], sizes = [104, 32], strides = [1, 1]} : vector<104x96xf32> to vector<104x32xf32>
    %130 = arith.addf %128, %129 : vector<104x32xf32>
    %cst_39 = arith.constant 0.000000e+00 : f32
    %131 = vector.broadcast %cst_39 : f32 to vector<104x32xf32>
    %132 = arith.subf %131, %130 : vector<104x32xf32>
    %133 = math.exp %132 : vector<104x32xf32>
    %cst_40 = arith.constant 1.000000e+00 : f32
    %134 = vector.broadcast %cst_40 : f32 to vector<104x32xf32>
    %135 = arith.addf %134, %133 : vector<104x32xf32>
    %136 = tpu.reciprocal %135 : vector<104x32xf32> -> vector<104x32xf32>
    %137 = vector.extract_strided_slice %118 {offsets = [0, 64], sizes = [104, 32], strides = [1, 1]} : vector<104x96xf32> to vector<104x32xf32>
    %138 = vector.extract_strided_slice %117 {offsets = [0, 64], sizes = [104, 32], strides = [1, 1]} : vector<104x96xf32> to vector<104x32xf32>
    %139 = arith.mulf %127, %138 : vector<104x32xf32>
    %140 = arith.addf %137, %139 : vector<104x32xf32>
    %141 = math.tanh %140 : vector<104x32xf32>
    %cst_41 = arith.constant 1.000000e+00 : f32
    %142 = vector.broadcast %cst_41 : f32 to vector<104x32xf32>
    %143 = arith.subf %142, %136 : vector<104x32xf32>
    %144 = arith.mulf %143, %141 : vector<104x32xf32>
    %145 = arith.mulf %136, %111 : vector<104x32xf32>
    %146 = arith.addf %144, %145 : vector<104x32xf32>
    %c3 = arith.constant 3 : index
    %c0_42 = arith.constant 0 : index
    %c0_43 = arith.constant 0 : index
    %147 = vector.load %arg6[%c3, %c0_42, %c0_43] : memref<10x104x32xf32, #tpu.memory_space<vmem>>, vector<1x104x32xf32>
    %148 = vector.shape_cast %147 : vector<1x104x32xf32> to vector<104x32xf32>
    %149 = vector.shape_cast %146 : vector<104x32xf32> to vector<1x104x32xf32>
    tpu.vector_store %arg6[%c3, %c0_42, %c0_43], %149 {strides = array<i32>} : memref<10x104x32xf32, #tpu.memory_space<vmem>>, vector<1x104x32xf32>,
    %cst_44 = arith.constant dense<0.000000e+00> : vector<104x96xf32>
    %150 = tpu.matmul %146, %1, %cst_44 {dimension_numbers = #tpu.dot_dimension_numbers<[1], [0], [0], [1], [0, 0, 1, 1], [], []>} : vector<104x32xf32>, vector<32x96xf32>, vector<104x96xf32> -> vector<104x96xf32>
    %151 = vector.broadcast %3 : vector<1x96xf32> to vector<104x96xf32>
    %152 = arith.addf %150, %151 : vector<104x96xf32>
    %153 = vector.extract_strided_slice %8 {offsets = [416, 0], sizes = [104, 96], strides = [1, 1]} : vector<1040x96xf32> to vector<104x96xf32>
    %154 = vector.extract_strided_slice %153 {offsets = [0, 0], sizes = [104, 32], strides = [1, 1]} : vector<104x96xf32> to vector<104x32xf32>
    %155 = vector.extract_strided_slice %152 {offsets = [0, 0], sizes = [104, 32], strides = [1, 1]} : vector<104x96xf32> to vector<104x32xf32>
    %156 = arith.addf %154, %155 : vector<104x32xf32>
    %cst_45 = arith.constant 0.000000e+00 : f32
    %157 = vector.broadcast %cst_45 : f32 to vector<104x32xf32>
    %158 = arith.subf %157, %156 : vector<104x32xf32>
    %159 = math.exp %158 : vector<104x32xf32>
    %cst_46 = arith.constant 1.000000e+00 : f32
    %160 = vector.broadcast %cst_46 : f32 to vector<104x32xf32>
    %161 = arith.addf %160, %159 : vector<104x32xf32>
    %162 = tpu.reciprocal %161 : vector<104x32xf32> -> vector<104x32xf32>
    %163 = vector.extract_strided_slice %153 {offsets = [0, 32], sizes = [104, 32], strides = [1, 1]} : vector<104x96xf32> to vector<104x32xf32>
    %164 = vector.extract_strided_slice %152 {offsets = [0, 32], sizes = [104, 32], strides = [1, 1]} : vector<104x96xf32> to vector<104x32xf32>
    %165 = arith.addf %163, %164 : vector<104x32xf32>
    %cst_47 = arith.constant 0.000000e+00 : f32
    %166 = vector.broadcast %cst_47 : f32 to vector<104x32xf32>
    %167 = arith.subf %166, %165 : vector<104x32xf32>
    %168 = math.exp %167 : vector<104x32xf32>
    %cst_48 = arith.constant 1.000000e+00 : f32
    %169 = vector.broadcast %cst_48 : f32 to vector<104x32xf32>
    %170 = arith.addf %169, %168 : vector<104x32xf32>
    %171 = tpu.reciprocal %170 : vector<104x32xf32> -> vector<104x32xf32>
    %172 = vector.extract_strided_slice %153 {offsets = [0, 64], sizes = [104, 32], strides = [1, 1]} : vector<104x96xf32> to vector<104x32xf32>
    %173 = vector.extract_strided_slice %152 {offsets = [0, 64], sizes = [104, 32], strides = [1, 1]} : vector<104x96xf32> to vector<104x32xf32>
    %174 = arith.mulf %162, %173 : vector<104x32xf32>
    %175 = arith.addf %172, %174 : vector<104x32xf32>
    %176 = math.tanh %175 : vector<104x32xf32>
    %cst_49 = arith.constant 1.000000e+00 : f32
    %177 = vector.broadcast %cst_49 : f32 to vector<104x32xf32>
    %178 = arith.subf %177, %171 : vector<104x32xf32>
    %179 = arith.mulf %178, %176 : vector<104x32xf32>
    %180 = arith.mulf %171, %146 : vector<104x32xf32>
    %181 = arith.addf %179, %180 : vector<104x32xf32>
    %c4 = arith.constant 4 : index
    %c0_50 = arith.constant 0 : index
    %c0_51 = arith.constant 0 : index
    %182 = vector.load %arg6[%c4, %c0_50, %c0_51] : memref<10x104x32xf32, #tpu.memory_space<vmem>>, vector<1x104x32xf32>
    %183 = vector.shape_cast %182 : vector<1x104x32xf32> to vector<104x32xf32>
    %184 = vector.shape_cast %181 : vector<104x32xf32> to vector<1x104x32xf32>
    tpu.vector_store %arg6[%c4, %c0_50, %c0_51], %184 {strides = array<i32>} : memref<10x104x32xf32, #tpu.memory_space<vmem>>, vector<1x104x32xf32>,
    %cst_52 = arith.constant dense<0.000000e+00> : vector<104x96xf32>
    %185 = tpu.matmul %181, %1, %cst_52 {dimension_numbers = #tpu.dot_dimension_numbers<[1], [0], [0], [1], [0, 0, 1, 1], [], []>} : vector<104x32xf32>, vector<32x96xf32>, vector<104x96xf32> -> vector<104x96xf32>
    %186 = vector.broadcast %3 : vector<1x96xf32> to vector<104x96xf32>
    %187 = arith.addf %185, %186 : vector<104x96xf32>
    %188 = vector.extract_strided_slice %8 {offsets = [520, 0], sizes = [104, 96], strides = [1, 1]} : vector<1040x96xf32> to vector<104x96xf32>
    %189 = vector.extract_strided_slice %188 {offsets = [0, 0], sizes = [104, 32], strides = [1, 1]} : vector<104x96xf32> to vector<104x32xf32>
    %190 = vector.extract_strided_slice %187 {offsets = [0, 0], sizes = [104, 32], strides = [1, 1]} : vector<104x96xf32> to vector<104x32xf32>
    %191 = arith.addf %189, %190 : vector<104x32xf32>
    %cst_53 = arith.constant 0.000000e+00 : f32
    %192 = vector.broadcast %cst_53 : f32 to vector<104x32xf32>
    %193 = arith.subf %192, %191 : vector<104x32xf32>
    %194 = math.exp %193 : vector<104x32xf32>
    %cst_54 = arith.constant 1.000000e+00 : f32
    %195 = vector.broadcast %cst_54 : f32 to vector<104x32xf32>
    %196 = arith.addf %195, %194 : vector<104x32xf32>
    %197 = tpu.reciprocal %196 : vector<104x32xf32> -> vector<104x32xf32>
    %198 = vector.extract_strided_slice %188 {offsets = [0, 32], sizes = [104, 32], strides = [1, 1]} : vector<104x96xf32> to vector<104x32xf32>
    %199 = vector.extract_strided_slice %187 {offsets = [0, 32], sizes = [104, 32], strides = [1, 1]} : vector<104x96xf32> to vector<104x32xf32>
    %200 = arith.addf %198, %199 : vector<104x32xf32>
    %cst_55 = arith.constant 0.000000e+00 : f32
    %201 = vector.broadcast %cst_55 : f32 to vector<104x32xf32>
    %202 = arith.subf %201, %200 : vector<104x32xf32>
    %203 = math.exp %202 : vector<104x32xf32>
    %cst_56 = arith.constant 1.000000e+00 : f32
    %204 = vector.broadcast %cst_56 : f32 to vector<104x32xf32>
    %205 = arith.addf %204, %203 : vector<104x32xf32>
    %206 = tpu.reciprocal %205 : vector<104x32xf32> -> vector<104x32xf32>
    %207 = vector.extract_strided_slice %188 {offsets = [0, 64], sizes = [104, 32], strides = [1, 1]} : vector<104x96xf32> to vector<104x32xf32>
    %208 = vector.extract_strided_slice %187 {offsets = [0, 64], sizes = [104, 32], strides = [1, 1]} : vector<104x96xf32> to vector<104x32xf32>
    %209 = arith.mulf %197, %208 : vector<104x32xf32>
    %210 = arith.addf %207, %209 : vector<104x32xf32>
    %211 = math.tanh %210 : vector<104x32xf32>
    %cst_57 = arith.constant 1.000000e+00 : f32
    %212 = vector.broadcast %cst_57 : f32 to vector<104x32xf32>
    %213 = arith.subf %212, %206 : vector<104x32xf32>
    %214 = arith.mulf %213, %211 : vector<104x32xf32>
    %215 = arith.mulf %206, %181 : vector<104x32xf32>
    %216 = arith.addf %214, %215 : vector<104x32xf32>
    %c5 = arith.constant 5 : index
    %c0_58 = arith.constant 0 : index
    %c0_59 = arith.constant 0 : index
    %217 = vector.load %arg6[%c5, %c0_58, %c0_59] : memref<10x104x32xf32, #tpu.memory_space<vmem>>, vector<1x104x32xf32>
    %218 = vector.shape_cast %217 : vector<1x104x32xf32> to vector<104x32xf32>
    %219 = vector.shape_cast %216 : vector<104x32xf32> to vector<1x104x32xf32>
    tpu.vector_store %arg6[%c5, %c0_58, %c0_59], %219 {strides = array<i32>} : memref<10x104x32xf32, #tpu.memory_space<vmem>>, vector<1x104x32xf32>,
    %cst_60 = arith.constant dense<0.000000e+00> : vector<104x96xf32>
    %220 = tpu.matmul %216, %1, %cst_60 {dimension_numbers = #tpu.dot_dimension_numbers<[1], [0], [0], [1], [0, 0, 1, 1], [], []>} : vector<104x32xf32>, vector<32x96xf32>, vector<104x96xf32> -> vector<104x96xf32>
    %221 = vector.broadcast %3 : vector<1x96xf32> to vector<104x96xf32>
    %222 = arith.addf %220, %221 : vector<104x96xf32>
    %223 = vector.extract_strided_slice %8 {offsets = [624, 0], sizes = [104, 96], strides = [1, 1]} : vector<1040x96xf32> to vector<104x96xf32>
    %224 = vector.extract_strided_slice %223 {offsets = [0, 0], sizes = [104, 32], strides = [1, 1]} : vector<104x96xf32> to vector<104x32xf32>
    %225 = vector.extract_strided_slice %222 {offsets = [0, 0], sizes = [104, 32], strides = [1, 1]} : vector<104x96xf32> to vector<104x32xf32>
    %226 = arith.addf %224, %225 : vector<104x32xf32>
    %cst_61 = arith.constant 0.000000e+00 : f32
    %227 = vector.broadcast %cst_61 : f32 to vector<104x32xf32>
    %228 = arith.subf %227, %226 : vector<104x32xf32>
    %229 = math.exp %228 : vector<104x32xf32>
    %cst_62 = arith.constant 1.000000e+00 : f32
    %230 = vector.broadcast %cst_62 : f32 to vector<104x32xf32>
    %231 = arith.addf %230, %229 : vector<104x32xf32>
    %232 = tpu.reciprocal %231 : vector<104x32xf32> -> vector<104x32xf32>
    %233 = vector.extract_strided_slice %223 {offsets = [0, 32], sizes = [104, 32], strides = [1, 1]} : vector<104x96xf32> to vector<104x32xf32>
    %234 = vector.extract_strided_slice %222 {offsets = [0, 32], sizes = [104, 32], strides = [1, 1]} : vector<104x96xf32> to vector<104x32xf32>
    %235 = arith.addf %233, %234 : vector<104x32xf32>
    %cst_63 = arith.constant 0.000000e+00 : f32
    %236 = vector.broadcast %cst_63 : f32 to vector<104x32xf32>
    %237 = arith.subf %236, %235 : vector<104x32xf32>
    %238 = math.exp %237 : vector<104x32xf32>
    %cst_64 = arith.constant 1.000000e+00 : f32
    %239 = vector.broadcast %cst_64 : f32 to vector<104x32xf32>
    %240 = arith.addf %239, %238 : vector<104x32xf32>
    %241 = tpu.reciprocal %240 : vector<104x32xf32> -> vector<104x32xf32>
    %242 = vector.extract_strided_slice %223 {offsets = [0, 64], sizes = [104, 32], strides = [1, 1]} : vector<104x96xf32> to vector<104x32xf32>
    %243 = vector.extract_strided_slice %222 {offsets = [0, 64], sizes = [104, 32], strides = [1, 1]} : vector<104x96xf32> to vector<104x32xf32>
    %244 = arith.mulf %232, %243 : vector<104x32xf32>
    %245 = arith.addf %242, %244 : vector<104x32xf32>
    %246 = math.tanh %245 : vector<104x32xf32>
    %cst_65 = arith.constant 1.000000e+00 : f32
    %247 = vector.broadcast %cst_65 : f32 to vector<104x32xf32>
    %248 = arith.subf %247, %241 : vector<104x32xf32>
    %249 = arith.mulf %248, %246 : vector<104x32xf32>
    %250 = arith.mulf %241, %216 : vector<104x32xf32>
    %251 = arith.addf %249, %250 : vector<104x32xf32>
    %c6 = arith.constant 6 : index
    %c0_66 = arith.constant 0 : index
    %c0_67 = arith.constant 0 : index
    %252 = vector.load %arg6[%c6, %c0_66, %c0_67] : memref<10x104x32xf32, #tpu.memory_space<vmem>>, vector<1x104x32xf32>
    %253 = vector.shape_cast %252 : vector<1x104x32xf32> to vector<104x32xf32>
    %254 = vector.shape_cast %251 : vector<104x32xf32> to vector<1x104x32xf32>
    tpu.vector_store %arg6[%c6, %c0_66, %c0_67], %254 {strides = array<i32>} : memref<10x104x32xf32, #tpu.memory_space<vmem>>, vector<1x104x32xf32>,
    %cst_68 = arith.constant dense<0.000000e+00> : vector<104x96xf32>
    %255 = tpu.matmul %251, %1, %cst_68 {dimension_numbers = #tpu.dot_dimension_numbers<[1], [0], [0], [1], [0, 0, 1, 1], [], []>} : vector<104x32xf32>, vector<32x96xf32>, vector<104x96xf32> -> vector<104x96xf32>
    %256 = vector.broadcast %3 : vector<1x96xf32> to vector<104x96xf32>
    %257 = arith.addf %255, %256 : vector<104x96xf32>
    %258 = vector.extract_strided_slice %8 {offsets = [728, 0], sizes = [104, 96], strides = [1, 1]} : vector<1040x96xf32> to vector<104x96xf32>
    %259 = vector.extract_strided_slice %258 {offsets = [0, 0], sizes = [104, 32], strides = [1, 1]} : vector<104x96xf32> to vector<104x32xf32>
    %260 = vector.extract_strided_slice %257 {offsets = [0, 0], sizes = [104, 32], strides = [1, 1]} : vector<104x96xf32> to vector<104x32xf32>
    %261 = arith.addf %259, %260 : vector<104x32xf32>
    %cst_69 = arith.constant 0.000000e+00 : f32
    %262 = vector.broadcast %cst_69 : f32 to vector<104x32xf32>
    %263 = arith.subf %262, %261 : vector<104x32xf32>
    %264 = math.exp %263 : vector<104x32xf32>
    %cst_70 = arith.constant 1.000000e+00 : f32
    %265 = vector.broadcast %cst_70 : f32 to vector<104x32xf32>
    %266 = arith.addf %265, %264 : vector<104x32xf32>
    %267 = tpu.reciprocal %266 : vector<104x32xf32> -> vector<104x32xf32>
    %268 = vector.extract_strided_slice %258 {offsets = [0, 32], sizes = [104, 32], strides = [1, 1]} : vector<104x96xf32> to vector<104x32xf32>
    %269 = vector.extract_strided_slice %257 {offsets = [0, 32], sizes = [104, 32], strides = [1, 1]} : vector<104x96xf32> to vector<104x32xf32>
    %270 = arith.addf %268, %269 : vector<104x32xf32>
    %cst_71 = arith.constant 0.000000e+00 : f32
    %271 = vector.broadcast %cst_71 : f32 to vector<104x32xf32>
    %272 = arith.subf %271, %270 : vector<104x32xf32>
    %273 = math.exp %272 : vector<104x32xf32>
    %cst_72 = arith.constant 1.000000e+00 : f32
    %274 = vector.broadcast %cst_72 : f32 to vector<104x32xf32>
    %275 = arith.addf %274, %273 : vector<104x32xf32>
    %276 = tpu.reciprocal %275 : vector<104x32xf32> -> vector<104x32xf32>
    %277 = vector.extract_strided_slice %258 {offsets = [0, 64], sizes = [104, 32], strides = [1, 1]} : vector<104x96xf32> to vector<104x32xf32>
    %278 = vector.extract_strided_slice %257 {offsets = [0, 64], sizes = [104, 32], strides = [1, 1]} : vector<104x96xf32> to vector<104x32xf32>
    %279 = arith.mulf %267, %278 : vector<104x32xf32>
    %280 = arith.addf %277, %279 : vector<104x32xf32>
    %281 = math.tanh %280 : vector<104x32xf32>
    %cst_73 = arith.constant 1.000000e+00 : f32
    %282 = vector.broadcast %cst_73 : f32 to vector<104x32xf32>
    %283 = arith.subf %282, %276 : vector<104x32xf32>
    %284 = arith.mulf %283, %281 : vector<104x32xf32>
    %285 = arith.mulf %276, %251 : vector<104x32xf32>
    %286 = arith.addf %284, %285 : vector<104x32xf32>
    %c7 = arith.constant 7 : index
    %c0_74 = arith.constant 0 : index
    %c0_75 = arith.constant 0 : index
    %287 = vector.load %arg6[%c7, %c0_74, %c0_75] : memref<10x104x32xf32, #tpu.memory_space<vmem>>, vector<1x104x32xf32>
    %288 = vector.shape_cast %287 : vector<1x104x32xf32> to vector<104x32xf32>
    %289 = vector.shape_cast %286 : vector<104x32xf32> to vector<1x104x32xf32>
    tpu.vector_store %arg6[%c7, %c0_74, %c0_75], %289 {strides = array<i32>} : memref<10x104x32xf32, #tpu.memory_space<vmem>>, vector<1x104x32xf32>,
    %cst_76 = arith.constant dense<0.000000e+00> : vector<104x96xf32>
    %290 = tpu.matmul %286, %1, %cst_76 {dimension_numbers = #tpu.dot_dimension_numbers<[1], [0], [0], [1], [0, 0, 1, 1], [], []>} : vector<104x32xf32>, vector<32x96xf32>, vector<104x96xf32> -> vector<104x96xf32>
    %291 = vector.broadcast %3 : vector<1x96xf32> to vector<104x96xf32>
    %292 = arith.addf %290, %291 : vector<104x96xf32>
    %293 = vector.extract_strided_slice %8 {offsets = [832, 0], sizes = [104, 96], strides = [1, 1]} : vector<1040x96xf32> to vector<104x96xf32>
    %294 = vector.extract_strided_slice %293 {offsets = [0, 0], sizes = [104, 32], strides = [1, 1]} : vector<104x96xf32> to vector<104x32xf32>
    %295 = vector.extract_strided_slice %292 {offsets = [0, 0], sizes = [104, 32], strides = [1, 1]} : vector<104x96xf32> to vector<104x32xf32>
    %296 = arith.addf %294, %295 : vector<104x32xf32>
    %cst_77 = arith.constant 0.000000e+00 : f32
    %297 = vector.broadcast %cst_77 : f32 to vector<104x32xf32>
    %298 = arith.subf %297, %296 : vector<104x32xf32>
    %299 = math.exp %298 : vector<104x32xf32>
    %cst_78 = arith.constant 1.000000e+00 : f32
    %300 = vector.broadcast %cst_78 : f32 to vector<104x32xf32>
    %301 = arith.addf %300, %299 : vector<104x32xf32>
    %302 = tpu.reciprocal %301 : vector<104x32xf32> -> vector<104x32xf32>
    %303 = vector.extract_strided_slice %293 {offsets = [0, 32], sizes = [104, 32], strides = [1, 1]} : vector<104x96xf32> to vector<104x32xf32>
    %304 = vector.extract_strided_slice %292 {offsets = [0, 32], sizes = [104, 32], strides = [1, 1]} : vector<104x96xf32> to vector<104x32xf32>
    %305 = arith.addf %303, %304 : vector<104x32xf32>
    %cst_79 = arith.constant 0.000000e+00 : f32
    %306 = vector.broadcast %cst_79 : f32 to vector<104x32xf32>
    %307 = arith.subf %306, %305 : vector<104x32xf32>
    %308 = math.exp %307 : vector<104x32xf32>
    %cst_80 = arith.constant 1.000000e+00 : f32
    %309 = vector.broadcast %cst_80 : f32 to vector<104x32xf32>
    %310 = arith.addf %309, %308 : vector<104x32xf32>
    %311 = tpu.reciprocal %310 : vector<104x32xf32> -> vector<104x32xf32>
    %312 = vector.extract_strided_slice %293 {offsets = [0, 64], sizes = [104, 32], strides = [1, 1]} : vector<104x96xf32> to vector<104x32xf32>
    %313 = vector.extract_strided_slice %292 {offsets = [0, 64], sizes = [104, 32], strides = [1, 1]} : vector<104x96xf32> to vector<104x32xf32>
    %314 = arith.mulf %302, %313 : vector<104x32xf32>
    %315 = arith.addf %312, %314 : vector<104x32xf32>
    %316 = math.tanh %315 : vector<104x32xf32>
    %cst_81 = arith.constant 1.000000e+00 : f32
    %317 = vector.broadcast %cst_81 : f32 to vector<104x32xf32>
    %318 = arith.subf %317, %311 : vector<104x32xf32>
    %319 = arith.mulf %318, %316 : vector<104x32xf32>
    %320 = arith.mulf %311, %286 : vector<104x32xf32>
    %321 = arith.addf %319, %320 : vector<104x32xf32>
    %c8 = arith.constant 8 : index
    %c0_82 = arith.constant 0 : index
    %c0_83 = arith.constant 0 : index
    %322 = vector.load %arg6[%c8, %c0_82, %c0_83] : memref<10x104x32xf32, #tpu.memory_space<vmem>>, vector<1x104x32xf32>
    %323 = vector.shape_cast %322 : vector<1x104x32xf32> to vector<104x32xf32>
    %324 = vector.shape_cast %321 : vector<104x32xf32> to vector<1x104x32xf32>
    tpu.vector_store %arg6[%c8, %c0_82, %c0_83], %324 {strides = array<i32>} : memref<10x104x32xf32, #tpu.memory_space<vmem>>, vector<1x104x32xf32>,
    %cst_84 = arith.constant dense<0.000000e+00> : vector<104x96xf32>
    %325 = tpu.matmul %321, %1, %cst_84 {dimension_numbers = #tpu.dot_dimension_numbers<[1], [0], [0], [1], [0, 0, 1, 1], [], []>} : vector<104x32xf32>, vector<32x96xf32>, vector<104x96xf32> -> vector<104x96xf32>
    %326 = vector.broadcast %3 : vector<1x96xf32> to vector<104x96xf32>
    %327 = arith.addf %325, %326 : vector<104x96xf32>
    %328 = vector.extract_strided_slice %8 {offsets = [936, 0], sizes = [104, 96], strides = [1, 1]} : vector<1040x96xf32> to vector<104x96xf32>
    %329 = vector.extract_strided_slice %328 {offsets = [0, 0], sizes = [104, 32], strides = [1, 1]} : vector<104x96xf32> to vector<104x32xf32>
    %330 = vector.extract_strided_slice %327 {offsets = [0, 0], sizes = [104, 32], strides = [1, 1]} : vector<104x96xf32> to vector<104x32xf32>
    %331 = arith.addf %329, %330 : vector<104x32xf32>
    %cst_85 = arith.constant 0.000000e+00 : f32
    %332 = vector.broadcast %cst_85 : f32 to vector<104x32xf32>
    %333 = arith.subf %332, %331 : vector<104x32xf32>
    %334 = math.exp %333 : vector<104x32xf32>
    %cst_86 = arith.constant 1.000000e+00 : f32
    %335 = vector.broadcast %cst_86 : f32 to vector<104x32xf32>
    %336 = arith.addf %335, %334 : vector<104x32xf32>
    %337 = tpu.reciprocal %336 : vector<104x32xf32> -> vector<104x32xf32>
    %338 = vector.extract_strided_slice %328 {offsets = [0, 32], sizes = [104, 32], strides = [1, 1]} : vector<104x96xf32> to vector<104x32xf32>
    %339 = vector.extract_strided_slice %327 {offsets = [0, 32], sizes = [104, 32], strides = [1, 1]} : vector<104x96xf32> to vector<104x32xf32>
    %340 = arith.addf %338, %339 : vector<104x32xf32>
    %cst_87 = arith.constant 0.000000e+00 : f32
    %341 = vector.broadcast %cst_87 : f32 to vector<104x32xf32>
    %342 = arith.subf %341, %340 : vector<104x32xf32>
    %343 = math.exp %342 : vector<104x32xf32>
    %cst_88 = arith.constant 1.000000e+00 : f32
    %344 = vector.broadcast %cst_88 : f32 to vector<104x32xf32>
    %345 = arith.addf %344, %343 : vector<104x32xf32>
    %346 = tpu.reciprocal %345 : vector<104x32xf32> -> vector<104x32xf32>
    %347 = vector.extract_strided_slice %328 {offsets = [0, 64], sizes = [104, 32], strides = [1, 1]} : vector<104x96xf32> to vector<104x32xf32>
    %348 = vector.extract_strided_slice %327 {offsets = [0, 64], sizes = [104, 32], strides = [1, 1]} : vector<104x96xf32> to vector<104x32xf32>
    %349 = arith.mulf %337, %348 : vector<104x32xf32>
    %350 = arith.addf %347, %349 : vector<104x32xf32>
    %351 = math.tanh %350 : vector<104x32xf32>
    %cst_89 = arith.constant 1.000000e+00 : f32
    %352 = vector.broadcast %cst_89 : f32 to vector<104x32xf32>
    %353 = arith.subf %352, %346 : vector<104x32xf32>
    %354 = arith.mulf %353, %351 : vector<104x32xf32>
    %355 = arith.mulf %346, %321 : vector<104x32xf32>
    %356 = arith.addf %354, %355 : vector<104x32xf32>
    %c9 = arith.constant 9 : index
    %c0_90 = arith.constant 0 : index
    %c0_91 = arith.constant 0 : index
    %357 = vector.load %arg6[%c9, %c0_90, %c0_91] : memref<10x104x32xf32, #tpu.memory_space<vmem>>, vector<1x104x32xf32>
    %358 = vector.shape_cast %357 : vector<1x104x32xf32> to vector<104x32xf32>
    %359 = vector.shape_cast %356 : vector<104x32xf32> to vector<1x104x32xf32>
    tpu.vector_store %arg6[%c9, %c0_90, %c0_91], %359 {strides = array<i32>} : memref<10x104x32xf32, #tpu.memory_space<vmem>>, vector<1x104x32xf32>,
    return
  }
  func.func @transform_0(%arg0: i32) -> (i32, i32, i32) {
    %c0_i32 = arith.constant 0 : i32
    %c0_i32_0 = arith.constant 0 : i32
    %c0_i32_1 = arith.constant 0 : i32
    return %c0_i32, %arg0, %c0_i32_0 : i32, i32, i32
  }
  func.func @transform_1(%arg0: i32) -> (i32, i32) {
    %c0_i32 = arith.constant 0 : i32
    %c0_i32_0 = arith.constant 0 : i32
    %c0_i32_1 = arith.constant 0 : i32
    return %c0_i32, %c0_i32_0 : i32, i32
  }
  func.func @transform_2(%arg0: i32) -> (i32, i32) {
    %c0_i32 = arith.constant 0 : i32
    %c0_i32_0 = arith.constant 0 : i32
    %c0_i32_1 = arith.constant 0 : i32
    return %c0_i32, %c0_i32_0 : i32, i32
  }
  func.func @transform_3(%arg0: i32) -> (i32, i32) {
    %c0_i32 = arith.constant 0 : i32
    %c0_i32_0 = arith.constant 0 : i32
    %c0_i32_1 = arith.constant 0 : i32
    return %c0_i32, %c0_i32_0 : i32, i32
  }
  func.func @transform_4(%arg0: i32) -> (i32, i32) {
    %c0_i32 = arith.constant 0 : i32
    %c0_i32_0 = arith.constant 0 : i32
    %c0_i32_1 = arith.constant 0 : i32
    return %c0_i32, %c0_i32_0 : i32, i32
  }
  func.func @transform_5(%arg0: i32) -> (i32, i32, i32) {
    %c0_i32 = arith.constant 0 : i32
    %c0_i32_0 = arith.constant 0 : i32
    %c0_i32_1 = arith.constant 0 : i32
    return %c0_i32, %arg0, %c0_i32_0 : i32, i32, i32
  }
}

</mosaic_0001>

<llo_original>
// kernel: tpu_custom_call.1
$region0: #{tpu_custom_call.1}
  #allocation0 [shape = 'u32[]', space=smem, size = 0x4, offset = 0x4, fixed_abs, tag = 'smem constant byte address 0x4 - core index']
  #allocation1 [shape = 'u32[144,128]{1,0:T(1,128)}', space=vmem, size = 0x12000, scoped, tag = 'internal scratch']
  %s0 = inlined_call_operand.vmem [shape: f32[10,208,32], index: 0, kind: input, shape index: {}]
  %s1 = inlined_call_operand.vmem [shape: f32[32,96], index: 1, kind: input, shape index: {}]
  %s2 = inlined_call_operand.vmem [shape: f32[32,96], index: 2, kind: input, shape index: {}]
  %s3 = inlined_call_operand.vmem [shape: f32[1,96], index: 3, kind: input, shape index: {}]
  %s4 = inlined_call_operand.vmem [shape: f32[1,96], index: 4, kind: input, shape index: {}]
  %s5 = inlined_call_operand.vmem [shape: f32[10,208,32], index: 5, kind: output, shape index: {}]
  %s6 = sld [smem:[#allocation0]]
  $region125: #{tpu_custom_call.1} parent=0
    _
  %s8 = ssub.s32 1, %s6
  %s9 = scalar_select 0, %s8, %s6
  $region1: #{tpu_custom_call.1} parent=0
    #allocation2 [shape = 'u8[1064960]{0}', space=vmem, size = 0x104000, scoped, tag = 'input window, operand 0']
    #allocation3 [shape = 'u8[1064960]{0}', space=vmem, size = 0x104000, scoped, tag = 'output window, operand 0']
    loop: start=0, step=1, limit=4
    $region2: #{tpu_custom_call.1} parent=1 // loop_pre_header
      _
    $region3: #{tpu_custom_call.1} parent=1 // loop_header
      %s11 = sphi 0, %s15
      %p12 = scmp.ge.s32.totalorder %s11, 4
      %s21 = sphi 0, %s23
      %s24 = sphi 0, %s21
      %s25 = sphi 0, %s24
      %s41 = sphi 0, %s25
      %s45 = sphi 0, %s45
      %s47 = sphi 0, %s45
      %s48 = sphi 0, %s47
      %s62 = sphi 0, %s48
      %s66 = sphi 0, %s66
      %s68 = sphi 0, %s66
      %s69 = sphi 0, %s68
      %s83 = sphi 0, %s69
      %s87 = sphi 0, %s87
      %s89 = sphi 0, %s87
      %s90 = sphi 0, %s89
      %s104 = sphi 0, %s90
      %s108 = sphi 0, %s108
      %s110 = sphi 0, %s108
      %s111 = sphi 0, %s110
      %s125 = sphi 0, %s111
      %s131 = sphi 0, %s133
      %s134 = sphi 0, %s131
      %s135 = sphi 0, %s134
      %s151 = sphi 0, %s135
    $region4: #{tpu_custom_call.1} parent=1 // loop_header_branch
      %14 = sbr.rel (%p12) target = $region8
    $region5: #{tpu_custom_call.1} parent=1 // loop_body
      %s16 = ssub.s32 %s11, 1
      %s17 = ssub.s32 %s11, 2
      %s18 = sadd.s32 %s11, 1
      %s19 = ssub.s32 %s11, %s18
      %p20 = scmp.eq.s32.totalorder %s19, 0
      %s22 = sadd.s32 %s21, 1
      %s23 = scalar_select %p20, %s21, %s22
      %p26 = pneg %p20
      %p27 = scmp.eq.s32.totalorder %s11, 1
      %p28 = por %p26, %p27
      %p29 = scmp.ne.s32.totalorder %s21, %s24
      %p30 = scmp.eq.s32.totalorder %s11, 0
      %p31 = por %p29, %p30
      %p32 = scmp.ne.s32.totalorder %s21, %s24
      %p33 = scmp.eq.s32.totalorder %s16, 1
      %p34 = por %p32, %p33
      %p35 = scmp.ne.s32.totalorder %s24, %s25
      %p36 = scmp.eq.s32.totalorder %s16, 0
      %p37 = por %p35, %p36
      %p38 = scmp.ne.s32.totalorder %s24, %s25
      %p39 = scmp.eq.s32.totalorder %s17, 1
      %p40 = por %p38, %p39
      %p42 = scmp.ne.s32.totalorder %s25, %s41
      %p43 = scmp.eq.s32.totalorder %s17, 0
      %p44 = por %p42, %p43
      %s46 = sadd.s32 %s45, 1
      %p49 = scmp.eq.s32.totalorder %s11, 1
      %p50 = scmp.ne.s32.totalorder %s45, %s47
      %p51 = scmp.eq.s32.totalorder %s11, 0
      %p52 = por %p50, %p51
      %p53 = scmp.ne.s32.totalorder %s45, %s47
      %p54 = scmp.eq.s32.totalorder %s16, 1
      %p55 = por %p53, %p54
      %p56 = scmp.ne.s32.totalorder %s47, %s48
      %p57 = scmp.eq.s32.totalorder %s16, 0
      %p58 = por %p56, %p57
      %p59 = scmp.ne.s32.totalorder %s47, %s48
      %p60 = scmp.eq.s32.totalorder %s17, 1
      %p61 = por %p59, %p60
      %p63 = scmp.ne.s32.totalorder %s48, %s62
      %p64 = scmp.eq.s32.totalorder %s17, 0
      %p65 = por %p63, %p64
      %s67 = sadd.s32 %s66, 1
      %p70 = scmp.eq.s32.totalorder %s11, 1
      %p71 = scmp.ne.s32.totalorder %s66, %s68
      %p72 = scmp.eq.s32.totalorder %s11, 0
      %p73 = por %p71, %p72
      %p74 = scmp.ne.s32.totalorder %s66, %s68
      %p75 = scmp.eq.s32.totalorder %s16, 1
      %p76 = por %p74, %p75
      %p77 = scmp.ne.s32.totalorder %s68, %s69
      %p78 = scmp.eq.s32.totalorder %s16, 0
      %p79 = por %p77, %p78
      %p80 = scmp.ne.s32.totalorder %s68, %s69
      %p81 = scmp.eq.s32.totalorder %s17, 1
      %p82 = por %p80, %p81
      %p84 = scmp.ne.s32.totalorder %s69, %s83
      %p85 = scmp.eq.s32.totalorder %s17, 0
      %p86 = por %p84, %p85
      %s88 = sadd.s32 %s87, 1
      %p91 = scmp.eq.s32.totalorder %s11, 1
      %p92 = scmp.ne.s32.totalorder %s87, %s89
      %p93 = scmp.eq.s32.totalorder %s11, 0
      %p94 = por %p92, %p93
      %p95 = scmp.ne.s32.totalorder %s87, %s89
      %p96 = scmp.eq.s32.totalorder %s16, 1
      %p97 = por %p95, %p96
      %p98 = scmp.ne.s32.totalorder %s89, %s90
      %p99 = scmp.eq.s32.totalorder %s16, 0
      %p100 = por %p98, %p99
      %p101 = scmp.ne.s32.totalorder %s89, %s90
      %p102 = scmp.eq.s32.totalorder %s17, 1
      %p103 = por %p101, %p102
      %p105 = scmp.ne.s32.totalorder %s90, %s104
      %p106 = scmp.eq.s32.totalorder %s17, 0
      %p107 = por %p105, %p106
      %s109 = sadd.s32 %s108, 1
      %p112 = scmp.eq.s32.totalorder %s11, 1
      %p113 = scmp.ne.s32.totalorder %s108, %s110
      %p114 = scmp.eq.s32.totalorder %s11, 0
      %p115 = por %p113, %p114
      %p116 = scmp.ne.s32.totalorder %s108, %s110
      %p117 = scmp.eq.s32.totalorder %s16, 1
      %p118 = por %p116, %p117
      %p119 = scmp.ne.s32.totalorder %s110, %s111
      %p120 = scmp.eq.s32.totalorder %s16, 0
      %p121 = por %p119, %p120
      %p122 = scmp.ne.s32.totalorder %s110, %s111
      %p123 = scmp.eq.s32.totalorder %s17, 1
      %p124 = por %p122, %p123
      %p126 = scmp.ne.s32.totalorder %s111, %s125
      %p127 = scmp.eq.s32.totalorder %s17, 0
      %p128 = por %p126, %p127
      %s129 = ssub.s32 %s11, %s18
      %p130 = scmp.eq.s32.totalorder %s129, 0
      %s132 = sadd.s32 %s131, 1
      %s133 = scalar_select %p130, %s131, %s132
      %p136 = pneg %p130
      %p137 = scmp.eq.s32.totalorder %s11, 1
      %p138 = por %p136, %p137
      %p139 = scmp.ne.s32.totalorder %s131, %s134
      %p140 = scmp.eq.s32.totalorder %s11, 0
      %p141 = por %p139, %p140
      %p142 = scmp.ne.s32.totalorder %s131, %s134
      %p143 = scmp.eq.s32.totalorder %s16, 1
      %p144 = por %p142, %p143
      %p145 = scmp.ne.s32.totalorder %s134, %s135
      %p146 = scmp.eq.s32.totalorder %s16, 0
      %p147 = por %p145, %p146
      %p148 = scmp.ne.s32.totalorder %s134, %s135
      %p149 = scmp.eq.s32.totalorder %s17, 1
      %p150 = por %p148, %p149
      %p152 = scmp.ne.s32.totalorder %s135, %s151
      %p153 = scmp.eq.s32.totalorder %s17, 0
      %p154 = por %p152, %p153
      %p155 = scmp.le.s32.totalorder 1, %s11
      %p156 = scmp.lt.s32.totalorder %s11, 3
      %p157 = pnand %p155, %p156
      %p158 = pneg %p157
      // Predicated region
      $region9: #{tpu_custom_call.1} parent=5 // pred_check
        _
      $region10: #{tpu_custom_call.1} parent=5 // pred_check_branch
        %160 = sbr.rel (%p157) target = $region12
      $region11: #{tpu_custom_call.1} parent=5 // pred_region
        %s161 = ssub.s32 %s11, 1
        // Predicated region
        $region13: #{tpu_custom_call.1} parent=11 // pred_check
          %p162 = pneg %p58
        $region14: #{tpu_custom_call.1} parent=11 // pred_check_branch
          %164 = sbr.rel (%p162) target = $region16
        $region15: #{tpu_custom_call.1} parent=11 // pred_region
          _
        $region16: #{tpu_custom_call.1} parent=11 // pred_fallthru
          _
        // Predicated region
        $region17: #{tpu_custom_call.1} parent=11 // pred_check
          %p165 = pneg %p79
        $region18: #{tpu_custom_call.1} parent=11 // pred_check_branch
          %167 = sbr.rel (%p165) target = $region20
        $region19: #{tpu_custom_call.1} parent=11 // pred_region
          _
        $region20: #{tpu_custom_call.1} parent=11 // pred_fallthru
          _
        // Predicated region
        $region21: #{tpu_custom_call.1} parent=11 // pred_check
          %p168 = pneg %p100
        $region22: #{tpu_custom_call.1} parent=11 // pred_check_branch
          %170 = sbr.rel (%p168) target = $region24
        $region23: #{tpu_custom_call.1} parent=11 // pred_region
          _
        $region24: #{tpu_custom_call.1} parent=11 // pred_fallthru
          _
        // Predicated region
        $region25: #{tpu_custom_call.1} parent=11 // pred_check
          %p171 = pneg %p121
        $region26: #{tpu_custom_call.1} parent=11 // pred_check_branch
          %173 = sbr.rel (%p171) target = $region28
        $region27: #{tpu_custom_call.1} parent=11 // pred_region
          _
        $region28: #{tpu_custom_call.1} parent=11 // pred_fallthru
          _
      $region12: #{tpu_custom_call.1} parent=5 // pred_fallthru
        _
      %p174 = scmp.lt.s32.totalorder %s11, 2
      // Predicated region
      $region29: #{tpu_custom_call.1} parent=5 // pred_check
        %p175 = pneg %p174
      $region30: #{tpu_custom_call.1} parent=5 // pred_check_branch
        %177 = sbr.rel (%p175) target = $region32
      $region31: #{tpu_custom_call.1} parent=5 // pred_region
        // Predicated region
        $region33: #{tpu_custom_call.1} parent=31 // pred_check
          %p178 = pneg %p31
        $region34: #{tpu_custom_call.1} parent=31 // pred_check_branch
          %180 = sbr.rel (%p178) target = $region36
        $region35: #{tpu_custom_call.1} parent=31 // pred_region
          %s181 = sand.u32 %s21, 1
          %s182 = sand.u32 %s21, 1
          %s183 = smul.addr %s182, 1040
          %s184 = scalar_lea.vmem [#allocation2], %s183
          %s185 = smul.u32 13, %s11
          %s186 = smul.addr %s185, 8
          %s187 = scalar_lea.vmem %s0, %s186
          // Predicated region
          $region37: #{tpu_custom_call.1} parent=35 // pred_check
            _
          $region38: #{tpu_custom_call.1} parent=35 // pred_check_branch
            %189 = sbr.rel (0) target = $region40
          $region39: #{tpu_custom_call.1} parent=35 // pred_region
            // Predicated region
            $region41: #{tpu_custom_call.1} parent=39 // pred_check
              _
            $region42: #{tpu_custom_call.1} parent=39 // pred_check_branch
              %191 = sbr.rel (0) target = $region44
            $region43: #{tpu_custom_call.1} parent=39 // pred_region
              // Predicated region
              $region56: #{tpu_custom_call.1} parent=43 // pred_check
                _
              $region57: #{tpu_custom_call.1} parent=43 // pred_check_branch
                %465 = sbr.rel (0) target = $region59
              $region58: #{tpu_custom_call.1} parent=43 // pred_region
                loop: start=0, step=1, limit=1
                $region60: #{tpu_custom_call.1} parent=58 // loop_pre_header
                  _
                $region61: #{tpu_custom_call.1} parent=58 // loop_header
                  %s467 = sphi 0, %s471
                  %p468 = scmp.ge.s32.totalorder %s467, 1
                  %s472 = sphi %s187, %s187
                  %s473 = sphi %s184, %s184
                $region62: #{tpu_custom_call.1} parent=58 // loop_header_branch
                  %470 = sbr.rel (%p468) target = $region66
                $region63: #{tpu_custom_call.1} parent=58 // loop_body
                  %v474 = vld [vmem:[%s472] sm:$0xff]
                  %475 = vst [vmem:[%s473] sm:$0xff] %v474
                  %v476 = vld [vmem:[%s472 + $0x8] sm:$0xff]
                  %477 = vst [vmem:[%s473 + $0x8] sm:$0xff] %v476
                  %v478 = vld [vmem:[%s472 + $0x10] sm:$0xff]
                  %479 = vst [vmem:[%s473 + $0x10] sm:$0xff] %v478
                  %v480 = vld [vmem:[%s472 + $0x18] sm:$0xff]
                  %481 = vst [vmem:[%s473 + $0x18] sm:$0xff] %v480
                  %v482 = vld [vmem:[%s472 + $0x20] sm:$0xff]
                  %483 = vst [vmem:[%s473 + $0x20] sm:$0xff] %v482
                  %v484 = vld [vmem:[%s472 + $0x28] sm:$0xff]
                  %485 = vst [vmem:[%s473 + $0x28] sm:$0xff] %v484
                  %v486 = vld [vmem:[%s472 + $0x30] sm:$0xff]
                  %487 = vst [vmem:[%s473 + $0x30] sm:$0xff] %v486
                  %v488 = vld [vmem:[%s472 + $0x38] sm:$0xff]
                  %489 = vst [vmem:[%s473 + $0x38] sm:$0xff] %v488
                  %v490 = vld [vmem:[%s472 + $0x40] sm:$0xff]
                  %491 = vst [vmem:[%s473 + $0x40] sm:$0xff] %v490
                  %v492 = vld [vmem:[%s472 + $0x48] sm:$0xff]
                  %493 = vst [vmem:[%s473 + $0x48] sm:$0xff] %v492
                  %v494 = vld [vmem:[%s472 + $0x50] sm:$0xff]
                  %495 = vst [vmem:[%s473 + $0x50] sm:$0xff] %v494
                  %v496 = vld [vmem:[%s472 + $0x58] sm:$0xff]
                  %497 = vst [vmem:[%s473 + $0x58] sm:$0xff] %v496
                  %v498 = vld [vmem:[%s472 + $0x60] sm:$0xff]
                  %499 = vst [vmem:[%s473 + $0x60] sm:$0xff] %v498
                  %v500 = vld [vmem:[%s472 + $0xd0] sm:$0xff]
                  %501 = vst [vmem:[%s473 + $0x68] sm:$0xff] %v500
                  %v502 = vld [vmem:[%s472 + $0xd8] sm:$0xff]
                  %503 = vst [vmem:[%s473 + $0x70] sm:$0xff] %v502
                  %v504 = vld [vmem:[%s472 + $0xe0] sm:$0xff]
                  %505 = vst [vmem:[%s473 + $0x78] sm:$0xff] %v504
                  %v506 = vld [vmem:[%s472 + $0xe8] sm:$0xff]
                  %507 = vst [vmem:[%s473 + $0x80] sm:$0xff] %v506
                  %v508 = vld [vmem:[%s472 + $0xf0] sm:$0xff]
                  %509 = vst [vmem:[%s473 + $0x88] sm:$0xff] %v508
                  %v510 = vld [vmem:[%s472 + $0xf8] sm:$0xff]
                  %511 = vst [vmem:[%s473 + $0x90] sm:$0xff] %v510
                  %v512 = vld [vmem:[%s472 + $0x100] sm:$0xff]
                  %513 = vst [vmem:[%s473 + $0x98] sm:$0xff] %v512
                  %v514 = vld [vmem:[%s472 + $0x108] sm:$0xff]
                  %515 = vst [vmem:[%s473 + $0xa0] sm:$0xff] %v514
                  %v516 = vld [vmem:[%s472 + $0x110] sm:$0xff]
                  %517 = vst [vmem:[%s473 + $0xa8] sm:$0xff] %v516
                  %v518 = vld [vmem:[%s472 + $0x118] sm:$0xff]
                  %519 = vst [vmem:[%s473 + $0xb0] sm:$0xff] %v518
                  %v520 = vld [vmem:[%s472 + $0x120] sm:$0xff]
                  %521 = vst [vmem:[%s473 + $0xb8] sm:$0xff] %v520
                  %v522 = vld [vmem:[%s472 + $0x128] sm:$0xff]
                  %523 = vst [vmem:[%s473 + $0xc0] sm:$0xff] %v522
                  %v524 = vld [vmem:[%s472 + $0x130] sm:$0xff]
                  %525 = vst [vmem:[%s473 + $0xc8] sm:$0xff] %v524
                  %v526 = vld [vmem:[%s472 + $0x1a0] sm:$0xff]
                  %527 = vst [vmem:[%s473 + $0xd0] sm:$0xff] %v526
                  %v528 = vld [vmem:[%s472 + $0x1a8] sm:$0xff]
                  %529 = vst [vmem:[%s473 + $0xd8] sm:$0xff] %v528
                  %v530 = vld [vmem:[%s472 + $0x1b0] sm:$0xff]
                  %531 = vst [vmem:[%s473 + $0xe0] sm:$0xff] %v530
                  %v532 = vld [vmem:[%s472 + $0x1b8] sm:$0xff]
                  %533 = vst [vmem:[%s473 + $0xe8] sm:$0xff] %v532
                  %v534 = vld [vmem:[%s472 + $0x1c0] sm:$0xff]
                  %535 = vst [vmem:[%s473 + $0xf0] sm:$0xff] %v534
                  %v536 = vld [vmem:[%s472 + $0x1c8] sm:$0xff]
                  %537 = vst [vmem:[%s473 + $0xf8] sm:$0xff] %v536
                  %v538 = vld [vmem:[%s472 + $0x1d0] sm:$0xff]
                  %539 = vst [vmem:[%s473 + $0x100] sm:$0xff] %v538
                  %v540 = vld [vmem:[%s472 + $0x1d8] sm:$0xff]
                  %541 = vst [vmem:[%s473 + $0x108] sm:$0xff] %v540
                  %v542 = vld [vmem:[%s472 + $0x1e0] sm:$0xff]
                  %543 = vst [vmem:[%s473 + $0x110] sm:$0xff] %v542
                  %v544 = vld [vmem:[%s472 + $0x1e8] sm:$0xff]
                  %545 = vst [vmem:[%s473 + $0x118] sm:$0xff] %v544
                  %v546 = vld [vmem:[%s472 + $0x1f0] sm:$0xff]
                  %547 = vst [vmem:[%s473 + $0x120] sm:$0xff] %v546
                  %v548 = vld [vmem:[%s472 + $0x1f8] sm:$0xff]
                  %549 = vst [vmem:[%s473 + $0x128] sm:$0xff] %v548
                  %v550 = vld [vmem:[%s472 + $0x200] sm:$0xff]
                  %551 = vst [vmem:[%s473 + $0x130] sm:$0xff] %v550
                  %v552 = vld [vmem:[%s472 + $0x270] sm:$0xff]
                  %553 = vst [vmem:[%s473 + $0x138] sm:$0xff] %v552
                  %v554 = vld [vmem:[%s472 + $0x278] sm:$0xff]
                  %555 = vst [vmem:[%s473 + $0x140] sm:$0xff] %v554
                  %v556 = vld [vmem:[%s472 + $0x280] sm:$0xff]
                  %557 = vst [vmem:[%s473 + $0x148] sm:$0xff] %v556
                  %v558 = vld [vmem:[%s472 + $0x288] sm:$0xff]
                  %559 = vst [vmem:[%s473 + $0x150] sm:$0xff] %v558
                  %v560 = vld [vmem:[%s472 + $0x290] sm:$0xff]
                  %561 = vst [vmem:[%s473 + $0x158] sm:$0xff] %v560
                  %v562 = vld [vmem:[%s472 + $0x298] sm:$0xff]
                  %563 = vst [vmem:[%s473 + $0x160] sm:$0xff] %v562
                  %v564 = vld [vmem:[%s472 + $0x2a0] sm:$0xff]
                  %565 = vst [vmem:[%s473 + $0x168] sm:$0xff] %v564
                  %v566 = vld [vmem:[%s472 + $0x2a8] sm:$0xff]
                  %567 = vst [vmem:[%s473 + $0x170] sm:$0xff] %v566
                  %v568 = vld [vmem:[%s472 + $0x2b0] sm:$0xff]
                  %569 = vst [vmem:[%s473 + $0x178] sm:$0xff] %v568
                  %v570 = vld [vmem:[%s472 + $0x2b8] sm:$0xff]
                  %571 = vst [vmem:[%s473 + $0x180] sm:$0xff] %v570
                  %v572 = vld [vmem:[%s472 + $0x2c0] sm:$0xff]
                  %573 = vst [vmem:[%s473 + $0x188] sm:$0xff] %v572
                  %v574 = vld [vmem:[%s472 + $0x2c8] sm:$0xff]
                  %575 = vst [vmem:[%s473 + $0x190] sm:$0xff] %v574
                  %v576 = vld [vmem:[%s472 + $0x2d0] sm:$0xff]
                  %577 = vst [vmem:[%s473 + $0x198] sm:$0xff] %v576
                  %v578 = vld [vmem:[%s472 + $0x340] sm:$0xff]
                  %579 = vst [vmem:[%s473 + $0x1a0] sm:$0xff] %v578
                  %v580 = vld [vmem:[%s472 + $0x348] sm:$0xff]
                  %581 = vst [vmem:[%s473 + $0x1a8] sm:$0xff] %v580
                  %v582 = vld [vmem:[%s472 + $0x350] sm:$0xff]
                  %583 = vst [vmem:[%s473 + $0x1b0] sm:$0xff] %v582
                  %v584 = vld [vmem:[%s472 + $0x358] sm:$0xff]
                  %585 = vst [vmem:[%s473 + $0x1b8] sm:$0xff] %v584
                  %v586 = vld [vmem:[%s472 + $0x360] sm:$0xff]
                  %587 = vst [vmem:[%s473 + $0x1c0] sm:$0xff] %v586
                  %v588 = vld [vmem:[%s472 + $0x368] sm:$0xff]
                  %589 = vst [vmem:[%s473 + $0x1c8] sm:$0xff] %v588
                  %v590 = vld [vmem:[%s472 + $0x370] sm:$0xff]
                  %591 = vst [vmem:[%s473 + $0x1d0] sm:$0xff] %v590
                  %v592 = vld [vmem:[%s472 + $0x378] sm:$0xff]
                  %593 = vst [vmem:[%s473 + $0x1d8] sm:$0xff] %v592
                  %v594 = vld [vmem:[%s472 + $0x380] sm:$0xff]
                  %595 = vst [vmem:[%s473 + $0x1e0] sm:$0xff] %v594
                  %v596 = vld [vmem:[%s472 + $0x388] sm:$0xff]
                  %597 = vst [vmem:[%s473 + $0x1e8] sm:$0xff] %v596
                  %v598 = vld [vmem:[%s472 + $0x390] sm:$0xff]
                  %599 = vst [vmem:[%s473 + $0x1f0] sm:$0xff] %v598
                  %v600 = vld [vmem:[%s472 + $0x398] sm:$0xff]
                  %601 = vst [vmem:[%s473 + $0x1f8] sm:$0xff] %v600
                  %v602 = vld [vmem:[%s472 + $0x3a0] sm:$0xff]
                  %603 = vst [vmem:[%s473 + $0x200] sm:$0xff] %v602
                  %v604 = vld [vmem:[%s472 + $0x410] sm:$0xff]
                  %605 = vst [vmem:[%s473 + $0x208] sm:$0xff] %v604
                  %v606 = vld [vmem:[%s472 + $0x418] sm:$0xff]
                  %607 = vst [vmem:[%s473 + $0x210] sm:$0xff] %v606
                  %v608 = vld [vmem:[%s472 + $0x420] sm:$0xff]
                  %609 = vst [vmem:[%s473 + $0x218] sm:$0xff] %v608
                  %v610 = vld [vmem:[%s472 + $0x428] sm:$0xff]
                  %611 = vst [vmem:[%s473 + $0x220] sm:$0xff] %v610
                  %v612 = vld [vmem:[%s472 + $0x430] sm:$0xff]
                  %613 = vst [vmem:[%s473 + $0x228] sm:$0xff] %v612
                  %v614 = vld [vmem:[%s472 + $0x438] sm:$0xff]
                  %615 = vst [vmem:[%s473 + $0x230] sm:$0xff] %v614
                  %v616 = vld [vmem:[%s472 + $0x440] sm:$0xff]
                  %617 = vst [vmem:[%s473 + $0x238] sm:$0xff] %v616
                  %v618 = vld [vmem:[%s472 + $0x448] sm:$0xff]
                  %619 = vst [vmem:[%s473 + $0x240] sm:$0xff] %v618
                  %v620 = vld [vmem:[%s472 + $0x450] sm:$0xff]
                  %621 = vst [vmem:[%s473 + $0x248] sm:$0xff] %v620
                  %v622 = vld [vmem:[%s472 + $0x458] sm:$0xff]
                  %623 = vst [vmem:[%s473 + $0x250] sm:$0xff] %v622
                  %v624 = vld [vmem:[%s472 + $0x460] sm:$0xff]
                  %625 = vst [vmem:[%s473 + $0x258] sm:$0xff] %v624
                  %v626 = vld [vmem:[%s472 + $0x468] sm:$0xff]
                  %627 = vst [vmem:[%s473 + $0x260] sm:$0xff] %v626
                  %v628 = vld [vmem:[%s472 + $0x470] sm:$0xff]
                  %629 = vst [vmem:[%s473 + $0x268] sm:$0xff] %v628
                  %v630 = vld [vmem:[%s472 + $0x4e0] sm:$0xff]
                  %631 = vst [vmem:[%s473 + $0x270] sm:$0xff] %v630
                  %v632 = vld [vmem:[%s472 + $0x4e8] sm:$0xff]
                  %633 = vst [vmem:[%s473 + $0x278] sm:$0xff] %v632
                  %v634 = vld [vmem:[%s472 + $0x4f0] sm:$0xff]
                  %635 = vst [vmem:[%s473 + $0x280] sm:$0xff] %v634
                  %v636 = vld [vmem:[%s472 + $0x4f8] sm:$0xff]
                  %637 = vst [vmem:[%s473 + $0x288] sm:$0xff] %v636
                  %v638 = vld [vmem:[%s472 + $0x500] sm:$0xff]
                  %639 = vst [vmem:[%s473 + $0x290] sm:$0xff] %v638
                  %v640 = vld [vmem:[%s472 + $0x508] sm:$0xff]
                  %641 = vst [vmem:[%s473 + $0x298] sm:$0xff] %v640
                  %v642 = vld [vmem:[%s472 + $0x510] sm:$0xff]
                  %643 = vst [vmem:[%s473 + $0x2a0] sm:$0xff] %v642
                  %v644 = vld [vmem:[%s472 + $0x518] sm:$0xff]
                  %645 = vst [vmem:[%s473 + $0x2a8] sm:$0xff] %v644
                  %v646 = vld [vmem:[%s472 + $0x520] sm:$0xff]
                  %647 = vst [vmem:[%s473 + $0x2b0] sm:$0xff] %v646
                  %v648 = vld [vmem:[%s472 + $0x528] sm:$0xff]
                  %649 = vst [vmem:[%s473 + $0x2b8] sm:$0xff] %v648
                  %v650 = vld [vmem:[%s472 + $0x530] sm:$0xff]
                  %651 = vst [vmem:[%s473 + $0x2c0] sm:$0xff] %v650
                  %v652 = vld [vmem:[%s472 + $0x538] sm:$0xff]
                  %653 = vst [vmem:[%s473 + $0x2c8] sm:$0xff] %v652
                  %v654 = vld [vmem:[%s472 + $0x540] sm:$0xff]
                  %655 = vst [vmem:[%s473 + $0x2d0] sm:$0xff] %v654
                  %v656 = vld [vmem:[%s472 + $0x5b0] sm:$0xff]
                  %657 = vst [vmem:[%s473 + $0x2d8] sm:$0xff] %v656
                  %v658 = vld [vmem:[%s472 + $0x5b8] sm:$0xff]
                  %659 = vst [vmem:[%s473 + $0x2e0] sm:$0xff] %v658
                  %v660 = vld [vmem:[%s472 + $0x5c0] sm:$0xff]
                  %661 = vst [vmem:[%s473 + $0x2e8] sm:$0xff] %v660
                  %v662 = vld [vmem:[%s472 + $0x5c8] sm:$0xff]
                  %663 = vst [vmem:[%s473 + $0x2f0] sm:$0xff] %v662
                  %v664 = vld [vmem:[%s472 + $0x5d0] sm:$0xff]
                  %665 = vst [vmem:[%s473 + $0x2f8] sm:$0xff] %v664
                  %v666 = vld [vmem:[%s472 + $0x5d8] sm:$0xff]
                  %667 = vst [vmem:[%s473 + $0x300] sm:$0xff] %v666
                  %v668 = vld [vmem:[%s472 + $0x5e0] sm:$0xff]
                  %669 = vst [vmem:[%s473 + $0x308] sm:$0xff] %v668
                  %v670 = vld [vmem:[%s472 + $0x5e8] sm:$0xff]
                  %671 = vst [vmem:[%s473 + $0x310] sm:$0xff] %v670
                  %v672 = vld [vmem:[%s472 + $0x5f0] sm:$0xff]
                  %673 = vst [vmem:[%s473 + $0x318] sm:$0xff] %v672
                  %v674 = vld [vmem:[%s472 + $0x5f8] sm:$0xff]
                  %675 = vst [vmem:[%s473 + $0x320] sm:$0xff] %v674
                  %v676 = vld [vmem:[%s472 + $0x600] sm:$0xff]
                  %677 = vst [vmem:[%s473 + $0x328] sm:$0xff] %v676
                  %v678 = vld [vmem:[%s472 + $0x608] sm:$0xff]
                  %679 = vst [vmem:[%s473 + $0x330] sm:$0xff] %v678
                  %v680 = vld [vmem:[%s472 + $0x610] sm:$0xff]
                  %681 = vst [vmem:[%s473 + $0x338] sm:$0xff] %v680
                  %v682 = vld [vmem:[%s472 + $0x680] sm:$0xff]
                  %683 = vst [vmem:[%s473 + $0x340] sm:$0xff] %v682
                  %v684 = vld [vmem:[%s472 + $0x688] sm:$0xff]
                  %685 = vst [vmem:[%s473 + $0x348] sm:$0xff] %v684
                  %v686 = vld [vmem:[%s472 + $0x690] sm:$0xff]
                  %687 = vst [vmem:[%s473 + $0x350] sm:$0xff] %v686
                  %v688 = vld [vmem:[%s472 + $0x698] sm:$0xff]
                  %689 = vst [vmem:[%s473 + $0x358] sm:$0xff] %v688
                  %v690 = vld [vmem:[%s472 + $0x6a0] sm:$0xff]
                  %691 = vst [vmem:[%s473 + $0x360] sm:$0xff] %v690
                  %v692 = vld [vmem:[%s472 + $0x6a8] sm:$0xff]
                  %693 = vst [vmem:[%s473 + $0x368] sm:$0xff] %v692
                  %v694 = vld [vmem:[%s472 + $0x6b0] sm:$0xff]
                  %695 = vst [vmem:[%s473 + $0x370] sm:$0xff] %v694
                  %v696 = vld [vmem:[%s472 + $0x6b8] sm:$0xff]
                  %697 = vst [vmem:[%s473 + $0x378] sm:$0xff] %v696
                  %v698 = vld [vmem:[%s472 + $0x6c0] sm:$0xff]
                  %699 = vst [vmem:[%s473 + $0x380] sm:$0xff] %v698
                  %v700 = vld [vmem:[%s472 + $0x6c8] sm:$0xff]
                  %701 = vst [vmem:[%s473 + $0x388] sm:$0xff] %v700
                  %v702 = vld [vmem:[%s472 + $0x6d0] sm:$0xff]
                  %703 = vst [vmem:[%s473 + $0x390] sm:$0xff] %v702
                  %v704 = vld [vmem:[%s472 + $0x6d8] sm:$0xff]
                  %705 = vst [vmem:[%s473 + $0x398] sm:$0xff] %v704
                  %v706 = vld [vmem:[%s472 + $0x6e0] sm:$0xff]
                  %707 = vst [vmem:[%s473 + $0x3a0] sm:$0xff] %v706
                  %v708 = vld [vmem:[%s472 + $0x750] sm:$0xff]
                  %709 = vst [vmem:[%s473 + $0x3a8] sm:$0xff] %v708
                  %v710 = vld [vmem:[%s472 + $0x758] sm:$0xff]
                  %711 = vst [vmem:[%s473 + $0x3b0] sm:$0xff] %v710
                  %v712 = vld [vmem:[%s472 + $0x760] sm:$0xff]
                  %713 = vst [vmem:[%s473 + $0x3b8] sm:$0xff] %v712
                  %v714 = vld [vmem:[%s472 + $0x768] sm:$0xff]
                  %715 = vst [vmem:[%s473 + $0x3c0] sm:$0xff] %v714
                  %v716 = vld [vmem:[%s472 + $0x770] sm:$0xff]
                  %717 = vst [vmem:[%s473 + $0x3c8] sm:$0xff] %v716
                  %v718 = vld [vmem:[%s472 + $0x778] sm:$0xff]
                  %719 = vst [vmem:[%s473 + $0x3d0] sm:$0xff] %v718
                  %v720 = vld [vmem:[%s472 + $0x780] sm:$0xff]
                  %721 = vst [vmem:[%s473 + $0x3d8] sm:$0xff] %v720
                  %v722 = vld [vmem:[%s472 + $0x788] sm:$0xff]
                  %723 = vst [vmem:[%s473 + $0x3e0] sm:$0xff] %v722
                  %v724 = vld [vmem:[%s472 + $0x790] sm:$0xff]
                  %725 = vst [vmem:[%s473 + $0x3e8] sm:$0xff] %v724
                  %v726 = vld [vmem:[%s472 + $0x798] sm:$0xff]
                  %727 = vst [vmem:[%s473 + $0x3f0] sm:$0xff] %v726
                  %v728 = vld [vmem:[%s472 + $0x7a0] sm:$0xff]
                  %729 = vst [vmem:[%s473 + $0x3f8] sm:$0xff] %v728
                  %v730 = vld [vmem:[%s472 + $0x7a8] sm:$0xff]
                  %731 = vst [vmem:[%s473 + $0x400] sm:$0xff] %v730
                  %v732 = vld [vmem:[%s472 + $0x7b0] sm:$0xff]
                  %733 = vst [vmem:[%s473 + $0x408] sm:$0xff] %v732
                $region64: #{tpu_custom_call.1} parent=58 // loop_footer
                  %s471 = sadd.s32 1, %s467
                $region65: #{tpu_custom_call.1} parent=58 // loop_footer_branch
                  %466 = sbr.rel target = $region61
                $region66: #{tpu_custom_call.1} parent=58 // loop_exit
                  _
              $region59: #{tpu_custom_call.1} parent=43 // pred_fallthru
                _
              // Predicated region
              $region67: #{tpu_custom_call.1} parent=43 // pred_check
                _
              $region68: #{tpu_custom_call.1} parent=43 // pred_check_branch
                %735 = sbr.rel target = $region70
              $region69: #{tpu_custom_call.1} parent=43 // pred_region
                _
              $region70: #{tpu_custom_call.1} parent=43 // pred_fallthru
                _
            $region44: #{tpu_custom_call.1} parent=39 // pred_fallthru
              _
            // Predicated region
            $region45: #{tpu_custom_call.1} parent=39 // pred_check
              _
            $region46: #{tpu_custom_call.1} parent=39 // pred_check_branch
              %193 = sbr.rel target = $region48
            $region47: #{tpu_custom_call.1} parent=39 // pred_region
              %s195 = ssub.s32 256, 1
              loop: start=0, step=1, limit=1
              $region49: #{tpu_custom_call.1} parent=47 // loop_pre_header
                _
              $region50: #{tpu_custom_call.1} parent=47 // loop_header
                %s197 = sphi 0, %s201
                %p198 = scmp.ge.s32.totalorder %s197, 1
                %s202 = sphi %s187, %s187
                %s203 = sphi %s184, %s184
              $region51: #{tpu_custom_call.1} parent=47 // loop_header_branch
                %200 = sbr.rel (%p198) target = $region55
              $region52: #{tpu_custom_call.1} parent=47 // loop_body
                %v204 = vld [vmem:[%s202] sm:%s195]
                %205 = vst [vmem:[%s203] sm:%s195] %v204
                %v206 = vld [vmem:[%s202 + $0x8] sm:%s195]
                %207 = vst [vmem:[%s203 + $0x8] sm:%s195] %v206
                %v208 = vld [vmem:[%s202 + $0x10] sm:%s195]
                %209 = vst [vmem:[%s203 + $0x10] sm:%s195] %v208
                %v210 = vld [vmem:[%s202 + $0x18] sm:%s195]
                %211 = vst [vmem:[%s203 + $0x18] sm:%s195] %v210
                %v212 = vld [vmem:[%s202 + $0x20] sm:%s195]
                %213 = vst [vmem:[%s203 + $0x20] sm:%s195] %v212
                %v214 = vld [vmem:[%s202 + $0x28] sm:%s195]
                %215 = vst [vmem:[%s203 + $0x28] sm:%s195] %v214
                %v216 = vld [vmem:[%s202 + $0x30] sm:%s195]
                %217 = vst [vmem:[%s203 + $0x30] sm:%s195] %v216
                %v218 = vld [vmem:[%s202 + $0x38] sm:%s195]
                %219 = vst [vmem:[%s203 + $0x38] sm:%s195] %v218
                %v220 = vld [vmem:[%s202 + $0x40] sm:%s195]
                %221 = vst [vmem:[%s203 + $0x40] sm:%s195] %v220
                %v222 = vld [vmem:[%s202 + $0x48] sm:%s195]
                %223 = vst [vmem:[%s203 + $0x48] sm:%s195] %v222
                %v224 = vld [vmem:[%s202 + $0x50] sm:%s195]
                %225 = vst [vmem:[%s203 + $0x50] sm:%s195] %v224
                %v226 = vld [vmem:[%s202 + $0x58] sm:%s195]
                %227 = vst [vmem:[%s203 + $0x58] sm:%s195] %v226
                %v228 = vld [vmem:[%s202 + $0x60] sm:%s195]
                %229 = vst [vmem:[%s203 + $0x60] sm:%s195] %v228
                %v230 = vld [vmem:[%s202 + $0xd0] sm:%s195]
                %231 = vst [vmem:[%s203 + $0x68] sm:%s195] %v230
                %v232 = vld [vmem:[%s202 + $0xd8] sm:%s195]
                %233 = vst [vmem:[%s203 + $0x70] sm:%s195] %v232
                %v234 = vld [vmem:[%s202 + $0xe0] sm:%s195]
                %235 = vst [vmem:[%s203 + $0x78] sm:%s195] %v234
                %v236 = vld [vmem:[%s202 + $0xe8] sm:%s195]
                %237 = vst [vmem:[%s203 + $0x80] sm:%s195] %v236
                %v238 = vld [vmem:[%s202 + $0xf0] sm:%s195]
                %239 = vst [vmem:[%s203 + $0x88] sm:%s195] %v238
                %v240 = vld [vmem:[%s202 + $0xf8] sm:%s195]
                %241 = vst [vmem:[%s203 + $0x90] sm:%s195] %v240
                %v242 = vld [vmem:[%s202 + $0x100] sm:%s195]
                %243 = vst [vmem:[%s203 + $0x98] sm:%s195] %v242
                %v244 = vld [vmem:[%s202 + $0x108] sm:%s195]
                %245 = vst [vmem:[%s203 + $0xa0] sm:%s195] %v244
                %v246 = vld [vmem:[%s202 + $0x110] sm:%s195]
                %247 = vst [vmem:[%s203 + $0xa8] sm:%s195] %v246
                %v248 = vld [vmem:[%s202 + $0x118] sm:%s195]
                %249 = vst [vmem:[%s203 + $0xb0] sm:%s195] %v248
                %v250 = vld [vmem:[%s202 + $0x120] sm:%s195]
                %251 = vst [vmem:[%s203 + $0xb8] sm:%s195] %v250
                %v252 = vld [vmem:[%s202 + $0x128] sm:%s195]
                %253 = vst [vmem:[%s203 + $0xc0] sm:%s195] %v252
                %v254 = vld [vmem:[%s202 + $0x130] sm:%s195]
                %255 = vst [vmem:[%s203 + $0xc8] sm:%s195] %v254
                %v256 = vld [vmem:[%s202 + $0x1a0] sm:%s195]
                %257 = vst [vmem:[%s203 + $0xd0] sm:%s195] %v256
                %v258 = vld [vmem:[%s202 + $0x1a8] sm:%s195]
                %259 = vst [vmem:[%s203 + $0xd8] sm:%s195] %v258
                %v260 = vld [vmem:[%s202 + $0x1b0] sm:%s195]
                %261 = vst [vmem:[%s203 + $0xe0] sm:%s195] %v260
                %v262 = vld [vmem:[%s202 + $0x1b8] sm:%s195]
                %263 = vst [vmem:[%s203 + $0xe8] sm:%s195] %v262
                %v264 = vld [vmem:[%s202 + $0x1c0] sm:%s195]
                %265 = vst [vmem:[%s203 + $0xf0] sm:%s195] %v264
                %v266 = vld [vmem:[%s202 + $0x1c8] sm:%s195]
                %267 = vst [vmem:[%s203 + $0xf8] sm:%s195] %v266
                %v268 = vld [vmem:[%s202 + $0x1d0] sm:%s195]
                %269 = vst [vmem:[%s203 + $0x100] sm:%s195] %v268
                %v270 = vld [vmem:[%s202 + $0x1d8] sm:%s195]
                %271 = vst [vmem:[%s203 + $0x108] sm:%s195] %v270
                %v272 = vld [vmem:[%s202 + $0x1e0] sm:%s195]
                %273 = vst [vmem:[%s203 + $0x110] sm:%s195] %v272
                %v274 = vld [vmem:[%s202 + $0x1e8] sm:%s195]
                %275 = vst [vmem:[%s203 + $0x118] sm:%s195] %v274
                %v276 = vld [vmem:[%s202 + $0x1f0] sm:%s195]
                %277 = vst [vmem:[%s203 + $0x120] sm:%s195] %v276
                %v278 = vld [vmem:[%s202 + $0x1f8] sm:%s195]
                %279 = vst [vmem:[%s203 + $0x128] sm:%s195] %v278
                %v280 = vld [vmem:[%s202 + $0x200] sm:%s195]
                %281 = vst [vmem:[%s203 + $0x130] sm:%s195] %v280
                %v282 = vld [vmem:[%s202 + $0x270] sm:%s195]
                %283 = vst [vmem:[%s203 + $0x138] sm:%s195] %v282
                %v284 = vld [vmem:[%s202 + $0x278] sm:%s195]
                %285 = vst [vmem:[%s203 + $0x140] sm:%s195] %v284
                %v286 = vld [vmem:[%s202 + $0x280] sm:%s195]
                %287 = vst [vmem:[%s203 + $0x148] sm:%s195] %v286
                %v288 = vld [vmem:[%s202 + $0x288] sm:%s195]
                %289 = vst [vmem:[%s203 + $0x150] sm:%s195] %v288
                %v290 = vld [vmem:[%s202 + $0x290] sm:%s195]
                %291 = vst [vmem:[%s203 + $0x158] sm:%s195] %v290
                %v292 = vld [vmem:[%s202 + $0x298] sm:%s195]
                %293 = vst [vmem:[%s203 + $0x160] sm:%s195] %v292
                %v294 = vld [vmem:[%s202 + $0x2a0] sm:%s195]
                %295 = vst [vmem:[%s203 + $0x168] sm:%s195] %v294
                %v296 = vld [vmem:[%s202 + $0x2a8] sm:%s195]
                %297 = vst [vmem:[%s203 + $0x170] sm:%s195] %v296
                %v298 = vld [vmem:[%s202 + $0x2b0] sm:%s195]
                %299 = vst [vmem:[%s203 + $0x178] sm:%s195] %v298
                %v300 = vld [vmem:[%s202 + $0x2b8] sm:%s195]
                %301 = vst [vmem:[%s203 + $0x180] sm:%s195] %v300
                %v302 = vld [vmem:[%s202 + $0x2c0] sm:%s195]
                %303 = vst [vmem:[%s203 + $0x188] sm:%s195] %v302
                %v304 = vld [vmem:[%s202 + $0x2c8] sm:%s195]
                %305 = vst [vmem:[%s203 + $0x190] sm:%s195] %v304
                %v306 = vld [vmem:[%s202 + $0x2d0] sm:%s195]
                %307 = vst [vmem:[%s203 + $0x198] sm:%s195] %v306
                %v308 = vld [vmem:[%s202 + $0x340] sm:%s195]
                %309 = vst [vmem:[%s203 + $0x1a0] sm:%s195] %v308
                %v310 = vld [vmem:[%s202 + $0x348] sm:%s195]
                %311 = vst [vmem:[%s203 + $0x1a8] sm:%s195] %v310
                %v312 = vld [vmem:[%s202 + $0x350] sm:%s195]
                %313 = vst [vmem:[%s203 + $0x1b0] sm:%s195] %v312
                %v314 = vld [vmem:[%s202 + $0x358] sm:%s195]
                %315 = vst [vmem:[%s203 + $0x1b8] sm:%s195] %v314
                %v316 = vld [vmem:[%s202 + $0x360] sm:%s195]
                %317 = vst [vmem:[%s203 + $0x1c0] sm:%s195] %v316
                %v318 = vld [vmem:[%s202 + $0x368] sm:%s195]
                %319 = vst [vmem:[%s203 + $0x1c8] sm:%s195] %v318
                %v320 = vld [vmem:[%s202 + $0x370] sm:%s195]
                %321 = vst [vmem:[%s203 + $0x1d0] sm:%s195] %v320
                %v322 = vld [vmem:[%s202 + $0x378] sm:%s195]
                %323 = vst [vmem:[%s203 + $0x1d8] sm:%s195] %v322
                %v324 = vld [vmem:[%s202 + $0x380] sm:%s195]
                %325 = vst [vmem:[%s203 + $0x1e0] sm:%s195] %v324
                %v326 = vld [vmem:[%s202 + $0x388] sm:%s195]
                %327 = vst [vmem:[%s203 + $0x1e8] sm:%s195] %v326
                %v328 = vld [vmem:[%s202 + $0x390] sm:%s195]
                %329 = vst [vmem:[%s203 + $0x1f0] sm:%s195] %v328
                %v330 = vld [vmem:[%s202 + $0x398] sm:%s195]
                %331 = vst [vmem:[%s203 + $0x1f8] sm:%s195] %v330
                %v332 = vld [vmem:[%s202 + $0x3a0] sm:%s195]
                %333 = vst [vmem:[%s203 + $0x200] sm:%s195] %v332
                %v334 = vld [vmem:[%s202 + $0x410] sm:%s195]
                %335 = vst [vmem:[%s203 + $0x208] sm:%s195] %v334
                %v336 = vld [vmem:[%s202 + $0x418] sm:%s195]
                %337 = vst [vmem:[%s203 + $0x210] sm:%s195] %v336
                %v338 = vld [vmem:[%s202 + $0x420] sm:%s195]
                %339 = vst [vmem:[%s203 + $0x218] sm:%s195] %v338
                %v340 = vld [vmem:[%s202 + $0x428] sm:%s195]
                %341 = vst [vmem:[%s203 + $0x220] sm:%s195] %v340
                %v342 = vld [vmem:[%s202 + $0x430] sm:%s195]
                %343 = vst [vmem:[%s203 + $0x228] sm:%s195] %v342
                %v344 = vld [vmem:[%s202 + $0x438] sm:%s195]
                %345 = vst [vmem:[%s203 + $0x230] sm:%s195] %v344
                %v346 = vld [vmem:[%s202 + $0x440] sm:%s195]
                %347 = vst [vmem:[%s203 + $0x238] sm:%s195] %v346
                %v348 = vld [vmem:[%s202 + $0x448] sm:%s195]
                %349 = vst [vmem:[%s203 + $0x240] sm:%s195] %v348
                %v350 = vld [vmem:[%s202 + $0x450] sm:%s195]
                %351 = vst [vmem:[%s203 + $0x248] sm:%s195] %v350
                %v352 = vld [vmem:[%s202 + $0x458] sm:%s195]
                %353 = vst [vmem:[%s203 + $0x250] sm:%s195] %v352
                %v354 = vld [vmem:[%s202 + $0x460] sm:%s195]
                %355 = vst [vmem:[%s203 + $0x258] sm:%s195] %v354
                %v356 = vld [vmem:[%s202 + $0x468] sm:%s195]
                %357 = vst [vmem:[%s203 + $0x260] sm:%s195] %v356
                %v358 = vld [vmem:[%s202 + $0x470] sm:%s195]
                %359 = vst [vmem:[%s203 + $0x268] sm:%s195] %v358
                %v360 = vld [vmem:[%s202 + $0x4e0] sm:%s195]
                %361 = vst [vmem:[%s203 + $0x270] sm:%s195] %v360
                %v362 = vld [vmem:[%s202 + $0x4e8] sm:%s195]
                %363 = vst [vmem:[%s203 + $0x278] sm:%s195] %v362
                %v364 = vld [vmem:[%s202 + $0x4f0] sm:%s195]
                %365 = vst [vmem:[%s203 + $0x280] sm:%s195] %v364
                %v366 = vld [vmem:[%s202 + $0x4f8] sm:%s195]
                %367 = vst [vmem:[%s203 + $0x288] sm:%s195] %v366
                %v368 = vld [vmem:[%s202 + $0x500] sm:%s195]
                %369 = vst [vmem:[%s203 + $0x290] sm:%s195] %v368
                %v370 = vld [vmem:[%s202 + $0x508] sm:%s195]
                %371 = vst [vmem:[%s203 + $0x298] sm:%s195] %v370
                %v372 = vld [vmem:[%s202 + $0x510] sm:%s195]
                %373 = vst [vmem:[%s203 + $0x2a0] sm:%s195] %v372
                %v374 = vld [vmem:[%s202 + $0x518] sm:%s195]
                %375 = vst [vmem:[%s203 + $0x2a8] sm:%s195] %v374
                %v376 = vld [vmem:[%s202 + $0x520] sm:%s195]
                %377 = vst [vmem:[%s203 + $0x2b0] sm:%s195] %v376
                %v378 = vld [vmem:[%s202 + $0x528] sm:%s195]
                %379 = vst [vmem:[%s203 + $0x2b8] sm:%s195] %v378
                %v380 = vld [vmem:[%s202 + $0x530] sm:%s195]
                %381 = vst [vmem:[%s203 + $0x2c0] sm:%s195] %v380
                %v382 = vld [vmem:[%s202 + $0x538] sm:%s195]
                %383 = vst [vmem:[%s203 + $0x2c8] sm:%s195] %v382
                %v384 = vld [vmem:[%s202 + $0x540] sm:%s195]
                %385 = vst [vmem:[%s203 + $0x2d0] sm:%s195] %v384
                %v386 = vld [vmem:[%s202 + $0x5b0] sm:%s195]
                %387 = vst [vmem:[%s203 + $0x2d8] sm:%s195] %v386
                %v388 = vld [vmem:[%s202 + $0x5b8] sm:%s195]
                %389 = vst [vmem:[%s203 + $0x2e0] sm:%s195] %v388
                %v390 = vld [vmem:[%s202 + $0x5c0] sm:%s195]
                %391 = vst [vmem:[%s203 + $0x2e8] sm:%s195] %v390
                %v392 = vld [vmem:[%s202 + $0x5c8] sm:%s195]
                %393 = vst [vmem:[%s203 + $0x2f0] sm:%s195] %v392
                %v394 = vld [vmem:[%s202 + $0x5d0] sm:%s195]
                %395 = vst [vmem:[%s203 + $0x2f8] sm:%s195] %v394
                %v396 = vld [vmem:[%s202 + $0x5d8] sm:%s195]
                %397 = vst [vmem:[%s203 + $0x300] sm:%s195] %v396
                %v398 = vld [vmem:[%s202 + $0x5e0] sm:%s195]
                %399 = vst [vmem:[%s203 + $0x308] sm:%s195] %v398
                %v400 = vld [vmem:[%s202 + $0x5e8] sm:%s195]
                %401 = vst [vmem:[%s203 + $0x310] sm:%s195] %v400
                %v402 = vld [vmem:[%s202 + $0x5f0] sm:%s195]
                %403 = vst [vmem:[%s203 + $0x318] sm:%s195] %v402
                %v404 = vld [vmem:[%s202 + $0x5f8] sm:%s195]
                %405 = vst [vmem:[%s203 + $0x320] sm:%s195] %v404
                %v406 = vld [vmem:[%s202 + $0x600] sm:%s195]
                %407 = vst [vmem:[%s203 + $0x328] sm:%s195] %v406
                %v408 = vld [vmem:[%s202 + $0x608] sm:%s195]
                %409 = vst [vmem:[%s203 + $0x330] sm:%s195] %v408
                %v410 = vld [vmem:[%s202 + $0x610] sm:%s195]
                %411 = vst [vmem:[%s203 + $0x338] sm:%s195] %v410
                %v412 = vld [vmem:[%s202 + $0x680] sm:%s195]
                %413 = vst [vmem:[%s203 + $0x340] sm:%s195] %v412
                %v414 = vld [vmem:[%s202 + $0x688] sm:%s195]
                %415 = vst [vmem:[%s203 + $0x348] sm:%s195] %v414
                %v416 = vld [vmem:[%s202 + $0x690] sm:%s195]
                %417 = vst [vmem:[%s203 + $0x350] sm:%s195] %v416
                %v418 = vld [vmem:[%s202 + $0x698] sm:%s195]
                %419 = vst [vmem:[%s203 + $0x358] sm:%s195] %v418
                %v420 = vld [vmem:[%s202 + $0x6a0] sm:%s195]
                %421 = vst [vmem:[%s203 + $0x360] sm:%s195] %v420
                %v422 = vld [vmem:[%s202 + $0x6a8] sm:%s195]
                %423 = vst [vmem:[%s203 + $0x368] sm:%s195] %v422
                %v424 = vld [vmem:[%s202 + $0x6b0] sm:%s195]
                %425 = vst [vmem:[%s203 + $0x370] sm:%s195] %v424
                %v426 = vld [vmem:[%s202 + $0x6b8] sm:%s195]
                %427 = vst [vmem:[%s203 + $0x378] sm:%s195] %v426
                %v428 = vld [vmem:[%s202 + $0x6c0] sm:%s195]
                %429 = vst [vmem:[%s203 + $0x380] sm:%s195] %v428
                %v430 = vld [vmem:[%s202 + $0x6c8] sm:%s195]
                %431 = vst [vmem:[%s203 + $0x388] sm:%s195] %v430
                %v432 = vld [vmem:[%s202 + $0x6d0] sm:%s195]
                %433 = vst [vmem:[%s203 + $0x390] sm:%s195] %v432
                %v434 = vld [vmem:[%s202 + $0x6d8] sm:%s195]
                %435 = vst [vmem:[%s203 + $0x398] sm:%s195] %v434
                %v436 = vld [vmem:[%s202 + $0x6e0] sm:%s195]
                %437 = vst [vmem:[%s203 + $0x3a0] sm:%s195] %v436
                %v438 = vld [vmem:[%s202 + $0x750] sm:%s195]
                %439 = vst [vmem:[%s203 + $0x3a8] sm:%s195] %v438
                %v440 = vld [vmem:[%s202 + $0x758] sm:%s195]
                %441 = vst [vmem:[%s203 + $0x3b0] sm:%s195] %v440
                %v442 = vld [vmem:[%s202 + $0x760] sm:%s195]
                %443 = vst [vmem:[%s203 + $0x3b8] sm:%s195] %v442
                %v444 = vld [vmem:[%s202 + $0x768] sm:%s195]
                %445 = vst [vmem:[%s203 + $0x3c0] sm:%s195] %v444
                %v446 = vld [vmem:[%s202 + $0x770] sm:%s195]
                %447 = vst [vmem:[%s203 + $0x3c8] sm:%s195] %v446
                %v448 = vld [vmem:[%s202 + $0x778] sm:%s195]
                %449 = vst [vmem:[%s203 + $0x3d0] sm:%s195] %v448
                %v450 = vld [vmem:[%s202 + $0x780] sm:%s195]
                %451 = vst [vmem:[%s203 + $0x3d8] sm:%s195] %v450
                %v452 = vld [vmem:[%s202 + $0x788] sm:%s195]
                %453 = vst [vmem:[%s203 + $0x3e0] sm:%s195] %v452
                %v454 = vld [vmem:[%s202 + $0x790] sm:%s195]
                %455 = vst [vmem:[%s203 + $0x3e8] sm:%s195] %v454
                %v456 = vld [vmem:[%s202 + $0x798] sm:%s195]
                %457 = vst [vmem:[%s203 + $0x3f0] sm:%s195] %v456
                %v458 = vld [vmem:[%s202 + $0x7a0] sm:%s195]
                %459 = vst [vmem:[%s203 + $0x3f8] sm:%s195] %v458
                %v460 = vld [vmem:[%s202 + $0x7a8] sm:%s195]
                %461 = vst [vmem:[%s203 + $0x400] sm:%s195] %v460
                %v462 = vld [vmem:[%s202 + $0x7b0] sm:%s195]
                %463 = vst [vmem:[%s203 + $0x408] sm:%s195] %v462
              $region53: #{tpu_custom_call.1} parent=47 // loop_footer
                %s201 = sadd.s32 1, %s197
              $region54: #{tpu_custom_call.1} parent=47 // loop_footer_branch
                %196 = sbr.rel target = $region50
              $region55: #{tpu_custom_call.1} parent=47 // loop_exit
                _
            $region48: #{tpu_custom_call.1} parent=39 // pred_fallthru
              _
          $region40: #{tpu_custom_call.1} parent=35 // pred_fallthru
            _
          %736 = vnop
        $region36: #{tpu_custom_call.1} parent=31 // pred_fallthru
          _
      $region32: #{tpu_custom_call.1} parent=5 // pred_fallthru
        _
      %p737 = scmp.le.s32.totalorder 1, %s11
      %p738 = scmp.lt.s32.totalorder %s11, 3
      %p739 = pnand %p737, %p738
      %p740 = pneg %p739
      // Predicated region
      $region71: #{tpu_custom_call.1} parent=5 // pred_check
        _
      $region72: #{tpu_custom_call.1} parent=5 // pred_check_branch
        %742 = sbr.rel (%p739) target = $region74
      $region73: #{tpu_custom_call.1} parent=5 // pred_region
        %s743 = ssub.s32 %s11, 1
        %s744 = sand.u32 %s24, 1
        %s745 = sand.u32 %s24, 1
        %s746 = smul.addr %s745, 1040
        %s747 = scalar_lea.vmem [#allocation2], %s746
        // Predicated region
        $region75: #{tpu_custom_call.1} parent=73 // pred_check
          %p748 = pneg %p37
        $region76: #{tpu_custom_call.1} parent=73 // pred_check_branch
          %750 = sbr.rel (%p748) target = $region78
        $region77: #{tpu_custom_call.1} parent=73 // pred_region
          _
        $region78: #{tpu_custom_call.1} parent=73 // pred_fallthru
          _
        %s751 = sand.u32 %s24, 1
        %s752 = sand.u32 %s24, 1
        %s753 = smul.addr %s752, 1040
        %s754 = scalar_lea.vmem [#allocation2], %s753
        %p755 = pneg %p37
        %p756 = pneg %p34
        %p757 = pneg %p58
        %p758 = pneg %p55
        %p759 = pneg %p79
        %p760 = pneg %p76
        %p761 = pneg %p100
        %p762 = pneg %p97
        %p763 = pneg %p121
        %p764 = pneg %p118
        %p765 = pneg %p147
        %p766 = pneg %p144
        %s767 = sand.u32 %s134, 1
        %s768 = sand.u32 %s134, 1
        %s769 = smul.addr %s768, 1040
        %s770 = scalar_lea.vmem [#allocation3], %s769
        %s771 = smul.u32 13, %s16
        %s772 = smul.u32 13, %s16
        %v773 = vld [vmem:[%s1] sm:$0xff]
        %v774 = vld [vmem:[%s1 + $0x8] sm:$0xff]
        %v775 = vld [vmem:[%s1 + $0x10] sm:$0xff]
        %v776 = vld [vmem:[%s1 + $0x18] sm:$0xff]
        %v777 = vld [vmem:[%s2] sm:$0xff]
        %v778 = vld [vmem:[%s2 + $0x8] sm:$0xff]
        %v779 = vld [vmem:[%s2 + $0x10] sm:$0xff]
        %v780 = vld [vmem:[%s2 + $0x18] sm:$0xff]
        %v781 = vld [vmem:[%s3] sm:$0x1]
        %v782 = vld [vmem:[%s4] sm:$0x1]
        %v783 = vld [vmem:[%s747] sm:$0xff]
        %v784 = vld [vmem:[%s747 + $0x8] sm:$0xff]
        %v785 = vld [vmem:[%s747 + $0x10] sm:$0xff]
        %v786 = vld [vmem:[%s747 + $0x18] sm:$0xff]
        %v787 = vld [vmem:[%s747 + $0x20] sm:$0xff]
        %v788 = vld [vmem:[%s747 + $0x28] sm:$0xff]
        %v789 = vld [vmem:[%s747 + $0x30] sm:$0xff]
        %v790 = vld [vmem:[%s747 + $0x38] sm:$0xff]
        %v791 = vld [vmem:[%s747 + $0x40] sm:$0xff]
        %v792 = vld [vmem:[%s747 + $0x48] sm:$0xff]
        %v793 = vld [vmem:[%s747 + $0x50] sm:$0xff]
        %v794 = vld [vmem:[%s747 + $0x58] sm:$0xff]
        %v795 = vld [vmem:[%s747 + $0x60] sm:$0xff]
        %v796 = vld [vmem:[%s747 + $0x68] sm:$0xff]
        %v797 = vld [vmem:[%s747 + $0x70] sm:$0xff]
        %v798 = vld [vmem:[%s747 + $0x78] sm:$0xff]
        %v799 = vld [vmem:[%s747 + $0x80] sm:$0xff]
        %v800 = vld [vmem:[%s747 + $0x88] sm:$0xff]
        %v801 = vld [vmem:[%s747 + $0x90] sm:$0xff]
        %v802 = vld [vmem:[%s747 + $0x98] sm:$0xff]
        %v803 = vld [vmem:[%s747 + $0xa0] sm:$0xff]
        %v804 = vld [vmem:[%s747 + $0xa8] sm:$0xff]
        %v805 = vld [vmem:[%s747 + $0xb0] sm:$0xff]
        %v806 = vld [vmem:[%s747 + $0xb8] sm:$0xff]
        %v807 = vld [vmem:[%s747 + $0xc0] sm:$0xff]
        %v808 = vld [vmem:[%s747 + $0xc8] sm:$0xff]
        %v809 = vld [vmem:[%s747 + $0xd0] sm:$0xff]
        %v810 = vld [vmem:[%s747 + $0xd8] sm:$0xff]
        %v811 = vld [vmem:[%s747 + $0xe0] sm:$0xff]
        %v812 = vld [vmem:[%s747 + $0xe8] sm:$0xff]
        %v813 = vld [vmem:[%s747 + $0xf0] sm:$0xff]
        %v814 = vld [vmem:[%s747 + $0xf8] sm:$0xff]
        %v815 = vld [vmem:[%s747 + $0x100] sm:$0xff]
        %v816 = vld [vmem:[%s747 + $0x108] sm:$0xff]
        %v817 = vld [vmem:[%s747 + $0x110] sm:$0xff]
        %v818 = vld [vmem:[%s747 + $0x118] sm:$0xff]
        %v819 = vld [vmem:[%s747 + $0x120] sm:$0xff]
        %v820 = vld [vmem:[%s747 + $0x128] sm:$0xff]
        %v821 = vld [vmem:[%s747 + $0x130] sm:$0xff]
        %v822 = vld [vmem:[%s747 + $0x138] sm:$0xff]
        %v823 = vld [vmem:[%s747 + $0x140] sm:$0xff]
        %v824 = vld [vmem:[%s747 + $0x148] sm:$0xff]
        %v825 = vld [vmem:[%s747 + $0x150] sm:$0xff]
        %v826 = vld [vmem:[%s747 + $0x158] sm:$0xff]
        %v827 = vld [vmem:[%s747 + $0x160] sm:$0xff]
        %v828 = vld [vmem:[%s747 + $0x168] sm:$0xff]
        %v829 = vld [vmem:[%s747 + $0x170] sm:$0xff]
        %v830 = vld [vmem:[%s747 + $0x178] sm:$0xff]
        %v831 = vld [vmem:[%s747 + $0x180] sm:$0xff]
        %v832 = vld [vmem:[%s747 + $0x188] sm:$0xff]
        %v833 = vld [vmem:[%s747 + $0x190] sm:$0xff]
        %v834 = vld [vmem:[%s747 + $0x198] sm:$0xff]
        %v835 = vld [vmem:[%s747 + $0x1a0] sm:$0xff]
        %v836 = vld [vmem:[%s747 + $0x1a8] sm:$0xff]
        %v837 = vld [vmem:[%s747 + $0x1b0] sm:$0xff]
        %v838 = vld [vmem:[%s747 + $0x1b8] sm:$0xff]
        %v839 = vld [vmem:[%s747 + $0x1c0] sm:$0xff]
        %v840 = vld [vmem:[%s747 + $0x1c8] sm:$0xff]
        %v841 = vld [vmem:[%s747 + $0x1d0] sm:$0xff]
        %v842 = vld [vmem:[%s747 + $0x1d8] sm:$0xff]
        %v843 = vld [vmem:[%s747 + $0x1e0] sm:$0xff]
        %v844 = vld [vmem:[%s747 + $0x1e8] sm:$0xff]
        %v845 = vld [vmem:[%s747 + $0x1f0] sm:$0xff]
        %v846 = vld [vmem:[%s747 + $0x1f8] sm:$0xff]
        %v847 = vld [vmem:[%s747 + $0x200] sm:$0xff]
        %v848 = vld [vmem:[%s747 + $0x208] sm:$0xff]
        %v849 = vld [vmem:[%s747 + $0x210] sm:$0xff]
        %v850 = vld [vmem:[%s747 + $0x218] sm:$0xff]
        %v851 = vld [vmem:[%s747 + $0x220] sm:$0xff]
        %v852 = vld [vmem:[%s747 + $0x228] sm:$0xff]
        %v853 = vld [vmem:[%s747 + $0x230] sm:$0xff]
        %v854 = vld [vmem:[%s747 + $0x238] sm:$0xff]
        %v855 = vld [vmem:[%s747 + $0x240] sm:$0xff]
        %v856 = vld [vmem:[%s747 + $0x248] sm:$0xff]
        %v857 = vld [vmem:[%s747 + $0x250] sm:$0xff]
        %v858 = vld [vmem:[%s747 + $0x258] sm:$0xff]
        %v859 = vld [vmem:[%s747 + $0x260] sm:$0xff]
        %v860 = vld [vmem:[%s747 + $0x268] sm:$0xff]
        %v861 = vld [vmem:[%s747 + $0x270] sm:$0xff]
        %v862 = vld [vmem:[%s747 + $0x278] sm:$0xff]
        %v863 = vld [vmem:[%s747 + $0x280] sm:$0xff]
        %v864 = vld [vmem:[%s747 + $0x288] sm:$0xff]
        %v865 = vld [vmem:[%s747 + $0x290] sm:$0xff]
        %v866 = vld [vmem:[%s747 + $0x298] sm:$0xff]
        %v867 = vld [vmem:[%s747 + $0x2a0] sm:$0xff]
        %v868 = vld [vmem:[%s747 + $0x2a8] sm:$0xff]
        %v869 = vld [vmem:[%s747 + $0x2b0] sm:$0xff]
        %v870 = vld [vmem:[%s747 + $0x2b8] sm:$0xff]
        %v871 = vld [vmem:[%s747 + $0x2c0] sm:$0xff]
        %v872 = vld [vmem:[%s747 + $0x2c8] sm:$0xff]
        %v873 = vld [vmem:[%s747 + $0x2d0] sm:$0xff]
        %v874 = vld [vmem:[%s747 + $0x2d8] sm:$0xff]
        %v875 = vld [vmem:[%s747 + $0x2e0] sm:$0xff]
        %v876 = vld [vmem:[%s747 + $0x2e8] sm:$0xff]
        %v877 = vld [vmem:[%s747 + $0x2f0] sm:$0xff]
        %v878 = vld [vmem:[%s747 + $0x2f8] sm:$0xff]
        %v879 = vld [vmem:[%s747 + $0x300] sm:$0xff]
        %v880 = vld [vmem:[%s747 + $0x308] sm:$0xff]
        %v881 = vld [vmem:[%s747 + $0x310] sm:$0xff]
        %v882 = vld [vmem:[%s747 + $0x318] sm:$0xff]
        %v883 = vld [vmem:[%s747 + $0x320] sm:$0xff]
        %v884 = vld [vmem:[%s747 + $0x328] sm:$0xff]
        %v885 = vld [vmem:[%s747 + $0x330] sm:$0xff]
        %v886 = vld [vmem:[%s747 + $0x338] sm:$0xff]
        %v887 = vld [vmem:[%s747 + $0x340] sm:$0xff]
        %v888 = vld [vmem:[%s747 + $0x348] sm:$0xff]
        %v889 = vld [vmem:[%s747 + $0x350] sm:$0xff]
        %v890 = vld [vmem:[%s747 + $0x358] sm:$0xff]
        %v891 = vld [vmem:[%s747 + $0x360] sm:$0xff]
        %v892 = vld [vmem:[%s747 + $0x368] sm:$0xff]
        %v893 = vld [vmem:[%s747 + $0x370] sm:$0xff]
        %v894 = vld [vmem:[%s747 + $0x378] sm:$0xff]
        %v895 = vld [vmem:[%s747 + $0x380] sm:$0xff]
        %v896 = vld [vmem:[%s747 + $0x388] sm:$0xff]
        %v897 = vld [vmem:[%s747 + $0x390] sm:$0xff]
        %v898 = vld [vmem:[%s747 + $0x398] sm:$0xff]
        %v899 = vld [vmem:[%s747 + $0x3a0] sm:$0xff]
        %v900 = vld [vmem:[%s747 + $0x3a8] sm:$0xff]
        %v901 = vld [vmem:[%s747 + $0x3b0] sm:$0xff]
        %v902 = vld [vmem:[%s747 + $0x3b8] sm:$0xff]
        %v903 = vld [vmem:[%s747 + $0x3c0] sm:$0xff]
        %v904 = vld [vmem:[%s747 + $0x3c8] sm:$0xff]
        %v905 = vld [vmem:[%s747 + $0x3d0] sm:$0xff]
        %v906 = vld [vmem:[%s747 + $0x3d8] sm:$0xff]
        %v907 = vld [vmem:[%s747 + $0x3e0] sm:$0xff]
        %v908 = vld [vmem:[%s747 + $0x3e8] sm:$0xff]
        %v909 = vld [vmem:[%s747 + $0x3f0] sm:$0xff]
        %v910 = vld [vmem:[%s747 + $0x3f8] sm:$0xff]
        %v911 = vld [vmem:[%s747 + $0x400] sm:$0xff]
        %v912 = vld [vmem:[%s747 + $0x408] sm:$0xff]
        %v914 = vlaneseq
        %v915 = vshrl.u32 %v914, 7
        %v916 = vsub.s32 0, %v915
        %v917 = vrot.slane %v781, %v916
        %vm919 = vcmask 261120
        %v921 = vsel %vm919, %v783, 0
        %v924 = vsel %vm919, %v784, 0
        %v927 = vsel %vm919, %v785, 0
        %v930 = vsel %vm919, %v786, 0
        %v933 = vsel %vm919, %v787, 0
        %v936 = vsel %vm919, %v788, 0
        %v939 = vsel %vm919, %v789, 0
        %v942 = vsel %vm919, %v790, 0
        %v945 = vsel %vm919, %v791, 0
        %v948 = vsel %vm919, %v792, 0
        %v951 = vsel %vm919, %v793, 0
        %v954 = vsel %vm919, %v794, 0
        %v957 = vsel %vm919, %v795, 0
        %v960 = vsel %vm919, %v796, 0
        %v963 = vsel %vm919, %v797, 0
        %v966 = vsel %vm919, %v798, 0
        %v969 = vsel %vm919, %v799, 0
        %v972 = vsel %vm919, %v800, 0
        %v975 = vsel %vm919, %v801, 0
        %v978 = vsel %vm919, %v802, 0
        %v981 = vsel %vm919, %v803, 0
        %v984 = vsel %vm919, %v804, 0
        %v987 = vsel %vm919, %v805, 0
        %v990 = vsel %vm919, %v806, 0
        %v993 = vsel %vm919, %v807, 0
        %v996 = vsel %vm919, %v808, 0
        %v999 = vsel %vm919, %v809, 0
        %v1002 = vsel %vm919, %v810, 0
        %v1005 = vsel %vm919, %v811, 0
        %v1008 = vsel %vm919, %v812, 0
        %v1011 = vsel %vm919, %v813, 0
        %v1014 = vsel %vm919, %v814, 0
        %v1017 = vsel %vm919, %v815, 0
        %v1020 = vsel %vm919, %v816, 0
        %v1023 = vsel %vm919, %v817, 0
        %v1026 = vsel %vm919, %v818, 0
        %v1029 = vsel %vm919, %v819, 0
        %v1032 = vsel %vm919, %v820, 0
        %v1035 = vsel %vm919, %v821, 0
        %v1038 = vsel %vm919, %v822, 0
        %v1041 = vsel %vm919, %v823, 0
        %v1044 = vsel %vm919, %v824, 0
        %v1047 = vsel %vm919, %v825, 0
        %v1050 = vsel %vm919, %v826, 0
        %v1053 = vsel %vm919, %v827, 0
        %v1056 = vsel %vm919, %v828, 0
        %v1059 = vsel %vm919, %v829, 0
        %v1062 = vsel %vm919, %v830, 0
        %v1065 = vsel %vm919, %v831, 0
        %v1068 = vsel %vm919, %v832, 0
        %v1071 = vsel %vm919, %v833, 0
        %v1074 = vsel %vm919, %v834, 0
        %v1077 = vsel %vm919, %v835, 0
        %v1080 = vsel %vm919, %v836, 0
        %v1083 = vsel %vm919, %v837, 0
        %v1086 = vsel %vm919, %v838, 0
        %v1089 = vsel %vm919, %v839, 0
        %v1092 = vsel %vm919, %v840, 0
        %v1095 = vsel %vm919, %v841, 0
        %v1098 = vsel %vm919, %v842, 0
        %v1101 = vsel %vm919, %v843, 0
        %v1104 = vsel %vm919, %v844, 0
        %v1107 = vsel %vm919, %v845, 0
        %v1110 = vsel %vm919, %v846, 0
        %v1113 = vsel %vm919, %v847, 0
        %v1116 = vsel %vm919, %v848, 0
        %v1119 = vsel %vm919, %v849, 0
        %v1122 = vsel %vm919, %v850, 0
        %v1125 = vsel %vm919, %v851, 0
        %v1128 = vsel %vm919, %v852, 0
        %v1131 = vsel %vm919, %v853, 0
        %v1134 = vsel %vm919, %v854, 0
        %v1137 = vsel %vm919, %v855, 0
        %v1140 = vsel %vm919, %v856, 0
        %v1143 = vsel %vm919, %v857, 0
        %v1146 = vsel %vm919, %v858, 0
        %v1149 = vsel %vm919, %v859, 0
        %v1152 = vsel %vm919, %v860, 0
        %v1155 = vsel %vm919, %v861, 0
        %v1158 = vsel %vm919, %v862, 0
        %v1161 = vsel %vm919, %v863, 0
        %v1164 = vsel %vm919, %v864, 0
        %v1167 = vsel %vm919, %v865, 0
        %v1170 = vsel %vm919, %v866, 0
        %v1173 = vsel %vm919, %v867, 0
        %v1176 = vsel %vm919, %v868, 0
        %v1179 = vsel %vm919, %v869, 0
        %v1182 = vsel %vm919, %v870, 0
        %v1185 = vsel %vm919, %v871, 0
        %v1188 = vsel %vm919, %v872, 0
        %v1191 = vsel %vm919, %v873, 0
        %v1194 = vsel %vm919, %v874, 0
        %v1197 = vsel %vm919, %v875, 0
        %v1200 = vsel %vm919, %v876, 0
        %v1203 = vsel %vm919, %v877, 0
        %v1206 = vsel %vm919, %v878, 0
        %v1209 = vsel %vm919, %v879, 0
        %v1212 = vsel %vm919, %v880, 0
        %v1215 = vsel %vm919, %v881, 0
        %v1218 = vsel %vm919, %v882, 0
        %v1221 = vsel %vm919, %v883, 0
        %v1224 = vsel %vm919, %v884, 0
        %v1227 = vsel %vm919, %v885, 0
        %v1230 = vsel %vm919, %v886, 0
        %v1233 = vsel %vm919, %v887, 0
        %v1236 = vsel %vm919, %v888, 0
        %v1239 = vsel %vm919, %v889, 0
        %v1242 = vsel %vm919, %v890, 0
        %v1245 = vsel %vm919, %v891, 0
        %v1248 = vsel %vm919, %v892, 0
        %v1251 = vsel %vm919, %v893, 0
        %v1254 = vsel %vm919, %v894, 0
        %v1257 = vsel %vm919, %v895, 0
        %v1260 = vsel %vm919, %v896, 0
        %v1263 = vsel %vm919, %v897, 0
        %v1266 = vsel %vm919, %v898, 0
        %v1269 = vsel %vm919, %v899, 0
        %v1272 = vsel %vm919, %v900, 0
        %v1275 = vsel %vm919, %v901, 0
        %v1278 = vsel %vm919, %v902, 0
        %v1281 = vsel %vm919, %v903, 0
        %v1284 = vsel %vm919, %v904, 0
        %v1287 = vsel %vm919, %v905, 0
        %v1290 = vsel %vm919, %v906, 0
        %v1293 = vsel %vm919, %v907, 0
        %v1296 = vsel %vm919, %v908, 0
        %v1299 = vsel %vm919, %v909, 0
        %v1302 = vsel %vm919, %v910, 0
        %v1305 = vsel %vm919, %v911, 0
        %v1308 = vsel %vm919, %v912, 0
        %1310 = vmatprep.subr.mxu0 0.0
        %1311 = vmatpush1.msra.mxu0 0.0
        %1312 = vmatprep.subr.mxu0 0.0
        %1313 = vmatpush1.msra.mxu0 0.0
        %1314 = vmatprep.subr.mxu0 0.0
        %1315 = vmatpush1.msra.mxu0 0.0
        %1316 = vmatprep.subr.mxu0 0.0
        %1317 = vmatpush1.msra.mxu0 0.0
        %1318 = vmatprep.subr.mxu0 0.0
        %1319 = vmatpush1.msra.mxu0 0.0
        %1320 = vmatprep.subr.mxu0 0.0
        %1321 = vmatpush1.msra.mxu0 0.0
        %1322 = vmatprep.subr.mxu0 0.0
        %1323 = vmatpush1.msra.mxu0 0.0
        %1324 = vmatprep.subr.mxu0 0.0
        %1325 = vmatpush1.msra.mxu0 0.0
        %1326 = vmatprep.subr.mxu0 0.0
        %1327 = vmatpush1.msra.mxu0 0.0
        %1328 = vmatprep.subr.mxu0 0.0
        %1329 = vmatpush1.msra.mxu0 0.0
        %1330 = vmatprep.subr.mxu0 0.0
        %1331 = vmatpush1.msra.mxu0 0.0
        %1332 = vmatprep.subr.mxu0 0.0
        %1333 = vmatpush1.msra.mxu0 0.0
        %1334 = vmatprep.subr.mxu0 0.0
        %1335 = vmatpush1.msra.mxu0 %v776
        %1336 = vmatprep.subr.mxu0 0.0
        %1337 = vmatpush1.msra.mxu0 %v775
        %1338 = vmatprep.subr.mxu0 0.0
        %1339 = vmatpush1.msra.mxu0 %v774
        %1340 = vmatprep.subr.mxu0 0.0
        %1341 = vmatpush1.msra.mxu0 %v773
        %1342 = vmatprep.subr.mxu0 0.0
        %1343 = vmatpush2.msra.mxu0 0.0
        %1344 = vmatprep.subr.mxu0 0.0
        %1345 = vmatpush2.msra.mxu0 0.0
        %1346 = vmatprep.subr.mxu0 0.0
        %1347 = vmatpush2.msra.mxu0 0.0
        %1348 = vmatprep.subr.mxu0 0.0
        %1349 = vmatpush2.msra.mxu0 0.0
        %1350 = vmatprep.subr.mxu0 0.0
        %1351 = vmatpush2.msra.mxu0 0.0
        %1352 = vmatprep.subr.mxu0 0.0
        %1353 = vmatpush2.msra.mxu0 0.0
        %1354 = vmatprep.subr.mxu0 0.0
        %1355 = vmatpush2.msra.mxu0 0.0
        %1356 = vmatprep.subr.mxu0 0.0
        %1357 = vmatpush2.msra.mxu0 0.0
        %1358 = vmatprep.subr.mxu0 0.0
        %1359 = vmatpush2.msra.mxu0 0.0
        %1360 = vmatprep.subr.mxu0 0.0
        %1361 = vmatpush2.msra.mxu0 0.0
        %1362 = vmatprep.subr.mxu0 0.0
        %1363 = vmatpush2.msra.mxu0 0.0
        %1364 = vmatprep.subr.mxu0 0.0
        %1365 = vmatpush2.msra.mxu0 0.0
        %1366 = vmatprep.subr.mxu0 0.0
        %1367 = vmatpush2.msra.mxu0 0.0
        %1368 = vmatprep.subr.mxu0 0.0
        %1369 = vmatpush2.msra.mxu0 0.0
        %1370 = vmatprep.subr.mxu0 0.0
        %1371 = vmatpush2.msra.mxu0 0.0
        %1372 = vmatprep.subr.mxu0 0.0
        %1373 = vmatpush2.msra.mxu0 0.0
        %1374 = vmatprep.mubr.f32.mxu0 0.0
        %1375 = vmatmul.mubr.f32.gmra.mxu0 %v921
        %v1376 = vpop.f32.mrf.mxu0
        %v1377 = vadd.f32 %v917, %v1376
        %v1378 = vpop.f32.mrf.mxu0
        %1379 = vmatprep.mubr.f32.mxu0 0.0
        %1380 = vmatmul.mubr.f32.gmra.mxu0 %v924
        %v1381 = vpop.f32.mrf.mxu0
        %v1382 = vadd.f32 %v917, %v1381
        %v1383 = vpop.f32.mrf.mxu0
        %1384 = vmatprep.mubr.f32.mxu0 0.0
        %1385 = vmatmul.mubr.f32.gmra.mxu0 %v927
        %v1386 = vpop.f32.mrf.mxu0
        %v1387 = vadd.f32 %v917, %v1386
        %v1388 = vpop.f32.mrf.mxu0
        %1389 = vmatprep.mubr.f32.mxu0 0.0
        %1390 = vmatmul.mubr.f32.gmra.mxu0 %v930
        %v1391 = vpop.f32.mrf.mxu0
        %v1392 = vadd.f32 %v917, %v1391
        %v1393 = vpop.f32.mrf.mxu0
        %1394 = vmatprep.mubr.f32.mxu0 0.0
        %1395 = vmatmul.mubr.f32.gmra.mxu0 %v933
        %v1396 = vpop.f32.mrf.mxu0
        %v1397 = vadd.f32 %v917, %v1396
        %v1398 = vpop.f32.mrf.mxu0
        %1399 = vmatprep.mubr.f32.mxu0 0.0
        %1400 = vmatmul.mubr.f32.gmra.mxu0 %v936
        %v1401 = vpop.f32.mrf.mxu0
        %v1402 = vadd.f32 %v917, %v1401
        %v1403 = vpop.f32.mrf.mxu0
        %1404 = vmatprep.mubr.f32.mxu0 0.0
        %1405 = vmatmul.mubr.f32.gmra.mxu0 %v939
        %v1406 = vpop.f32.mrf.mxu0
        %v1407 = vadd.f32 %v917, %v1406
        %v1408 = vpop.f32.mrf.mxu0
        %1409 = vmatprep.mubr.f32.mxu0 0.0
        %1410 = vmatmul.mubr.f32.gmra.mxu0 %v942
        %v1411 = vpop.f32.mrf.mxu0
        %v1412 = vadd.f32 %v917, %v1411
        %v1413 = vpop.f32.mrf.mxu0
        %1414 = vmatprep.mubr.f32.mxu0 0.0
        %1415 = vmatmul.mubr.f32.gmra.mxu0 %v945
        %v1416 = vpop.f32.mrf.mxu0
        %v1417 = vadd.f32 %v917, %v1416
        %v1418 = vpop.f32.mrf.mxu0
        %1419 = vmatprep.mubr.f32.mxu0 0.0
        %1420 = vmatmul.mubr.f32.gmra.mxu0 %v948
        %v1421 = vpop.f32.mrf.mxu0
        %v1422 = vadd.f32 %v917, %v1421
        %v1423 = vpop.f32.mrf.mxu0
        %1424 = vmatprep.mubr.f32.mxu0 0.0
        %1425 = vmatmul.mubr.f32.gmra.mxu0 %v951
        %v1426 = vpop.f32.mrf.mxu0
        %v1427 = vadd.f32 %v917, %v1426
        %v1428 = vpop.f32.mrf.mxu0
        %1429 = vmatprep.mubr.f32.mxu0 0.0
        %1430 = vmatmul.mubr.f32.gmra.mxu0 %v954
        %v1431 = vpop.f32.mrf.mxu0
        %v1432 = vadd.f32 %v917, %v1431
        %v1433 = vpop.f32.mrf.mxu0
        %1434 = vmatprep.mubr.f32.mxu0 0.0
        %1435 = vmatmul.mubr.f32.gmra.mxu0 %v957
        %v1436 = vpop.f32.mrf.mxu0
        %v1437 = vadd.f32 %v917, %v1436
        %v1438 = vpop.f32.mrf.mxu0
        %1439 = vmatprep.mubr.f32.mxu0 0.0
        %1440 = vmatmul.mubr.f32.gmra.mxu0 %v960
        %v1441 = vpop.f32.mrf.mxu0
        %v1442 = vadd.f32 %v917, %v1441
        %v1443 = vpop.f32.mrf.mxu0
        %1444 = vmatprep.mubr.f32.mxu0 0.0
        %1445 = vmatmul.mubr.f32.gmra.mxu0 %v963
        %v1446 = vpop.f32.mrf.mxu0
        %v1447 = vadd.f32 %v917, %v1446
        %v1448 = vpop.f32.mrf.mxu0
        %1449 = vmatprep.mubr.f32.mxu0 0.0
        %1450 = vmatmul.mubr.f32.gmra.mxu0 %v966
        %v1451 = vpop.f32.mrf.mxu0
        %v1452 = vadd.f32 %v917, %v1451
        %v1453 = vpop.f32.mrf.mxu0
        %1454 = vmatprep.mubr.f32.mxu0 0.0
        %1455 = vmatmul.mubr.f32.gmra.mxu0 %v969
        %v1456 = vpop.f32.mrf.mxu0
        %v1457 = vadd.f32 %v917, %v1456
        %v1458 = vpop.f32.mrf.mxu0
        %1459 = vmatprep.mubr.f32.mxu0 0.0
        %1460 = vmatmul.mubr.f32.gmra.mxu0 %v972
        %v1461 = vpop.f32.mrf.mxu0
        %v1462 = vadd.f32 %v917, %v1461
        %v1463 = vpop.f32.mrf.mxu0
        %1464 = vmatprep.mubr.f32.mxu0 0.0
        %1465 = vmatmul.mubr.f32.gmra.mxu0 %v975
        %v1466 = vpop.f32.mrf.mxu0
        %v1467 = vadd.f32 %v917, %v1466
        %v1468 = vpop.f32.mrf.mxu0
        %1469 = vmatprep.mubr.f32.mxu0 0.0
        %1470 = vmatmul.mubr.f32.gmra.mxu0 %v978
        %v1471 = vpop.f32.mrf.mxu0
        %v1472 = vadd.f32 %v917, %v1471
        %v1473 = vpop.f32.mrf.mxu0
        %1474 = vmatprep.mubr.f32.mxu0 0.0
        %1475 = vmatmul.mubr.f32.gmra.mxu0 %v981
        %v1476 = vpop.f32.mrf.mxu0
        %v1477 = vadd.f32 %v917, %v1476
        %v1478 = vpop.f32.mrf.mxu0
        %1479 = vmatprep.mubr.f32.mxu0 0.0
        %1480 = vmatmul.mubr.f32.gmra.mxu0 %v984
        %v1481 = vpop.f32.mrf.mxu0
        %v1482 = vadd.f32 %v917, %v1481
        %v1483 = vpop.f32.mrf.mxu0
        %1484 = vmatprep.mubr.f32.mxu0 0.0
        %1485 = vmatmul.mubr.f32.gmra.mxu0 %v987
        %v1486 = vpop.f32.mrf.mxu0
        %v1487 = vadd.f32 %v917, %v1486
        %v1488 = vpop.f32.mrf.mxu0
        %1489 = vmatprep.mubr.f32.mxu0 0.0
        %1490 = vmatmul.mubr.f32.gmra.mxu0 %v990
        %v1491 = vpop.f32.mrf.mxu0
        %v1492 = vadd.f32 %v917, %v1491
        %v1493 = vpop.f32.mrf.mxu0
        %1494 = vmatprep.mubr.f32.mxu0 0.0
        %1495 = vmatmul.mubr.f32.gmra.mxu0 %v993
        %v1496 = vpop.f32.mrf.mxu0
        %v1497 = vadd.f32 %v917, %v1496
        %v1498 = vpop.f32.mrf.mxu0
        %1499 = vmatprep.mubr.f32.mxu0 0.0
        %1500 = vmatmul.mubr.f32.gmra.mxu0 %v996
        %v1501 = vpop.f32.mrf.mxu0
        %v1502 = vadd.f32 %v917, %v1501
        %v1503 = vpop.f32.mrf.mxu0
        %1504 = vmatprep.mubr.f32.mxu0 0.0
        %1505 = vmatmul.mubr.f32.gmra.mxu0 %v999
        %v1506 = vpop.f32.mrf.mxu0
        %v1507 = vadd.f32 %v917, %v1506
        %v1508 = vpop.f32.mrf.mxu0
        %1509 = vmatprep.mubr.f32.mxu0 0.0
        %1510 = vmatmul.mubr.f32.gmra.mxu0 %v1002
        %v1511 = vpop.f32.mrf.mxu0
        %v1512 = vadd.f32 %v917, %v1511
        %v1513 = vpop.f32.mrf.mxu0
        %1514 = vmatprep.mubr.f32.mxu0 0.0
        %1515 = vmatmul.mubr.f32.gmra.mxu0 %v1005
        %v1516 = vpop.f32.mrf.mxu0
        %v1517 = vadd.f32 %v917, %v1516
        %v1518 = vpop.f32.mrf.mxu0
        %1519 = vmatprep.mubr.f32.mxu0 0.0
        %1520 = vmatmul.mubr.f32.gmra.mxu0 %v1008
        %v1521 = vpop.f32.mrf.mxu0
        %v1522 = vadd.f32 %v917, %v1521
        %v1523 = vpop.f32.mrf.mxu0
        %1524 = vmatprep.mubr.f32.mxu0 0.0
        %1525 = vmatmul.mubr.f32.gmra.mxu0 %v1011
        %v1526 = vpop.f32.mrf.mxu0
        %v1527 = vadd.f32 %v917, %v1526
        %v1528 = vpop.f32.mrf.mxu0
        %1529 = vmatprep.mubr.f32.mxu0 0.0
        %1530 = vmatmul.mubr.f32.gmra.mxu0 %v1014
        %v1531 = vpop.f32.mrf.mxu0
        %v1532 = vadd.f32 %v917, %v1531
        %v1533 = vpop.f32.mrf.mxu0
        %1534 = vmatprep.mubr.f32.mxu0 0.0
        %1535 = vmatmul.mubr.f32.gmra.mxu0 %v1017
        %v1536 = vpop.f32.mrf.mxu0
        %v1537 = vadd.f32 %v917, %v1536
        %v1538 = vpop.f32.mrf.mxu0
        %1539 = vmatprep.mubr.f32.mxu0 0.0
        %1540 = vmatmul.mubr.f32.gmra.mxu0 %v1020
        %v1541 = vpop.f32.mrf.mxu0
        %v1542 = vadd.f32 %v917, %v1541
        %v1543 = vpop.f32.mrf.mxu0
        %1544 = vmatprep.mubr.f32.mxu0 0.0
        %1545 = vmatmul.mubr.f32.gmra.mxu0 %v1023
        %v1546 = vpop.f32.mrf.mxu0
        %v1547 = vadd.f32 %v917, %v1546
        %v1548 = vpop.f32.mrf.mxu0
        %1549 = vmatprep.mubr.f32.mxu0 0.0
        %1550 = vmatmul.mubr.f32.gmra.mxu0 %v1026
        %v1551 = vpop.f32.mrf.mxu0
        %v1552 = vadd.f32 %v917, %v1551
        %v1553 = vpop.f32.mrf.mxu0
        %1554 = vmatprep.mubr.f32.mxu0 0.0
        %1555 = vmatmul.mubr.f32.gmra.mxu0 %v1029
        %v1556 = vpop.f32.mrf.mxu0
        %v1557 = vadd.f32 %v917, %v1556
        %v1558 = vpop.f32.mrf.mxu0
        %1559 = vmatprep.mubr.f32.mxu0 0.0
        %1560 = vmatmul.mubr.f32.gmra.mxu0 %v1032
        %v1561 = vpop.f32.mrf.mxu0
        %v1562 = vadd.f32 %v917, %v1561
        %v1563 = vpop.f32.mrf.mxu0
        %1564 = vmatprep.mubr.f32.mxu0 0.0
        %1565 = vmatmul.mubr.f32.gmra.mxu0 %v1035
        %v1566 = vpop.f32.mrf.mxu0
        %v1567 = vadd.f32 %v917, %v1566
        %v1568 = vpop.f32.mrf.mxu0
        %1569 = vmatprep.mubr.f32.mxu0 0.0
        %1570 = vmatmul.mubr.f32.gmra.mxu0 %v1038
        %v1571 = vpop.f32.mrf.mxu0
        %v1572 = vadd.f32 %v917, %v1571
        %v1573 = vpop.f32.mrf.mxu0
        %1574 = vmatprep.mubr.f32.mxu0 0.0
        %1575 = vmatmul.mubr.f32.gmra.mxu0 %v1041
        %v1576 = vpop.f32.mrf.mxu0
        %v1577 = vadd.f32 %v917, %v1576
        %v1578 = vpop.f32.mrf.mxu0
        %1579 = vmatprep.mubr.f32.mxu0 0.0
        %1580 = vmatmul.mubr.f32.gmra.mxu0 %v1044
        %v1581 = vpop.f32.mrf.mxu0
        %v1582 = vadd.f32 %v917, %v1581
        %v1583 = vpop.f32.mrf.mxu0
        %1584 = vmatprep.mubr.f32.mxu0 0.0
        %1585 = vmatmul.mubr.f32.gmra.mxu0 %v1047
        %v1586 = vpop.f32.mrf.mxu0
        %v1587 = vadd.f32 %v917, %v1586
        %v1588 = vpop.f32.mrf.mxu0
        %1589 = vmatprep.mubr.f32.mxu0 0.0
        %1590 = vmatmul.mubr.f32.gmra.mxu0 %v1050
        %v1591 = vpop.f32.mrf.mxu0
        %v1592 = vadd.f32 %v917, %v1591
        %v1593 = vpop.f32.mrf.mxu0
        %1594 = vmatprep.mubr.f32.mxu0 0.0
        %1595 = vmatmul.mubr.f32.gmra.mxu0 %v1053
        %v1596 = vpop.f32.mrf.mxu0
        %v1597 = vadd.f32 %v917, %v1596
        %v1598 = vpop.f32.mrf.mxu0
        %1599 = vmatprep.mubr.f32.mxu0 0.0
        %1600 = vmatmul.mubr.f32.gmra.mxu0 %v1056
        %v1601 = vpop.f32.mrf.mxu0
        %v1602 = vadd.f32 %v917, %v1601
        %v1603 = vpop.f32.mrf.mxu0
        %1604 = vmatprep.mubr.f32.mxu0 0.0
        %1605 = vmatmul.mubr.f32.gmra.mxu0 %v1059
        %v1606 = vpop.f32.mrf.mxu0
        %v1607 = vadd.f32 %v917, %v1606
        %v1608 = vpop.f32.mrf.mxu0
        %1609 = vmatprep.mubr.f32.mxu0 0.0
        %1610 = vmatmul.mubr.f32.gmra.mxu0 %v1062
        %v1611 = vpop.f32.mrf.mxu0
        %v1612 = vadd.f32 %v917, %v1611
        %v1613 = vpop.f32.mrf.mxu0
        %1614 = vmatprep.mubr.f32.mxu0 0.0
        %1615 = vmatmul.mubr.f32.gmra.mxu0 %v1065
        %v1616 = vpop.f32.mrf.mxu0
        %v1617 = vadd.f32 %v917, %v1616
        %v1618 = vpop.f32.mrf.mxu0
        %1619 = vmatprep.mubr.f32.mxu0 0.0
        %1620 = vmatmul.mubr.f32.gmra.mxu0 %v1068
        %v1621 = vpop.f32.mrf.mxu0
        %v1622 = vadd.f32 %v917, %v1621
        %v1623 = vpop.f32.mrf.mxu0
        %1624 = vmatprep.mubr.f32.mxu0 0.0
        %1625 = vmatmul.mubr.f32.gmra.mxu0 %v1071
        %v1626 = vpop.f32.mrf.mxu0
        %v1627 = vadd.f32 %v917, %v1626
        %v1628 = vpop.f32.mrf.mxu0
        %1629 = vmatprep.mubr.f32.mxu0 0.0
        %1630 = vmatmul.mubr.f32.gmra.mxu0 %v1074
        %v1631 = vpop.f32.mrf.mxu0
        %v1632 = vadd.f32 %v917, %v1631
        %v1633 = vpop.f32.mrf.mxu0
        %1634 = vmatprep.mubr.f32.mxu0 0.0
        %1635 = vmatmul.mubr.f32.gmra.mxu0 %v1077
        %v1636 = vpop.f32.mrf.mxu0
        %v1637 = vadd.f32 %v917, %v1636
        %v1638 = vpop.f32.mrf.mxu0
        %1639 = vmatprep.mubr.f32.mxu0 0.0
        %1640 = vmatmul.mubr.f32.gmra.mxu0 %v1080
        %v1641 = vpop.f32.mrf.mxu0
        %v1642 = vadd.f32 %v917, %v1641
        %v1643 = vpop.f32.mrf.mxu0
        %1644 = vmatprep.mubr.f32.mxu0 0.0
        %1645 = vmatmul.mubr.f32.gmra.mxu0 %v1083
        %v1646 = vpop.f32.mrf.mxu0
        %v1647 = vadd.f32 %v917, %v1646
        %v1648 = vpop.f32.mrf.mxu0
        %1649 = vmatprep.mubr.f32.mxu0 0.0
        %1650 = vmatmul.mubr.f32.gmra.mxu0 %v1086
        %v1651 = vpop.f32.mrf.mxu0
        %v1652 = vadd.f32 %v917, %v1651
        %v1653 = vpop.f32.mrf.mxu0
        %1654 = vmatprep.mubr.f32.mxu0 0.0
        %1655 = vmatmul.mubr.f32.gmra.mxu0 %v1089
        %v1656 = vpop.f32.mrf.mxu0
        %v1657 = vadd.f32 %v917, %v1656
        %v1658 = vpop.f32.mrf.mxu0
        %1659 = vmatprep.mubr.f32.mxu0 0.0
        %1660 = vmatmul.mubr.f32.gmra.mxu0 %v1092
        %v1661 = vpop.f32.mrf.mxu0
        %v1662 = vadd.f32 %v917, %v1661
        %v1663 = vpop.f32.mrf.mxu0
        %1664 = vmatprep.mubr.f32.mxu0 0.0
        %1665 = vmatmul.mubr.f32.gmra.mxu0 %v1095
        %v1666 = vpop.f32.mrf.mxu0
        %v1667 = vadd.f32 %v917, %v1666
        %v1668 = vpop.f32.mrf.mxu0
        %1669 = vmatprep.mubr.f32.mxu0 0.0
        %1670 = vmatmul.mubr.f32.gmra.mxu0 %v1098
        %v1671 = vpop.f32.mrf.mxu0
        %v1672 = vadd.f32 %v917, %v1671
        %v1673 = vpop.f32.mrf.mxu0
        %1674 = vmatprep.mubr.f32.mxu0 0.0
        %1675 = vmatmul.mubr.f32.gmra.mxu0 %v1101
        %v1676 = vpop.f32.mrf.mxu0
        %v1677 = vadd.f32 %v917, %v1676
        %v1678 = vpop.f32.mrf.mxu0
        %1679 = vmatprep.mubr.f32.mxu0 0.0
        %1680 = vmatmul.mubr.f32.gmra.mxu0 %v1104
        %v1681 = vpop.f32.mrf.mxu0
        %v1682 = vadd.f32 %v917, %v1681
        %v1683 = vpop.f32.mrf.mxu0
        %1684 = vmatprep.mubr.f32.mxu0 0.0
        %1685 = vmatmul.mubr.f32.gmra.mxu0 %v1107
        %v1686 = vpop.f32.mrf.mxu0
        %v1687 = vadd.f32 %v917, %v1686
        %v1688 = vpop.f32.mrf.mxu0
        %1689 = vmatprep.mubr.f32.mxu0 0.0
        %1690 = vmatmul.mubr.f32.gmra.mxu0 %v1110
        %v1691 = vpop.f32.mrf.mxu0
        %v1692 = vadd.f32 %v917, %v1691
        %v1693 = vpop.f32.mrf.mxu0
        %1694 = vmatprep.mubr.f32.mxu0 0.0
        %1695 = vmatmul.mubr.f32.gmra.mxu0 %v1113
        %v1696 = vpop.f32.mrf.mxu0
        %v1697 = vadd.f32 %v917, %v1696
        %v1698 = vpop.f32.mrf.mxu0
        %1699 = vmatprep.mubr.f32.mxu0 0.0
        %1700 = vmatmul.mubr.f32.gmra.mxu0 %v1116
        %v1701 = vpop.f32.mrf.mxu0
        %v1702 = vadd.f32 %v917, %v1701
        %v1703 = vpop.f32.mrf.mxu0
        %1704 = vmatprep.mubr.f32.mxu0 0.0
        %1705 = vmatmul.mubr.f32.gmra.mxu0 %v1119
        %v1706 = vpop.f32.mrf.mxu0
        %v1707 = vadd.f32 %v917, %v1706
        %v1708 = vpop.f32.mrf.mxu0
        %1709 = vmatprep.mubr.f32.mxu0 0.0
        %1710 = vmatmul.mubr.f32.gmra.mxu0 %v1122
        %v1711 = vpop.f32.mrf.mxu0
        %v1712 = vadd.f32 %v917, %v1711
        %v1713 = vpop.f32.mrf.mxu0
        %1714 = vmatprep.mubr.f32.mxu0 0.0
        %1715 = vmatmul.mubr.f32.gmra.mxu0 %v1125
        %v1716 = vpop.f32.mrf.mxu0
        %v1717 = vadd.f32 %v917, %v1716
        %v1718 = vpop.f32.mrf.mxu0
        %1719 = vmatprep.mubr.f32.mxu0 0.0
        %1720 = vmatmul.mubr.f32.gmra.mxu0 %v1128
        %v1721 = vpop.f32.mrf.mxu0
        %v1722 = vadd.f32 %v917, %v1721
        %v1723 = vpop.f32.mrf.mxu0
        %1724 = vmatprep.mubr.f32.mxu0 0.0
        %1725 = vmatmul.mubr.f32.gmra.mxu0 %v1131
        %v1726 = vpop.f32.mrf.mxu0
        %v1727 = vadd.f32 %v917, %v1726
        %v1728 = vpop.f32.mrf.mxu0
        %1729 = vmatprep.mubr.f32.mxu0 0.0
        %1730 = vmatmul.mubr.f32.gmra.mxu0 %v1134
        %v1731 = vpop.f32.mrf.mxu0
        %v1732 = vadd.f32 %v917, %v1731
        %v1733 = vpop.f32.mrf.mxu0
        %1734 = vmatprep.mubr.f32.mxu0 0.0
        %1735 = vmatmul.mubr.f32.gmra.mxu0 %v1137
        %v1736 = vpop.f32.mrf.mxu0
        %v1737 = vadd.f32 %v917, %v1736
        %v1738 = vpop.f32.mrf.mxu0
        %1739 = vmatprep.mubr.f32.mxu0 0.0
        %1740 = vmatmul.mubr.f32.gmra.mxu0 %v1140
        %v1741 = vpop.f32.mrf.mxu0
        %v1742 = vadd.f32 %v917, %v1741
        %v1743 = vpop.f32.mrf.mxu0
        %1744 = vmatprep.mubr.f32.mxu0 0.0
        %1745 = vmatmul.mubr.f32.gmra.mxu0 %v1143
        %v1746 = vpop.f32.mrf.mxu0
        %v1747 = vadd.f32 %v917, %v1746
        %v1748 = vpop.f32.mrf.mxu0
        %1749 = vmatprep.mubr.f32.mxu0 0.0
        %1750 = vmatmul.mubr.f32.gmra.mxu0 %v1146
        %v1751 = vpop.f32.mrf.mxu0
        %v1752 = vadd.f32 %v917, %v1751
        %v1753 = vpop.f32.mrf.mxu0
        %1754 = vmatprep.mubr.f32.mxu0 0.0
        %1755 = vmatmul.mubr.f32.gmra.mxu0 %v1149
        %v1756 = vpop.f32.mrf.mxu0
        %v1757 = vadd.f32 %v917, %v1756
        %v1758 = vpop.f32.mrf.mxu0
        %1759 = vmatprep.mubr.f32.mxu0 0.0
        %1760 = vmatmul.mubr.f32.gmra.mxu0 %v1152
        %v1761 = vpop.f32.mrf.mxu0
        %v1762 = vadd.f32 %v917, %v1761
        %v1763 = vpop.f32.mrf.mxu0
        %1764 = vmatprep.mubr.f32.mxu0 0.0
        %1765 = vmatmul.mubr.f32.gmra.mxu0 %v1155
        %v1766 = vpop.f32.mrf.mxu0
        %v1767 = vadd.f32 %v917, %v1766
        %v1768 = vpop.f32.mrf.mxu0
        %1769 = vmatprep.mubr.f32.mxu0 0.0
        %1770 = vmatmul.mubr.f32.gmra.mxu0 %v1158
        %v1771 = vpop.f32.mrf.mxu0
        %v1772 = vadd.f32 %v917, %v1771
        %v1773 = vpop.f32.mrf.mxu0
        %1774 = vmatprep.mubr.f32.mxu0 0.0
        %1775 = vmatmul.mubr.f32.gmra.mxu0 %v1161
        %v1776 = vpop.f32.mrf.mxu0
        %v1777 = vadd.f32 %v917, %v1776
        %v1778 = vpop.f32.mrf.mxu0
        %1779 = vmatprep.mubr.f32.mxu0 0.0
        %1780 = vmatmul.mubr.f32.gmra.mxu0 %v1164
        %v1781 = vpop.f32.mrf.mxu0
        %v1782 = vadd.f32 %v917, %v1781
        %v1783 = vpop.f32.mrf.mxu0
        %1784 = vmatprep.mubr.f32.mxu0 0.0
        %1785 = vmatmul.mubr.f32.gmra.mxu0 %v1167
        %v1786 = vpop.f32.mrf.mxu0
        %v1787 = vadd.f32 %v917, %v1786
        %v1788 = vpop.f32.mrf.mxu0
        %1789 = vmatprep.mubr.f32.mxu0 0.0
        %1790 = vmatmul.mubr.f32.gmra.mxu0 %v1170
        %v1791 = vpop.f32.mrf.mxu0
        %v1792 = vadd.f32 %v917, %v1791
        %v1793 = vpop.f32.mrf.mxu0
        %1794 = vmatprep.mubr.f32.mxu0 0.0
        %1795 = vmatmul.mubr.f32.gmra.mxu0 %v1173
        %v1796 = vpop.f32.mrf.mxu0
        %v1797 = vadd.f32 %v917, %v1796
        %v1798 = vpop.f32.mrf.mxu0
        %1799 = vmatprep.mubr.f32.mxu0 0.0
        %1800 = vmatmul.mubr.f32.gmra.mxu0 %v1176
        %v1801 = vpop.f32.mrf.mxu0
        %v1802 = vadd.f32 %v917, %v1801
        %v1803 = vpop.f32.mrf.mxu0
        %1804 = vmatprep.mubr.f32.mxu0 0.0
        %1805 = vmatmul.mubr.f32.gmra.mxu0 %v1179
        %v1806 = vpop.f32.mrf.mxu0
        %v1807 = vadd.f32 %v917, %v1806
        %v1808 = vpop.f32.mrf.mxu0
        %1809 = vmatprep.mubr.f32.mxu0 0.0
        %1810 = vmatmul.mubr.f32.gmra.mxu0 %v1182
        %v1811 = vpop.f32.mrf.mxu0
        %v1812 = vadd.f32 %v917, %v1811
        %v1813 = vpop.f32.mrf.mxu0
        %1814 = vmatprep.mubr.f32.mxu0 0.0
        %1815 = vmatmul.mubr.f32.gmra.mxu0 %v1185
        %v1816 = vpop.f32.mrf.mxu0
        %v1817 = vadd.f32 %v917, %v1816
        %v1818 = vpop.f32.mrf.mxu0
        %1819 = vmatprep.mubr.f32.mxu0 0.0
        %1820 = vmatmul.mubr.f32.gmra.mxu0 %v1188
        %v1821 = vpop.f32.mrf.mxu0
        %v1822 = vadd.f32 %v917, %v1821
        %v1823 = vpop.f32.mrf.mxu0
        %1824 = vmatprep.mubr.f32.mxu0 0.0
        %1825 = vmatmul.mubr.f32.gmra.mxu0 %v1191
        %v1826 = vpop.f32.mrf.mxu0
        %v1827 = vadd.f32 %v917, %v1826
        %v1828 = vpop.f32.mrf.mxu0
        %1829 = vmatprep.mubr.f32.mxu0 0.0
        %1830 = vmatmul.mubr.f32.gmra.mxu0 %v1194
        %v1831 = vpop.f32.mrf.mxu0
        %v1832 = vadd.f32 %v917, %v1831
        %v1833 = vpop.f32.mrf.mxu0
        %1834 = vmatprep.mubr.f32.mxu0 0.0
        %1835 = vmatmul.mubr.f32.gmra.mxu0 %v1197
        %v1836 = vpop.f32.mrf.mxu0
        %v1837 = vadd.f32 %v917, %v1836
        %v1838 = vpop.f32.mrf.mxu0
        %1839 = vmatprep.mubr.f32.mxu0 0.0
        %1840 = vmatmul.mubr.f32.gmra.mxu0 %v1200
        %v1841 = vpop.f32.mrf.mxu0
        %v1842 = vadd.f32 %v917, %v1841
        %v1843 = vpop.f32.mrf.mxu0
        %1844 = vmatprep.mubr.f32.mxu0 0.0
        %1845 = vmatmul.mubr.f32.gmra.mxu0 %v1203
        %v1846 = vpop.f32.mrf.mxu0
        %v1847 = vadd.f32 %v917, %v1846
        %v1848 = vpop.f32.mrf.mxu0
        %1849 = vmatprep.mubr.f32.mxu0 0.0
        %1850 = vmatmul.mubr.f32.gmra.mxu0 %v1206
        %v1851 = vpop.f32.mrf.mxu0
        %v1852 = vadd.f32 %v917, %v1851
        %v1853 = vpop.f32.mrf.mxu0
        %1854 = vmatprep.mubr.f32.mxu0 0.0
        %1855 = vmatmul.mubr.f32.gmra.mxu0 %v1209
        %v1856 = vpop.f32.mrf.mxu0
        %v1857 = vadd.f32 %v917, %v1856
        %v1858 = vpop.f32.mrf.mxu0
        %1859 = vmatprep.mubr.f32.mxu0 0.0
        %1860 = vmatmul.mubr.f32.gmra.mxu0 %v1212
        %v1861 = vpop.f32.mrf.mxu0
        %v1862 = vadd.f32 %v917, %v1861
        %v1863 = vpop.f32.mrf.mxu0
        %1864 = vmatprep.mubr.f32.mxu0 0.0
        %1865 = vmatmul.mubr.f32.gmra.mxu0 %v1215
        %v1866 = vpop.f32.mrf.mxu0
        %v1867 = vadd.f32 %v917, %v1866
        %v1868 = vpop.f32.mrf.mxu0
        %1869 = vmatprep.mubr.f32.mxu0 0.0
        %1870 = vmatmul.mubr.f32.gmra.mxu0 %v1218
        %v1871 = vpop.f32.mrf.mxu0
        %v1872 = vadd.f32 %v917, %v1871
        %v1873 = vpop.f32.mrf.mxu0
        %1874 = vmatprep.mubr.f32.mxu0 0.0
        %1875 = vmatmul.mubr.f32.gmra.mxu0 %v1221
        %v1876 = vpop.f32.mrf.mxu0
        %v1877 = vadd.f32 %v917, %v1876
        %v1878 = vpop.f32.mrf.mxu0
        %1879 = vmatprep.mubr.f32.mxu0 0.0
        %1880 = vmatmul.mubr.f32.gmra.mxu0 %v1224
        %v1881 = vpop.f32.mrf.mxu0
        %v1882 = vadd.f32 %v917, %v1881
        %v1883 = vpop.f32.mrf.mxu0
        %1884 = vmatprep.mubr.f32.mxu0 0.0
        %1885 = vmatmul.mubr.f32.gmra.mxu0 %v1227
        %v1886 = vpop.f32.mrf.mxu0
        %v1887 = vadd.f32 %v917, %v1886
        %v1888 = vpop.f32.mrf.mxu0
        %1889 = vmatprep.mubr.f32.mxu0 0.0
        %1890 = vmatmul.mubr.f32.gmra.mxu0 %v1230
        %v1891 = vpop.f32.mrf.mxu0
        %v1892 = vadd.f32 %v917, %v1891
        %v1893 = vpop.f32.mrf.mxu0
        %1894 = vmatprep.mubr.f32.mxu0 0.0
        %1895 = vmatmul.mubr.f32.gmra.mxu0 %v1233
        %v1896 = vpop.f32.mrf.mxu0
        %v1897 = vadd.f32 %v917, %v1896
        %v1898 = vpop.f32.mrf.mxu0
        %1899 = vmatprep.mubr.f32.mxu0 0.0
        %1900 = vmatmul.mubr.f32.gmra.mxu0 %v1236
        %v1901 = vpop.f32.mrf.mxu0
        %v1902 = vadd.f32 %v917, %v1901
        %v1903 = vpop.f32.mrf.mxu0
        %1904 = vmatprep.mubr.f32.mxu0 0.0
        %1905 = vmatmul.mubr.f32.gmra.mxu0 %v1239
        %v1906 = vpop.f32.mrf.mxu0
        %v1907 = vadd.f32 %v917, %v1906
        %v1908 = vpop.f32.mrf.mxu0
        %1909 = vmatprep.mubr.f32.mxu0 0.0
        %1910 = vmatmul.mubr.f32.gmra.mxu0 %v1242
        %v1911 = vpop.f32.mrf.mxu0
        %v1912 = vadd.f32 %v917, %v1911
        %v1913 = vpop.f32.mrf.mxu0
        %1914 = vmatprep.mubr.f32.mxu0 0.0
        %1915 = vmatmul.mubr.f32.gmra.mxu0 %v1245
        %v1916 = vpop.f32.mrf.mxu0
        %v1917 = vadd.f32 %v917, %v1916
        %v1918 = vpop.f32.mrf.mxu0
        %1919 = vmatprep.mubr.f32.mxu0 0.0
        %1920 = vmatmul.mubr.f32.gmra.mxu0 %v1248
        %v1921 = vpop.f32.mrf.mxu0
        %v1922 = vadd.f32 %v917, %v1921
        %v1923 = vpop.f32.mrf.mxu0
        %1924 = vmatprep.mubr.f32.mxu0 0.0
        %1925 = vmatmul.mubr.f32.gmra.mxu0 %v1251
        %v1926 = vpop.f32.mrf.mxu0
        %v1927 = vadd.f32 %v917, %v1926
        %v1928 = vpop.f32.mrf.mxu0
        %1929 = vmatprep.mubr.f32.mxu0 0.0
        %1930 = vmatmul.mubr.f32.gmra.mxu0 %v1254
        %v1931 = vpop.f32.mrf.mxu0
        %v1932 = vadd.f32 %v917, %v1931
        %v1933 = vpop.f32.mrf.mxu0
        %1934 = vmatprep.mubr.f32.mxu0 0.0
        %1935 = vmatmul.mubr.f32.gmra.mxu0 %v1257
        %v1936 = vpop.f32.mrf.mxu0
        %v1937 = vadd.f32 %v917, %v1936
        %v1938 = vpop.f32.mrf.mxu0
        %1939 = vmatprep.mubr.f32.mxu0 0.0
        %1940 = vmatmul.mubr.f32.gmra.mxu0 %v1260
        %v1941 = vpop.f32.mrf.mxu0
        %v1942 = vadd.f32 %v917, %v1941
        %v1943 = vpop.f32.mrf.mxu0
        %1944 = vmatprep.mubr.f32.mxu0 0.0
        %1945 = vmatmul.mubr.f32.gmra.mxu0 %v1263
        %v1946 = vpop.f32.mrf.mxu0
        %v1947 = vadd.f32 %v917, %v1946
        %v1948 = vpop.f32.mrf.mxu0
        %1949 = vmatprep.mubr.f32.mxu0 0.0
        %1950 = vmatmul.mubr.f32.gmra.mxu0 %v1266
        %v1951 = vpop.f32.mrf.mxu0
        %v1952 = vadd.f32 %v917, %v1951
        %v1953 = vpop.f32.mrf.mxu0
        %1954 = vmatprep.mubr.f32.mxu0 0.0
        %1955 = vmatmul.mubr.f32.gmra.mxu0 %v1269
        %v1956 = vpop.f32.mrf.mxu0
        %v1957 = vadd.f32 %v917, %v1956
        %v1958 = vpop.f32.mrf.mxu0
        %1959 = vmatprep.mubr.f32.mxu0 0.0
        %1960 = vmatmul.mubr.f32.gmra.mxu0 %v1272
        %v1961 = vpop.f32.mrf.mxu0
        %v1962 = vadd.f32 %v917, %v1961
        %v1963 = vpop.f32.mrf.mxu0
        %1964 = vmatprep.mubr.f32.mxu0 0.0
        %1965 = vmatmul.mubr.f32.gmra.mxu0 %v1275
        %v1966 = vpop.f32.mrf.mxu0
        %v1967 = vadd.f32 %v917, %v1966
        %v1968 = vpop.f32.mrf.mxu0
        %1969 = vmatprep.mubr.f32.mxu0 0.0
        %1970 = vmatmul.mubr.f32.gmra.mxu0 %v1278
        %v1971 = vpop.f32.mrf.mxu0
        %v1972 = vadd.f32 %v917, %v1971
        %v1973 = vpop.f32.mrf.mxu0
        %1974 = vmatprep.mubr.f32.mxu0 0.0
        %1975 = vmatmul.mubr.f32.gmra.mxu0 %v1281
        %v1976 = vpop.f32.mrf.mxu0
        %v1977 = vadd.f32 %v917, %v1976
        %v1978 = vpop.f32.mrf.mxu0
        %1979 = vmatprep.mubr.f32.mxu0 0.0
        %1980 = vmatmul.mubr.f32.gmra.mxu0 %v1284
        %v1981 = vpop.f32.mrf.mxu0
        %v1982 = vadd.f32 %v917, %v1981
        %v1983 = vpop.f32.mrf.mxu0
        %1984 = vmatprep.mubr.f32.mxu0 0.0
        %1985 = vmatmul.mubr.f32.gmra.mxu0 %v1287
        %v1986 = vpop.f32.mrf.mxu0
        %v1987 = vadd.f32 %v917, %v1986
        %v1988 = vpop.f32.mrf.mxu0
        %1989 = vmatprep.mubr.f32.mxu0 0.0
        %1990 = vmatmul.mubr.f32.gmra.mxu0 %v1290
        %v1991 = vpop.f32.mrf.mxu0
        %v1992 = vadd.f32 %v917, %v1991
        %v1993 = vpop.f32.mrf.mxu0
        %1994 = vmatprep.mubr.f32.mxu0 0.0
        %1995 = vmatmul.mubr.f32.gmra.mxu0 %v1293
        %v1996 = vpop.f32.mrf.mxu0
        %v1997 = vadd.f32 %v917, %v1996
        %v1998 = vpop.f32.mrf.mxu0
        %1999 = vmatprep.mubr.f32.mxu0 0.0
        %2000 = vmatmul.mubr.f32.gmra.mxu0 %v1296
        %v2001 = vpop.f32.mrf.mxu0
        %v2002 = vadd.f32 %v917, %v2001
        %v2003 = vpop.f32.mrf.mxu0
        %2004 = vmatprep.mubr.f32.mxu0 0.0
        %2005 = vmatmul.mubr.f32.gmra.mxu0 %v1299
        %v2006 = vpop.f32.mrf.mxu0
        %v2007 = vadd.f32 %v917, %v2006
        %v2008 = vpop.f32.mrf.mxu0
        %2009 = vmatprep.mubr.f32.mxu0 0.0
        %2010 = vmatmul.mubr.f32.gmra.mxu0 %v1302
        %v2011 = vpop.f32.mrf.mxu0
        %v2012 = vadd.f32 %v917, %v2011
        %v2013 = vpop.f32.mrf.mxu0
        %2014 = vmatprep.mubr.f32.mxu0 0.0
        %2015 = vmatmul.mubr.f32.gmra.mxu0 %v1305
        %v2016 = vpop.f32.mrf.mxu0
        %v2017 = vadd.f32 %v917, %v2016
        %v2018 = vpop.f32.mrf.mxu0
        %2019 = vmatprep.mubr.f32.mxu0 0.0
        %2020 = vmatmul.mubr.f32.gmra.mxu0 %v1308
        %v2021 = vpop.f32.mrf.mxu0
        %v2022 = vadd.f32 %v917, %v2021
        %v2023 = vpop.f32.mrf.mxu0
        %2024 = vdwg.mxu0
        %v2026 = vlaneseq
        %v2027 = vshrl.u32 %v2026, 7
        %v2028 = vsub.s32 0, %v2027
        %v2029 = vrot.slane %v782, %v2028
        %v2032 = vsel %vm919, 0.0, 0
        %2034 = vmatprep.subr.mxu0 0.0
        %2035 = vmatpush1.msra.mxu0 0.0
        %2036 = vmatprep.subr.mxu0 0.0
        %2037 = vmatpush1.msra.mxu0 0.0
        %2038 = vmatprep.subr.mxu0 0.0
        %2039 = vmatpush1.msra.mxu0 0.0
        %2040 = vmatprep.subr.mxu0 0.0
        %2041 = vmatpush1.msra.mxu0 0.0
        %2042 = vmatprep.subr.mxu0 0.0
        %2043 = vmatpush1.msra.mxu0 0.0
        %2044 = vmatprep.subr.mxu0 0.0
        %2045 = vmatpush1.msra.mxu0 0.0
        %2046 = vmatprep.subr.mxu0 0.0
        %2047 = vmatpush1.msra.mxu0 0.0
        %2048 = vmatprep.subr.mxu0 0.0
        %2049 = vmatpush1.msra.mxu0 0.0
        %2050 = vmatprep.subr.mxu0 0.0
        %2051 = vmatpush1.msra.mxu0 0.0
        %2052 = vmatprep.subr.mxu0 0.0
        %2053 = vmatpush1.msra.mxu0 0.0
        %2054 = vmatprep.subr.mxu0 0.0
        %2055 = vmatpush1.msra.mxu0 0.0
        %2056 = vmatprep.subr.mxu0 0.0
        %2057 = vmatpush1.msra.mxu0 0.0
        %2058 = vmatprep.subr.mxu0 0.0
        %2059 = vmatpush1.msra.mxu0 %v780
        %2060 = vmatprep.subr.mxu0 0.0
        %2061 = vmatpush1.msra.mxu0 %v779
        %2062 = vmatprep.subr.mxu0 0.0
        %2063 = vmatpush1.msra.mxu0 %v778
        %2064 = vmatprep.subr.mxu0 0.0
        %2065 = vmatpush1.msra.mxu0 %v777
        %2066 = vmatprep.subr.mxu0 0.0
        %2067 = vmatpush2.msra.mxu0 0.0
        %2068 = vmatprep.subr.mxu0 0.0
        %2069 = vmatpush2.msra.mxu0 0.0
        %2070 = vmatprep.subr.mxu0 0.0
        %2071 = vmatpush2.msra.mxu0 0.0
        %2072 = vmatprep.subr.mxu0 0.0
        %2073 = vmatpush2.msra.mxu0 0.0
        %2074 = vmatprep.subr.mxu0 0.0
        %2075 = vmatpush2.msra.mxu0 0.0
        %2076 = vmatprep.subr.mxu0 0.0
        %2077 = vmatpush2.msra.mxu0 0.0
        %2078 = vmatprep.subr.mxu0 0.0
        %2079 = vmatpush2.msra.mxu0 0.0
        %2080 = vmatprep.subr.mxu0 0.0
        %2081 = vmatpush2.msra.mxu0 0.0
        %2082 = vmatprep.subr.mxu0 0.0
        %2083 = vmatpush2.msra.mxu0 0.0
        %2084 = vmatprep.subr.mxu0 0.0
        %2085 = vmatpush2.msra.mxu0 0.0
        %2086 = vmatprep.subr.mxu0 0.0
        %2087 = vmatpush2.msra.mxu0 0.0
        %2088 = vmatprep.subr.mxu0 0.0
        %2089 = vmatpush2.msra.mxu0 0.0
        %2090 = vmatprep.subr.mxu0 0.0
        %2091 = vmatpush2.msra.mxu0 0.0
        %2092 = vmatprep.subr.mxu0 0.0
        %2093 = vmatpush2.msra.mxu0 0.0
        %2094 = vmatprep.subr.mxu0 0.0
        %2095 = vmatpush2.msra.mxu0 0.0
        %2096 = vmatprep.subr.mxu0 0.0
        %2097 = vmatpush2.msra.mxu0 0.0
        %2098 = vmatprep.mubr.f32.mxu0 0.0
        %2099 = vmatmul.mubr.f32.gmra.mxu0 %v2032
        %v2100 = vpop.f32.mrf.mxu0
        %v2101 = vadd.f32 %v2029, %v2100
        %v2102 = vpop.f32.mrf.mxu0
        %2103 = vmatprep.mubr.f32.mxu0 0.0
        %2104 = vmatmul.mubr.f32.gmra.mxu0 %v2032
        %v2105 = vpop.f32.mrf.mxu0
        %v2106 = vadd.f32 %v2029, %v2105
        %v2107 = vpop.f32.mrf.mxu0
        %2108 = vmatprep.mubr.f32.mxu0 0.0
        %2109 = vmatmul.mubr.f32.gmra.mxu0 %v2032
        %v2110 = vpop.f32.mrf.mxu0
        %v2111 = vadd.f32 %v2029, %v2110
        %v2112 = vpop.f32.mrf.mxu0
        %2113 = vmatprep.mubr.f32.mxu0 0.0
        %2114 = vmatmul.mubr.f32.gmra.mxu0 %v2032
        %v2115 = vpop.f32.mrf.mxu0
        %v2116 = vadd.f32 %v2029, %v2115
        %v2117 = vpop.f32.mrf.mxu0
        %2118 = vmatprep.mubr.f32.mxu0 0.0
        %2119 = vmatmul.mubr.f32.gmra.mxu0 %v2032
        %v2120 = vpop.f32.mrf.mxu0
        %v2121 = vadd.f32 %v2029, %v2120
        %v2122 = vpop.f32.mrf.mxu0
        %2123 = vmatprep.mubr.f32.mxu0 0.0
        %2124 = vmatmul.mubr.f32.gmra.mxu0 %v2032
        %v2125 = vpop.f32.mrf.mxu0
        %v2126 = vadd.f32 %v2029, %v2125
        %v2127 = vpop.f32.mrf.mxu0
        %2128 = vmatprep.mubr.f32.mxu0 0.0
        %2129 = vmatmul.mubr.f32.gmra.mxu0 %v2032
        %v2130 = vpop.f32.mrf.mxu0
        %v2131 = vadd.f32 %v2029, %v2130
        %v2132 = vpop.f32.mrf.mxu0
        %2133 = vmatprep.mubr.f32.mxu0 0.0
        %2134 = vmatmul.mubr.f32.gmra.mxu0 %v2032
        %v2135 = vpop.f32.mrf.mxu0
        %v2136 = vadd.f32 %v2029, %v2135
        %v2137 = vpop.f32.mrf.mxu0
        %2138 = vmatprep.mubr.f32.mxu0 0.0
        %2139 = vmatmul.mubr.f32.gmra.mxu0 %v2032
        %v2140 = vpop.f32.mrf.mxu0
        %v2141 = vadd.f32 %v2029, %v2140
        %v2142 = vpop.f32.mrf.mxu0
        %2143 = vmatprep.mubr.f32.mxu0 0.0
        %2144 = vmatmul.mubr.f32.gmra.mxu0 %v2032
        %v2145 = vpop.f32.mrf.mxu0
        %v2146 = vadd.f32 %v2029, %v2145
        %v2147 = vpop.f32.mrf.mxu0
        %2148 = vmatprep.mubr.f32.mxu0 0.0
        %2149 = vmatmul.mubr.f32.gmra.mxu0 %v2032
        %v2150 = vpop.f32.mrf.mxu0
        %v2151 = vadd.f32 %v2029, %v2150
        %v2152 = vpop.f32.mrf.mxu0
        %2153 = vmatprep.mubr.f32.mxu0 0.0
        %2154 = vmatmul.mubr.f32.gmra.mxu0 %v2032
        %v2155 = vpop.f32.mrf.mxu0
        %v2156 = vadd.f32 %v2029, %v2155
        %v2157 = vpop.f32.mrf.mxu0
        %2158 = vmatprep.mubr.f32.mxu0 0.0
        %2159 = vmatmul.mubr.f32.gmra.mxu0 %v2032
        %v2160 = vpop.f32.mrf.mxu0
        %v2161 = vadd.f32 %v2029, %v2160
        %v2162 = vpop.f32.mrf.mxu0
        %2163 = vdwg.mxu0
        %v2164 = vadd.f32 %v1377, %v2101
        %v2165 = vadd.f32 %v1382, %v2106
        %v2166 = vadd.f32 %v1387, %v2111
        %v2167 = vadd.f32 %v1392, %v2116
        %v2168 = vadd.f32 %v1397, %v2121
        %v2169 = vadd.f32 %v1402, %v2126
        %v2170 = vadd.f32 %v1407, %v2131
        %v2171 = vadd.f32 %v1412, %v2136
        %v2172 = vadd.f32 %v1417, %v2141
        %v2173 = vadd.f32 %v1422, %v2146
        %v2174 = vadd.f32 %v1427, %v2151
        %v2175 = vadd.f32 %v1432, %v2156
        %v2176 = vadd.f32 %v1437, %v2161
        %v2177 = vsub.f32 0.0, %v2164
        %v2178 = vsub.f32 0.0, %v2165
        %v2179 = vsub.f32 0.0, %v2166
        %v2180 = vsub.f32 0.0, %v2167
        %v2181 = vsub.f32 0.0, %v2168
        %v2182 = vsub.f32 0.0, %v2169
        %v2183 = vsub.f32 0.0, %v2170
        %v2184 = vsub.f32 0.0, %v2171
        %v2185 = vsub.f32 0.0, %v2172
        %v2186 = vsub.f32 0.0, %v2173
        %v2187 = vsub.f32 0.0, %v2174
        %v2188 = vsub.f32 0.0, %v2175
        %v2189 = vsub.f32 0.0, %v2176
        %v2190 = vmul.f32 %v2177, 1.442695
        %v2191 = vpow.pop %v2190
        %v2192 = vmul.f32 %v2178, 1.442695
        %v2193 = vpow.pop %v2192
        %v2194 = vmul.f32 %v2179, 1.442695
        %v2195 = vpow.pop %v2194
        %v2196 = vmul.f32 %v2180, 1.442695
        %v2197 = vpow.pop %v2196
        %v2198 = vmul.f32 %v2181, 1.442695
        %v2199 = vpow.pop %v2198
        %v2200 = vmul.f32 %v2182, 1.442695
        %v2201 = vpow.pop %v2200
        %v2202 = vmul.f32 %v2183, 1.442695
        %v2203 = vpow.pop %v2202
        %v2204 = vmul.f32 %v2184, 1.442695
        %v2205 = vpow.pop %v2204
        %v2206 = vmul.f32 %v2185, 1.442695
        %v2207 = vpow.pop %v2206
        %v2208 = vmul.f32 %v2186, 1.442695
        %v2209 = vpow.pop %v2208
        %v2210 = vmul.f32 %v2187, 1.442695
        %v2211 = vpow.pop %v2210
        %v2212 = vmul.f32 %v2188, 1.442695
        %v2213 = vpow.pop %v2212
        %v2214 = vmul.f32 %v2189, 1.442695
        %v2215 = vpow.pop %v2214
        %v2216 = vadd.f32 %v2191, 1.0
        %v2217 = vadd.f32 %v2193, 1.0
        %v2218 = vadd.f32 %v2195, 1.0
        %v2219 = vadd.f32 %v2197, 1.0
        %v2220 = vadd.f32 %v2199, 1.0
        %v2221 = vadd.f32 %v2201, 1.0
        %v2222 = vadd.f32 %v2203, 1.0
        %v2223 = vadd.f32 %v2205, 1.0
        %v2224 = vadd.f32 %v2207, 1.0
        %v2225 = vadd.f32 %v2209, 1.0
        %v2226 = vadd.f32 %v2211, 1.0
        %v2227 = vadd.f32 %v2213, 1.0
        %v2228 = vadd.f32 %v2215, 1.0
        %v2229 = vrcp.pop %v2216
        %v2230 = vrcp.pop %v2217
        %v2231 = vrcp.pop %v2218
        %v2232 = vrcp.pop %v2219
        %v2233 = vrcp.pop %v2220
        %v2234 = vrcp.pop %v2221
        %v2235 = vrcp.pop %v2222
        %v2236 = vrcp.pop %v2223
        %v2237 = vrcp.pop %v2224
        %v2238 = vrcp.pop %v2225
        %v2239 = vrcp.pop %v2226
        %v2240 = vrcp.pop %v2227
        %v2241 = vrcp.pop %v2228
        %2255 = vrot.lane.b32.xlu0 %v2101, 64
        %v2256 = vpop.permute.xlu0 %2255
        %2257 = vrot.lane.b32.xlu0 %v2106, 64
        %v2258 = vpop.permute.xlu0 %2257
        %2259 = vrot.lane.b32.xlu0 %v2111, 64
        %v2260 = vpop.permute.xlu0 %2259
        %2261 = vrot.lane.b32.xlu0 %v2116, 64
        %v2262 = vpop.permute.xlu0 %2261
        %2263 = vrot.lane.b32.xlu0 %v2121, 64
        %v2264 = vpop.permute.xlu0 %2263
        %2265 = vrot.lane.b32.xlu0 %v2126, 64
        %v2266 = vpop.permute.xlu0 %2265
        %2267 = vrot.lane.b32.xlu0 %v2131, 64
        %v2268 = vpop.permute.xlu0 %2267
        %2269 = vrot.lane.b32.xlu0 %v2136, 64
        %v2270 = vpop.permute.xlu0 %2269
        %2271 = vrot.lane.b32.xlu0 %v2141, 64
        %v2272 = vpop.permute.xlu0 %2271
        %2273 = vrot.lane.b32.xlu0 %v2146, 64
        %v2274 = vpop.permute.xlu0 %2273
        %2275 = vrot.lane.b32.xlu0 %v2151, 64
        %v2276 = vpop.permute.xlu0 %2275
        %2277 = vrot.lane.b32.xlu0 %v2156, 64
        %v2278 = vpop.permute.xlu0 %2277
        %2279 = vrot.lane.b32.xlu0 %v2161, 64
        %v2280 = vpop.permute.xlu0 %2279
        %v2294 = vmul.f32 %v2229, %v2256
        %v2295 = vmul.f32 %v2230, %v2258
        %v2296 = vmul.f32 %v2231, %v2260
        %v2297 = vmul.f32 %v2232, %v2262
        %v2298 = vmul.f32 %v2233, %v2264
        %v2299 = vmul.f32 %v2234, %v2266
        %v2300 = vmul.f32 %v2235, %v2268
        %v2301 = vmul.f32 %v2236, %v2270
        %v2302 = vmul.f32 %v2237, %v2272
        %v2303 = vmul.f32 %v2238, %v2274
        %v2304 = vmul.f32 %v2239, %v2276
        %v2305 = vmul.f32 %v2240, %v2278
        %v2306 = vmul.f32 %v2241, %v2280
        %2320 = vrot.lane.b32.xlu0 %v2294, 64
        %v2321 = vpop.permute.xlu0 %2320
        %2322 = vrot.lane.b32.xlu0 %v2295, 64
        %v2323 = vpop.permute.xlu0 %2322
        %2324 = vrot.lane.b32.xlu0 %v2296, 64
        %v2325 = vpop.permute.xlu0 %2324
        %2326 = vrot.lane.b32.xlu0 %v2297, 64
        %v2327 = vpop.permute.xlu0 %2326
        %2328 = vrot.lane.b32.xlu0 %v2298, 64
        %v2329 = vpop.permute.xlu0 %2328
        %2330 = vrot.lane.b32.xlu0 %v2299, 64
        %v2331 = vpop.permute.xlu0 %2330
        %2332 = vrot.lane.b32.xlu0 %v2300, 64
        %v2333 = vpop.permute.xlu0 %2332
        %2334 = vrot.lane.b32.xlu0 %v2301, 64
        %v2335 = vpop.permute.xlu0 %2334
        %2336 = vrot.lane.b32.xlu0 %v2302, 64
        %v2337 = vpop.permute.xlu0 %2336
        %2338 = vrot.lane.b32.xlu0 %v2303, 64
        %v2339 = vpop.permute.xlu0 %2338
        %2340 = vrot.lane.b32.xlu0 %v2304, 64
        %v2341 = vpop.permute.xlu0 %2340
        %2342 = vrot.lane.b32.xlu0 %v2305, 64
        %v2343 = vpop.permute.xlu0 %2342
        %2344 = vrot.lane.b32.xlu0 %v2306, 64
        %v2345 = vpop.permute.xlu0 %2344
        %v2359 = vadd.f32 %v1377, %v2321
        %v2360 = vadd.f32 %v1382, %v2323
        %v2361 = vadd.f32 %v1387, %v2325
        %v2362 = vadd.f32 %v1392, %v2327
        %v2363 = vadd.f32 %v1397, %v2329
        %v2364 = vadd.f32 %v1402, %v2331
        %v2365 = vadd.f32 %v1407, %v2333
        %v2366 = vadd.f32 %v1412, %v2335
        %v2367 = vadd.f32 %v1417, %v2337
        %v2368 = vadd.f32 %v1422, %v2339
        %v2369 = vadd.f32 %v1427, %v2341
        %v2370 = vadd.f32 %v1432, %v2343
        %v2371 = vadd.f32 %v1437, %v2345
        %v2372 = vtanh.pop %v2359
        %v2373 = vtanh.pop %v2360
        %v2374 = vtanh.pop %v2361
        %v2375 = vtanh.pop %v2362
        %v2376 = vtanh.pop %v2363
        %v2377 = vtanh.pop %v2364
        %v2378 = vtanh.pop %v2365
        %v2379 = vtanh.pop %v2366
        %v2380 = vtanh.pop %v2367
        %v2381 = vtanh.pop %v2368
        %v2382 = vtanh.pop %v2369
        %v2383 = vtanh.pop %v2370
        %v2384 = vtanh.pop %v2371
        %v2385 = vsub.f32 1.0, %v2229
        %v2386 = vsub.f32 1.0, %v2230
        %v2387 = vsub.f32 1.0, %v2231
        %v2388 = vsub.f32 1.0, %v2232
        %v2389 = vsub.f32 1.0, %v2233
        %v2390 = vsub.f32 1.0, %v2234
        %v2391 = vsub.f32 1.0, %v2235
        %v2392 = vsub.f32 1.0, %v2236
        %v2393 = vsub.f32 1.0, %v2237
        %v2394 = vsub.f32 1.0, %v2238
        %v2395 = vsub.f32 1.0, %v2239
        %v2396 = vsub.f32 1.0, %v2240
        %v2397 = vsub.f32 1.0, %v2241
        %2411 = vrot.lane.b32.xlu0 %v2372, 96
        %v2412 = vpop.permute.xlu0 %2411
        %2413 = vrot.lane.b32.xlu0 %v2373, 96
        %v2414 = vpop.permute.xlu0 %2413
        %2415 = vrot.lane.b32.xlu0 %v2374, 96
        %v2416 = vpop.permute.xlu0 %2415
        %2417 = vrot.lane.b32.xlu0 %v2375, 96
        %v2418 = vpop.permute.xlu0 %2417
        %2419 = vrot.lane.b32.xlu0 %v2376, 96
        %v2420 = vpop.permute.xlu0 %2419
        %2421 = vrot.lane.b32.xlu0 %v2377, 96
        %v2422 = vpop.permute.xlu0 %2421
        %2423 = vrot.lane.b32.xlu0 %v2378, 96
        %v2424 = vpop.permute.xlu0 %2423
        %2425 = vrot.lane.b32.xlu0 %v2379, 96
        %v2426 = vpop.permute.xlu0 %2425
        %2427 = vrot.lane.b32.xlu0 %v2380, 96
        %v2428 = vpop.permute.xlu0 %2427
        %2429 = vrot.lane.b32.xlu0 %v2381, 96
        %v2430 = vpop.permute.xlu0 %2429
        %2431 = vrot.lane.b32.xlu0 %v2382, 96
        %v2432 = vpop.permute.xlu0 %2431
        %2433 = vrot.lane.b32.xlu0 %v2383, 96
        %v2434 = vpop.permute.xlu0 %2433
        %2435 = vrot.lane.b32.xlu0 %v2384, 96
        %v2436 = vpop.permute.xlu0 %2435
        %v2450 = vmul.f32 %v2385, %v2412
        %v2451 = vmul.f32 %v2386, %v2414
        %v2452 = vmul.f32 %v2387, %v2416
        %v2453 = vmul.f32 %v2388, %v2418
        %v2454 = vmul.f32 %v2389, %v2420
        %v2455 = vmul.f32 %v2390, %v2422
        %v2456 = vmul.f32 %v2391, %v2424
        %v2457 = vmul.f32 %v2392, %v2426
        %v2458 = vmul.f32 %v2393, %v2428
        %v2459 = vmul.f32 %v2394, %v2430
        %v2460 = vmul.f32 %v2395, %v2432
        %v2461 = vmul.f32 %v2396, %v2434
        %v2462 = vmul.f32 %v2397, %v2436
        %v2463 = vmul.f32 %v2229, 0.0
        %v2464 = vmul.f32 %v2230, 0.0
        %v2465 = vmul.f32 %v2231, 0.0
        %v2466 = vmul.f32 %v2232, 0.0
        %v2467 = vmul.f32 %v2233, 0.0
        %v2468 = vmul.f32 %v2234, 0.0
        %v2469 = vmul.f32 %v2235, 0.0
        %v2470 = vmul.f32 %v2236, 0.0
        %v2471 = vmul.f32 %v2237, 0.0
        %v2472 = vmul.f32 %v2238, 0.0
        %v2473 = vmul.f32 %v2239, 0.0
        %v2474 = vmul.f32 %v2240, 0.0
        %v2475 = vmul.f32 %v2241, 0.0
        %v2476 = vadd.f32 %v2450, %v2463
        %v2477 = vadd.f32 %v2451, %v2464
        %v2478 = vadd.f32 %v2452, %v2465
        %v2479 = vadd.f32 %v2453, %v2466
        %v2480 = vadd.f32 %v2454, %v2467
        %v2481 = vadd.f32 %v2455, %v2468
        %v2482 = vadd.f32 %v2456, %v2469
        %v2483 = vadd.f32 %v2457, %v2470
        %v2484 = vadd.f32 %v2458, %v2471
        %v2485 = vadd.f32 %v2459, %v2472
        %v2486 = vadd.f32 %v2460, %v2473
        %v2487 = vadd.f32 %v2461, %v2474
        %v2488 = vadd.f32 %v2462, %v2475
        %2502 = vrot.lane.b32.xlu0 %v2476, 96
        %v2503 = vpop.permute.xlu0 %2502
        %2504 = vrot.lane.b32.xlu0 %v2477, 96
        %v2505 = vpop.permute.xlu0 %2504
        %2506 = vrot.lane.b32.xlu0 %v2478, 96
        %v2507 = vpop.permute.xlu0 %2506
        %2508 = vrot.lane.b32.xlu0 %v2479, 96
        %v2509 = vpop.permute.xlu0 %2508
        %2510 = vrot.lane.b32.xlu0 %v2480, 96
        %v2511 = vpop.permute.xlu0 %2510
        %2512 = vrot.lane.b32.xlu0 %v2481, 96
        %v2513 = vpop.permute.xlu0 %2512
        %2514 = vrot.lane.b32.xlu0 %v2482, 96
        %v2515 = vpop.permute.xlu0 %2514
        %2516 = vrot.lane.b32.xlu0 %v2483, 96
        %v2517 = vpop.permute.xlu0 %2516
        %2518 = vrot.lane.b32.xlu0 %v2484, 96
        %v2519 = vpop.permute.xlu0 %2518
        %2520 = vrot.lane.b32.xlu0 %v2485, 96
        %v2521 = vpop.permute.xlu0 %2520
        %2522 = vrot.lane.b32.xlu0 %v2486, 96
        %v2523 = vpop.permute.xlu0 %2522
        %2524 = vrot.lane.b32.xlu0 %v2487, 96
        %v2525 = vpop.permute.xlu0 %2524
        %2526 = vrot.lane.b32.xlu0 %v2488, 96
        %v2527 = vpop.permute.xlu0 %2526
        %2541 = vst.msk [vmem:[%s770] sm:$0xff] %vm919, %v2503
        %2542 = vst.msk [vmem:[%s770 + $0x8] sm:$0xff] %vm919, %v2505
        %2543 = vst.msk [vmem:[%s770 + $0x10] sm:$0xff] %vm919, %v2507
        %2544 = vst.msk [vmem:[%s770 + $0x18] sm:$0xff] %vm919, %v2509
        %2545 = vst.msk [vmem:[%s770 + $0x20] sm:$0xff] %vm919, %v2511
        %2546 = vst.msk [vmem:[%s770 + $0x28] sm:$0xff] %vm919, %v2513
        %2547 = vst.msk [vmem:[%s770 + $0x30] sm:$0xff] %vm919, %v2515
        %2548 = vst.msk [vmem:[%s770 + $0x38] sm:$0xff] %vm919, %v2517
        %2549 = vst.msk [vmem:[%s770 + $0x40] sm:$0xff] %vm919, %v2519
        %2550 = vst.msk [vmem:[%s770 + $0x48] sm:$0xff] %vm919, %v2521
        %2551 = vst.msk [vmem:[%s770 + $0x50] sm:$0xff] %vm919, %v2523
        %2552 = vst.msk [vmem:[%s770 + $0x58] sm:$0xff] %vm919, %v2525
        %2553 = vst.msk [vmem:[%s770 + $0x60] sm:$0xff] %vm919, %v2527
        %v2554 = vsel %vm919, %v2503, 0
        %v2556 = vsel %vm919, %v2505, 0
        %v2558 = vsel %vm919, %v2507, 0
        %v2560 = vsel %vm919, %v2509, 0
        %v2562 = vsel %vm919, %v2511, 0
        %v2564 = vsel %vm919, %v2513, 0
        %v2566 = vsel %vm919, %v2515, 0
        %v2568 = vsel %vm919, %v2517, 0
        %v2570 = vsel %vm919, %v2519, 0
        %v2572 = vsel %vm919, %v2521, 0
        %v2574 = vsel %vm919, %v2523, 0
        %v2576 = vsel %vm919, %v2525, 0
        %v2578 = vsel %vm919, %v2527, 0
        %2580 = vmatprep.subr.mxu0 0.0
        %2581 = vmatpush1.msra.mxu0 0.0
        %2582 = vmatprep.subr.mxu0 0.0
        %2583 = vmatpush1.msra.mxu0 0.0
        %2584 = vmatprep.subr.mxu0 0.0
        %2585 = vmatpush1.msra.mxu0 0.0
        %2586 = vmatprep.subr.mxu0 0.0
        %2587 = vmatpush1.msra.mxu0 0.0
        %2588 = vmatprep.subr.mxu0 0.0
        %2589 = vmatpush1.msra.mxu0 0.0
        %2590 = vmatprep.subr.mxu0 0.0
        %2591 = vmatpush1.msra.mxu0 0.0
        %2592 = vmatprep.subr.mxu0 0.0
        %2593 = vmatpush1.msra.mxu0 0.0
        %2594 = vmatprep.subr.mxu0 0.0
        %2595 = vmatpush1.msra.mxu0 0.0
        %2596 = vmatprep.subr.mxu0 0.0
        %2597 = vmatpush1.msra.mxu0 0.0
        %2598 = vmatprep.subr.mxu0 0.0
        %2599 = vmatpush1.msra.mxu0 0.0
        %2600 = vmatprep.subr.mxu0 0.0
        %2601 = vmatpush1.msra.mxu0 0.0
        %2602 = vmatprep.subr.mxu0 0.0
        %2603 = vmatpush1.msra.mxu0 0.0
        %2604 = vmatprep.subr.mxu0 0.0
        %2605 = vmatpush1.msra.mxu0 %v780
        %2606 = vmatprep.subr.mxu0 0.0
        %2607 = vmatpush1.msra.mxu0 %v779
        %2608 = vmatprep.subr.mxu0 0.0
        %2609 = vmatpush1.msra.mxu0 %v778
        %2610 = vmatprep.subr.mxu0 0.0
        %2611 = vmatpush1.msra.mxu0 %v777
        %2612 = vmatprep.subr.mxu0 0.0
        %2613 = vmatpush2.msra.mxu0 0.0
        %2614 = vmatprep.subr.mxu0 0.0
        %2615 = vmatpush2.msra.mxu0 0.0
        %2616 = vmatprep.subr.mxu0 0.0
        %2617 = vmatpush2.msra.mxu0 0.0
        %2618 = vmatprep.subr.mxu0 0.0
        %2619 = vmatpush2.msra.mxu0 0.0
        %2620 = vmatprep.subr.mxu0 0.0
        %2621 = vmatpush2.msra.mxu0 0.0
        %2622 = vmatprep.subr.mxu0 0.0
        %2623 = vmatpush2.msra.mxu0 0.0
        %2624 = vmatprep.subr.mxu0 0.0
        %2625 = vmatpush2.msra.mxu0 0.0
        %2626 = vmatprep.subr.mxu0 0.0
        %2627 = vmatpush2.msra.mxu0 0.0
        %2628 = vmatprep.subr.mxu0 0.0
        %2629 = vmatpush2.msra.mxu0 0.0
        %2630 = vmatprep.subr.mxu0 0.0
        %2631 = vmatpush2.msra.mxu0 0.0
        %2632 = vmatprep.subr.mxu0 0.0
        %2633 = vmatpush2.msra.mxu0 0.0
        %2634 = vmatprep.subr.mxu0 0.0
        %2635 = vmatpush2.msra.mxu0 0.0
        %2636 = vmatprep.subr.mxu0 0.0
        %2637 = vmatpush2.msra.mxu0 0.0
        %2638 = vmatprep.subr.mxu0 0.0
        %2639 = vmatpush2.msra.mxu0 0.0
        %2640 = vmatprep.subr.mxu0 0.0
        %2641 = vmatpush2.msra.mxu0 0.0
        %2642 = vmatprep.subr.mxu0 0.0
        %2643 = vmatpush2.msra.mxu0 0.0
        %2644 = vmatprep.mubr.f32.mxu0 0.0
        %2645 = vmatmul.mubr.f32.gmra.mxu0 %v2554
        %v2646 = vpop.f32.mrf.mxu0
        %v2647 = vadd.f32 %v2029, %v2646
        %v2648 = vpop.f32.mrf.mxu0
        %2649 = vmatprep.mubr.f32.mxu0 0.0
        %2650 = vmatmul.mubr.f32.gmra.mxu0 %v2556
        %v2651 = vpop.f32.mrf.mxu0
        %v2652 = vadd.f32 %v2029, %v2651
        %v2653 = vpop.f32.mrf.mxu0
        %2654 = vmatprep.mubr.f32.mxu0 0.0
        %2655 = vmatmul.mubr.f32.gmra.mxu0 %v2558
        %v2656 = vpop.f32.mrf.mxu0
        %v2657 = vadd.f32 %v2029, %v2656
        %v2658 = vpop.f32.mrf.mxu0
        %2659 = vmatprep.mubr.f32.mxu0 0.0
        %2660 = vmatmul.mubr.f32.gmra.mxu0 %v2560
        %v2661 = vpop.f32.mrf.mxu0
        %v2662 = vadd.f32 %v2029, %v2661
        %v2663 = vpop.f32.mrf.mxu0
        %2664 = vmatprep.mubr.f32.mxu0 0.0
        %2665 = vmatmul.mubr.f32.gmra.mxu0 %v2562
        %v2666 = vpop.f32.mrf.mxu0
        %v2667 = vadd.f32 %v2029, %v2666
        %v2668 = vpop.f32.mrf.mxu0
        %2669 = vmatprep.mubr.f32.mxu0 0.0
        %2670 = vmatmul.mubr.f32.gmra.mxu0 %v2564
        %v2671 = vpop.f32.mrf.mxu0
        %v2672 = vadd.f32 %v2029, %v2671
        %v2673 = vpop.f32.mrf.mxu0
        %2674 = vmatprep.mubr.f32.mxu0 0.0
        %2675 = vmatmul.mubr.f32.gmra.mxu0 %v2566
        %v2676 = vpop.f32.mrf.mxu0
        %v2677 = vadd.f32 %v2029, %v2676
        %v2678 = vpop.f32.mrf.mxu0
        %2679 = vmatprep.mubr.f32.mxu0 0.0
        %2680 = vmatmul.mubr.f32.gmra.mxu0 %v2568
        %v2681 = vpop.f32.mrf.mxu0
        %v2682 = vadd.f32 %v2029, %v2681
        %v2683 = vpop.f32.mrf.mxu0
        %2684 = vmatprep.mubr.f32.mxu0 0.0
        %2685 = vmatmul.mubr.f32.gmra.mxu0 %v2570
        %v2686 = vpop.f32.mrf.mxu0
        %v2687 = vadd.f32 %v2029, %v2686
        %v2688 = vpop.f32.mrf.mxu0
        %2689 = vmatprep.mubr.f32.mxu0 0.0
        %2690 = vmatmul.mubr.f32.gmra.mxu0 %v2572
        %v2691 = vpop.f32.mrf.mxu0
        %v2692 = vadd.f32 %v2029, %v2691
        %v2693 = vpop.f32.mrf.mxu0
        %2694 = vmatprep.mubr.f32.mxu0 0.0
        %2695 = vmatmul.mubr.f32.gmra.mxu0 %v2574
        %v2696 = vpop.f32.mrf.mxu0
        %v2697 = vadd.f32 %v2029, %v2696
        %v2698 = vpop.f32.mrf.mxu0
        %2699 = vmatprep.mubr.f32.mxu0 0.0
        %2700 = vmatmul.mubr.f32.gmra.mxu0 %v2576
        %v2701 = vpop.f32.mrf.mxu0
        %v2702 = vadd.f32 %v2029, %v2701
        %v2703 = vpop.f32.mrf.mxu0
        %2704 = vmatprep.mubr.f32.mxu0 0.0
        %2705 = vmatmul.mubr.f32.gmra.mxu0 %v2578
        %v2706 = vpop.f32.mrf.mxu0
        %v2707 = vadd.f32 %v2029, %v2706
        %v2708 = vpop.f32.mrf.mxu0
        %2709 = vdwg.mxu0
        %v2710 = vadd.f32 %v1442, %v2647
        %v2711 = vadd.f32 %v1447, %v2652
        %v2712 = vadd.f32 %v1452, %v2657
        %v2713 = vadd.f32 %v1457, %v2662
        %v2714 = vadd.f32 %v1462, %v2667
        %v2715 = vadd.f32 %v1467, %v2672
        %v2716 = vadd.f32 %v1472, %v2677
        %v2717 = vadd.f32 %v1477, %v2682
        %v2718 = vadd.f32 %v1482, %v2687
        %v2719 = vadd.f32 %v1487, %v2692
        %v2720 = vadd.f32 %v1492, %v2697
        %v2721 = vadd.f32 %v1497, %v2702
        %v2722 = vadd.f32 %v1502, %v2707
        %v2723 = vsub.f32 0.0, %v2710
        %v2724 = vsub.f32 0.0, %v2711
        %v2725 = vsub.f32 0.0, %v2712
        %v2726 = vsub.f32 0.0, %v2713
        %v2727 = vsub.f32 0.0, %v2714
        %v2728 = vsub.f32 0.0, %v2715
        %v2729 = vsub.f32 0.0, %v2716
        %v2730 = vsub.f32 0.0, %v2717
        %v2731 = vsub.f32 0.0, %v2718
        %v2732 = vsub.f32 0.0, %v2719
        %v2733 = vsub.f32 0.0, %v2720
        %v2734 = vsub.f32 0.0, %v2721
        %v2735 = vsub.f32 0.0, %v2722
        %v2736 = vmul.f32 %v2723, 1.442695
        %v2737 = vpow.pop %v2736
        %v2738 = vmul.f32 %v2724, 1.442695
        %v2739 = vpow.pop %v2738
        %v2740 = vmul.f32 %v2725, 1.442695
        %v2741 = vpow.pop %v2740
        %v2742 = vmul.f32 %v2726, 1.442695
        %v2743 = vpow.pop %v2742
        %v2744 = vmul.f32 %v2727, 1.442695
        %v2745 = vpow.pop %v2744
        %v2746 = vmul.f32 %v2728, 1.442695
        %v2747 = vpow.pop %v2746
        %v2748 = vmul.f32 %v2729, 1.442695
        %v2749 = vpow.pop %v2748
        %v2750 = vmul.f32 %v2730, 1.442695
        %v2751 = vpow.pop %v2750
        %v2752 = vmul.f32 %v2731, 1.442695
        %v2753 = vpow.pop %v2752
        %v2754 = vmul.f32 %v2732, 1.442695
        %v2755 = vpow.pop %v2754
        %v2756 = vmul.f32 %v2733, 1.442695
        %v2757 = vpow.pop %v2756
        %v2758 = vmul.f32 %v2734, 1.442695
        %v2759 = vpow.pop %v2758
        %v2760 = vmul.f32 %v2735, 1.442695
        %v2761 = vpow.pop %v2760
        %v2762 = vadd.f32 %v2737, 1.0
        %v2763 = vadd.f32 %v2739, 1.0
        %v2764 = vadd.f32 %v2741, 1.0
        %v2765 = vadd.f32 %v2743, 1.0
        %v2766 = vadd.f32 %v2745, 1.0
        %v2767 = vadd.f32 %v2747, 1.0
        %v2768 = vadd.f32 %v2749, 1.0
        %v2769 = vadd.f32 %v2751, 1.0
        %v2770 = vadd.f32 %v2753, 1.0
        %v2771 = vadd.f32 %v2755, 1.0
        %v2772 = vadd.f32 %v2757, 1.0
        %v2773 = vadd.f32 %v2759, 1.0
        %v2774 = vadd.f32 %v2761, 1.0
        %v2775 = vrcp.pop %v2762
        %v2776 = vrcp.pop %v2763
        %v2777 = vrcp.pop %v2764
        %v2778 = vrcp.pop %v2765
        %v2779 = vrcp.pop %v2766
        %v2780 = vrcp.pop %v2767
        %v2781 = vrcp.pop %v2768
        %v2782 = vrcp.pop %v2769
        %v2783 = vrcp.pop %v2770
        %v2784 = vrcp.pop %v2771
        %v2785 = vrcp.pop %v2772
        %v2786 = vrcp.pop %v2773
        %v2787 = vrcp.pop %v2774
        %2801 = vrot.lane.b32.xlu0 %v2647, 64
        %v2802 = vpop.permute.xlu0 %2801
        %2803 = vrot.lane.b32.xlu0 %v2652, 64
        %v2804 = vpop.permute.xlu0 %2803
        %2805 = vrot.lane.b32.xlu0 %v2657, 64
        %v2806 = vpop.permute.xlu0 %2805
        %2807 = vrot.lane.b32.xlu0 %v2662, 64
        %v2808 = vpop.permute.xlu0 %2807
        %2809 = vrot.lane.b32.xlu0 %v2667, 64
        %v2810 = vpop.permute.xlu0 %2809
        %2811 = vrot.lane.b32.xlu0 %v2672, 64
        %v2812 = vpop.permute.xlu0 %2811
        %2813 = vrot.lane.b32.xlu0 %v2677, 64
        %v2814 = vpop.permute.xlu0 %2813
        %2815 = vrot.lane.b32.xlu0 %v2682, 64
        %v2816 = vpop.permute.xlu0 %2815
        %2817 = vrot.lane.b32.xlu0 %v2687, 64
        %v2818 = vpop.permute.xlu0 %2817
        %2819 = vrot.lane.b32.xlu0 %v2692, 64
        %v2820 = vpop.permute.xlu0 %2819
        %2821 = vrot.lane.b32.xlu0 %v2697, 64
        %v2822 = vpop.permute.xlu0 %2821
        %2823 = vrot.lane.b32.xlu0 %v2702, 64
        %v2824 = vpop.permute.xlu0 %2823
        %2825 = vrot.lane.b32.xlu0 %v2707, 64
        %v2826 = vpop.permute.xlu0 %2825
        %v2840 = vmul.f32 %v2775, %v2802
        %v2841 = vmul.f32 %v2776, %v2804
        %v2842 = vmul.f32 %v2777, %v2806
        %v2843 = vmul.f32 %v2778, %v2808
        %v2844 = vmul.f32 %v2779, %v2810
        %v2845 = vmul.f32 %v2780, %v2812
        %v2846 = vmul.f32 %v2781, %v2814
        %v2847 = vmul.f32 %v2782, %v2816
        %v2848 = vmul.f32 %v2783, %v2818
        %v2849 = vmul.f32 %v2784, %v2820
        %v2850 = vmul.f32 %v2785, %v2822
        %v2851 = vmul.f32 %v2786, %v2824
        %v2852 = vmul.f32 %v2787, %v2826
        %2866 = vrot.lane.b32.xlu0 %v2840, 64
        %v2867 = vpop.permute.xlu0 %2866
        %2868 = vrot.lane.b32.xlu0 %v2841, 64
        %v2869 = vpop.permute.xlu0 %2868
        %2870 = vrot.lane.b32.xlu0 %v2842, 64
        %v2871 = vpop.permute.xlu0 %2870
        %2872 = vrot.lane.b32.xlu0 %v2843, 64
        %v2873 = vpop.permute.xlu0 %2872
        %2874 = vrot.lane.b32.xlu0 %v2844, 64
        %v2875 = vpop.permute.xlu0 %2874
        %2876 = vrot.lane.b32.xlu0 %v2845, 64
        %v2877 = vpop.permute.xlu0 %2876
        %2878 = vrot.lane.b32.xlu0 %v2846, 64
        %v2879 = vpop.permute.xlu0 %2878
        %2880 = vrot.lane.b32.xlu0 %v2847, 64
        %v2881 = vpop.permute.xlu0 %2880
        %2882 = vrot.lane.b32.xlu0 %v2848, 64
        %v2883 = vpop.permute.xlu0 %2882
        %2884 = vrot.lane.b32.xlu0 %v2849, 64
        %v2885 = vpop.permute.xlu0 %2884
        %2886 = vrot.lane.b32.xlu0 %v2850, 64
        %v2887 = vpop.permute.xlu0 %2886
        %2888 = vrot.lane.b32.xlu0 %v2851, 64
        %v2889 = vpop.permute.xlu0 %2888
        %2890 = vrot.lane.b32.xlu0 %v2852, 64
        %v2891 = vpop.permute.xlu0 %2890
        %v2905 = vadd.f32 %v1442, %v2867
        %v2906 = vadd.f32 %v1447, %v2869
        %v2907 = vadd.f32 %v1452, %v2871
        %v2908 = vadd.f32 %v1457, %v2873
        %v2909 = vadd.f32 %v1462, %v2875
        %v2910 = vadd.f32 %v1467, %v2877
        %v2911 = vadd.f32 %v1472, %v2879
        %v2912 = vadd.f32 %v1477, %v2881
        %v2913 = vadd.f32 %v1482, %v2883
        %v2914 = vadd.f32 %v1487, %v2885
        %v2915 = vadd.f32 %v1492, %v2887
        %v2916 = vadd.f32 %v1497, %v2889
        %v2917 = vadd.f32 %v1502, %v2891
        %v2918 = vtanh.pop %v2905
        %v2919 = vtanh.pop %v2906
        %v2920 = vtanh.pop %v2907
        %v2921 = vtanh.pop %v2908
        %v2922 = vtanh.pop %v2909
        %v2923 = vtanh.pop %v2910
        %v2924 = vtanh.pop %v2911
        %v2925 = vtanh.pop %v2912
        %v2926 = vtanh.pop %v2913
        %v2927 = vtanh.pop %v2914
        %v2928 = vtanh.pop %v2915
        %v2929 = vtanh.pop %v2916
        %v2930 = vtanh.pop %v2917
        %v2931 = vsub.f32 1.0, %v2775
        %v2932 = vsub.f32 1.0, %v2776
        %v2933 = vsub.f32 1.0, %v2777
        %v2934 = vsub.f32 1.0, %v2778
        %v2935 = vsub.f32 1.0, %v2779
        %v2936 = vsub.f32 1.0, %v2780
        %v2937 = vsub.f32 1.0, %v2781
        %v2938 = vsub.f32 1.0, %v2782
        %v2939 = vsub.f32 1.0, %v2783
        %v2940 = vsub.f32 1.0, %v2784
        %v2941 = vsub.f32 1.0, %v2785
        %v2942 = vsub.f32 1.0, %v2786
        %v2943 = vsub.f32 1.0, %v2787
        %2957 = vrot.lane.b32.xlu0 %v2918, 96
        %v2958 = vpop.permute.xlu0 %2957
        %2959 = vrot.lane.b32.xlu0 %v2919, 96
        %v2960 = vpop.permute.xlu0 %2959
        %2961 = vrot.lane.b32.xlu0 %v2920, 96
        %v2962 = vpop.permute.xlu0 %2961
        %2963 = vrot.lane.b32.xlu0 %v2921, 96
        %v2964 = vpop.permute.xlu0 %2963
        %2965 = vrot.lane.b32.xlu0 %v2922, 96
        %v2966 = vpop.permute.xlu0 %2965
        %2967 = vrot.lane.b32.xlu0 %v2923, 96
        %v2968 = vpop.permute.xlu0 %2967
        %2969 = vrot.lane.b32.xlu0 %v2924, 96
        %v2970 = vpop.permute.xlu0 %2969
        %2971 = vrot.lane.b32.xlu0 %v2925, 96
        %v2972 = vpop.permute.xlu0 %2971
        %2973 = vrot.lane.b32.xlu0 %v2926, 96
        %v2974 = vpop.permute.xlu0 %2973
        %2975 = vrot.lane.b32.xlu0 %v2927, 96
        %v2976 = vpop.permute.xlu0 %2975
        %2977 = vrot.lane.b32.xlu0 %v2928, 96
        %v2978 = vpop.permute.xlu0 %2977
        %2979 = vrot.lane.b32.xlu0 %v2929, 96
        %v2980 = vpop.permute.xlu0 %2979
        %2981 = vrot.lane.b32.xlu0 %v2930, 96
        %v2982 = vpop.permute.xlu0 %2981
        %v2996 = vmul.f32 %v2931, %v2958
        %v2997 = vmul.f32 %v2932, %v2960
        %v2998 = vmul.f32 %v2933, %v2962
        %v2999 = vmul.f32 %v2934, %v2964
        %v3000 = vmul.f32 %v2935, %v2966
        %v3001 = vmul.f32 %v2936, %v2968
        %v3002 = vmul.f32 %v2937, %v2970
        %v3003 = vmul.f32 %v2938, %v2972
        %v3004 = vmul.f32 %v2939, %v2974
        %v3005 = vmul.f32 %v2940, %v2976
        %v3006 = vmul.f32 %v2941, %v2978
        %v3007 = vmul.f32 %v2942, %v2980
        %v3008 = vmul.f32 %v2943, %v2982
        %v3009 = vmul.f32 %v2775, %v2476
        %v3010 = vmul.f32 %v2776, %v2477
        %v3011 = vmul.f32 %v2777, %v2478
        %v3012 = vmul.f32 %v2778, %v2479
        %v3013 = vmul.f32 %v2779, %v2480
        %v3014 = vmul.f32 %v2780, %v2481
        %v3015 = vmul.f32 %v2781, %v2482
        %v3016 = vmul.f32 %v2782, %v2483
        %v3017 = vmul.f32 %v2783, %v2484
        %v3018 = vmul.f32 %v2784, %v2485
        %v3019 = vmul.f32 %v2785, %v2486
        %v3020 = vmul.f32 %v2786, %v2487
        %v3021 = vmul.f32 %v2787, %v2488
        %v3022 = vadd.f32 %v2996, %v3009
        %v3023 = vadd.f32 %v2997, %v3010
        %v3024 = vadd.f32 %v2998, %v3011
        %v3025 = vadd.f32 %v2999, %v3012
        %v3026 = vadd.f32 %v3000, %v3013
        %v3027 = vadd.f32 %v3001, %v3014
        %v3028 = vadd.f32 %v3002, %v3015
        %v3029 = vadd.f32 %v3003, %v3016
        %v3030 = vadd.f32 %v3004, %v3017
        %v3031 = vadd.f32 %v3005, %v3018
        %v3032 = vadd.f32 %v3006, %v3019
        %v3033 = vadd.f32 %v3007, %v3020
        %v3034 = vadd.f32 %v3008, %v3021
        %3048 = vrot.lane.b32.xlu0 %v3022, 96
        %v3049 = vpop.permute.xlu0 %3048
        %3050 = vrot.lane.b32.xlu0 %v3023, 96
        %v3051 = vpop.permute.xlu0 %3050
        %3052 = vrot.lane.b32.xlu0 %v3024, 96
        %v3053 = vpop.permute.xlu0 %3052
        %3054 = vrot.lane.b32.xlu0 %v3025, 96
        %v3055 = vpop.permute.xlu0 %3054
        %3056 = vrot.lane.b32.xlu0 %v3026, 96
        %v3057 = vpop.permute.xlu0 %3056
        %3058 = vrot.lane.b32.xlu0 %v3027, 96
        %v3059 = vpop.permute.xlu0 %3058
        %3060 = vrot.lane.b32.xlu0 %v3028, 96
        %v3061 = vpop.permute.xlu0 %3060
        %3062 = vrot.lane.b32.xlu0 %v3029, 96
        %v3063 = vpop.permute.xlu0 %3062
        %3064 = vrot.lane.b32.xlu0 %v3030, 96
        %v3065 = vpop.permute.xlu0 %3064
        %3066 = vrot.lane.b32.xlu0 %v3031, 96
        %v3067 = vpop.permute.xlu0 %3066
        %3068 = vrot.lane.b32.xlu0 %v3032, 96
        %v3069 = vpop.permute.xlu0 %3068
        %3070 = vrot.lane.b32.xlu0 %v3033, 96
        %v3071 = vpop.permute.xlu0 %3070
        %3072 = vrot.lane.b32.xlu0 %v3034, 96
        %v3073 = vpop.permute.xlu0 %3072
        %s3087 = scalar_lea.vmem %s770, 104 [#allocation3]
        %3088 = vst.msk [vmem:[%s3087] sm:$0xff] %vm919, %v3049
        %3089 = vst.msk [vmem:[%s3087 + $0x8] sm:$0xff] %vm919, %v3051
        %3090 = vst.msk [vmem:[%s3087 + $0x10] sm:$0xff] %vm919, %v3053
        %3091 = vst.msk [vmem:[%s3087 + $0x18] sm:$0xff] %vm919, %v3055
        %3092 = vst.msk [vmem:[%s3087 + $0x20] sm:$0xff] %vm919, %v3057
        %3093 = vst.msk [vmem:[%s3087 + $0x28] sm:$0xff] %vm919, %v3059
        %3094 = vst.msk [vmem:[%s3087 + $0x30] sm:$0xff] %vm919, %v3061
        %3095 = vst.msk [vmem:[%s3087 + $0x38] sm:$0xff] %vm919, %v3063
        %3096 = vst.msk [vmem:[%s3087 + $0x40] sm:$0xff] %vm919, %v3065
        %3097 = vst.msk [vmem:[%s3087 + $0x48] sm:$0xff] %vm919, %v3067
        %3098 = vst.msk [vmem:[%s3087 + $0x50] sm:$0xff] %vm919, %v3069
        %3099 = vst.msk [vmem:[%s3087 + $0x58] sm:$0xff] %vm919, %v3071
        %3100 = vst.msk [vmem:[%s3087 + $0x60] sm:$0xff] %vm919, %v3073
        %v3101 = vsel %vm919, %v3049, 0
        %v3103 = vsel %vm919, %v3051, 0
        %v3105 = vsel %vm919, %v3053, 0
        %v3107 = vsel %vm919, %v3055, 0
        %v3109 = vsel %vm919, %v3057, 0
        %v3111 = vsel %vm919, %v3059, 0
        %v3113 = vsel %vm919, %v3061, 0
        %v3115 = vsel %vm919, %v3063, 0
        %v3117 = vsel %vm919, %v3065, 0
        %v3119 = vsel %vm919, %v3067, 0
        %v3121 = vsel %vm919, %v3069, 0
        %v3123 = vsel %vm919, %v3071, 0
        %v3125 = vsel %vm919, %v3073, 0
        %3127 = vmatprep.subr.mxu0 0.0
        %3128 = vmatpush1.msra.mxu0 0.0
        %3129 = vmatprep.subr.mxu0 0.0
        %3130 = vmatpush1.msra.mxu0 0.0
        %3131 = vmatprep.subr.mxu0 0.0
        %3132 = vmatpush1.msra.mxu0 0.0
        %3133 = vmatprep.subr.mxu0 0.0
        %3134 = vmatpush1.msra.mxu0 0.0
        %3135 = vmatprep.subr.mxu0 0.0
        %3136 = vmatpush1.msra.mxu0 0.0
        %3137 = vmatprep.subr.mxu0 0.0
        %3138 = vmatpush1.msra.mxu0 0.0
        %3139 = vmatprep.subr.mxu0 0.0
        %3140 = vmatpush1.msra.mxu0 0.0
        %3141 = vmatprep.subr.mxu0 0.0
        %3142 = vmatpush1.msra.mxu0 0.0
        %3143 = vmatprep.subr.mxu0 0.0
        %3144 = vmatpush1.msra.mxu0 0.0
        %3145 = vmatprep.subr.mxu0 0.0
        %3146 = vmatpush1.msra.mxu0 0.0
        %3147 = vmatprep.subr.mxu0 0.0
        %3148 = vmatpush1.msra.mxu0 0.0
        %3149 = vmatprep.subr.mxu0 0.0
        %3150 = vmatpush1.msra.mxu0 0.0
        %3151 = vmatprep.subr.mxu0 0.0
        %3152 = vmatpush1.msra.mxu0 %v780
        %3153 = vmatprep.subr.mxu0 0.0
        %3154 = vmatpush1.msra.mxu0 %v779
        %3155 = vmatprep.subr.mxu0 0.0
        %3156 = vmatpush1.msra.mxu0 %v778
        %3157 = vmatprep.subr.mxu0 0.0
        %3158 = vmatpush1.msra.mxu0 %v777
        %3159 = vmatprep.subr.mxu0 0.0
        %3160 = vmatpush2.msra.mxu0 0.0
        %3161 = vmatprep.subr.mxu0 0.0
        %3162 = vmatpush2.msra.mxu0 0.0
        %3163 = vmatprep.subr.mxu0 0.0
        %3164 = vmatpush2.msra.mxu0 0.0
        %3165 = vmatprep.subr.mxu0 0.0
        %3166 = vmatpush2.msra.mxu0 0.0
        %3167 = vmatprep.subr.mxu0 0.0
        %3168 = vmatpush2.msra.mxu0 0.0
        %3169 = vmatprep.subr.mxu0 0.0
        %3170 = vmatpush2.msra.mxu0 0.0
        %3171 = vmatprep.subr.mxu0 0.0
        %3172 = vmatpush2.msra.mxu0 0.0
        %3173 = vmatprep.subr.mxu0 0.0
        %3174 = vmatpush2.msra.mxu0 0.0
        %3175 = vmatprep.subr.mxu0 0.0
        %3176 = vmatpush2.msra.mxu0 0.0
        %3177 = vmatprep.subr.mxu0 0.0
        %3178 = vmatpush2.msra.mxu0 0.0
        %3179 = vmatprep.subr.mxu0 0.0
        %3180 = vmatpush2.msra.mxu0 0.0
        %3181 = vmatprep.subr.mxu0 0.0
        %3182 = vmatpush2.msra.mxu0 0.0
        %3183 = vmatprep.subr.mxu0 0.0
        %3184 = vmatpush2.msra.mxu0 0.0
        %3185 = vmatprep.subr.mxu0 0.0
        %3186 = vmatpush2.msra.mxu0 0.0
        %3187 = vmatprep.subr.mxu0 0.0
        %3188 = vmatpush2.msra.mxu0 0.0
        %3189 = vmatprep.subr.mxu0 0.0
        %3190 = vmatpush2.msra.mxu0 0.0
        %3191 = vmatprep.mubr.f32.mxu0 0.0
        %3192 = vmatmul.mubr.f32.gmra.mxu0 %v3101
        %v3193 = vpop.f32.mrf.mxu0
        %v3194 = vadd.f32 %v2029, %v3193
        %v3195 = vpop.f32.mrf.mxu0
        %3196 = vmatprep.mubr.f32.mxu0 0.0
        %3197 = vmatmul.mubr.f32.gmra.mxu0 %v3103
        %v3198 = vpop.f32.mrf.mxu0
        %v3199 = vadd.f32 %v2029, %v3198
        %v3200 = vpop.f32.mrf.mxu0
        %3201 = vmatprep.mubr.f32.mxu0 0.0
        %3202 = vmatmul.mubr.f32.gmra.mxu0 %v3105
        %v3203 = vpop.f32.mrf.mxu0
        %v3204 = vadd.f32 %v2029, %v3203
        %v3205 = vpop.f32.mrf.mxu0
        %3206 = vmatprep.mubr.f32.mxu0 0.0
        %3207 = vmatmul.mubr.f32.gmra.mxu0 %v3107
        %v3208 = vpop.f32.mrf.mxu0
        %v3209 = vadd.f32 %v2029, %v3208
        %v3210 = vpop.f32.mrf.mxu0
        %3211 = vmatprep.mubr.f32.mxu0 0.0
        %3212 = vmatmul.mubr.f32.gmra.mxu0 %v3109
        %v3213 = vpop.f32.mrf.mxu0
        %v3214 = vadd.f32 %v2029, %v3213
        %v3215 = vpop.f32.mrf.mxu0
        %3216 = vmatprep.mubr.f32.mxu0 0.0
        %3217 = vmatmul.mubr.f32.gmra.mxu0 %v3111
        %v3218 = vpop.f32.mrf.mxu0
        %v3219 = vadd.f32 %v2029, %v3218
        %v3220 = vpop.f32.mrf.mxu0
        %3221 = vmatprep.mubr.f32.mxu0 0.0
        %3222 = vmatmul.mubr.f32.gmra.mxu0 %v3113
        %v3223 = vpop.f32.mrf.mxu0
        %v3224 = vadd.f32 %v2029, %v3223
        %v3225 = vpop.f32.mrf.mxu0
        %3226 = vmatprep.mubr.f32.mxu0 0.0
        %3227 = vmatmul.mubr.f32.gmra.mxu0 %v3115
        %v3228 = vpop.f32.mrf.mxu0
        %v3229 = vadd.f32 %v2029, %v3228
        %v3230 = vpop.f32.mrf.mxu0
        %3231 = vmatprep.mubr.f32.mxu0 0.0
        %3232 = vmatmul.mubr.f32.gmra.mxu0 %v3117
        %v3233 = vpop.f32.mrf.mxu0
        %v3234 = vadd.f32 %v2029, %v3233
        %v3235 = vpop.f32.mrf.mxu0
        %3236 = vmatprep.mubr.f32.mxu0 0.0
        %3237 = vmatmul.mubr.f32.gmra.mxu0 %v3119
        %v3238 = vpop.f32.mrf.mxu0
        %v3239 = vadd.f32 %v2029, %v3238
        %v3240 = vpop.f32.mrf.mxu0
        %3241 = vmatprep.mubr.f32.mxu0 0.0
        %3242 = vmatmul.mubr.f32.gmra.mxu0 %v3121
        %v3243 = vpop.f32.mrf.mxu0
        %v3244 = vadd.f32 %v2029, %v3243
        %v3245 = vpop.f32.mrf.mxu0
        %3246 = vmatprep.mubr.f32.mxu0 0.0
        %3247 = vmatmul.mubr.f32.gmra.mxu0 %v3123
        %v3248 = vpop.f32.mrf.mxu0
        %v3249 = vadd.f32 %v2029, %v3248
        %v3250 = vpop.f32.mrf.mxu0
        %3251 = vmatprep.mubr.f32.mxu0 0.0
        %3252 = vmatmul.mubr.f32.gmra.mxu0 %v3125
        %v3253 = vpop.f32.mrf.mxu0
        %v3254 = vadd.f32 %v2029, %v3253
        %v3255 = vpop.f32.mrf.mxu0
        %3256 = vdwg.mxu0
        %v3257 = vadd.f32 %v1507, %v3194
        %v3258 = vadd.f32 %v1512, %v3199
        %v3259 = vadd.f32 %v1517, %v3204
        %v3260 = vadd.f32 %v1522, %v3209
        %v3261 = vadd.f32 %v1527, %v3214
        %v3262 = vadd.f32 %v1532, %v3219
        %v3263 = vadd.f32 %v1537, %v3224
        %v3264 = vadd.f32 %v1542, %v3229
        %v3265 = vadd.f32 %v1547, %v3234
        %v3266 = vadd.f32 %v1552, %v3239
        %v3267 = vadd.f32 %v1557, %v3244
        %v3268 = vadd.f32 %v1562, %v3249
        %v3269 = vadd.f32 %v1567, %v3254
        %v3270 = vsub.f32 0.0, %v3257
        %v3271 = vsub.f32 0.0, %v3258
        %v3272 = vsub.f32 0.0, %v3259
        %v3273 = vsub.f32 0.0, %v3260
        %v3274 = vsub.f32 0.0, %v3261
        %v3275 = vsub.f32 0.0, %v3262
        %v3276 = vsub.f32 0.0, %v3263
        %v3277 = vsub.f32 0.0, %v3264
        %v3278 = vsub.f32 0.0, %v3265
        %v3279 = vsub.f32 0.0, %v3266
        %v3280 = vsub.f32 0.0, %v3267
        %v3281 = vsub.f32 0.0, %v3268
        %v3282 = vsub.f32 0.0, %v3269
        %v3283 = vmul.f32 %v3270, 1.442695
        %v3284 = vpow.pop %v3283
        %v3285 = vmul.f32 %v3271, 1.442695
        %v3286 = vpow.pop %v3285
        %v3287 = vmul.f32 %v3272, 1.442695
        %v3288 = vpow.pop %v3287
        %v3289 = vmul.f32 %v3273, 1.442695
        %v3290 = vpow.pop %v3289
        %v3291 = vmul.f32 %v3274, 1.442695
        %v3292 = vpow.pop %v3291
        %v3293 = vmul.f32 %v3275, 1.442695
        %v3294 = vpow.pop %v3293
        %v3295 = vmul.f32 %v3276, 1.442695
        %v3296 = vpow.pop %v3295
        %v3297 = vmul.f32 %v3277, 1.442695
        %v3298 = vpow.pop %v3297
        %v3299 = vmul.f32 %v3278, 1.442695
        %v3300 = vpow.pop %v3299
        %v3301 = vmul.f32 %v3279, 1.442695
        %v3302 = vpow.pop %v3301
        %v3303 = vmul.f32 %v3280, 1.442695
        %v3304 = vpow.pop %v3303
        %v3305 = vmul.f32 %v3281, 1.442695
        %v3306 = vpow.pop %v3305
        %v3307 = vmul.f32 %v3282, 1.442695
        %v3308 = vpow.pop %v3307
        %v3309 = vadd.f32 %v3284, 1.0
        %v3310 = vadd.f32 %v3286, 1.0
        %v3311 = vadd.f32 %v3288, 1.0
        %v3312 = vadd.f32 %v3290, 1.0
        %v3313 = vadd.f32 %v3292, 1.0
        %v3314 = vadd.f32 %v3294, 1.0
        %v3315 = vadd.f32 %v3296, 1.0
        %v3316 = vadd.f32 %v3298, 1.0
        %v3317 = vadd.f32 %v3300, 1.0
        %v3318 = vadd.f32 %v3302, 1.0
        %v3319 = vadd.f32 %v3304, 1.0
        %v3320 = vadd.f32 %v3306, 1.0
        %v3321 = vadd.f32 %v3308, 1.0
        %v3322 = vrcp.pop %v3309
        %v3323 = vrcp.pop %v3310
        %v3324 = vrcp.pop %v3311
        %v3325 = vrcp.pop %v3312
        %v3326 = vrcp.pop %v3313
        %v3327 = vrcp.pop %v3314
        %v3328 = vrcp.pop %v3315
        %v3329 = vrcp.pop %v3316
        %v3330 = vrcp.pop %v3317
        %v3331 = vrcp.pop %v3318
        %v3332 = vrcp.pop %v3319
        %v3333 = vrcp.pop %v3320
        %v3334 = vrcp.pop %v3321
        %3348 = vrot.lane.b32.xlu0 %v3194, 64
        %v3349 = vpop.permute.xlu0 %3348
        %3350 = vrot.lane.b32.xlu0 %v3199, 64
        %v3351 = vpop.permute.xlu0 %3350
        %3352 = vrot.lane.b32.xlu0 %v3204, 64
        %v3353 = vpop.permute.xlu0 %3352
        %3354 = vrot.lane.b32.xlu0 %v3209, 64
        %v3355 = vpop.permute.xlu0 %3354
        %3356 = vrot.lane.b32.xlu0 %v3214, 64
        %v3357 = vpop.permute.xlu0 %3356
        %3358 = vrot.lane.b32.xlu0 %v3219, 64
        %v3359 = vpop.permute.xlu0 %3358
        %3360 = vrot.lane.b32.xlu0 %v3224, 64
        %v3361 = vpop.permute.xlu0 %3360
        %3362 = vrot.lane.b32.xlu0 %v3229, 64
        %v3363 = vpop.permute.xlu0 %3362
        %3364 = vrot.lane.b32.xlu0 %v3234, 64
        %v3365 = vpop.permute.xlu0 %3364
        %3366 = vrot.lane.b32.xlu0 %v3239, 64
        %v3367 = vpop.permute.xlu0 %3366
        %3368 = vrot.lane.b32.xlu0 %v3244, 64
        %v3369 = vpop.permute.xlu0 %3368
        %3370 = vrot.lane.b32.xlu0 %v3249, 64
        %v3371 = vpop.permute.xlu0 %3370
        %3372 = vrot.lane.b32.xlu0 %v3254, 64
        %v3373 = vpop.permute.xlu0 %3372
        %v3387 = vmul.f32 %v3322, %v3349
        %v3388 = vmul.f32 %v3323, %v3351
        %v3389 = vmul.f32 %v3324, %v3353
        %v3390 = vmul.f32 %v3325, %v3355
        %v3391 = vmul.f32 %v3326, %v3357
        %v3392 = vmul.f32 %v3327, %v3359
        %v3393 = vmul.f32 %v3328, %v3361
        %v3394 = vmul.f32 %v3329, %v3363
        %v3395 = vmul.f32 %v3330, %v3365
        %v3396 = vmul.f32 %v3331, %v3367
        %v3397 = vmul.f32 %v3332, %v3369
        %v3398 = vmul.f32 %v3333, %v3371
        %v3399 = vmul.f32 %v3334, %v3373
        %3413 = vrot.lane.b32.xlu0 %v3387, 64
        %v3414 = vpop.permute.xlu0 %3413
        %3415 = vrot.lane.b32.xlu0 %v3388, 64
        %v3416 = vpop.permute.xlu0 %3415
        %3417 = vrot.lane.b32.xlu0 %v3389, 64
        %v3418 = vpop.permute.xlu0 %3417
        %3419 = vrot.lane.b32.xlu0 %v3390, 64
        %v3420 = vpop.permute.xlu0 %3419
        %3421 = vrot.lane.b32.xlu0 %v3391, 64
        %v3422 = vpop.permute.xlu0 %3421
        %3423 = vrot.lane.b32.xlu0 %v3392, 64
        %v3424 = vpop.permute.xlu0 %3423
        %3425 = vrot.lane.b32.xlu0 %v3393, 64
        %v3426 = vpop.permute.xlu0 %3425
        %3427 = vrot.lane.b32.xlu0 %v3394, 64
        %v3428 = vpop.permute.xlu0 %3427
        %3429 = vrot.lane.b32.xlu0 %v3395, 64
        %v3430 = vpop.permute.xlu0 %3429
        %3431 = vrot.lane.b32.xlu0 %v3396, 64
        %v3432 = vpop.permute.xlu0 %3431
        %3433 = vrot.lane.b32.xlu0 %v3397, 64
        %v3434 = vpop.permute.xlu0 %3433
        %3435 = vrot.lane.b32.xlu0 %v3398, 64
        %v3436 = vpop.permute.xlu0 %3435
        %3437 = vrot.lane.b32.xlu0 %v3399, 64
        %v3438 = vpop.permute.xlu0 %3437
        %v3452 = vadd.f32 %v1507, %v3414
        %v3453 = vadd.f32 %v1512, %v3416
        %v3454 = vadd.f32 %v1517, %v3418
        %v3455 = vadd.f32 %v1522, %v3420
        %v3456 = vadd.f32 %v1527, %v3422
        %v3457 = vadd.f32 %v1532, %v3424
        %v3458 = vadd.f32 %v1537, %v3426
        %v3459 = vadd.f32 %v1542, %v3428
        %v3460 = vadd.f32 %v1547, %v3430
        %v3461 = vadd.f32 %v1552, %v3432
        %v3462 = vadd.f32 %v1557, %v3434
        %v3463 = vadd.f32 %v1562, %v3436
        %v3464 = vadd.f32 %v1567, %v3438
        %v3465 = vtanh.pop %v3452
        %v3466 = vtanh.pop %v3453
        %v3467 = vtanh.pop %v3454
        %v3468 = vtanh.pop %v3455
        %v3469 = vtanh.pop %v3456
        %v3470 = vtanh.pop %v3457
        %v3471 = vtanh.pop %v3458
        %v3472 = vtanh.pop %v3459
        %v3473 = vtanh.pop %v3460
        %v3474 = vtanh.pop %v3461
        %v3475 = vtanh.pop %v3462
        %v3476 = vtanh.pop %v3463
        %v3477 = vtanh.pop %v3464
        %v3478 = vsub.f32 1.0, %v3322
        %v3479 = vsub.f32 1.0, %v3323
        %v3480 = vsub.f32 1.0, %v3324
        %v3481 = vsub.f32 1.0, %v3325
        %v3482 = vsub.f32 1.0, %v3326
        %v3483 = vsub.f32 1.0, %v3327
        %v3484 = vsub.f32 1.0, %v3328
        %v3485 = vsub.f32 1.0, %v3329
        %v3486 = vsub.f32 1.0, %v3330
        %v3487 = vsub.f32 1.0, %v3331
        %v3488 = vsub.f32 1.0, %v3332
        %v3489 = vsub.f32 1.0, %v3333
        %v3490 = vsub.f32 1.0, %v3334
        %3504 = vrot.lane.b32.xlu0 %v3465, 96
        %v3505 = vpop.permute.xlu0 %3504
        %3506 = vrot.lane.b32.xlu0 %v3466, 96
        %v3507 = vpop.permute.xlu0 %3506
        %3508 = vrot.lane.b32.xlu0 %v3467, 96
        %v3509 = vpop.permute.xlu0 %3508
        %3510 = vrot.lane.b32.xlu0 %v3468, 96
        %v3511 = vpop.permute.xlu0 %3510
        %3512 = vrot.lane.b32.xlu0 %v3469, 96
        %v3513 = vpop.permute.xlu0 %3512
        %3514 = vrot.lane.b32.xlu0 %v3470, 96
        %v3515 = vpop.permute.xlu0 %3514
        %3516 = vrot.lane.b32.xlu0 %v3471, 96
        %v3517 = vpop.permute.xlu0 %3516
        %3518 = vrot.lane.b32.xlu0 %v3472, 96
        %v3519 = vpop.permute.xlu0 %3518
        %3520 = vrot.lane.b32.xlu0 %v3473, 96
        %v3521 = vpop.permute.xlu0 %3520
        %3522 = vrot.lane.b32.xlu0 %v3474, 96
        %v3523 = vpop.permute.xlu0 %3522
        %3524 = vrot.lane.b32.xlu0 %v3475, 96
        %v3525 = vpop.permute.xlu0 %3524
        %3526 = vrot.lane.b32.xlu0 %v3476, 96
        %v3527 = vpop.permute.xlu0 %3526
        %3528 = vrot.lane.b32.xlu0 %v3477, 96
        %v3529 = vpop.permute.xlu0 %3528
        %v3543 = vmul.f32 %v3478, %v3505
        %v3544 = vmul.f32 %v3479, %v3507
        %v3545 = vmul.f32 %v3480, %v3509
        %v3546 = vmul.f32 %v3481, %v3511
        %v3547 = vmul.f32 %v3482, %v3513
        %v3548 = vmul.f32 %v3483, %v3515
        %v3549 = vmul.f32 %v3484, %v3517
        %v3550 = vmul.f32 %v3485, %v3519
        %v3551 = vmul.f32 %v3486, %v3521
        %v3552 = vmul.f32 %v3487, %v3523
        %v3553 = vmul.f32 %v3488, %v3525
        %v3554 = vmul.f32 %v3489, %v3527
        %v3555 = vmul.f32 %v3490, %v3529
        %v3556 = vmul.f32 %v3322, %v3022
        %v3557 = vmul.f32 %v3323, %v3023
        %v3558 = vmul.f32 %v3324, %v3024
        %v3559 = vmul.f32 %v3325, %v3025
        %v3560 = vmul.f32 %v3326, %v3026
        %v3561 = vmul.f32 %v3327, %v3027
        %v3562 = vmul.f32 %v3328, %v3028
        %v3563 = vmul.f32 %v3329, %v3029
        %v3564 = vmul.f32 %v3330, %v3030
        %v3565 = vmul.f32 %v3331, %v3031
        %v3566 = vmul.f32 %v3332, %v3032
        %v3567 = vmul.f32 %v3333, %v3033
        %v3568 = vmul.f32 %v3334, %v3034
        %v3569 = vadd.f32 %v3543, %v3556
        %v3570 = vadd.f32 %v3544, %v3557
        %v3571 = vadd.f32 %v3545, %v3558
        %v3572 = vadd.f32 %v3546, %v3559
        %v3573 = vadd.f32 %v3547, %v3560
        %v3574 = vadd.f32 %v3548, %v3561
        %v3575 = vadd.f32 %v3549, %v3562
        %v3576 = vadd.f32 %v3550, %v3563
        %v3577 = vadd.f32 %v3551, %v3564
        %v3578 = vadd.f32 %v3552, %v3565
        %v3579 = vadd.f32 %v3553, %v3566
        %v3580 = vadd.f32 %v3554, %v3567
        %v3581 = vadd.f32 %v3555, %v3568
        %3595 = vrot.lane.b32.xlu0 %v3569, 96
        %v3596 = vpop.permute.xlu0 %3595
        %3597 = vrot.lane.b32.xlu0 %v3570, 96
        %v3598 = vpop.permute.xlu0 %3597
        %3599 = vrot.lane.b32.xlu0 %v3571, 96
        %v3600 = vpop.permute.xlu0 %3599
        %3601 = vrot.lane.b32.xlu0 %v3572, 96
        %v3602 = vpop.permute.xlu0 %3601
        %3603 = vrot.lane.b32.xlu0 %v3573, 96
        %v3604 = vpop.permute.xlu0 %3603
        %3605 = vrot.lane.b32.xlu0 %v3574, 96
        %v3606 = vpop.permute.xlu0 %3605
        %3607 = vrot.lane.b32.xlu0 %v3575, 96
        %v3608 = vpop.permute.xlu0 %3607
        %3609 = vrot.lane.b32.xlu0 %v3576, 96
        %v3610 = vpop.permute.xlu0 %3609
        %3611 = vrot.lane.b32.xlu0 %v3577, 96
        %v3612 = vpop.permute.xlu0 %3611
        %3613 = vrot.lane.b32.xlu0 %v3578, 96
        %v3614 = vpop.permute.xlu0 %3613
        %3615 = vrot.lane.b32.xlu0 %v3579, 96
        %v3616 = vpop.permute.xlu0 %3615
        %3617 = vrot.lane.b32.xlu0 %v3580, 96
        %v3618 = vpop.permute.xlu0 %3617
        %3619 = vrot.lane.b32.xlu0 %v3581, 96
        %v3620 = vpop.permute.xlu0 %3619
        %s3634 = scalar_lea.vmem %s770, 208 [#allocation3]
        %3635 = vst.msk [vmem:[%s3634] sm:$0xff] %vm919, %v3596
        %3636 = vst.msk [vmem:[%s3634 + $0x8] sm:$0xff] %vm919, %v3598
        %3637 = vst.msk [vmem:[%s3634 + $0x10] sm:$0xff] %vm919, %v3600
        %3638 = vst.msk [vmem:[%s3634 + $0x18] sm:$0xff] %vm919, %v3602
        %3639 = vst.msk [vmem:[%s3634 + $0x20] sm:$0xff] %vm919, %v3604
        %3640 = vst.msk [vmem:[%s3634 + $0x28] sm:$0xff] %vm919, %v3606
        %3641 = vst.msk [vmem:[%s3634 + $0x30] sm:$0xff] %vm919, %v3608
        %3642 = vst.msk [vmem:[%s3634 + $0x38] sm:$0xff] %vm919, %v3610
        %3643 = vst.msk [vmem:[%s3634 + $0x40] sm:$0xff] %vm919, %v3612
        %3644 = vst.msk [vmem:[%s3634 + $0x48] sm:$0xff] %vm919, %v3614
        %3645 = vst.msk [vmem:[%s3634 + $0x50] sm:$0xff] %vm919, %v3616
        %3646 = vst.msk [vmem:[%s3634 + $0x58] sm:$0xff] %vm919, %v3618
        %3647 = vst.msk [vmem:[%s3634 + $0x60] sm:$0xff] %vm919, %v3620
        %v3648 = vsel %vm919, %v3596, 0
        %v3650 = vsel %vm919, %v3598, 0
        %v3652 = vsel %vm919, %v3600, 0
        %v3654 = vsel %vm919, %v3602, 0
        %v3656 = vsel %vm919, %v3604, 0
        %v3658 = vsel %vm919, %v3606, 0
        %v3660 = vsel %vm919, %v3608, 0
        %v3662 = vsel %vm919, %v3610, 0
        %v3664 = vsel %vm919, %v3612, 0
        %v3666 = vsel %vm919, %v3614, 0
        %v3668 = vsel %vm919, %v3616, 0
        %v3670 = vsel %vm919, %v3618, 0
        %v3672 = vsel %vm919, %v3620, 0
        %3674 = vmatprep.subr.mxu0 0.0
        %3675 = vmatpush1.msra.mxu0 0.0
        %3676 = vmatprep.subr.mxu0 0.0
        %3677 = vmatpush1.msra.mxu0 0.0
        %3678 = vmatprep.subr.mxu0 0.0
        %3679 = vmatpush1.msra.mxu0 0.0
        %3680 = vmatprep.subr.mxu0 0.0
        %3681 = vmatpush1.msra.mxu0 0.0
        %3682 = vmatprep.subr.mxu0 0.0
        %3683 = vmatpush1.msra.mxu0 0.0
        %3684 = vmatprep.subr.mxu0 0.0
        %3685 = vmatpush1.msra.mxu0 0.0
        %3686 = vmatprep.subr.mxu0 0.0
        %3687 = vmatpush1.msra.mxu0 0.0
        %3688 = vmatprep.subr.mxu0 0.0
        %3689 = vmatpush1.msra.mxu0 0.0
        %3690 = vmatprep.subr.mxu0 0.0
        %3691 = vmatpush1.msra.mxu0 0.0
        %3692 = vmatprep.subr.mxu0 0.0
        %3693 = vmatpush1.msra.mxu0 0.0
        %3694 = vmatprep.subr.mxu0 0.0
        %3695 = vmatpush1.msra.mxu0 0.0
        %3696 = vmatprep.subr.mxu0 0.0
        %3697 = vmatpush1.msra.mxu0 0.0
        %3698 = vmatprep.subr.mxu0 0.0
        %3699 = vmatpush1.msra.mxu0 %v780
        %3700 = vmatprep.subr.mxu0 0.0
        %3701 = vmatpush1.msra.mxu0 %v779
        %3702 = vmatprep.subr.mxu0 0.0
        %3703 = vmatpush1.msra.mxu0 %v778
        %3704 = vmatprep.subr.mxu0 0.0
        %3705 = vmatpush1.msra.mxu0 %v777
        %3706 = vmatprep.subr.mxu0 0.0
        %3707 = vmatpush2.msra.mxu0 0.0
        %3708 = vmatprep.subr.mxu0 0.0
        %3709 = vmatpush2.msra.mxu0 0.0
        %3710 = vmatprep.subr.mxu0 0.0
        %3711 = vmatpush2.msra.mxu0 0.0
        %3712 = vmatprep.subr.mxu0 0.0
        %3713 = vmatpush2.msra.mxu0 0.0
        %3714 = vmatprep.subr.mxu0 0.0
        %3715 = vmatpush2.msra.mxu0 0.0
        %3716 = vmatprep.subr.mxu0 0.0
        %3717 = vmatpush2.msra.mxu0 0.0
        %3718 = vmatprep.subr.mxu0 0.0
        %3719 = vmatpush2.msra.mxu0 0.0
        %3720 = vmatprep.subr.mxu0 0.0
        %3721 = vmatpush2.msra.mxu0 0.0
        %3722 = vmatprep.subr.mxu0 0.0
        %3723 = vmatpush2.msra.mxu0 0.0
        %3724 = vmatprep.subr.mxu0 0.0
        %3725 = vmatpush2.msra.mxu0 0.0
        %3726 = vmatprep.subr.mxu0 0.0
        %3727 = vmatpush2.msra.mxu0 0.0
        %3728 = vmatprep.subr.mxu0 0.0
        %3729 = vmatpush2.msra.mxu0 0.0
        %3730 = vmatprep.subr.mxu0 0.0
        %3731 = vmatpush2.msra.mxu0 0.0
        %3732 = vmatprep.subr.mxu0 0.0
        %3733 = vmatpush2.msra.mxu0 0.0
        %3734 = vmatprep.subr.mxu0 0.0
        %3735 = vmatpush2.msra.mxu0 0.0
        %3736 = vmatprep.subr.mxu0 0.0
        %3737 = vmatpush2.msra.mxu0 0.0
        %3738 = vmatprep.mubr.f32.mxu0 0.0
        %3739 = vmatmul.mubr.f32.gmra.mxu0 %v3648
        %v3740 = vpop.f32.mrf.mxu0
        %v3741 = vadd.f32 %v2029, %v3740
        %v3742 = vpop.f32.mrf.mxu0
        %3743 = vmatprep.mubr.f32.mxu0 0.0
        %3744 = vmatmul.mubr.f32.gmra.mxu0 %v3650
        %v3745 = vpop.f32.mrf.mxu0
        %v3746 = vadd.f32 %v2029, %v3745
        %v3747 = vpop.f32.mrf.mxu0
        %3748 = vmatprep.mubr.f32.mxu0 0.0
        %3749 = vmatmul.mubr.f32.gmra.mxu0 %v3652
        %v3750 = vpop.f32.mrf.mxu0
        %v3751 = vadd.f32 %v2029, %v3750
        %v3752 = vpop.f32.mrf.mxu0
        %3753 = vmatprep.mubr.f32.mxu0 0.0
        %3754 = vmatmul.mubr.f32.gmra.mxu0 %v3654
        %v3755 = vpop.f32.mrf.mxu0
        %v3756 = vadd.f32 %v2029, %v3755
        %v3757 = vpop.f32.mrf.mxu0
        %3758 = vmatprep.mubr.f32.mxu0 0.0
        %3759 = vmatmul.mubr.f32.gmra.mxu0 %v3656
        %v3760 = vpop.f32.mrf.mxu0
        %v3761 = vadd.f32 %v2029, %v3760
        %v3762 = vpop.f32.mrf.mxu0
        %3763 = vmatprep.mubr.f32.mxu0 0.0
        %3764 = vmatmul.mubr.f32.gmra.mxu0 %v3658
        %v3765 = vpop.f32.mrf.mxu0
        %v3766 = vadd.f32 %v2029, %v3765
        %v3767 = vpop.f32.mrf.mxu0
        %3768 = vmatprep.mubr.f32.mxu0 0.0
        %3769 = vmatmul.mubr.f32.gmra.mxu0 %v3660
        %v3770 = vpop.f32.mrf.mxu0
        %v3771 = vadd.f32 %v2029, %v3770
        %v3772 = vpop.f32.mrf.mxu0
        %3773 = vmatprep.mubr.f32.mxu0 0.0
        %3774 = vmatmul.mubr.f32.gmra.mxu0 %v3662
        %v3775 = vpop.f32.mrf.mxu0
        %v3776 = vadd.f32 %v2029, %v3775
        %v3777 = vpop.f32.mrf.mxu0
        %3778 = vmatprep.mubr.f32.mxu0 0.0
        %3779 = vmatmul.mubr.f32.gmra.mxu0 %v3664
        %v3780 = vpop.f32.mrf.mxu0
        %v3781 = vadd.f32 %v2029, %v3780
        %v3782 = vpop.f32.mrf.mxu0
        %3783 = vmatprep.mubr.f32.mxu0 0.0
        %3784 = vmatmul.mubr.f32.gmra.mxu0 %v3666
        %v3785 = vpop.f32.mrf.mxu0
        %v3786 = vadd.f32 %v2029, %v3785
        %v3787 = vpop.f32.mrf.mxu0
        %3788 = vmatprep.mubr.f32.mxu0 0.0
        %3789 = vmatmul.mubr.f32.gmra.mxu0 %v3668
        %v3790 = vpop.f32.mrf.mxu0
        %v3791 = vadd.f32 %v2029, %v3790
        %v3792 = vpop.f32.mrf.mxu0
        %3793 = vmatprep.mubr.f32.mxu0 0.0
        %3794 = vmatmul.mubr.f32.gmra.mxu0 %v3670
        %v3795 = vpop.f32.mrf.mxu0
        %v3796 = vadd.f32 %v2029, %v3795
        %v3797 = vpop.f32.mrf.mxu0
        %3798 = vmatprep.mubr.f32.mxu0 0.0
        %3799 = vmatmul.mubr.f32.gmra.mxu0 %v3672
        %v3800 = vpop.f32.mrf.mxu0
        %v3801 = vadd.f32 %v2029, %v3800
        %v3802 = vpop.f32.mrf.mxu0
        %3803 = vdwg.mxu0
        %v3804 = vadd.f32 %v1572, %v3741
        %v3805 = vadd.f32 %v1577, %v3746
        %v3806 = vadd.f32 %v1582, %v3751
        %v3807 = vadd.f32 %v1587, %v3756
        %v3808 = vadd.f32 %v1592, %v3761
        %v3809 = vadd.f32 %v1597, %v3766
        %v3810 = vadd.f32 %v1602, %v3771
        %v3811 = vadd.f32 %v1607, %v3776
        %v3812 = vadd.f32 %v1612, %v3781
        %v3813 = vadd.f32 %v1617, %v3786
        %v3814 = vadd.f32 %v1622, %v3791
        %v3815 = vadd.f32 %v1627, %v3796
        %v3816 = vadd.f32 %v1632, %v3801
        %v3817 = vsub.f32 0.0, %v3804
        %v3818 = vsub.f32 0.0, %v3805
        %v3819 = vsub.f32 0.0, %v3806
        %v3820 = vsub.f32 0.0, %v3807
        %v3821 = vsub.f32 0.0, %v3808
        %v3822 = vsub.f32 0.0, %v3809
        %v3823 = vsub.f32 0.0, %v3810
        %v3824 = vsub.f32 0.0, %v3811
        %v3825 = vsub.f32 0.0, %v3812
        %v3826 = vsub.f32 0.0, %v3813
        %v3827 = vsub.f32 0.0, %v3814
        %v3828 = vsub.f32 0.0, %v3815
        %v3829 = vsub.f32 0.0, %v3816
        %v3830 = vmul.f32 %v3817, 1.442695
        %v3831 = vpow.pop %v3830
        %v3832 = vmul.f32 %v3818, 1.442695
        %v3833 = vpow.pop %v3832
        %v3834 = vmul.f32 %v3819, 1.442695
        %v3835 = vpow.pop %v3834
        %v3836 = vmul.f32 %v3820, 1.442695
        %v3837 = vpow.pop %v3836
        %v3838 = vmul.f32 %v3821, 1.442695
        %v3839 = vpow.pop %v3838
        %v3840 = vmul.f32 %v3822, 1.442695
        %v3841 = vpow.pop %v3840
        %v3842 = vmul.f32 %v3823, 1.442695
        %v3843 = vpow.pop %v3842
        %v3844 = vmul.f32 %v3824, 1.442695
        %v3845 = vpow.pop %v3844
        %v3846 = vmul.f32 %v3825, 1.442695
        %v3847 = vpow.pop %v3846
        %v3848 = vmul.f32 %v3826, 1.442695
        %v3849 = vpow.pop %v3848
        %v3850 = vmul.f32 %v3827, 1.442695
        %v3851 = vpow.pop %v3850
        %v3852 = vmul.f32 %v3828, 1.442695
        %v3853 = vpow.pop %v3852
        %v3854 = vmul.f32 %v3829, 1.442695
        %v3855 = vpow.pop %v3854
        %v3856 = vadd.f32 %v3831, 1.0
        %v3857 = vadd.f32 %v3833, 1.0
        %v3858 = vadd.f32 %v3835, 1.0
        %v3859 = vadd.f32 %v3837, 1.0
        %v3860 = vadd.f32 %v3839, 1.0
        %v3861 = vadd.f32 %v3841, 1.0
        %v3862 = vadd.f32 %v3843, 1.0
        %v3863 = vadd.f32 %v3845, 1.0
        %v3864 = vadd.f32 %v3847, 1.0
        %v3865 = vadd.f32 %v3849, 1.0
        %v3866 = vadd.f32 %v3851, 1.0
        %v3867 = vadd.f32 %v3853, 1.0
        %v3868 = vadd.f32 %v3855, 1.0
        %v3869 = vrcp.pop %v3856
        %v3870 = vrcp.pop %v3857
        %v3871 = vrcp.pop %v3858
        %v3872 = vrcp.pop %v3859
        %v3873 = vrcp.pop %v3860
        %v3874 = vrcp.pop %v3861
        %v3875 = vrcp.pop %v3862
        %v3876 = vrcp.pop %v3863
        %v3877 = vrcp.pop %v3864
        %v3878 = vrcp.pop %v3865
        %v3879 = vrcp.pop %v3866
        %v3880 = vrcp.pop %v3867
        %v3881 = vrcp.pop %v3868
        %3895 = vrot.lane.b32.xlu0 %v3741, 64
        %v3896 = vpop.permute.xlu0 %3895
        %3897 = vrot.lane.b32.xlu0 %v3746, 64
        %v3898 = vpop.permute.xlu0 %3897
        %3899 = vrot.lane.b32.xlu0 %v3751, 64
        %v3900 = vpop.permute.xlu0 %3899
        %3901 = vrot.lane.b32.xlu0 %v3756, 64
        %v3902 = vpop.permute.xlu0 %3901
        %3903 = vrot.lane.b32.xlu0 %v3761, 64
        %v3904 = vpop.permute.xlu0 %3903
        %3905 = vrot.lane.b32.xlu0 %v3766, 64
        %v3906 = vpop.permute.xlu0 %3905
        %3907 = vrot.lane.b32.xlu0 %v3771, 64
        %v3908 = vpop.permute.xlu0 %3907
        %3909 = vrot.lane.b32.xlu0 %v3776, 64
        %v3910 = vpop.permute.xlu0 %3909
        %3911 = vrot.lane.b32.xlu0 %v3781, 64
        %v3912 = vpop.permute.xlu0 %3911
        %3913 = vrot.lane.b32.xlu0 %v3786, 64
        %v3914 = vpop.permute.xlu0 %3913
        %3915 = vrot.lane.b32.xlu0 %v3791, 64
        %v3916 = vpop.permute.xlu0 %3915
        %3917 = vrot.lane.b32.xlu0 %v3796, 64
        %v3918 = vpop.permute.xlu0 %3917
        %3919 = vrot.lane.b32.xlu0 %v3801, 64
        %v3920 = vpop.permute.xlu0 %3919
        %v3934 = vmul.f32 %v3869, %v3896
        %v3935 = vmul.f32 %v3870, %v3898
        %v3936 = vmul.f32 %v3871, %v3900
        %v3937 = vmul.f32 %v3872, %v3902
        %v3938 = vmul.f32 %v3873, %v3904
        %v3939 = vmul.f32 %v3874, %v3906
        %v3940 = vmul.f32 %v3875, %v3908
        %v3941 = vmul.f32 %v3876, %v3910
        %v3942 = vmul.f32 %v3877, %v3912
        %v3943 = vmul.f32 %v3878, %v3914
        %v3944 = vmul.f32 %v3879, %v3916
        %v3945 = vmul.f32 %v3880, %v3918
        %v3946 = vmul.f32 %v3881, %v3920
        %3960 = vrot.lane.b32.xlu0 %v3934, 64
        %v3961 = vpop.permute.xlu0 %3960
        %3962 = vrot.lane.b32.xlu0 %v3935, 64
        %v3963 = vpop.permute.xlu0 %3962
        %3964 = vrot.lane.b32.xlu0 %v3936, 64
        %v3965 = vpop.permute.xlu0 %3964
        %3966 = vrot.lane.b32.xlu0 %v3937, 64
        %v3967 = vpop.permute.xlu0 %3966
        %3968 = vrot.lane.b32.xlu0 %v3938, 64
        %v3969 = vpop.permute.xlu0 %3968
        %3970 = vrot.lane.b32.xlu0 %v3939, 64
        %v3971 = vpop.permute.xlu0 %3970
        %3972 = vrot.lane.b32.xlu0 %v3940, 64
        %v3973 = vpop.permute.xlu0 %3972
        %3974 = vrot.lane.b32.xlu0 %v3941, 64
        %v3975 = vpop.permute.xlu0 %3974
        %3976 = vrot.lane.b32.xlu0 %v3942, 64
        %v3977 = vpop.permute.xlu0 %3976
        %3978 = vrot.lane.b32.xlu0 %v3943, 64
        %v3979 = vpop.permute.xlu0 %3978
        %3980 = vrot.lane.b32.xlu0 %v3944, 64
        %v3981 = vpop.permute.xlu0 %3980
        %3982 = vrot.lane.b32.xlu0 %v3945, 64
        %v3983 = vpop.permute.xlu0 %3982
        %3984 = vrot.lane.b32.xlu0 %v3946, 64
        %v3985 = vpop.permute.xlu0 %3984
        %v3999 = vadd.f32 %v1572, %v3961
        %v4000 = vadd.f32 %v1577, %v3963
        %v4001 = vadd.f32 %v1582, %v3965
        %v4002 = vadd.f32 %v1587, %v3967
        %v4003 = vadd.f32 %v1592, %v3969
        %v4004 = vadd.f32 %v1597, %v3971
        %v4005 = vadd.f32 %v1602, %v3973
        %v4006 = vadd.f32 %v1607, %v3975
        %v4007 = vadd.f32 %v1612, %v3977
        %v4008 = vadd.f32 %v1617, %v3979
        %v4009 = vadd.f32 %v1622, %v3981
        %v4010 = vadd.f32 %v1627, %v3983
        %v4011 = vadd.f32 %v1632, %v3985
        %v4012 = vtanh.pop %v3999
        %v4013 = vtanh.pop %v4000
        %v4014 = vtanh.pop %v4001
        %v4015 = vtanh.pop %v4002
        %v4016 = vtanh.pop %v4003
        %v4017 = vtanh.pop %v4004
        %v4018 = vtanh.pop %v4005
        %v4019 = vtanh.pop %v4006
        %v4020 = vtanh.pop %v4007
        %v4021 = vtanh.pop %v4008
        %v4022 = vtanh.pop %v4009
        %v4023 = vtanh.pop %v4010
        %v4024 = vtanh.pop %v4011
        %v4025 = vsub.f32 1.0, %v3869
        %v4026 = vsub.f32 1.0, %v3870
        %v4027 = vsub.f32 1.0, %v3871
        %v4028 = vsub.f32 1.0, %v3872
        %v4029 = vsub.f32 1.0, %v3873
        %v4030 = vsub.f32 1.0, %v3874
        %v4031 = vsub.f32 1.0, %v3875
        %v4032 = vsub.f32 1.0, %v3876
        %v4033 = vsub.f32 1.0, %v3877
        %v4034 = vsub.f32 1.0, %v3878
        %v4035 = vsub.f32 1.0, %v3879
        %v4036 = vsub.f32 1.0, %v3880
        %v4037 = vsub.f32 1.0, %v3881
        %4051 = vrot.lane.b32.xlu0 %v4012, 96
        %v4052 = vpop.permute.xlu0 %4051
        %4053 = vrot.lane.b32.xlu0 %v4013, 96
        %v4054 = vpop.permute.xlu0 %4053
        %4055 = vrot.lane.b32.xlu0 %v4014, 96
        %v4056 = vpop.permute.xlu0 %4055
        %4057 = vrot.lane.b32.xlu0 %v4015, 96
        %v4058 = vpop.permute.xlu0 %4057
        %4059 = vrot.lane.b32.xlu0 %v4016, 96
        %v4060 = vpop.permute.xlu0 %4059
        %4061 = vrot.lane.b32.xlu0 %v4017, 96
        %v4062 = vpop.permute.xlu0 %4061
        %4063 = vrot.lane.b32.xlu0 %v4018, 96
        %v4064 = vpop.permute.xlu0 %4063
        %4065 = vrot.lane.b32.xlu0 %v4019, 96
        %v4066 = vpop.permute.xlu0 %4065
        %4067 = vrot.lane.b32.xlu0 %v4020, 96
        %v4068 = vpop.permute.xlu0 %4067
        %4069 = vrot.lane.b32.xlu0 %v4021, 96
        %v4070 = vpop.permute.xlu0 %4069
        %4071 = vrot.lane.b32.xlu0 %v4022, 96
        %v4072 = vpop.permute.xlu0 %4071
        %4073 = vrot.lane.b32.xlu0 %v4023, 96
        %v4074 = vpop.permute.xlu0 %4073
        %4075 = vrot.lane.b32.xlu0 %v4024, 96
        %v4076 = vpop.permute.xlu0 %4075
        %v4090 = vmul.f32 %v4025, %v4052
        %v4091 = vmul.f32 %v4026, %v4054
        %v4092 = vmul.f32 %v4027, %v4056
        %v4093 = vmul.f32 %v4028, %v4058
        %v4094 = vmul.f32 %v4029, %v4060
        %v4095 = vmul.f32 %v4030, %v4062
        %v4096 = vmul.f32 %v4031, %v4064
        %v4097 = vmul.f32 %v4032, %v4066
        %v4098 = vmul.f32 %v4033, %v4068
        %v4099 = vmul.f32 %v4034, %v4070
        %v4100 = vmul.f32 %v4035, %v4072
        %v4101 = vmul.f32 %v4036, %v4074
        %v4102 = vmul.f32 %v4037, %v4076
        %v4103 = vmul.f32 %v3869, %v3569
        %v4104 = vmul.f32 %v3870, %v3570
        %v4105 = vmul.f32 %v3871, %v3571
        %v4106 = vmul.f32 %v3872, %v3572
        %v4107 = vmul.f32 %v3873, %v3573
        %v4108 = vmul.f32 %v3874, %v3574
        %v4109 = vmul.f32 %v3875, %v3575
        %v4110 = vmul.f32 %v3876, %v3576
        %v4111 = vmul.f32 %v3877, %v3577
        %v4112 = vmul.f32 %v3878, %v3578
        %v4113 = vmul.f32 %v3879, %v3579
        %v4114 = vmul.f32 %v3880, %v3580
        %v4115 = vmul.f32 %v3881, %v3581
        %v4116 = vadd.f32 %v4090, %v4103
        %v4117 = vadd.f32 %v4091, %v4104
        %v4118 = vadd.f32 %v4092, %v4105
        %v4119 = vadd.f32 %v4093, %v4106
        %v4120 = vadd.f32 %v4094, %v4107
        %v4121 = vadd.f32 %v4095, %v4108
        %v4122 = vadd.f32 %v4096, %v4109
        %v4123 = vadd.f32 %v4097, %v4110
        %v4124 = vadd.f32 %v4098, %v4111
        %v4125 = vadd.f32 %v4099, %v4112
        %v4126 = vadd.f32 %v4100, %v4113
        %v4127 = vadd.f32 %v4101, %v4114
        %v4128 = vadd.f32 %v4102, %v4115
        %4142 = vrot.lane.b32.xlu0 %v4116, 96
        %v4143 = vpop.permute.xlu0 %4142
        %4144 = vrot.lane.b32.xlu0 %v4117, 96
        %v4145 = vpop.permute.xlu0 %4144
        %4146 = vrot.lane.b32.xlu0 %v4118, 96
        %v4147 = vpop.permute.xlu0 %4146
        %4148 = vrot.lane.b32.xlu0 %v4119, 96
        %v4149 = vpop.permute.xlu0 %4148
        %4150 = vrot.lane.b32.xlu0 %v4120, 96
        %v4151 = vpop.permute.xlu0 %4150
        %4152 = vrot.lane.b32.xlu0 %v4121, 96
        %v4153 = vpop.permute.xlu0 %4152
        %4154 = vrot.lane.b32.xlu0 %v4122, 96
        %v4155 = vpop.permute.xlu0 %4154
        %4156 = vrot.lane.b32.xlu0 %v4123, 96
        %v4157 = vpop.permute.xlu0 %4156
        %4158 = vrot.lane.b32.xlu0 %v4124, 96
        %v4159 = vpop.permute.xlu0 %4158
        %4160 = vrot.lane.b32.xlu0 %v4125, 96
        %v4161 = vpop.permute.xlu0 %4160
        %4162 = vrot.lane.b32.xlu0 %v4126, 96
        %v4163 = vpop.permute.xlu0 %4162
        %4164 = vrot.lane.b32.xlu0 %v4127, 96
        %v4165 = vpop.permute.xlu0 %4164
        %4166 = vrot.lane.b32.xlu0 %v4128, 96
        %v4167 = vpop.permute.xlu0 %4166
        %s4181 = scalar_lea.vmem %s770, 312 [#allocation3]
        %4182 = vst.msk [vmem:[%s4181] sm:$0xff] %vm919, %v4143
        %4183 = vst.msk [vmem:[%s4181 + $0x8] sm:$0xff] %vm919, %v4145
        %4184 = vst.msk [vmem:[%s4181 + $0x10] sm:$0xff] %vm919, %v4147
        %4185 = vst.msk [vmem:[%s4181 + $0x18] sm:$0xff] %vm919, %v4149
        %4186 = vst.msk [vmem:[%s4181 + $0x20] sm:$0xff] %vm919, %v4151
        %4187 = vst.msk [vmem:[%s4181 + $0x28] sm:$0xff] %vm919, %v4153
        %4188 = vst.msk [vmem:[%s4181 + $0x30] sm:$0xff] %vm919, %v4155
        %4189 = vst.msk [vmem:[%s4181 + $0x38] sm:$0xff] %vm919, %v4157
        %4190 = vst.msk [vmem:[%s4181 + $0x40] sm:$0xff] %vm919, %v4159
        %4191 = vst.msk [vmem:[%s4181 + $0x48] sm:$0xff] %vm919, %v4161
        %4192 = vst.msk [vmem:[%s4181 + $0x50] sm:$0xff] %vm919, %v4163
        %4193 = vst.msk [vmem:[%s4181 + $0x58] sm:$0xff] %vm919, %v4165
        %4194 = vst.msk [vmem:[%s4181 + $0x60] sm:$0xff] %vm919, %v4167
        %v4195 = vsel %vm919, %v4143, 0
        %v4197 = vsel %vm919, %v4145, 0
        %v4199 = vsel %vm919, %v4147, 0
        %v4201 = vsel %vm919, %v4149, 0
        %v4203 = vsel %vm919, %v4151, 0
        %v4205 = vsel %vm919, %v4153, 0
        %v4207 = vsel %vm919, %v4155, 0
        %v4209 = vsel %vm919, %v4157, 0
        %v4211 = vsel %vm919, %v4159, 0
        %v4213 = vsel %vm919, %v4161, 0
        %v4215 = vsel %vm919, %v4163, 0
        %v4217 = vsel %vm919, %v4165, 0
        %v4219 = vsel %vm919, %v4167, 0
        %4221 = vmatprep.subr.mxu0 0.0
        %4222 = vmatpush1.msra.mxu0 0.0
        %4223 = vmatprep.subr.mxu0 0.0
        %4224 = vmatpush1.msra.mxu0 0.0
        %4225 = vmatprep.subr.mxu0 0.0
        %4226 = vmatpush1.msra.mxu0 0.0
        %4227 = vmatprep.subr.mxu0 0.0
        %4228 = vmatpush1.msra.mxu0 0.0
        %4229 = vmatprep.subr.mxu0 0.0
        %4230 = vmatpush1.msra.mxu0 0.0
        %4231 = vmatprep.subr.mxu0 0.0
        %4232 = vmatpush1.msra.mxu0 0.0
        %4233 = vmatprep.subr.mxu0 0.0
        %4234 = vmatpush1.msra.mxu0 0.0
        %4235 = vmatprep.subr.mxu0 0.0
        %4236 = vmatpush1.msra.mxu0 0.0
        %4237 = vmatprep.subr.mxu0 0.0
        %4238 = vmatpush1.msra.mxu0 0.0
        %4239 = vmatprep.subr.mxu0 0.0
        %4240 = vmatpush1.msra.mxu0 0.0
        %4241 = vmatprep.subr.mxu0 0.0
        %4242 = vmatpush1.msra.mxu0 0.0
        %4243 = vmatprep.subr.mxu0 0.0
        %4244 = vmatpush1.msra.mxu0 0.0
        %4245 = vmatprep.subr.mxu0 0.0
        %4246 = vmatpush1.msra.mxu0 %v780
        %4247 = vmatprep.subr.mxu0 0.0
        %4248 = vmatpush1.msra.mxu0 %v779
        %4249 = vmatprep.subr.mxu0 0.0
        %4250 = vmatpush1.msra.mxu0 %v778
        %4251 = vmatprep.subr.mxu0 0.0
        %4252 = vmatpush1.msra.mxu0 %v777
        %4253 = vmatprep.subr.mxu0 0.0
        %4254 = vmatpush2.msra.mxu0 0.0
        %4255 = vmatprep.subr.mxu0 0.0
        %4256 = vmatpush2.msra.mxu0 0.0
        %4257 = vmatprep.subr.mxu0 0.0
        %4258 = vmatpush2.msra.mxu0 0.0
        %4259 = vmatprep.subr.mxu0 0.0
        %4260 = vmatpush2.msra.mxu0 0.0
        %4261 = vmatprep.subr.mxu0 0.0
        %4262 = vmatpush2.msra.mxu0 0.0
        %4263 = vmatprep.subr.mxu0 0.0
        %4264 = vmatpush2.msra.mxu0 0.0
        %4265 = vmatprep.subr.mxu0 0.0
        %4266 = vmatpush2.msra.mxu0 0.0
        %4267 = vmatprep.subr.mxu0 0.0
        %4268 = vmatpush2.msra.mxu0 0.0
        %4269 = vmatprep.subr.mxu0 0.0
        %4270 = vmatpush2.msra.mxu0 0.0
        %4271 = vmatprep.subr.mxu0 0.0
        %4272 = vmatpush2.msra.mxu0 0.0
        %4273 = vmatprep.subr.mxu0 0.0
        %4274 = vmatpush2.msra.mxu0 0.0
        %4275 = vmatprep.subr.mxu0 0.0
        %4276 = vmatpush2.msra.mxu0 0.0
        %4277 = vmatprep.subr.mxu0 0.0
        %4278 = vmatpush2.msra.mxu0 0.0
        %4279 = vmatprep.subr.mxu0 0.0
        %4280 = vmatpush2.msra.mxu0 0.0
        %4281 = vmatprep.subr.mxu0 0.0
        %4282 = vmatpush2.msra.mxu0 0.0
        %4283 = vmatprep.subr.mxu0 0.0
        %4284 = vmatpush2.msra.mxu0 0.0
        %4285 = vmatprep.mubr.f32.mxu0 0.0
        %4286 = vmatmul.mubr.f32.gmra.mxu0 %v4195
        %v4287 = vpop.f32.mrf.mxu0
        %v4288 = vadd.f32 %v2029, %v4287
        %v4289 = vpop.f32.mrf.mxu0
        %4290 = vmatprep.mubr.f32.mxu0 0.0
        %4291 = vmatmul.mubr.f32.gmra.mxu0 %v4197
        %v4292 = vpop.f32.mrf.mxu0
        %v4293 = vadd.f32 %v2029, %v4292
        %v4294 = vpop.f32.mrf.mxu0
        %4295 = vmatprep.mubr.f32.mxu0 0.0
        %4296 = vmatmul.mubr.f32.gmra.mxu0 %v4199
        %v4297 = vpop.f32.mrf.mxu0
        %v4298 = vadd.f32 %v2029, %v4297
        %v4299 = vpop.f32.mrf.mxu0
        %4300 = vmatprep.mubr.f32.mxu0 0.0
        %4301 = vmatmul.mubr.f32.gmra.mxu0 %v4201
        %v4302 = vpop.f32.mrf.mxu0
        %v4303 = vadd.f32 %v2029, %v4302
        %v4304 = vpop.f32.mrf.mxu0
        %4305 = vmatprep.mubr.f32.mxu0 0.0
        %4306 = vmatmul.mubr.f32.gmra.mxu0 %v4203
        %v4307 = vpop.f32.mrf.mxu0
        %v4308 = vadd.f32 %v2029, %v4307
        %v4309 = vpop.f32.mrf.mxu0
        %4310 = vmatprep.mubr.f32.mxu0 0.0
        %4311 = vmatmul.mubr.f32.gmra.mxu0 %v4205
        %v4312 = vpop.f32.mrf.mxu0
        %v4313 = vadd.f32 %v2029, %v4312
        %v4314 = vpop.f32.mrf.mxu0
        %4315 = vmatprep.mubr.f32.mxu0 0.0
        %4316 = vmatmul.mubr.f32.gmra.mxu0 %v4207
        %v4317 = vpop.f32.mrf.mxu0
        %v4318 = vadd.f32 %v2029, %v4317
        %v4319 = vpop.f32.mrf.mxu0
        %4320 = vmatprep.mubr.f32.mxu0 0.0
        %4321 = vmatmul.mubr.f32.gmra.mxu0 %v4209
        %v4322 = vpop.f32.mrf.mxu0
        %v4323 = vadd.f32 %v2029, %v4322
        %v4324 = vpop.f32.mrf.mxu0
        %4325 = vmatprep.mubr.f32.mxu0 0.0
        %4326 = vmatmul.mubr.f32.gmra.mxu0 %v4211
        %v4327 = vpop.f32.mrf.mxu0
        %v4328 = vadd.f32 %v2029, %v4327
        %v4329 = vpop.f32.mrf.mxu0
        %4330 = vmatprep.mubr.f32.mxu0 0.0
        %4331 = vmatmul.mubr.f32.gmra.mxu0 %v4213
        %v4332 = vpop.f32.mrf.mxu0
        %v4333 = vadd.f32 %v2029, %v4332
        %v4334 = vpop.f32.mrf.mxu0
        %4335 = vmatprep.mubr.f32.mxu0 0.0
        %4336 = vmatmul.mubr.f32.gmra.mxu0 %v4215
        %v4337 = vpop.f32.mrf.mxu0
        %v4338 = vadd.f32 %v2029, %v4337
        %v4339 = vpop.f32.mrf.mxu0
        %4340 = vmatprep.mubr.f32.mxu0 0.0
        %4341 = vmatmul.mubr.f32.gmra.mxu0 %v4217
        %v4342 = vpop.f32.mrf.mxu0
        %v4343 = vadd.f32 %v2029, %v4342
        %v4344 = vpop.f32.mrf.mxu0
        %4345 = vmatprep.mubr.f32.mxu0 0.0
        %4346 = vmatmul.mubr.f32.gmra.mxu0 %v4219
        %v4347 = vpop.f32.mrf.mxu0
        %v4348 = vadd.f32 %v2029, %v4347
        %v4349 = vpop.f32.mrf.mxu0
        %4350 = vdwg.mxu0
        %v4351 = vadd.f32 %v1637, %v4288
        %v4352 = vadd.f32 %v1642, %v4293
        %v4353 = vadd.f32 %v1647, %v4298
        %v4354 = vadd.f32 %v1652, %v4303
        %v4355 = vadd.f32 %v1657, %v4308
        %v4356 = vadd.f32 %v1662, %v4313
        %v4357 = vadd.f32 %v1667, %v4318
        %v4358 = vadd.f32 %v1672, %v4323
        %v4359 = vadd.f32 %v1677, %v4328
        %v4360 = vadd.f32 %v1682, %v4333
        %v4361 = vadd.f32 %v1687, %v4338
        %v4362 = vadd.f32 %v1692, %v4343
        %v4363 = vadd.f32 %v1697, %v4348
        %v4364 = vsub.f32 0.0, %v4351
        %v4365 = vsub.f32 0.0, %v4352
        %v4366 = vsub.f32 0.0, %v4353
        %v4367 = vsub.f32 0.0, %v4354
        %v4368 = vsub.f32 0.0, %v4355
        %v4369 = vsub.f32 0.0, %v4356
        %v4370 = vsub.f32 0.0, %v4357
        %v4371 = vsub.f32 0.0, %v4358
        %v4372 = vsub.f32 0.0, %v4359
        %v4373 = vsub.f32 0.0, %v4360
        %v4374 = vsub.f32 0.0, %v4361
        %v4375 = vsub.f32 0.0, %v4362
        %v4376 = vsub.f32 0.0, %v4363
        %v4377 = vmul.f32 %v4364, 1.442695
        %v4378 = vpow.pop %v4377
        %v4379 = vmul.f32 %v4365, 1.442695
        %v4380 = vpow.pop %v4379
        %v4381 = vmul.f32 %v4366, 1.442695
        %v4382 = vpow.pop %v4381
        %v4383 = vmul.f32 %v4367, 1.442695
        %v4384 = vpow.pop %v4383
        %v4385 = vmul.f32 %v4368, 1.442695
        %v4386 = vpow.pop %v4385
        %v4387 = vmul.f32 %v4369, 1.442695
        %v4388 = vpow.pop %v4387
        %v4389 = vmul.f32 %v4370, 1.442695
        %v4390 = vpow.pop %v4389
        %v4391 = vmul.f32 %v4371, 1.442695
        %v4392 = vpow.pop %v4391
        %v4393 = vmul.f32 %v4372, 1.442695
        %v4394 = vpow.pop %v4393
        %v4395 = vmul.f32 %v4373, 1.442695
        %v4396 = vpow.pop %v4395
        %v4397 = vmul.f32 %v4374, 1.442695
        %v4398 = vpow.pop %v4397
        %v4399 = vmul.f32 %v4375, 1.442695
        %v4400 = vpow.pop %v4399
        %v4401 = vmul.f32 %v4376, 1.442695
        %v4402 = vpow.pop %v4401
        %v4403 = vadd.f32 %v4378, 1.0
        %v4404 = vadd.f32 %v4380, 1.0
        %v4405 = vadd.f32 %v4382, 1.0
        %v4406 = vadd.f32 %v4384, 1.0
        %v4407 = vadd.f32 %v4386, 1.0
        %v4408 = vadd.f32 %v4388, 1.0
        %v4409 = vadd.f32 %v4390, 1.0
        %v4410 = vadd.f32 %v4392, 1.0
        %v4411 = vadd.f32 %v4394, 1.0
        %v4412 = vadd.f32 %v4396, 1.0
        %v4413 = vadd.f32 %v4398, 1.0
        %v4414 = vadd.f32 %v4400, 1.0
        %v4415 = vadd.f32 %v4402, 1.0
        %v4416 = vrcp.pop %v4403
        %v4417 = vrcp.pop %v4404
        %v4418 = vrcp.pop %v4405
        %v4419 = vrcp.pop %v4406
        %v4420 = vrcp.pop %v4407
        %v4421 = vrcp.pop %v4408
        %v4422 = vrcp.pop %v4409
        %v4423 = vrcp.pop %v4410
        %v4424 = vrcp.pop %v4411
        %v4425 = vrcp.pop %v4412
        %v4426 = vrcp.pop %v4413
        %v4427 = vrcp.pop %v4414
        %v4428 = vrcp.pop %v4415
        %4442 = vrot.lane.b32.xlu0 %v4288, 64
        %v4443 = vpop.permute.xlu0 %4442
        %4444 = vrot.lane.b32.xlu0 %v4293, 64
        %v4445 = vpop.permute.xlu0 %4444
        %4446 = vrot.lane.b32.xlu0 %v4298, 64
        %v4447 = vpop.permute.xlu0 %4446
        %4448 = vrot.lane.b32.xlu0 %v4303, 64
        %v4449 = vpop.permute.xlu0 %4448
        %4450 = vrot.lane.b32.xlu0 %v4308, 64
        %v4451 = vpop.permute.xlu0 %4450
        %4452 = vrot.lane.b32.xlu0 %v4313, 64
        %v4453 = vpop.permute.xlu0 %4452
        %4454 = vrot.lane.b32.xlu0 %v4318, 64
        %v4455 = vpop.permute.xlu0 %4454
        %4456 = vrot.lane.b32.xlu0 %v4323, 64
        %v4457 = vpop.permute.xlu0 %4456
        %4458 = vrot.lane.b32.xlu0 %v4328, 64
        %v4459 = vpop.permute.xlu0 %4458
        %4460 = vrot.lane.b32.xlu0 %v4333, 64
        %v4461 = vpop.permute.xlu0 %4460
        %4462 = vrot.lane.b32.xlu0 %v4338, 64
        %v4463 = vpop.permute.xlu0 %4462
        %4464 = vrot.lane.b32.xlu0 %v4343, 64
        %v4465 = vpop.permute.xlu0 %4464
        %4466 = vrot.lane.b32.xlu0 %v4348, 64
        %v4467 = vpop.permute.xlu0 %4466
        %v4481 = vmul.f32 %v4416, %v4443
        %v4482 = vmul.f32 %v4417, %v4445
        %v4483 = vmul.f32 %v4418, %v4447
        %v4484 = vmul.f32 %v4419, %v4449
        %v4485 = vmul.f32 %v4420, %v4451
        %v4486 = vmul.f32 %v4421, %v4453
        %v4487 = vmul.f32 %v4422, %v4455
        %v4488 = vmul.f32 %v4423, %v4457
        %v4489 = vmul.f32 %v4424, %v4459
        %v4490 = vmul.f32 %v4425, %v4461
        %v4491 = vmul.f32 %v4426, %v4463
        %v4492 = vmul.f32 %v4427, %v4465
        %v4493 = vmul.f32 %v4428, %v4467
        %4507 = vrot.lane.b32.xlu0 %v4481, 64
        %v4508 = vpop.permute.xlu0 %4507
        %4509 = vrot.lane.b32.xlu0 %v4482, 64
        %v4510 = vpop.permute.xlu0 %4509
        %4511 = vrot.lane.b32.xlu0 %v4483, 64
        %v4512 = vpop.permute.xlu0 %4511
        %4513 = vrot.lane.b32.xlu0 %v4484, 64
        %v4514 = vpop.permute.xlu0 %4513
        %4515 = vrot.lane.b32.xlu0 %v4485, 64
        %v4516 = vpop.permute.xlu0 %4515
        %4517 = vrot.lane.b32.xlu0 %v4486, 64
        %v4518 = vpop.permute.xlu0 %4517
        %4519 = vrot.lane.b32.xlu0 %v4487, 64
        %v4520 = vpop.permute.xlu0 %4519
        %4521 = vrot.lane.b32.xlu0 %v4488, 64
        %v4522 = vpop.permute.xlu0 %4521
        %4523 = vrot.lane.b32.xlu0 %v4489, 64
        %v4524 = vpop.permute.xlu0 %4523
        %4525 = vrot.lane.b32.xlu0 %v4490, 64
        %v4526 = vpop.permute.xlu0 %4525
        %4527 = vrot.lane.b32.xlu0 %v4491, 64
        %v4528 = vpop.permute.xlu0 %4527
        %4529 = vrot.lane.b32.xlu0 %v4492, 64
        %v4530 = vpop.permute.xlu0 %4529
        %4531 = vrot.lane.b32.xlu0 %v4493, 64
        %v4532 = vpop.permute.xlu0 %4531
        %v4546 = vadd.f32 %v1637, %v4508
        %v4547 = vadd.f32 %v1642, %v4510
        %v4548 = vadd.f32 %v1647, %v4512
        %v4549 = vadd.f32 %v1652, %v4514
        %v4550 = vadd.f32 %v1657, %v4516
        %v4551 = vadd.f32 %v1662, %v4518
        %v4552 = vadd.f32 %v1667, %v4520
        %v4553 = vadd.f32 %v1672, %v4522
        %v4554 = vadd.f32 %v1677, %v4524
        %v4555 = vadd.f32 %v1682, %v4526
        %v4556 = vadd.f32 %v1687, %v4528
        %v4557 = vadd.f32 %v1692, %v4530
        %v4558 = vadd.f32 %v1697, %v4532
        %v4559 = vtanh.pop %v4546
        %v4560 = vtanh.pop %v4547
        %v4561 = vtanh.pop %v4548
        %v4562 = vtanh.pop %v4549
        %v4563 = vtanh.pop %v4550
        %v4564 = vtanh.pop %v4551
        %v4565 = vtanh.pop %v4552
        %v4566 = vtanh.pop %v4553
        %v4567 = vtanh.pop %v4554
        %v4568 = vtanh.pop %v4555
        %v4569 = vtanh.pop %v4556
        %v4570 = vtanh.pop %v4557
        %v4571 = vtanh.pop %v4558
        %v4572 = vsub.f32 1.0, %v4416
        %v4573 = vsub.f32 1.0, %v4417
        %v4574 = vsub.f32 1.0, %v4418
        %v4575 = vsub.f32 1.0, %v4419
        %v4576 = vsub.f32 1.0, %v4420
        %v4577 = vsub.f32 1.0, %v4421
        %v4578 = vsub.f32 1.0, %v4422
        %v4579 = vsub.f32 1.0, %v4423
        %v4580 = vsub.f32 1.0, %v4424
        %v4581 = vsub.f32 1.0, %v4425
        %v4582 = vsub.f32 1.0, %v4426
        %v4583 = vsub.f32 1.0, %v4427
        %v4584 = vsub.f32 1.0, %v4428
        %4598 = vrot.lane.b32.xlu0 %v4559, 96
        %v4599 = vpop.permute.xlu0 %4598
        %4600 = vrot.lane.b32.xlu0 %v4560, 96
        %v4601 = vpop.permute.xlu0 %4600
        %4602 = vrot.lane.b32.xlu0 %v4561, 96
        %v4603 = vpop.permute.xlu0 %4602
        %4604 = vrot.lane.b32.xlu0 %v4562, 96
        %v4605 = vpop.permute.xlu0 %4604
        %4606 = vrot.lane.b32.xlu0 %v4563, 96
        %v4607 = vpop.permute.xlu0 %4606
        %4608 = vrot.lane.b32.xlu0 %v4564, 96
        %v4609 = vpop.permute.xlu0 %4608
        %4610 = vrot.lane.b32.xlu0 %v4565, 96
        %v4611 = vpop.permute.xlu0 %4610
        %4612 = vrot.lane.b32.xlu0 %v4566, 96
        %v4613 = vpop.permute.xlu0 %4612
        %4614 = vrot.lane.b32.xlu0 %v4567, 96
        %v4615 = vpop.permute.xlu0 %4614
        %4616 = vrot.lane.b32.xlu0 %v4568, 96
        %v4617 = vpop.permute.xlu0 %4616
        %4618 = vrot.lane.b32.xlu0 %v4569, 96
        %v4619 = vpop.permute.xlu0 %4618
        %4620 = vrot.lane.b32.xlu0 %v4570, 96
        %v4621 = vpop.permute.xlu0 %4620
        %4622 = vrot.lane.b32.xlu0 %v4571, 96
        %v4623 = vpop.permute.xlu0 %4622
        %v4637 = vmul.f32 %v4572, %v4599
        %v4638 = vmul.f32 %v4573, %v4601
        %v4639 = vmul.f32 %v4574, %v4603
        %v4640 = vmul.f32 %v4575, %v4605
        %v4641 = vmul.f32 %v4576, %v4607
        %v4642 = vmul.f32 %v4577, %v4609
        %v4643 = vmul.f32 %v4578, %v4611
        %v4644 = vmul.f32 %v4579, %v4613
        %v4645 = vmul.f32 %v4580, %v4615
        %v4646 = vmul.f32 %v4581, %v4617
        %v4647 = vmul.f32 %v4582, %v4619
        %v4648 = vmul.f32 %v4583, %v4621
        %v4649 = vmul.f32 %v4584, %v4623
        %v4650 = vmul.f32 %v4416, %v4116
        %v4651 = vmul.f32 %v4417, %v4117
        %v4652 = vmul.f32 %v4418, %v4118
        %v4653 = vmul.f32 %v4419, %v4119
        %v4654 = vmul.f32 %v4420, %v4120
        %v4655 = vmul.f32 %v4421, %v4121
        %v4656 = vmul.f32 %v4422, %v4122
        %v4657 = vmul.f32 %v4423, %v4123
        %v4658 = vmul.f32 %v4424, %v4124
        %v4659 = vmul.f32 %v4425, %v4125
        %v4660 = vmul.f32 %v4426, %v4126
        %v4661 = vmul.f32 %v4427, %v4127
        %v4662 = vmul.f32 %v4428, %v4128
        %v4663 = vadd.f32 %v4637, %v4650
        %v4664 = vadd.f32 %v4638, %v4651
        %v4665 = vadd.f32 %v4639, %v4652
        %v4666 = vadd.f32 %v4640, %v4653
        %v4667 = vadd.f32 %v4641, %v4654
        %v4668 = vadd.f32 %v4642, %v4655
        %v4669 = vadd.f32 %v4643, %v4656
        %v4670 = vadd.f32 %v4644, %v4657
        %v4671 = vadd.f32 %v4645, %v4658
        %v4672 = vadd.f32 %v4646, %v4659
        %v4673 = vadd.f32 %v4647, %v4660
        %v4674 = vadd.f32 %v4648, %v4661
        %v4675 = vadd.f32 %v4649, %v4662
        %4689 = vrot.lane.b32.xlu0 %v4663, 96
        %v4690 = vpop.permute.xlu0 %4689
        %4691 = vrot.lane.b32.xlu0 %v4664, 96
        %v4692 = vpop.permute.xlu0 %4691
        %4693 = vrot.lane.b32.xlu0 %v4665, 96
        %v4694 = vpop.permute.xlu0 %4693
        %4695 = vrot.lane.b32.xlu0 %v4666, 96
        %v4696 = vpop.permute.xlu0 %4695
        %4697 = vrot.lane.b32.xlu0 %v4667, 96
        %v4698 = vpop.permute.xlu0 %4697
        %4699 = vrot.lane.b32.xlu0 %v4668, 96
        %v4700 = vpop.permute.xlu0 %4699
        %4701 = vrot.lane.b32.xlu0 %v4669, 96
        %v4702 = vpop.permute.xlu0 %4701
        %4703 = vrot.lane.b32.xlu0 %v4670, 96
        %v4704 = vpop.permute.xlu0 %4703
        %4705 = vrot.lane.b32.xlu0 %v4671, 96
        %v4706 = vpop.permute.xlu0 %4705
        %4707 = vrot.lane.b32.xlu0 %v4672, 96
        %v4708 = vpop.permute.xlu0 %4707
        %4709 = vrot.lane.b32.xlu0 %v4673, 96
        %v4710 = vpop.permute.xlu0 %4709
        %4711 = vrot.lane.b32.xlu0 %v4674, 96
        %v4712 = vpop.permute.xlu0 %4711
        %4713 = vrot.lane.b32.xlu0 %v4675, 96
        %v4714 = vpop.permute.xlu0 %4713
        %s4728 = scalar_lea.vmem %s770, 416 [#allocation3]
        %4729 = vst.msk [vmem:[%s4728] sm:$0xff] %vm919, %v4690
        %4730 = vst.msk [vmem:[%s4728 + $0x8] sm:$0xff] %vm919, %v4692
        %4731 = vst.msk [vmem:[%s4728 + $0x10] sm:$0xff] %vm919, %v4694
        %4732 = vst.msk [vmem:[%s4728 + $0x18] sm:$0xff] %vm919, %v4696
        %4733 = vst.msk [vmem:[%s4728 + $0x20] sm:$0xff] %vm919, %v4698
        %4734 = vst.msk [vmem:[%s4728 + $0x28] sm:$0xff] %vm919, %v4700
        %4735 = vst.msk [vmem:[%s4728 + $0x30] sm:$0xff] %vm919, %v4702
        %4736 = vst.msk [vmem:[%s4728 + $0x38] sm:$0xff] %vm919, %v4704
        %4737 = vst.msk [vmem:[%s4728 + $0x40] sm:$0xff] %vm919, %v4706
        %4738 = vst.msk [vmem:[%s4728 + $0x48] sm:$0xff] %vm919, %v4708
        %4739 = vst.msk [vmem:[%s4728 + $0x50] sm:$0xff] %vm919, %v4710
        %4740 = vst.msk [vmem:[%s4728 + $0x58] sm:$0xff] %vm919, %v4712
        %4741 = vst.msk [vmem:[%s4728 + $0x60] sm:$0xff] %vm919, %v4714
        %v4742 = vsel %vm919, %v4690, 0
        %v4744 = vsel %vm919, %v4692, 0
        %v4746 = vsel %vm919, %v4694, 0
        %v4748 = vsel %vm919, %v4696, 0
        %v4750 = vsel %vm919, %v4698, 0
        %v4752 = vsel %vm919, %v4700, 0
        %v4754 = vsel %vm919, %v4702, 0
        %v4756 = vsel %vm919, %v4704, 0
        %v4758 = vsel %vm919, %v4706, 0
        %v4760 = vsel %vm919, %v4708, 0
        %v4762 = vsel %vm919, %v4710, 0
        %v4764 = vsel %vm919, %v4712, 0
        %v4766 = vsel %vm919, %v4714, 0
        %4768 = vmatprep.subr.mxu0 0.0
        %4769 = vmatpush1.msra.mxu0 0.0
        %4770 = vmatprep.subr.mxu0 0.0
        %4771 = vmatpush1.msra.mxu0 0.0
        %4772 = vmatprep.subr.mxu0 0.0
        %4773 = vmatpush1.msra.mxu0 0.0
        %4774 = vmatprep.subr.mxu0 0.0
        %4775 = vmatpush1.msra.mxu0 0.0
        %4776 = vmatprep.subr.mxu0 0.0
        %4777 = vmatpush1.msra.mxu0 0.0
        %4778 = vmatprep.subr.mxu0 0.0
        %4779 = vmatpush1.msra.mxu0 0.0
        %4780 = vmatprep.subr.mxu0 0.0
        %4781 = vmatpush1.msra.mxu0 0.0
        %4782 = vmatprep.subr.mxu0 0.0
        %4783 = vmatpush1.msra.mxu0 0.0
        %4784 = vmatprep.subr.mxu0 0.0
        %4785 = vmatpush1.msra.mxu0 0.0
        %4786 = vmatprep.subr.mxu0 0.0
        %4787 = vmatpush1.msra.mxu0 0.0
        %4788 = vmatprep.subr.mxu0 0.0
        %4789 = vmatpush1.msra.mxu0 0.0
        %4790 = vmatprep.subr.mxu0 0.0
        %4791 = vmatpush1.msra.mxu0 0.0
        %4792 = vmatprep.subr.mxu0 0.0
        %4793 = vmatpush1.msra.mxu0 %v780
        %4794 = vmatprep.subr.mxu0 0.0
        %4795 = vmatpush1.msra.mxu0 %v779
        %4796 = vmatprep.subr.mxu0 0.0
        %4797 = vmatpush1.msra.mxu0 %v778
        %4798 = vmatprep.subr.mxu0 0.0
        %4799 = vmatpush1.msra.mxu0 %v777
        %4800 = vmatprep.subr.mxu0 0.0
        %4801 = vmatpush2.msra.mxu0 0.0
        %4802 = vmatprep.subr.mxu0 0.0
        %4803 = vmatpush2.msra.mxu0 0.0
        %4804 = vmatprep.subr.mxu0 0.0
        %4805 = vmatpush2.msra.mxu0 0.0
        %4806 = vmatprep.subr.mxu0 0.0
        %4807 = vmatpush2.msra.mxu0 0.0
        %4808 = vmatprep.subr.mxu0 0.0
        %4809 = vmatpush2.msra.mxu0 0.0
        %4810 = vmatprep.subr.mxu0 0.0
        %4811 = vmatpush2.msra.mxu0 0.0
        %4812 = vmatprep.subr.mxu0 0.0
        %4813 = vmatpush2.msra.mxu0 0.0
        %4814 = vmatprep.subr.mxu0 0.0
        %4815 = vmatpush2.msra.mxu0 0.0
        %4816 = vmatprep.subr.mxu0 0.0
        %4817 = vmatpush2.msra.mxu0 0.0
        %4818 = vmatprep.subr.mxu0 0.0
        %4819 = vmatpush2.msra.mxu0 0.0
        %4820 = vmatprep.subr.mxu0 0.0
        %4821 = vmatpush2.msra.mxu0 0.0
        %4822 = vmatprep.subr.mxu0 0.0
        %4823 = vmatpush2.msra.mxu0 0.0
        %4824 = vmatprep.subr.mxu0 0.0
        %4825 = vmatpush2.msra.mxu0 0.0
        %4826 = vmatprep.subr.mxu0 0.0
        %4827 = vmatpush2.msra.mxu0 0.0
        %4828 = vmatprep.subr.mxu0 0.0
        %4829 = vmatpush2.msra.mxu0 0.0
        %4830 = vmatprep.subr.mxu0 0.0
        %4831 = vmatpush2.msra.mxu0 0.0
        %4832 = vmatprep.mubr.f32.mxu0 0.0
        %4833 = vmatmul.mubr.f32.gmra.mxu0 %v4742
        %v4834 = vpop.f32.mrf.mxu0
        %v4835 = vadd.f32 %v2029, %v4834
        %v4836 = vpop.f32.mrf.mxu0
        %4837 = vmatprep.mubr.f32.mxu0 0.0
        %4838 = vmatmul.mubr.f32.gmra.mxu0 %v4744
        %v4839 = vpop.f32.mrf.mxu0
        %v4840 = vadd.f32 %v2029, %v4839
        %v4841 = vpop.f32.mrf.mxu0
        %4842 = vmatprep.mubr.f32.mxu0 0.0
        %4843 = vmatmul.mubr.f32.gmra.mxu0 %v4746
        %v4844 = vpop.f32.mrf.mxu0
        %v4845 = vadd.f32 %v2029, %v4844
        %v4846 = vpop.f32.mrf.mxu0
        %4847 = vmatprep.mubr.f32.mxu0 0.0
        %4848 = vmatmul.mubr.f32.gmra.mxu0 %v4748
        %v4849 = vpop.f32.mrf.mxu0
        %v4850 = vadd.f32 %v2029, %v4849
        %v4851 = vpop.f32.mrf.mxu0
        %4852 = vmatprep.mubr.f32.mxu0 0.0
        %4853 = vmatmul.mubr.f32.gmra.mxu0 %v4750
        %v4854 = vpop.f32.mrf.mxu0
        %v4855 = vadd.f32 %v2029, %v4854
        %v4856 = vpop.f32.mrf.mxu0
        %4857 = vmatprep.mubr.f32.mxu0 0.0
        %4858 = vmatmul.mubr.f32.gmra.mxu0 %v4752
        %v4859 = vpop.f32.mrf.mxu0
        %v4860 = vadd.f32 %v2029, %v4859
        %v4861 = vpop.f32.mrf.mxu0
        %4862 = vmatprep.mubr.f32.mxu0 0.0
        %4863 = vmatmul.mubr.f32.gmra.mxu0 %v4754
        %v4864 = vpop.f32.mrf.mxu0
        %v4865 = vadd.f32 %v2029, %v4864
        %v4866 = vpop.f32.mrf.mxu0
        %4867 = vmatprep.mubr.f32.mxu0 0.0
        %4868 = vmatmul.mubr.f32.gmra.mxu0 %v4756
        %v4869 = vpop.f32.mrf.mxu0
        %v4870 = vadd.f32 %v2029, %v4869
        %v4871 = vpop.f32.mrf.mxu0
        %4872 = vmatprep.mubr.f32.mxu0 0.0
        %4873 = vmatmul.mubr.f32.gmra.mxu0 %v4758
        %v4874 = vpop.f32.mrf.mxu0
        %v4875 = vadd.f32 %v2029, %v4874
        %v4876 = vpop.f32.mrf.mxu0
        %4877 = vmatprep.mubr.f32.mxu0 0.0
        %4878 = vmatmul.mubr.f32.gmra.mxu0 %v4760
        %v4879 = vpop.f32.mrf.mxu0
        %v4880 = vadd.f32 %v2029, %v4879
        %v4881 = vpop.f32.mrf.mxu0
        %4882 = vmatprep.mubr.f32.mxu0 0.0
        %4883 = vmatmul.mubr.f32.gmra.mxu0 %v4762
        %v4884 = vpop.f32.mrf.mxu0
        %v4885 = vadd.f32 %v2029, %v4884
        %v4886 = vpop.f32.mrf.mxu0
        %4887 = vmatprep.mubr.f32.mxu0 0.0
        %4888 = vmatmul.mubr.f32.gmra.mxu0 %v4764
        %v4889 = vpop.f32.mrf.mxu0
        %v4890 = vadd.f32 %v2029, %v4889
        %v4891 = vpop.f32.mrf.mxu0
        %4892 = vmatprep.mubr.f32.mxu0 0.0
        %4893 = vmatmul.mubr.f32.gmra.mxu0 %v4766
        %v4894 = vpop.f32.mrf.mxu0
        %v4895 = vadd.f32 %v2029, %v4894
        %v4896 = vpop.f32.mrf.mxu0
        %4897 = vdwg.mxu0
        %v4898 = vadd.f32 %v1702, %v4835
        %v4899 = vadd.f32 %v1707, %v4840
        %v4900 = vadd.f32 %v1712, %v4845
        %v4901 = vadd.f32 %v1717, %v4850
        %v4902 = vadd.f32 %v1722, %v4855
        %v4903 = vadd.f32 %v1727, %v4860
        %v4904 = vadd.f32 %v1732, %v4865
        %v4905 = vadd.f32 %v1737, %v4870
        %v4906 = vadd.f32 %v1742, %v4875
        %v4907 = vadd.f32 %v1747, %v4880
        %v4908 = vadd.f32 %v1752, %v4885
        %v4909 = vadd.f32 %v1757, %v4890
        %v4910 = vadd.f32 %v1762, %v4895
        %v4911 = vsub.f32 0.0, %v4898
        %v4912 = vsub.f32 0.0, %v4899
        %v4913 = vsub.f32 0.0, %v4900
        %v4914 = vsub.f32 0.0, %v4901
        %v4915 = vsub.f32 0.0, %v4902
        %v4916 = vsub.f32 0.0, %v4903
        %v4917 = vsub.f32 0.0, %v4904
        %v4918 = vsub.f32 0.0, %v4905
        %v4919 = vsub.f32 0.0, %v4906
        %v4920 = vsub.f32 0.0, %v4907
        %v4921 = vsub.f32 0.0, %v4908
        %v4922 = vsub.f32 0.0, %v4909
        %v4923 = vsub.f32 0.0, %v4910
        %v4924 = vmul.f32 %v4911, 1.442695
        %v4925 = vpow.pop %v4924
        %v4926 = vmul.f32 %v4912, 1.442695
        %v4927 = vpow.pop %v4926
        %v4928 = vmul.f32 %v4913, 1.442695
        %v4929 = vpow.pop %v4928
        %v4930 = vmul.f32 %v4914, 1.442695
        %v4931 = vpow.pop %v4930
        %v4932 = vmul.f32 %v4915, 1.442695
        %v4933 = vpow.pop %v4932
        %v4934 = vmul.f32 %v4916, 1.442695
        %v4935 = vpow.pop %v4934
        %v4936 = vmul.f32 %v4917, 1.442695
        %v4937 = vpow.pop %v4936
        %v4938 = vmul.f32 %v4918, 1.442695
        %v4939 = vpow.pop %v4938
        %v4940 = vmul.f32 %v4919, 1.442695
        %v4941 = vpow.pop %v4940
        %v4942 = vmul.f32 %v4920, 1.442695
        %v4943 = vpow.pop %v4942
        %v4944 = vmul.f32 %v4921, 1.442695
        %v4945 = vpow.pop %v4944
        %v4946 = vmul.f32 %v4922, 1.442695
        %v4947 = vpow.pop %v4946
        %v4948 = vmul.f32 %v4923, 1.442695
        %v4949 = vpow.pop %v4948
        %v4950 = vadd.f32 %v4925, 1.0
        %v4951 = vadd.f32 %v4927, 1.0
        %v4952 = vadd.f32 %v4929, 1.0
        %v4953 = vadd.f32 %v4931, 1.0
        %v4954 = vadd.f32 %v4933, 1.0
        %v4955 = vadd.f32 %v4935, 1.0
        %v4956 = vadd.f32 %v4937, 1.0
        %v4957 = vadd.f32 %v4939, 1.0
        %v4958 = vadd.f32 %v4941, 1.0
        %v4959 = vadd.f32 %v4943, 1.0
        %v4960 = vadd.f32 %v4945, 1.0
        %v4961 = vadd.f32 %v4947, 1.0
        %v4962 = vadd.f32 %v4949, 1.0
        %v4963 = vrcp.pop %v4950
        %v4964 = vrcp.pop %v4951
        %v4965 = vrcp.pop %v4952
        %v4966 = vrcp.pop %v4953
        %v4967 = vrcp.pop %v4954
        %v4968 = vrcp.pop %v4955
        %v4969 = vrcp.pop %v4956
        %v4970 = vrcp.pop %v4957
        %v4971 = vrcp.pop %v4958
        %v4972 = vrcp.pop %v4959
        %v4973 = vrcp.pop %v4960
        %v4974 = vrcp.pop %v4961
        %v4975 = vrcp.pop %v4962
        %4989 = vrot.lane.b32.xlu0 %v4835, 64
        %v4990 = vpop.permute.xlu0 %4989
        %4991 = vrot.lane.b32.xlu0 %v4840, 64
        %v4992 = vpop.permute.xlu0 %4991
        %4993 = vrot.lane.b32.xlu0 %v4845, 64
        %v4994 = vpop.permute.xlu0 %4993
        %4995 = vrot.lane.b32.xlu0 %v4850, 64
        %v4996 = vpop.permute.xlu0 %4995
        %4997 = vrot.lane.b32.xlu0 %v4855, 64
        %v4998 = vpop.permute.xlu0 %4997
        %4999 = vrot.lane.b32.xlu0 %v4860, 64
        %v5000 = vpop.permute.xlu0 %4999
        %5001 = vrot.lane.b32.xlu0 %v4865, 64
        %v5002 = vpop.permute.xlu0 %5001
        %5003 = vrot.lane.b32.xlu0 %v4870, 64
        %v5004 = vpop.permute.xlu0 %5003
        %5005 = vrot.lane.b32.xlu0 %v4875, 64
        %v5006 = vpop.permute.xlu0 %5005
        %5007 = vrot.lane.b32.xlu0 %v4880, 64
        %v5008 = vpop.permute.xlu0 %5007
        %5009 = vrot.lane.b32.xlu0 %v4885, 64
        %v5010 = vpop.permute.xlu0 %5009
        %5011 = vrot.lane.b32.xlu0 %v4890, 64
        %v5012 = vpop.permute.xlu0 %5011
        %5013 = vrot.lane.b32.xlu0 %v4895, 64
        %v5014 = vpop.permute.xlu0 %5013
        %v5028 = vmul.f32 %v4963, %v4990
        %v5029 = vmul.f32 %v4964, %v4992
        %v5030 = vmul.f32 %v4965, %v4994
        %v5031 = vmul.f32 %v4966, %v4996
        %v5032 = vmul.f32 %v4967, %v4998
        %v5033 = vmul.f32 %v4968, %v5000
        %v5034 = vmul.f32 %v4969, %v5002
        %v5035 = vmul.f32 %v4970, %v5004
        %v5036 = vmul.f32 %v4971, %v5006
        %v5037 = vmul.f32 %v4972, %v5008
        %v5038 = vmul.f32 %v4973, %v5010
        %v5039 = vmul.f32 %v4974, %v5012
        %v5040 = vmul.f32 %v4975, %v5014
        %5054 = vrot.lane.b32.xlu0 %v5028, 64
        %v5055 = vpop.permute.xlu0 %5054
        %5056 = vrot.lane.b32.xlu0 %v5029, 64
        %v5057 = vpop.permute.xlu0 %5056
        %5058 = vrot.lane.b32.xlu0 %v5030, 64
        %v5059 = vpop.permute.xlu0 %5058
        %5060 = vrot.lane.b32.xlu0 %v5031, 64
        %v5061 = vpop.permute.xlu0 %5060
        %5062 = vrot.lane.b32.xlu0 %v5032, 64
        %v5063 = vpop.permute.xlu0 %5062
        %5064 = vrot.lane.b32.xlu0 %v5033, 64
        %v5065 = vpop.permute.xlu0 %5064
        %5066 = vrot.lane.b32.xlu0 %v5034, 64
        %v5067 = vpop.permute.xlu0 %5066
        %5068 = vrot.lane.b32.xlu0 %v5035, 64
        %v5069 = vpop.permute.xlu0 %5068
        %5070 = vrot.lane.b32.xlu0 %v5036, 64
        %v5071 = vpop.permute.xlu0 %5070
        %5072 = vrot.lane.b32.xlu0 %v5037, 64
        %v5073 = vpop.permute.xlu0 %5072
        %5074 = vrot.lane.b32.xlu0 %v5038, 64
        %v5075 = vpop.permute.xlu0 %5074
        %5076 = vrot.lane.b32.xlu0 %v5039, 64
        %v5077 = vpop.permute.xlu0 %5076
        %5078 = vrot.lane.b32.xlu0 %v5040, 64
        %v5079 = vpop.permute.xlu0 %5078
        %v5093 = vadd.f32 %v1702, %v5055
        %v5094 = vadd.f32 %v1707, %v5057
        %v5095 = vadd.f32 %v1712, %v5059
        %v5096 = vadd.f32 %v1717, %v5061
        %v5097 = vadd.f32 %v1722, %v5063
        %v5098 = vadd.f32 %v1727, %v5065
        %v5099 = vadd.f32 %v1732, %v5067
        %v5100 = vadd.f32 %v1737, %v5069
        %v5101 = vadd.f32 %v1742, %v5071
        %v5102 = vadd.f32 %v1747, %v5073
        %v5103 = vadd.f32 %v1752, %v5075
        %v5104 = vadd.f32 %v1757, %v5077
        %v5105 = vadd.f32 %v1762, %v5079
        %v5106 = vtanh.pop %v5093
        %v5107 = vtanh.pop %v5094
        %v5108 = vtanh.pop %v5095
        %v5109 = vtanh.pop %v5096
        %v5110 = vtanh.pop %v5097
        %v5111 = vtanh.pop %v5098
        %v5112 = vtanh.pop %v5099
        %v5113 = vtanh.pop %v5100
        %v5114 = vtanh.pop %v5101
        %v5115 = vtanh.pop %v5102
        %v5116 = vtanh.pop %v5103
        %v5117 = vtanh.pop %v5104
        %v5118 = vtanh.pop %v5105
        %v5119 = vsub.f32 1.0, %v4963
        %v5120 = vsub.f32 1.0, %v4964
        %v5121 = vsub.f32 1.0, %v4965
        %v5122 = vsub.f32 1.0, %v4966
        %v5123 = vsub.f32 1.0, %v4967
        %v5124 = vsub.f32 1.0, %v4968
        %v5125 = vsub.f32 1.0, %v4969
        %v5126 = vsub.f32 1.0, %v4970
        %v5127 = vsub.f32 1.0, %v4971
        %v5128 = vsub.f32 1.0, %v4972
        %v5129 = vsub.f32 1.0, %v4973
        %v5130 = vsub.f32 1.0, %v4974
        %v5131 = vsub.f32 1.0, %v4975
        %5145 = vrot.lane.b32.xlu0 %v5106, 96
        %v5146 = vpop.permute.xlu0 %5145
        %5147 = vrot.lane.b32.xlu0 %v5107, 96
        %v5148 = vpop.permute.xlu0 %5147
        %5149 = vrot.lane.b32.xlu0 %v5108, 96
        %v5150 = vpop.permute.xlu0 %5149
        %5151 = vrot.lane.b32.xlu0 %v5109, 96
        %v5152 = vpop.permute.xlu0 %5151
        %5153 = vrot.lane.b32.xlu0 %v5110, 96
        %v5154 = vpop.permute.xlu0 %5153
        %5155 = vrot.lane.b32.xlu0 %v5111, 96
        %v5156 = vpop.permute.xlu0 %5155
        %5157 = vrot.lane.b32.xlu0 %v5112, 96
        %v5158 = vpop.permute.xlu0 %5157
        %5159 = vrot.lane.b32.xlu0 %v5113, 96
        %v5160 = vpop.permute.xlu0 %5159
        %5161 = vrot.lane.b32.xlu0 %v5114, 96
        %v5162 = vpop.permute.xlu0 %5161
        %5163 = vrot.lane.b32.xlu0 %v5115, 96
        %v5164 = vpop.permute.xlu0 %5163
        %5165 = vrot.lane.b32.xlu0 %v5116, 96
        %v5166 = vpop.permute.xlu0 %5165
        %5167 = vrot.lane.b32.xlu0 %v5117, 96
        %v5168 = vpop.permute.xlu0 %5167
        %5169 = vrot.lane.b32.xlu0 %v5118, 96
        %v5170 = vpop.permute.xlu0 %5169
        %v5184 = vmul.f32 %v5119, %v5146
        %v5185 = vmul.f32 %v5120, %v5148
        %v5186 = vmul.f32 %v5121, %v5150
        %v5187 = vmul.f32 %v5122, %v5152
        %v5188 = vmul.f32 %v5123, %v5154
        %v5189 = vmul.f32 %v5124, %v5156
        %v5190 = vmul.f32 %v5125, %v5158
        %v5191 = vmul.f32 %v5126, %v5160
        %v5192 = vmul.f32 %v5127, %v5162
        %v5193 = vmul.f32 %v5128, %v5164
        %v5194 = vmul.f32 %v5129, %v5166
        %v5195 = vmul.f32 %v5130, %v5168
        %v5196 = vmul.f32 %v5131, %v5170
        %v5197 = vmul.f32 %v4963, %v4663
        %v5198 = vmul.f32 %v4964, %v4664
        %v5199 = vmul.f32 %v4965, %v4665
        %v5200 = vmul.f32 %v4966, %v4666
        %v5201 = vmul.f32 %v4967, %v4667
        %v5202 = vmul.f32 %v4968, %v4668
        %v5203 = vmul.f32 %v4969, %v4669
        %v5204 = vmul.f32 %v4970, %v4670
        %v5205 = vmul.f32 %v4971, %v4671
        %v5206 = vmul.f32 %v4972, %v4672
        %v5207 = vmul.f32 %v4973, %v4673
        %v5208 = vmul.f32 %v4974, %v4674
        %v5209 = vmul.f32 %v4975, %v4675
        %v5210 = vadd.f32 %v5184, %v5197
        %v5211 = vadd.f32 %v5185, %v5198
        %v5212 = vadd.f32 %v5186, %v5199
        %v5213 = vadd.f32 %v5187, %v5200
        %v5214 = vadd.f32 %v5188, %v5201
        %v5215 = vadd.f32 %v5189, %v5202
        %v5216 = vadd.f32 %v5190, %v5203
        %v5217 = vadd.f32 %v5191, %v5204
        %v5218 = vadd.f32 %v5192, %v5205
        %v5219 = vadd.f32 %v5193, %v5206
        %v5220 = vadd.f32 %v5194, %v5207
        %v5221 = vadd.f32 %v5195, %v5208
        %v5222 = vadd.f32 %v5196, %v5209
        %5236 = vrot.lane.b32.xlu0 %v5210, 96
        %v5237 = vpop.permute.xlu0 %5236
        %5238 = vrot.lane.b32.xlu0 %v5211, 96
        %v5239 = vpop.permute.xlu0 %5238
        %5240 = vrot.lane.b32.xlu0 %v5212, 96
        %v5241 = vpop.permute.xlu0 %5240
        %5242 = vrot.lane.b32.xlu0 %v5213, 96
        %v5243 = vpop.permute.xlu0 %5242
        %5244 = vrot.lane.b32.xlu0 %v5214, 96
        %v5245 = vpop.permute.xlu0 %5244
        %5246 = vrot.lane.b32.xlu0 %v5215, 96
        %v5247 = vpop.permute.xlu0 %5246
        %5248 = vrot.lane.b32.xlu0 %v5216, 96
        %v5249 = vpop.permute.xlu0 %5248
        %5250 = vrot.lane.b32.xlu0 %v5217, 96
        %v5251 = vpop.permute.xlu0 %5250
        %5252 = vrot.lane.b32.xlu0 %v5218, 96
        %v5253 = vpop.permute.xlu0 %5252
        %5254 = vrot.lane.b32.xlu0 %v5219, 96
        %v5255 = vpop.permute.xlu0 %5254
        %5256 = vrot.lane.b32.xlu0 %v5220, 96
        %v5257 = vpop.permute.xlu0 %5256
        %5258 = vrot.lane.b32.xlu0 %v5221, 96
        %v5259 = vpop.permute.xlu0 %5258
        %5260 = vrot.lane.b32.xlu0 %v5222, 96
        %v5261 = vpop.permute.xlu0 %5260
        %s5275 = scalar_lea.vmem %s770, 520 [#allocation3]
        %5276 = vst.msk [vmem:[%s5275] sm:$0xff] %vm919, %v5237
        %5277 = vst.msk [vmem:[%s5275 + $0x8] sm:$0xff] %vm919, %v5239
        %5278 = vst.msk [vmem:[%s5275 + $0x10] sm:$0xff] %vm919, %v5241
        %5279 = vst.msk [vmem:[%s5275 + $0x18] sm:$0xff] %vm919, %v5243
        %5280 = vst.msk [vmem:[%s5275 + $0x20] sm:$0xff] %vm919, %v5245
        %5281 = vst.msk [vmem:[%s5275 + $0x28] sm:$0xff] %vm919, %v5247
        %5282 = vst.msk [vmem:[%s5275 + $0x30] sm:$0xff] %vm919, %v5249
        %5283 = vst.msk [vmem:[%s5275 + $0x38] sm:$0xff] %vm919, %v5251
        %5284 = vst.msk [vmem:[%s5275 + $0x40] sm:$0xff] %vm919, %v5253
        %5285 = vst.msk [vmem:[%s5275 + $0x48] sm:$0xff] %vm919, %v5255
        %5286 = vst.msk [vmem:[%s5275 + $0x50] sm:$0xff] %vm919, %v5257
        %5287 = vst.msk [vmem:[%s5275 + $0x58] sm:$0xff] %vm919, %v5259
        %5288 = vst.msk [vmem:[%s5275 + $0x60] sm:$0xff] %vm919, %v5261
        %v5289 = vsel %vm919, %v5237, 0
        %v5291 = vsel %vm919, %v5239, 0
        %v5293 = vsel %vm919, %v5241, 0
        %v5295 = vsel %vm919, %v5243, 0
        %v5297 = vsel %vm919, %v5245, 0
        %v5299 = vsel %vm919, %v5247, 0
        %v5301 = vsel %vm919, %v5249, 0
        %v5303 = vsel %vm919, %v5251, 0
        %v5305 = vsel %vm919, %v5253, 0
        %v5307 = vsel %vm919, %v5255, 0
        %v5309 = vsel %vm919, %v5257, 0
        %v5311 = vsel %vm919, %v5259, 0
        %v5313 = vsel %vm919, %v5261, 0
        %5315 = vmatprep.subr.mxu0 0.0
        %5316 = vmatpush1.msra.mxu0 0.0
        %5317 = vmatprep.subr.mxu0 0.0
        %5318 = vmatpush1.msra.mxu0 0.0
        %5319 = vmatprep.subr.mxu0 0.0
        %5320 = vmatpush1.msra.mxu0 0.0
        %5321 = vmatprep.subr.mxu0 0.0
        %5322 = vmatpush1.msra.mxu0 0.0
        %5323 = vmatprep.subr.mxu0 0.0
        %5324 = vmatpush1.msra.mxu0 0.0
        %5325 = vmatprep.subr.mxu0 0.0
        %5326 = vmatpush1.msra.mxu0 0.0
        %5327 = vmatprep.subr.mxu0 0.0
        %5328 = vmatpush1.msra.mxu0 0.0
        %5329 = vmatprep.subr.mxu0 0.0
        %5330 = vmatpush1.msra.mxu0 0.0
        %5331 = vmatprep.subr.mxu0 0.0
        %5332 = vmatpush1.msra.mxu0 0.0
        %5333 = vmatprep.subr.mxu0 0.0
        %5334 = vmatpush1.msra.mxu0 0.0
        %5335 = vmatprep.subr.mxu0 0.0
        %5336 = vmatpush1.msra.mxu0 0.0
        %5337 = vmatprep.subr.mxu0 0.0
        %5338 = vmatpush1.msra.mxu0 0.0
        %5339 = vmatprep.subr.mxu0 0.0
        %5340 = vmatpush1.msra.mxu0 %v780
        %5341 = vmatprep.subr.mxu0 0.0
        %5342 = vmatpush1.msra.mxu0 %v779
        %5343 = vmatprep.subr.mxu0 0.0
        %5344 = vmatpush1.msra.mxu0 %v778
        %5345 = vmatprep.subr.mxu0 0.0
        %5346 = vmatpush1.msra.mxu0 %v777
        %5347 = vmatprep.subr.mxu0 0.0
        %5348 = vmatpush2.msra.mxu0 0.0
        %5349 = vmatprep.subr.mxu0 0.0
        %5350 = vmatpush2.msra.mxu0 0.0
        %5351 = vmatprep.subr.mxu0 0.0
        %5352 = vmatpush2.msra.mxu0 0.0
        %5353 = vmatprep.subr.mxu0 0.0
        %5354 = vmatpush2.msra.mxu0 0.0
        %5355 = vmatprep.subr.mxu0 0.0
        %5356 = vmatpush2.msra.mxu0 0.0
        %5357 = vmatprep.subr.mxu0 0.0
        %5358 = vmatpush2.msra.mxu0 0.0
        %5359 = vmatprep.subr.mxu0 0.0
        %5360 = vmatpush2.msra.mxu0 0.0
        %5361 = vmatprep.subr.mxu0 0.0
        %5362 = vmatpush2.msra.mxu0 0.0
        %5363 = vmatprep.subr.mxu0 0.0
        %5364 = vmatpush2.msra.mxu0 0.0
        %5365 = vmatprep.subr.mxu0 0.0
        %5366 = vmatpush2.msra.mxu0 0.0
        %5367 = vmatprep.subr.mxu0 0.0
        %5368 = vmatpush2.msra.mxu0 0.0
        %5369 = vmatprep.subr.mxu0 0.0
        %5370 = vmatpush2.msra.mxu0 0.0
        %5371 = vmatprep.subr.mxu0 0.0
        %5372 = vmatpush2.msra.mxu0 0.0
        %5373 = vmatprep.subr.mxu0 0.0
        %5374 = vmatpush2.msra.mxu0 0.0
        %5375 = vmatprep.subr.mxu0 0.0
        %5376 = vmatpush2.msra.mxu0 0.0
        %5377 = vmatprep.subr.mxu0 0.0
        %5378 = vmatpush2.msra.mxu0 0.0
        %5379 = vmatprep.mubr.f32.mxu0 0.0
        %5380 = vmatmul.mubr.f32.gmra.mxu0 %v5289
        %v5381 = vpop.f32.mrf.mxu0
        %v5382 = vadd.f32 %v2029, %v5381
        %v5383 = vpop.f32.mrf.mxu0
        %5384 = vmatprep.mubr.f32.mxu0 0.0
        %5385 = vmatmul.mubr.f32.gmra.mxu0 %v5291
        %v5386 = vpop.f32.mrf.mxu0
        %v5387 = vadd.f32 %v2029, %v5386
        %v5388 = vpop.f32.mrf.mxu0
        %5389 = vmatprep.mubr.f32.mxu0 0.0
        %5390 = vmatmul.mubr.f32.gmra.mxu0 %v5293
        %v5391 = vpop.f32.mrf.mxu0
        %v5392 = vadd.f32 %v2029, %v5391
        %v5393 = vpop.f32.mrf.mxu0
        %5394 = vmatprep.mubr.f32.mxu0 0.0
        %5395 = vmatmul.mubr.f32.gmra.mxu0 %v5295
        %v5396 = vpop.f32.mrf.mxu0
        %v5397 = vadd.f32 %v2029, %v5396
        %v5398 = vpop.f32.mrf.mxu0
        %5399 = vmatprep.mubr.f32.mxu0 0.0
        %5400 = vmatmul.mubr.f32.gmra.mxu0 %v5297
        %v5401 = vpop.f32.mrf.mxu0
        %v5402 = vadd.f32 %v2029, %v5401
        %v5403 = vpop.f32.mrf.mxu0
        %5404 = vmatprep.mubr.f32.mxu0 0.0
        %5405 = vmatmul.mubr.f32.gmra.mxu0 %v5299
        %v5406 = vpop.f32.mrf.mxu0
        %v5407 = vadd.f32 %v2029, %v5406
        %v5408 = vpop.f32.mrf.mxu0
        %5409 = vmatprep.mubr.f32.mxu0 0.0
        %5410 = vmatmul.mubr.f32.gmra.mxu0 %v5301
        %v5411 = vpop.f32.mrf.mxu0
        %v5412 = vadd.f32 %v2029, %v5411
        %v5413 = vpop.f32.mrf.mxu0
        %5414 = vmatprep.mubr.f32.mxu0 0.0
        %5415 = vmatmul.mubr.f32.gmra.mxu0 %v5303
        %v5416 = vpop.f32.mrf.mxu0
        %v5417 = vadd.f32 %v2029, %v5416
        %v5418 = vpop.f32.mrf.mxu0
        %5419 = vmatprep.mubr.f32.mxu0 0.0
        %5420 = vmatmul.mubr.f32.gmra.mxu0 %v5305
        %v5421 = vpop.f32.mrf.mxu0
        %v5422 = vadd.f32 %v2029, %v5421
        %v5423 = vpop.f32.mrf.mxu0
        %5424 = vmatprep.mubr.f32.mxu0 0.0
        %5425 = vmatmul.mubr.f32.gmra.mxu0 %v5307
        %v5426 = vpop.f32.mrf.mxu0
        %v5427 = vadd.f32 %v2029, %v5426
        %v5428 = vpop.f32.mrf.mxu0
        %5429 = vmatprep.mubr.f32.mxu0 0.0
        %5430 = vmatmul.mubr.f32.gmra.mxu0 %v5309
        %v5431 = vpop.f32.mrf.mxu0
        %v5432 = vadd.f32 %v2029, %v5431
        %v5433 = vpop.f32.mrf.mxu0
        %5434 = vmatprep.mubr.f32.mxu0 0.0
        %5435 = vmatmul.mubr.f32.gmra.mxu0 %v5311
        %v5436 = vpop.f32.mrf.mxu0
        %v5437 = vadd.f32 %v2029, %v5436
        %v5438 = vpop.f32.mrf.mxu0
        %5439 = vmatprep.mubr.f32.mxu0 0.0
        %5440 = vmatmul.mubr.f32.gmra.mxu0 %v5313
        %v5441 = vpop.f32.mrf.mxu0
        %v5442 = vadd.f32 %v2029, %v5441
        %v5443 = vpop.f32.mrf.mxu0
        %5444 = vdwg.mxu0
        %v5445 = vadd.f32 %v1767, %v5382
        %v5446 = vadd.f32 %v1772, %v5387
        %v5447 = vadd.f32 %v1777, %v5392
        %v5448 = vadd.f32 %v1782, %v5397
        %v5449 = vadd.f32 %v1787, %v5402
        %v5450 = vadd.f32 %v1792, %v5407
        %v5451 = vadd.f32 %v1797, %v5412
        %v5452 = vadd.f32 %v1802, %v5417
        %v5453 = vadd.f32 %v1807, %v5422
        %v5454 = vadd.f32 %v1812, %v5427
        %v5455 = vadd.f32 %v1817, %v5432
        %v5456 = vadd.f32 %v1822, %v5437
        %v5457 = vadd.f32 %v1827, %v5442
        %v5458 = vsub.f32 0.0, %v5445
        %v5459 = vsub.f32 0.0, %v5446
        %v5460 = vsub.f32 0.0, %v5447
        %v5461 = vsub.f32 0.0, %v5448
        %v5462 = vsub.f32 0.0, %v5449
        %v5463 = vsub.f32 0.0, %v5450
        %v5464 = vsub.f32 0.0, %v5451
        %v5465 = vsub.f32 0.0, %v5452
        %v5466 = vsub.f32 0.0, %v5453
        %v5467 = vsub.f32 0.0, %v5454
        %v5468 = vsub.f32 0.0, %v5455
        %v5469 = vsub.f32 0.0, %v5456
        %v5470 = vsub.f32 0.0, %v5457
        %v5471 = vmul.f32 %v5458, 1.442695
        %v5472 = vpow.pop %v5471
        %v5473 = vmul.f32 %v5459, 1.442695
        %v5474 = vpow.pop %v5473
        %v5475 = vmul.f32 %v5460, 1.442695
        %v5476 = vpow.pop %v5475
        %v5477 = vmul.f32 %v5461, 1.442695
        %v5478 = vpow.pop %v5477
        %v5479 = vmul.f32 %v5462, 1.442695
        %v5480 = vpow.pop %v5479
        %v5481 = vmul.f32 %v5463, 1.442695
        %v5482 = vpow.pop %v5481
        %v5483 = vmul.f32 %v5464, 1.442695
        %v5484 = vpow.pop %v5483
        %v5485 = vmul.f32 %v5465, 1.442695
        %v5486 = vpow.pop %v5485
        %v5487 = vmul.f32 %v5466, 1.442695
        %v5488 = vpow.pop %v5487
        %v5489 = vmul.f32 %v5467, 1.442695
        %v5490 = vpow.pop %v5489
        %v5491 = vmul.f32 %v5468, 1.442695
        %v5492 = vpow.pop %v5491
        %v5493 = vmul.f32 %v5469, 1.442695
        %v5494 = vpow.pop %v5493
        %v5495 = vmul.f32 %v5470, 1.442695
        %v5496 = vpow.pop %v5495
        %v5497 = vadd.f32 %v5472, 1.0
        %v5498 = vadd.f32 %v5474, 1.0
        %v5499 = vadd.f32 %v5476, 1.0
        %v5500 = vadd.f32 %v5478, 1.0
        %v5501 = vadd.f32 %v5480, 1.0
        %v5502 = vadd.f32 %v5482, 1.0
        %v5503 = vadd.f32 %v5484, 1.0
        %v5504 = vadd.f32 %v5486, 1.0
        %v5505 = vadd.f32 %v5488, 1.0
        %v5506 = vadd.f32 %v5490, 1.0
        %v5507 = vadd.f32 %v5492, 1.0
        %v5508 = vadd.f32 %v5494, 1.0
        %v5509 = vadd.f32 %v5496, 1.0
        %v5510 = vrcp.pop %v5497
        %v5511 = vrcp.pop %v5498
        %v5512 = vrcp.pop %v5499
        %v5513 = vrcp.pop %v5500
        %v5514 = vrcp.pop %v5501
        %v5515 = vrcp.pop %v5502
        %v5516 = vrcp.pop %v5503
        %v5517 = vrcp.pop %v5504
        %v5518 = vrcp.pop %v5505
        %v5519 = vrcp.pop %v5506
        %v5520 = vrcp.pop %v5507
        %v5521 = vrcp.pop %v5508
        %v5522 = vrcp.pop %v5509
        %5536 = vrot.lane.b32.xlu0 %v5382, 64
        %v5537 = vpop.permute.xlu0 %5536
        %5538 = vrot.lane.b32.xlu0 %v5387, 64
        %v5539 = vpop.permute.xlu0 %5538
        %5540 = vrot.lane.b32.xlu0 %v5392, 64
        %v5541 = vpop.permute.xlu0 %5540
        %5542 = vrot.lane.b32.xlu0 %v5397, 64
        %v5543 = vpop.permute.xlu0 %5542
        %5544 = vrot.lane.b32.xlu0 %v5402, 64
        %v5545 = vpop.permute.xlu0 %5544
        %5546 = vrot.lane.b32.xlu0 %v5407, 64
        %v5547 = vpop.permute.xlu0 %5546
        %5548 = vrot.lane.b32.xlu0 %v5412, 64
        %v5549 = vpop.permute.xlu0 %5548
        %5550 = vrot.lane.b32.xlu0 %v5417, 64
        %v5551 = vpop.permute.xlu0 %5550
        %5552 = vrot.lane.b32.xlu0 %v5422, 64
        %v5553 = vpop.permute.xlu0 %5552
        %5554 = vrot.lane.b32.xlu0 %v5427, 64
        %v5555 = vpop.permute.xlu0 %5554
        %5556 = vrot.lane.b32.xlu0 %v5432, 64
        %v5557 = vpop.permute.xlu0 %5556
        %5558 = vrot.lane.b32.xlu0 %v5437, 64
        %v5559 = vpop.permute.xlu0 %5558
        %5560 = vrot.lane.b32.xlu0 %v5442, 64
        %v5561 = vpop.permute.xlu0 %5560
        %v5575 = vmul.f32 %v5510, %v5537
        %v5576 = vmul.f32 %v5511, %v5539
        %v5577 = vmul.f32 %v5512, %v5541
        %v5578 = vmul.f32 %v5513, %v5543
        %v5579 = vmul.f32 %v5514, %v5545
        %v5580 = vmul.f32 %v5515, %v5547
        %v5581 = vmul.f32 %v5516, %v5549
        %v5582 = vmul.f32 %v5517, %v5551
        %v5583 = vmul.f32 %v5518, %v5553
        %v5584 = vmul.f32 %v5519, %v5555
        %v5585 = vmul.f32 %v5520, %v5557
        %v5586 = vmul.f32 %v5521, %v5559
        %v5587 = vmul.f32 %v5522, %v5561
        %5601 = vrot.lane.b32.xlu0 %v5575, 64
        %v5602 = vpop.permute.xlu0 %5601
        %5603 = vrot.lane.b32.xlu0 %v5576, 64
        %v5604 = vpop.permute.xlu0 %5603
        %5605 = vrot.lane.b32.xlu0 %v5577, 64
        %v5606 = vpop.permute.xlu0 %5605
        %5607 = vrot.lane.b32.xlu0 %v5578, 64
        %v5608 = vpop.permute.xlu0 %5607
        %5609 = vrot.lane.b32.xlu0 %v5579, 64
        %v5610 = vpop.permute.xlu0 %5609
        %5611 = vrot.lane.b32.xlu0 %v5580, 64
        %v5612 = vpop.permute.xlu0 %5611
        %5613 = vrot.lane.b32.xlu0 %v5581, 64
        %v5614 = vpop.permute.xlu0 %5613
        %5615 = vrot.lane.b32.xlu0 %v5582, 64
        %v5616 = vpop.permute.xlu0 %5615
        %5617 = vrot.lane.b32.xlu0 %v5583, 64
        %v5618 = vpop.permute.xlu0 %5617
        %5619 = vrot.lane.b32.xlu0 %v5584, 64
        %v5620 = vpop.permute.xlu0 %5619
        %5621 = vrot.lane.b32.xlu0 %v5585, 64
        %v5622 = vpop.permute.xlu0 %5621
        %5623 = vrot.lane.b32.xlu0 %v5586, 64
        %v5624 = vpop.permute.xlu0 %5623
        %5625 = vrot.lane.b32.xlu0 %v5587, 64
        %v5626 = vpop.permute.xlu0 %5625
        %v5640 = vadd.f32 %v1767, %v5602
        %v5641 = vadd.f32 %v1772, %v5604
        %v5642 = vadd.f32 %v1777, %v5606
        %v5643 = vadd.f32 %v1782, %v5608
        %v5644 = vadd.f32 %v1787, %v5610
        %v5645 = vadd.f32 %v1792, %v5612
        %v5646 = vadd.f32 %v1797, %v5614
        %v5647 = vadd.f32 %v1802, %v5616
        %v5648 = vadd.f32 %v1807, %v5618
        %v5649 = vadd.f32 %v1812, %v5620
        %v5650 = vadd.f32 %v1817, %v5622
        %v5651 = vadd.f32 %v1822, %v5624
        %v5652 = vadd.f32 %v1827, %v5626
        %v5653 = vtanh.pop %v5640
        %v5654 = vtanh.pop %v5641
        %v5655 = vtanh.pop %v5642
        %v5656 = vtanh.pop %v5643
        %v5657 = vtanh.pop %v5644
        %v5658 = vtanh.pop %v5645
        %v5659 = vtanh.pop %v5646
        %v5660 = vtanh.pop %v5647
        %v5661 = vtanh.pop %v5648
        %v5662 = vtanh.pop %v5649
        %v5663 = vtanh.pop %v5650
        %v5664 = vtanh.pop %v5651
        %v5665 = vtanh.pop %v5652
        %v5666 = vsub.f32 1.0, %v5510
        %v5667 = vsub.f32 1.0, %v5511
        %v5668 = vsub.f32 1.0, %v5512
        %v5669 = vsub.f32 1.0, %v5513
        %v5670 = vsub.f32 1.0, %v5514
        %v5671 = vsub.f32 1.0, %v5515
        %v5672 = vsub.f32 1.0, %v5516
        %v5673 = vsub.f32 1.0, %v5517
        %v5674 = vsub.f32 1.0, %v5518
        %v5675 = vsub.f32 1.0, %v5519
        %v5676 = vsub.f32 1.0, %v5520
        %v5677 = vsub.f32 1.0, %v5521
        %v5678 = vsub.f32 1.0, %v5522
        %5692 = vrot.lane.b32.xlu0 %v5653, 96
        %v5693 = vpop.permute.xlu0 %5692
        %5694 = vrot.lane.b32.xlu0 %v5654, 96
        %v5695 = vpop.permute.xlu0 %5694
        %5696 = vrot.lane.b32.xlu0 %v5655, 96
        %v5697 = vpop.permute.xlu0 %5696
        %5698 = vrot.lane.b32.xlu0 %v5656, 96
        %v5699 = vpop.permute.xlu0 %5698
        %5700 = vrot.lane.b32.xlu0 %v5657, 96
        %v5701 = vpop.permute.xlu0 %5700
        %5702 = vrot.lane.b32.xlu0 %v5658, 96
        %v5703 = vpop.permute.xlu0 %5702
        %5704 = vrot.lane.b32.xlu0 %v5659, 96
        %v5705 = vpop.permute.xlu0 %5704
        %5706 = vrot.lane.b32.xlu0 %v5660, 96
        %v5707 = vpop.permute.xlu0 %5706
        %5708 = vrot.lane.b32.xlu0 %v5661, 96
        %v5709 = vpop.permute.xlu0 %5708
        %5710 = vrot.lane.b32.xlu0 %v5662, 96
        %v5711 = vpop.permute.xlu0 %5710
        %5712 = vrot.lane.b32.xlu0 %v5663, 96
        %v5713 = vpop.permute.xlu0 %5712
        %5714 = vrot.lane.b32.xlu0 %v5664, 96
        %v5715 = vpop.permute.xlu0 %5714
        %5716 = vrot.lane.b32.xlu0 %v5665, 96
        %v5717 = vpop.permute.xlu0 %5716
        %v5731 = vmul.f32 %v5666, %v5693
        %v5732 = vmul.f32 %v5667, %v5695
        %v5733 = vmul.f32 %v5668, %v5697
        %v5734 = vmul.f32 %v5669, %v5699
        %v5735 = vmul.f32 %v5670, %v5701
        %v5736 = vmul.f32 %v5671, %v5703
        %v5737 = vmul.f32 %v5672, %v5705
        %v5738 = vmul.f32 %v5673, %v5707
        %v5739 = vmul.f32 %v5674, %v5709
        %v5740 = vmul.f32 %v5675, %v5711
        %v5741 = vmul.f32 %v5676, %v5713
        %v5742 = vmul.f32 %v5677, %v5715
        %v5743 = vmul.f32 %v5678, %v5717
        %v5744 = vmul.f32 %v5510, %v5210
        %v5745 = vmul.f32 %v5511, %v5211
        %v5746 = vmul.f32 %v5512, %v5212
        %v5747 = vmul.f32 %v5513, %v5213
        %v5748 = vmul.f32 %v5514, %v5214
        %v5749 = vmul.f32 %v5515, %v5215
        %v5750 = vmul.f32 %v5516, %v5216
        %v5751 = vmul.f32 %v5517, %v5217
        %v5752 = vmul.f32 %v5518, %v5218
        %v5753 = vmul.f32 %v5519, %v5219
        %v5754 = vmul.f32 %v5520, %v5220
        %v5755 = vmul.f32 %v5521, %v5221
        %v5756 = vmul.f32 %v5522, %v5222
        %v5757 = vadd.f32 %v5731, %v5744
        %v5758 = vadd.f32 %v5732, %v5745
        %v5759 = vadd.f32 %v5733, %v5746
        %v5760 = vadd.f32 %v5734, %v5747
        %v5761 = vadd.f32 %v5735, %v5748
        %v5762 = vadd.f32 %v5736, %v5749
        %v5763 = vadd.f32 %v5737, %v5750
        %v5764 = vadd.f32 %v5738, %v5751
        %v5765 = vadd.f32 %v5739, %v5752
        %v5766 = vadd.f32 %v5740, %v5753
        %v5767 = vadd.f32 %v5741, %v5754
        %v5768 = vadd.f32 %v5742, %v5755
        %v5769 = vadd.f32 %v5743, %v5756
        %5783 = vrot.lane.b32.xlu0 %v5757, 96
        %v5784 = vpop.permute.xlu0 %5783
        %5785 = vrot.lane.b32.xlu0 %v5758, 96
        %v5786 = vpop.permute.xlu0 %5785
        %5787 = vrot.lane.b32.xlu0 %v5759, 96
        %v5788 = vpop.permute.xlu0 %5787
        %5789 = vrot.lane.b32.xlu0 %v5760, 96
        %v5790 = vpop.permute.xlu0 %5789
        %5791 = vrot.lane.b32.xlu0 %v5761, 96
        %v5792 = vpop.permute.xlu0 %5791
        %5793 = vrot.lane.b32.xlu0 %v5762, 96
        %v5794 = vpop.permute.xlu0 %5793
        %5795 = vrot.lane.b32.xlu0 %v5763, 96
        %v5796 = vpop.permute.xlu0 %5795
        %5797 = vrot.lane.b32.xlu0 %v5764, 96
        %v5798 = vpop.permute.xlu0 %5797
        %5799 = vrot.lane.b32.xlu0 %v5765, 96
        %v5800 = vpop.permute.xlu0 %5799
        %5801 = vrot.lane.b32.xlu0 %v5766, 96
        %v5802 = vpop.permute.xlu0 %5801
        %5803 = vrot.lane.b32.xlu0 %v5767, 96
        %v5804 = vpop.permute.xlu0 %5803
        %5805 = vrot.lane.b32.xlu0 %v5768, 96
        %v5806 = vpop.permute.xlu0 %5805
        %5807 = vrot.lane.b32.xlu0 %v5769, 96
        %v5808 = vpop.permute.xlu0 %5807
        %s5822 = scalar_lea.vmem %s770, 624 [#allocation3]
        %5823 = vst.msk [vmem:[%s5822] sm:$0xff] %vm919, %v5784
        %5824 = vst.msk [vmem:[%s5822 + $0x8] sm:$0xff] %vm919, %v5786
        %5825 = vst.msk [vmem:[%s5822 + $0x10] sm:$0xff] %vm919, %v5788
        %5826 = vst.msk [vmem:[%s5822 + $0x18] sm:$0xff] %vm919, %v5790
        %5827 = vst.msk [vmem:[%s5822 + $0x20] sm:$0xff] %vm919, %v5792
        %5828 = vst.msk [vmem:[%s5822 + $0x28] sm:$0xff] %vm919, %v5794
        %5829 = vst.msk [vmem:[%s5822 + $0x30] sm:$0xff] %vm919, %v5796
        %5830 = vst.msk [vmem:[%s5822 + $0x38] sm:$0xff] %vm919, %v5798
        %5831 = vst.msk [vmem:[%s5822 + $0x40] sm:$0xff] %vm919, %v5800
        %5832 = vst.msk [vmem:[%s5822 + $0x48] sm:$0xff] %vm919, %v5802
        %5833 = vst.msk [vmem:[%s5822 + $0x50] sm:$0xff] %vm919, %v5804
        %5834 = vst.msk [vmem:[%s5822 + $0x58] sm:$0xff] %vm919, %v5806
        %5835 = vst.msk [vmem:[%s5822 + $0x60] sm:$0xff] %vm919, %v5808
        %v5836 = vsel %vm919, %v5784, 0
        %v5838 = vsel %vm919, %v5786, 0
        %v5840 = vsel %vm919, %v5788, 0
        %v5842 = vsel %vm919, %v5790, 0
        %v5844 = vsel %vm919, %v5792, 0
        %v5846 = vsel %vm919, %v5794, 0
        %v5848 = vsel %vm919, %v5796, 0
        %v5850 = vsel %vm919, %v5798, 0
        %v5852 = vsel %vm919, %v5800, 0
        %v5854 = vsel %vm919, %v5802, 0
        %v5856 = vsel %vm919, %v5804, 0
        %v5858 = vsel %vm919, %v5806, 0
        %v5860 = vsel %vm919, %v5808, 0
        %5862 = vmatprep.subr.mxu0 0.0
        %5863 = vmatpush1.msra.mxu0 0.0
        %5864 = vmatprep.subr.mxu0 0.0
        %5865 = vmatpush1.msra.mxu0 0.0
        %5866 = vmatprep.subr.mxu0 0.0
        %5867 = vmatpush1.msra.mxu0 0.0
        %5868 = vmatprep.subr.mxu0 0.0
        %5869 = vmatpush1.msra.mxu0 0.0
        %5870 = vmatprep.subr.mxu0 0.0
        %5871 = vmatpush1.msra.mxu0 0.0
        %5872 = vmatprep.subr.mxu0 0.0
        %5873 = vmatpush1.msra.mxu0 0.0
        %5874 = vmatprep.subr.mxu0 0.0
        %5875 = vmatpush1.msra.mxu0 0.0
        %5876 = vmatprep.subr.mxu0 0.0
        %5877 = vmatpush1.msra.mxu0 0.0
        %5878 = vmatprep.subr.mxu0 0.0
        %5879 = vmatpush1.msra.mxu0 0.0
        %5880 = vmatprep.subr.mxu0 0.0
        %5881 = vmatpush1.msra.mxu0 0.0
        %5882 = vmatprep.subr.mxu0 0.0
        %5883 = vmatpush1.msra.mxu0 0.0
        %5884 = vmatprep.subr.mxu0 0.0
        %5885 = vmatpush1.msra.mxu0 0.0
        %5886 = vmatprep.subr.mxu0 0.0
        %5887 = vmatpush1.msra.mxu0 %v780
        %5888 = vmatprep.subr.mxu0 0.0
        %5889 = vmatpush1.msra.mxu0 %v779
        %5890 = vmatprep.subr.mxu0 0.0
        %5891 = vmatpush1.msra.mxu0 %v778
        %5892 = vmatprep.subr.mxu0 0.0
        %5893 = vmatpush1.msra.mxu0 %v777
        %5894 = vmatprep.subr.mxu0 0.0
        %5895 = vmatpush2.msra.mxu0 0.0
        %5896 = vmatprep.subr.mxu0 0.0
        %5897 = vmatpush2.msra.mxu0 0.0
        %5898 = vmatprep.subr.mxu0 0.0
        %5899 = vmatpush2.msra.mxu0 0.0
        %5900 = vmatprep.subr.mxu0 0.0
        %5901 = vmatpush2.msra.mxu0 0.0
        %5902 = vmatprep.subr.mxu0 0.0
        %5903 = vmatpush2.msra.mxu0 0.0
        %5904 = vmatprep.subr.mxu0 0.0
        %5905 = vmatpush2.msra.mxu0 0.0
        %5906 = vmatprep.subr.mxu0 0.0
        %5907 = vmatpush2.msra.mxu0 0.0
        %5908 = vmatprep.subr.mxu0 0.0
        %5909 = vmatpush2.msra.mxu0 0.0
        %5910 = vmatprep.subr.mxu0 0.0
        %5911 = vmatpush2.msra.mxu0 0.0
        %5912 = vmatprep.subr.mxu0 0.0
        %5913 = vmatpush2.msra.mxu0 0.0
        %5914 = vmatprep.subr.mxu0 0.0
        %5915 = vmatpush2.msra.mxu0 0.0
        %5916 = vmatprep.subr.mxu0 0.0
        %5917 = vmatpush2.msra.mxu0 0.0
        %5918 = vmatprep.subr.mxu0 0.0
        %5919 = vmatpush2.msra.mxu0 0.0
        %5920 = vmatprep.subr.mxu0 0.0
        %5921 = vmatpush2.msra.mxu0 0.0
        %5922 = vmatprep.subr.mxu0 0.0
        %5923 = vmatpush2.msra.mxu0 0.0
        %5924 = vmatprep.subr.mxu0 0.0
        %5925 = vmatpush2.msra.mxu0 0.0
        %5926 = vmatprep.mubr.f32.mxu0 0.0
        %5927 = vmatmul.mubr.f32.gmra.mxu0 %v5836
        %v5928 = vpop.f32.mrf.mxu0
        %v5929 = vadd.f32 %v2029, %v5928
        %v5930 = vpop.f32.mrf.mxu0
        %5931 = vmatprep.mubr.f32.mxu0 0.0
        %5932 = vmatmul.mubr.f32.gmra.mxu0 %v5838
        %v5933 = vpop.f32.mrf.mxu0
        %v5934 = vadd.f32 %v2029, %v5933
        %v5935 = vpop.f32.mrf.mxu0
        %5936 = vmatprep.mubr.f32.mxu0 0.0
        %5937 = vmatmul.mubr.f32.gmra.mxu0 %v5840
        %v5938 = vpop.f32.mrf.mxu0
        %v5939 = vadd.f32 %v2029, %v5938
        %v5940 = vpop.f32.mrf.mxu0
        %5941 = vmatprep.mubr.f32.mxu0 0.0
        %5942 = vmatmul.mubr.f32.gmra.mxu0 %v5842
        %v5943 = vpop.f32.mrf.mxu0
        %v5944 = vadd.f32 %v2029, %v5943
        %v5945 = vpop.f32.mrf.mxu0
        %5946 = vmatprep.mubr.f32.mxu0 0.0
        %5947 = vmatmul.mubr.f32.gmra.mxu0 %v5844
        %v5948 = vpop.f32.mrf.mxu0
        %v5949 = vadd.f32 %v2029, %v5948
        %v5950 = vpop.f32.mrf.mxu0
        %5951 = vmatprep.mubr.f32.mxu0 0.0
        %5952 = vmatmul.mubr.f32.gmra.mxu0 %v5846
        %v5953 = vpop.f32.mrf.mxu0
        %v5954 = vadd.f32 %v2029, %v5953
        %v5955 = vpop.f32.mrf.mxu0
        %5956 = vmatprep.mubr.f32.mxu0 0.0
        %5957 = vmatmul.mubr.f32.gmra.mxu0 %v5848
        %v5958 = vpop.f32.mrf.mxu0
        %v5959 = vadd.f32 %v2029, %v5958
        %v5960 = vpop.f32.mrf.mxu0
        %5961 = vmatprep.mubr.f32.mxu0 0.0
        %5962 = vmatmul.mubr.f32.gmra.mxu0 %v5850
        %v5963 = vpop.f32.mrf.mxu0
        %v5964 = vadd.f32 %v2029, %v5963
        %v5965 = vpop.f32.mrf.mxu0
        %5966 = vmatprep.mubr.f32.mxu0 0.0
        %5967 = vmatmul.mubr.f32.gmra.mxu0 %v5852
        %v5968 = vpop.f32.mrf.mxu0
        %v5969 = vadd.f32 %v2029, %v5968
        %v5970 = vpop.f32.mrf.mxu0
        %5971 = vmatprep.mubr.f32.mxu0 0.0
        %5972 = vmatmul.mubr.f32.gmra.mxu0 %v5854
        %v5973 = vpop.f32.mrf.mxu0
        %v5974 = vadd.f32 %v2029, %v5973
        %v5975 = vpop.f32.mrf.mxu0
        %5976 = vmatprep.mubr.f32.mxu0 0.0
        %5977 = vmatmul.mubr.f32.gmra.mxu0 %v5856
        %v5978 = vpop.f32.mrf.mxu0
        %v5979 = vadd.f32 %v2029, %v5978
        %v5980 = vpop.f32.mrf.mxu0
        %5981 = vmatprep.mubr.f32.mxu0 0.0
        %5982 = vmatmul.mubr.f32.gmra.mxu0 %v5858
        %v5983 = vpop.f32.mrf.mxu0
        %v5984 = vadd.f32 %v2029, %v5983
        %v5985 = vpop.f32.mrf.mxu0
        %5986 = vmatprep.mubr.f32.mxu0 0.0
        %5987 = vmatmul.mubr.f32.gmra.mxu0 %v5860
        %v5988 = vpop.f32.mrf.mxu0
        %v5989 = vadd.f32 %v2029, %v5988
        %v5990 = vpop.f32.mrf.mxu0
        %5991 = vdwg.mxu0
        %v5992 = vadd.f32 %v1832, %v5929
        %v5993 = vadd.f32 %v1837, %v5934
        %v5994 = vadd.f32 %v1842, %v5939
        %v5995 = vadd.f32 %v1847, %v5944
        %v5996 = vadd.f32 %v1852, %v5949
        %v5997 = vadd.f32 %v1857, %v5954
        %v5998 = vadd.f32 %v1862, %v5959
        %v5999 = vadd.f32 %v1867, %v5964
        %v6000 = vadd.f32 %v1872, %v5969
        %v6001 = vadd.f32 %v1877, %v5974
        %v6002 = vadd.f32 %v1882, %v5979
        %v6003 = vadd.f32 %v1887, %v5984
        %v6004 = vadd.f32 %v1892, %v5989
        %v6005 = vsub.f32 0.0, %v5992
        %v6006 = vsub.f32 0.0, %v5993
        %v6007 = vsub.f32 0.0, %v5994
        %v6008 = vsub.f32 0.0, %v5995
        %v6009 = vsub.f32 0.0, %v5996
        %v6010 = vsub.f32 0.0, %v5997
        %v6011 = vsub.f32 0.0, %v5998
        %v6012 = vsub.f32 0.0, %v5999
        %v6013 = vsub.f32 0.0, %v6000
        %v6014 = vsub.f32 0.0, %v6001
        %v6015 = vsub.f32 0.0, %v6002
        %v6016 = vsub.f32 0.0, %v6003
        %v6017 = vsub.f32 0.0, %v6004
        %v6018 = vmul.f32 %v6005, 1.442695
        %v6019 = vpow.pop %v6018
        %v6020 = vmul.f32 %v6006, 1.442695
        %v6021 = vpow.pop %v6020
        %v6022 = vmul.f32 %v6007, 1.442695
        %v6023 = vpow.pop %v6022
        %v6024 = vmul.f32 %v6008, 1.442695
        %v6025 = vpow.pop %v6024
        %v6026 = vmul.f32 %v6009, 1.442695
        %v6027 = vpow.pop %v6026
        %v6028 = vmul.f32 %v6010, 1.442695
        %v6029 = vpow.pop %v6028
        %v6030 = vmul.f32 %v6011, 1.442695
        %v6031 = vpow.pop %v6030
        %v6032 = vmul.f32 %v6012, 1.442695
        %v6033 = vpow.pop %v6032
        %v6034 = vmul.f32 %v6013, 1.442695
        %v6035 = vpow.pop %v6034
        %v6036 = vmul.f32 %v6014, 1.442695
        %v6037 = vpow.pop %v6036
        %v6038 = vmul.f32 %v6015, 1.442695
        %v6039 = vpow.pop %v6038
        %v6040 = vmul.f32 %v6016, 1.442695
        %v6041 = vpow.pop %v6040
        %v6042 = vmul.f32 %v6017, 1.442695
        %v6043 = vpow.pop %v6042
        %v6044 = vadd.f32 %v6019, 1.0
        %v6045 = vadd.f32 %v6021, 1.0
        %v6046 = vadd.f32 %v6023, 1.0
        %v6047 = vadd.f32 %v6025, 1.0
        %v6048 = vadd.f32 %v6027, 1.0
        %v6049 = vadd.f32 %v6029, 1.0
        %v6050 = vadd.f32 %v6031, 1.0
        %v6051 = vadd.f32 %v6033, 1.0
        %v6052 = vadd.f32 %v6035, 1.0
        %v6053 = vadd.f32 %v6037, 1.0
        %v6054 = vadd.f32 %v6039, 1.0
        %v6055 = vadd.f32 %v6041, 1.0
        %v6056 = vadd.f32 %v6043, 1.0
        %v6057 = vrcp.pop %v6044
        %v6058 = vrcp.pop %v6045
        %v6059 = vrcp.pop %v6046
        %v6060 = vrcp.pop %v6047
        %v6061 = vrcp.pop %v6048
        %v6062 = vrcp.pop %v6049
        %v6063 = vrcp.pop %v6050
        %v6064 = vrcp.pop %v6051
        %v6065 = vrcp.pop %v6052
        %v6066 = vrcp.pop %v6053
        %v6067 = vrcp.pop %v6054
        %v6068 = vrcp.pop %v6055
        %v6069 = vrcp.pop %v6056
        %6083 = vrot.lane.b32.xlu0 %v5929, 64
        %v6084 = vpop.permute.xlu0 %6083
        %6085 = vrot.lane.b32.xlu0 %v5934, 64
        %v6086 = vpop.permute.xlu0 %6085
        %6087 = vrot.lane.b32.xlu0 %v5939, 64
        %v6088 = vpop.permute.xlu0 %6087
        %6089 = vrot.lane.b32.xlu0 %v5944, 64
        %v6090 = vpop.permute.xlu0 %6089
        %6091 = vrot.lane.b32.xlu0 %v5949, 64
        %v6092 = vpop.permute.xlu0 %6091
        %6093 = vrot.lane.b32.xlu0 %v5954, 64
        %v6094 = vpop.permute.xlu0 %6093
        %6095 = vrot.lane.b32.xlu0 %v5959, 64
        %v6096 = vpop.permute.xlu0 %6095
        %6097 = vrot.lane.b32.xlu0 %v5964, 64
        %v6098 = vpop.permute.xlu0 %6097
        %6099 = vrot.lane.b32.xlu0 %v5969, 64
        %v6100 = vpop.permute.xlu0 %6099
        %6101 = vrot.lane.b32.xlu0 %v5974, 64
        %v6102 = vpop.permute.xlu0 %6101
        %6103 = vrot.lane.b32.xlu0 %v5979, 64
        %v6104 = vpop.permute.xlu0 %6103
        %6105 = vrot.lane.b32.xlu0 %v5984, 64
        %v6106 = vpop.permute.xlu0 %6105
        %6107 = vrot.lane.b32.xlu0 %v5989, 64
        %v6108 = vpop.permute.xlu0 %6107
        %v6122 = vmul.f32 %v6057, %v6084
        %v6123 = vmul.f32 %v6058, %v6086
        %v6124 = vmul.f32 %v6059, %v6088
        %v6125 = vmul.f32 %v6060, %v6090
        %v6126 = vmul.f32 %v6061, %v6092
        %v6127 = vmul.f32 %v6062, %v6094
        %v6128 = vmul.f32 %v6063, %v6096
        %v6129 = vmul.f32 %v6064, %v6098
        %v6130 = vmul.f32 %v6065, %v6100
        %v6131 = vmul.f32 %v6066, %v6102
        %v6132 = vmul.f32 %v6067, %v6104
        %v6133 = vmul.f32 %v6068, %v6106
        %v6134 = vmul.f32 %v6069, %v6108
        %6148 = vrot.lane.b32.xlu0 %v6122, 64
        %v6149 = vpop.permute.xlu0 %6148
        %6150 = vrot.lane.b32.xlu0 %v6123, 64
        %v6151 = vpop.permute.xlu0 %6150
        %6152 = vrot.lane.b32.xlu0 %v6124, 64
        %v6153 = vpop.permute.xlu0 %6152
        %6154 = vrot.lane.b32.xlu0 %v6125, 64
        %v6155 = vpop.permute.xlu0 %6154
        %6156 = vrot.lane.b32.xlu0 %v6126, 64
        %v6157 = vpop.permute.xlu0 %6156
        %6158 = vrot.lane.b32.xlu0 %v6127, 64
        %v6159 = vpop.permute.xlu0 %6158
        %6160 = vrot.lane.b32.xlu0 %v6128, 64
        %v6161 = vpop.permute.xlu0 %6160
        %6162 = vrot.lane.b32.xlu0 %v6129, 64
        %v6163 = vpop.permute.xlu0 %6162
        %6164 = vrot.lane.b32.xlu0 %v6130, 64
        %v6165 = vpop.permute.xlu0 %6164
        %6166 = vrot.lane.b32.xlu0 %v6131, 64
        %v6167 = vpop.permute.xlu0 %6166
        %6168 = vrot.lane.b32.xlu0 %v6132, 64
        %v6169 = vpop.permute.xlu0 %6168
        %6170 = vrot.lane.b32.xlu0 %v6133, 64
        %v6171 = vpop.permute.xlu0 %6170
        %6172 = vrot.lane.b32.xlu0 %v6134, 64
        %v6173 = vpop.permute.xlu0 %6172
        %v6187 = vadd.f32 %v1832, %v6149
        %v6188 = vadd.f32 %v1837, %v6151
        %v6189 = vadd.f32 %v1842, %v6153
        %v6190 = vadd.f32 %v1847, %v6155
        %v6191 = vadd.f32 %v1852, %v6157
        %v6192 = vadd.f32 %v1857, %v6159
        %v6193 = vadd.f32 %v1862, %v6161
        %v6194 = vadd.f32 %v1867, %v6163
        %v6195 = vadd.f32 %v1872, %v6165
        %v6196 = vadd.f32 %v1877, %v6167
        %v6197 = vadd.f32 %v1882, %v6169
        %v6198 = vadd.f32 %v1887, %v6171
        %v6199 = vadd.f32 %v1892, %v6173
        %v6200 = vtanh.pop %v6187
        %v6201 = vtanh.pop %v6188
        %v6202 = vtanh.pop %v6189
        %v6203 = vtanh.pop %v6190
        %v6204 = vtanh.pop %v6191
        %v6205 = vtanh.pop %v6192
        %v6206 = vtanh.pop %v6193
        %v6207 = vtanh.pop %v6194
        %v6208 = vtanh.pop %v6195
        %v6209 = vtanh.pop %v6196
        %v6210 = vtanh.pop %v6197
        %v6211 = vtanh.pop %v6198
        %v6212 = vtanh.pop %v6199
        %v6213 = vsub.f32 1.0, %v6057
        %v6214 = vsub.f32 1.0, %v6058
        %v6215 = vsub.f32 1.0, %v6059
        %v6216 = vsub.f32 1.0, %v6060
        %v6217 = vsub.f32 1.0, %v6061
        %v6218 = vsub.f32 1.0, %v6062
        %v6219 = vsub.f32 1.0, %v6063
        %v6220 = vsub.f32 1.0, %v6064
        %v6221 = vsub.f32 1.0, %v6065
        %v6222 = vsub.f32 1.0, %v6066
        %v6223 = vsub.f32 1.0, %v6067
        %v6224 = vsub.f32 1.0, %v6068
        %v6225 = vsub.f32 1.0, %v6069
        %6239 = vrot.lane.b32.xlu0 %v6200, 96
        %v6240 = vpop.permute.xlu0 %6239
        %6241 = vrot.lane.b32.xlu0 %v6201, 96
        %v6242 = vpop.permute.xlu0 %6241
        %6243 = vrot.lane.b32.xlu0 %v6202, 96
        %v6244 = vpop.permute.xlu0 %6243
        %6245 = vrot.lane.b32.xlu0 %v6203, 96
        %v6246 = vpop.permute.xlu0 %6245
        %6247 = vrot.lane.b32.xlu0 %v6204, 96
        %v6248 = vpop.permute.xlu0 %6247
        %6249 = vrot.lane.b32.xlu0 %v6205, 96
        %v6250 = vpop.permute.xlu0 %6249
        %6251 = vrot.lane.b32.xlu0 %v6206, 96
        %v6252 = vpop.permute.xlu0 %6251
        %6253 = vrot.lane.b32.xlu0 %v6207, 96
        %v6254 = vpop.permute.xlu0 %6253
        %6255 = vrot.lane.b32.xlu0 %v6208, 96
        %v6256 = vpop.permute.xlu0 %6255
        %6257 = vrot.lane.b32.xlu0 %v6209, 96
        %v6258 = vpop.permute.xlu0 %6257
        %6259 = vrot.lane.b32.xlu0 %v6210, 96
        %v6260 = vpop.permute.xlu0 %6259
        %6261 = vrot.lane.b32.xlu0 %v6211, 96
        %v6262 = vpop.permute.xlu0 %6261
        %6263 = vrot.lane.b32.xlu0 %v6212, 96
        %v6264 = vpop.permute.xlu0 %6263
        %v6278 = vmul.f32 %v6213, %v6240
        %v6279 = vmul.f32 %v6214, %v6242
        %v6280 = vmul.f32 %v6215, %v6244
        %v6281 = vmul.f32 %v6216, %v6246
        %v6282 = vmul.f32 %v6217, %v6248
        %v6283 = vmul.f32 %v6218, %v6250
        %v6284 = vmul.f32 %v6219, %v6252
        %v6285 = vmul.f32 %v6220, %v6254
        %v6286 = vmul.f32 %v6221, %v6256
        %v6287 = vmul.f32 %v6222, %v6258
        %v6288 = vmul.f32 %v6223, %v6260
        %v6289 = vmul.f32 %v6224, %v6262
        %v6290 = vmul.f32 %v6225, %v6264
        %v6291 = vmul.f32 %v6057, %v5757
        %v6292 = vmul.f32 %v6058, %v5758
        %v6293 = vmul.f32 %v6059, %v5759
        %v6294 = vmul.f32 %v6060, %v5760
        %v6295 = vmul.f32 %v6061, %v5761
        %v6296 = vmul.f32 %v6062, %v5762
        %v6297 = vmul.f32 %v6063, %v5763
        %v6298 = vmul.f32 %v6064, %v5764
        %v6299 = vmul.f32 %v6065, %v5765
        %v6300 = vmul.f32 %v6066, %v5766
        %v6301 = vmul.f32 %v6067, %v5767
        %v6302 = vmul.f32 %v6068, %v5768
        %v6303 = vmul.f32 %v6069, %v5769
        %v6304 = vadd.f32 %v6278, %v6291
        %v6305 = vadd.f32 %v6279, %v6292
        %v6306 = vadd.f32 %v6280, %v6293
        %v6307 = vadd.f32 %v6281, %v6294
        %v6308 = vadd.f32 %v6282, %v6295
        %v6309 = vadd.f32 %v6283, %v6296
        %v6310 = vadd.f32 %v6284, %v6297
        %v6311 = vadd.f32 %v6285, %v6298
        %v6312 = vadd.f32 %v6286, %v6299
        %v6313 = vadd.f32 %v6287, %v6300
        %v6314 = vadd.f32 %v6288, %v6301
        %v6315 = vadd.f32 %v6289, %v6302
        %v6316 = vadd.f32 %v6290, %v6303
        %6330 = vrot.lane.b32.xlu0 %v6304, 96
        %v6331 = vpop.permute.xlu0 %6330
        %6332 = vrot.lane.b32.xlu0 %v6305, 96
        %v6333 = vpop.permute.xlu0 %6332
        %6334 = vrot.lane.b32.xlu0 %v6306, 96
        %v6335 = vpop.permute.xlu0 %6334
        %6336 = vrot.lane.b32.xlu0 %v6307, 96
        %v6337 = vpop.permute.xlu0 %6336
        %6338 = vrot.lane.b32.xlu0 %v6308, 96
        %v6339 = vpop.permute.xlu0 %6338
        %6340 = vrot.lane.b32.xlu0 %v6309, 96
        %v6341 = vpop.permute.xlu0 %6340
        %6342 = vrot.lane.b32.xlu0 %v6310, 96
        %v6343 = vpop.permute.xlu0 %6342
        %6344 = vrot.lane.b32.xlu0 %v6311, 96
        %v6345 = vpop.permute.xlu0 %6344
        %6346 = vrot.lane.b32.xlu0 %v6312, 96
        %v6347 = vpop.permute.xlu0 %6346
        %6348 = vrot.lane.b32.xlu0 %v6313, 96
        %v6349 = vpop.permute.xlu0 %6348
        %6350 = vrot.lane.b32.xlu0 %v6314, 96
        %v6351 = vpop.permute.xlu0 %6350
        %6352 = vrot.lane.b32.xlu0 %v6315, 96
        %v6353 = vpop.permute.xlu0 %6352
        %6354 = vrot.lane.b32.xlu0 %v6316, 96
        %v6355 = vpop.permute.xlu0 %6354
        %s6369 = scalar_lea.vmem %s770, 728 [#allocation3]
        %6370 = vst.msk [vmem:[%s6369] sm:$0xff] %vm919, %v6331
        %6371 = vst.msk [vmem:[%s6369 + $0x8] sm:$0xff] %vm919, %v6333
        %6372 = vst.msk [vmem:[%s6369 + $0x10] sm:$0xff] %vm919, %v6335
        %6373 = vst.msk [vmem:[%s6369 + $0x18] sm:$0xff] %vm919, %v6337
        %6374 = vst.msk [vmem:[%s6369 + $0x20] sm:$0xff] %vm919, %v6339
        %6375 = vst.msk [vmem:[%s6369 + $0x28] sm:$0xff] %vm919, %v6341
        %6376 = vst.msk [vmem:[%s6369 + $0x30] sm:$0xff] %vm919, %v6343
        %6377 = vst.msk [vmem:[%s6369 + $0x38] sm:$0xff] %vm919, %v6345
        %6378 = vst.msk [vmem:[%s6369 + $0x40] sm:$0xff] %vm919, %v6347
        %6379 = vst.msk [vmem:[%s6369 + $0x48] sm:$0xff] %vm919, %v6349
        %6380 = vst.msk [vmem:[%s6369 + $0x50] sm:$0xff] %vm919, %v6351
        %6381 = vst.msk [vmem:[%s6369 + $0x58] sm:$0xff] %vm919, %v6353
        %6382 = vst.msk [vmem:[%s6369 + $0x60] sm:$0xff] %vm919, %v6355
        %v6383 = vsel %vm919, %v6331, 0
        %v6385 = vsel %vm919, %v6333, 0
        %v6387 = vsel %vm919, %v6335, 0
        %v6389 = vsel %vm919, %v6337, 0
        %v6391 = vsel %vm919, %v6339, 0
        %v6393 = vsel %vm919, %v6341, 0
        %v6395 = vsel %vm919, %v6343, 0
        %v6397 = vsel %vm919, %v6345, 0
        %v6399 = vsel %vm919, %v6347, 0
        %v6401 = vsel %vm919, %v6349, 0
        %v6403 = vsel %vm919, %v6351, 0
        %v6405 = vsel %vm919, %v6353, 0
        %v6407 = vsel %vm919, %v6355, 0
        %6409 = vmatprep.subr.mxu0 0.0
        %6410 = vmatpush1.msra.mxu0 0.0
        %6411 = vmatprep.subr.mxu0 0.0
        %6412 = vmatpush1.msra.mxu0 0.0
        %6413 = vmatprep.subr.mxu0 0.0
        %6414 = vmatpush1.msra.mxu0 0.0
        %6415 = vmatprep.subr.mxu0 0.0
        %6416 = vmatpush1.msra.mxu0 0.0
        %6417 = vmatprep.subr.mxu0 0.0
        %6418 = vmatpush1.msra.mxu0 0.0
        %6419 = vmatprep.subr.mxu0 0.0
        %6420 = vmatpush1.msra.mxu0 0.0
        %6421 = vmatprep.subr.mxu0 0.0
        %6422 = vmatpush1.msra.mxu0 0.0
        %6423 = vmatprep.subr.mxu0 0.0
        %6424 = vmatpush1.msra.mxu0 0.0
        %6425 = vmatprep.subr.mxu0 0.0
        %6426 = vmatpush1.msra.mxu0 0.0
        %6427 = vmatprep.subr.mxu0 0.0
        %6428 = vmatpush1.msra.mxu0 0.0
        %6429 = vmatprep.subr.mxu0 0.0
        %6430 = vmatpush1.msra.mxu0 0.0
        %6431 = vmatprep.subr.mxu0 0.0
        %6432 = vmatpush1.msra.mxu0 0.0
        %6433 = vmatprep.subr.mxu0 0.0
        %6434 = vmatpush1.msra.mxu0 %v780
        %6435 = vmatprep.subr.mxu0 0.0
        %6436 = vmatpush1.msra.mxu0 %v779
        %6437 = vmatprep.subr.mxu0 0.0
        %6438 = vmatpush1.msra.mxu0 %v778
        %6439 = vmatprep.subr.mxu0 0.0
        %6440 = vmatpush1.msra.mxu0 %v777
        %6441 = vmatprep.subr.mxu0 0.0
        %6442 = vmatpush2.msra.mxu0 0.0
        %6443 = vmatprep.subr.mxu0 0.0
        %6444 = vmatpush2.msra.mxu0 0.0
        %6445 = vmatprep.subr.mxu0 0.0
        %6446 = vmatpush2.msra.mxu0 0.0
        %6447 = vmatprep.subr.mxu0 0.0
        %6448 = vmatpush2.msra.mxu0 0.0
        %6449 = vmatprep.subr.mxu0 0.0
        %6450 = vmatpush2.msra.mxu0 0.0
        %6451 = vmatprep.subr.mxu0 0.0
        %6452 = vmatpush2.msra.mxu0 0.0
        %6453 = vmatprep.subr.mxu0 0.0
        %6454 = vmatpush2.msra.mxu0 0.0
        %6455 = vmatprep.subr.mxu0 0.0
        %6456 = vmatpush2.msra.mxu0 0.0
        %6457 = vmatprep.subr.mxu0 0.0
        %6458 = vmatpush2.msra.mxu0 0.0
        %6459 = vmatprep.subr.mxu0 0.0
        %6460 = vmatpush2.msra.mxu0 0.0
        %6461 = vmatprep.subr.mxu0 0.0
        %6462 = vmatpush2.msra.mxu0 0.0
        %6463 = vmatprep.subr.mxu0 0.0
        %6464 = vmatpush2.msra.mxu0 0.0
        %6465 = vmatprep.subr.mxu0 0.0
        %6466 = vmatpush2.msra.mxu0 0.0
        %6467 = vmatprep.subr.mxu0 0.0
        %6468 = vmatpush2.msra.mxu0 0.0
        %6469 = vmatprep.subr.mxu0 0.0
        %6470 = vmatpush2.msra.mxu0 0.0
        %6471 = vmatprep.subr.mxu0 0.0
        %6472 = vmatpush2.msra.mxu0 0.0
        %6473 = vmatprep.mubr.f32.mxu0 0.0
        %6474 = vmatmul.mubr.f32.gmra.mxu0 %v6383
        %v6475 = vpop.f32.mrf.mxu0
        %v6476 = vadd.f32 %v2029, %v6475
        %v6477 = vpop.f32.mrf.mxu0
        %6478 = vmatprep.mubr.f32.mxu0 0.0
        %6479 = vmatmul.mubr.f32.gmra.mxu0 %v6385
        %v6480 = vpop.f32.mrf.mxu0
        %v6481 = vadd.f32 %v2029, %v6480
        %v6482 = vpop.f32.mrf.mxu0
        %6483 = vmatprep.mubr.f32.mxu0 0.0
        %6484 = vmatmul.mubr.f32.gmra.mxu0 %v6387
        %v6485 = vpop.f32.mrf.mxu0
        %v6486 = vadd.f32 %v2029, %v6485
        %v6487 = vpop.f32.mrf.mxu0
        %6488 = vmatprep.mubr.f32.mxu0 0.0
        %6489 = vmatmul.mubr.f32.gmra.mxu0 %v6389
        %v6490 = vpop.f32.mrf.mxu0
        %v6491 = vadd.f32 %v2029, %v6490
        %v6492 = vpop.f32.mrf.mxu0
        %6493 = vmatprep.mubr.f32.mxu0 0.0
        %6494 = vmatmul.mubr.f32.gmra.mxu0 %v6391
        %v6495 = vpop.f32.mrf.mxu0
        %v6496 = vadd.f32 %v2029, %v6495
        %v6497 = vpop.f32.mrf.mxu0
        %6498 = vmatprep.mubr.f32.mxu0 0.0
        %6499 = vmatmul.mubr.f32.gmra.mxu0 %v6393
        %v6500 = vpop.f32.mrf.mxu0
        %v6501 = vadd.f32 %v2029, %v6500
        %v6502 = vpop.f32.mrf.mxu0
        %6503 = vmatprep.mubr.f32.mxu0 0.0
        %6504 = vmatmul.mubr.f32.gmra.mxu0 %v6395
        %v6505 = vpop.f32.mrf.mxu0
        %v6506 = vadd.f32 %v2029, %v6505
        %v6507 = vpop.f32.mrf.mxu0
        %6508 = vmatprep.mubr.f32.mxu0 0.0
        %6509 = vmatmul.mubr.f32.gmra.mxu0 %v6397
        %v6510 = vpop.f32.mrf.mxu0
        %v6511 = vadd.f32 %v2029, %v6510
        %v6512 = vpop.f32.mrf.mxu0
        %6513 = vmatprep.mubr.f32.mxu0 0.0
        %6514 = vmatmul.mubr.f32.gmra.mxu0 %v6399
        %v6515 = vpop.f32.mrf.mxu0
        %v6516 = vadd.f32 %v2029, %v6515
        %v6517 = vpop.f32.mrf.mxu0
        %6518 = vmatprep.mubr.f32.mxu0 0.0
        %6519 = vmatmul.mubr.f32.gmra.mxu0 %v6401
        %v6520 = vpop.f32.mrf.mxu0
        %v6521 = vadd.f32 %v2029, %v6520
        %v6522 = vpop.f32.mrf.mxu0
        %6523 = vmatprep.mubr.f32.mxu0 0.0
        %6524 = vmatmul.mubr.f32.gmra.mxu0 %v6403
        %v6525 = vpop.f32.mrf.mxu0
        %v6526 = vadd.f32 %v2029, %v6525
        %v6527 = vpop.f32.mrf.mxu0
        %6528 = vmatprep.mubr.f32.mxu0 0.0
        %6529 = vmatmul.mubr.f32.gmra.mxu0 %v6405
        %v6530 = vpop.f32.mrf.mxu0
        %v6531 = vadd.f32 %v2029, %v6530
        %v6532 = vpop.f32.mrf.mxu0
        %6533 = vmatprep.mubr.f32.mxu0 0.0
        %6534 = vmatmul.mubr.f32.gmra.mxu0 %v6407
        %v6535 = vpop.f32.mrf.mxu0
        %v6536 = vadd.f32 %v2029, %v6535
        %v6537 = vpop.f32.mrf.mxu0
        %6538 = vdwg.mxu0
        %v6539 = vadd.f32 %v1897, %v6476
        %v6540 = vadd.f32 %v1902, %v6481
        %v6541 = vadd.f32 %v1907, %v6486
        %v6542 = vadd.f32 %v1912, %v6491
        %v6543 = vadd.f32 %v1917, %v6496
        %v6544 = vadd.f32 %v1922, %v6501
        %v6545 = vadd.f32 %v1927, %v6506
        %v6546 = vadd.f32 %v1932, %v6511
        %v6547 = vadd.f32 %v1937, %v6516
        %v6548 = vadd.f32 %v1942, %v6521
        %v6549 = vadd.f32 %v1947, %v6526
        %v6550 = vadd.f32 %v1952, %v6531
        %v6551 = vadd.f32 %v1957, %v6536
        %v6552 = vsub.f32 0.0, %v6539
        %v6553 = vsub.f32 0.0, %v6540
        %v6554 = vsub.f32 0.0, %v6541
        %v6555 = vsub.f32 0.0, %v6542
        %v6556 = vsub.f32 0.0, %v6543
        %v6557 = vsub.f32 0.0, %v6544
        %v6558 = vsub.f32 0.0, %v6545
        %v6559 = vsub.f32 0.0, %v6546
        %v6560 = vsub.f32 0.0, %v6547
        %v6561 = vsub.f32 0.0, %v6548
        %v6562 = vsub.f32 0.0, %v6549
        %v6563 = vsub.f32 0.0, %v6550
        %v6564 = vsub.f32 0.0, %v6551
        %v6565 = vmul.f32 %v6552, 1.442695
        %v6566 = vpow.pop %v6565
        %v6567 = vmul.f32 %v6553, 1.442695
        %v6568 = vpow.pop %v6567
        %v6569 = vmul.f32 %v6554, 1.442695
        %v6570 = vpow.pop %v6569
        %v6571 = vmul.f32 %v6555, 1.442695
        %v6572 = vpow.pop %v6571
        %v6573 = vmul.f32 %v6556, 1.442695
        %v6574 = vpow.pop %v6573
        %v6575 = vmul.f32 %v6557, 1.442695
        %v6576 = vpow.pop %v6575
        %v6577 = vmul.f32 %v6558, 1.442695
        %v6578 = vpow.pop %v6577
        %v6579 = vmul.f32 %v6559, 1.442695
        %v6580 = vpow.pop %v6579
        %v6581 = vmul.f32 %v6560, 1.442695
        %v6582 = vpow.pop %v6581
        %v6583 = vmul.f32 %v6561, 1.442695
        %v6584 = vpow.pop %v6583
        %v6585 = vmul.f32 %v6562, 1.442695
        %v6586 = vpow.pop %v6585
        %v6587 = vmul.f32 %v6563, 1.442695
        %v6588 = vpow.pop %v6587
        %v6589 = vmul.f32 %v6564, 1.442695
        %v6590 = vpow.pop %v6589
        %v6591 = vadd.f32 %v6566, 1.0
        %v6592 = vadd.f32 %v6568, 1.0
        %v6593 = vadd.f32 %v6570, 1.0
        %v6594 = vadd.f32 %v6572, 1.0
        %v6595 = vadd.f32 %v6574, 1.0
        %v6596 = vadd.f32 %v6576, 1.0
        %v6597 = vadd.f32 %v6578, 1.0
        %v6598 = vadd.f32 %v6580, 1.0
        %v6599 = vadd.f32 %v6582, 1.0
        %v6600 = vadd.f32 %v6584, 1.0
        %v6601 = vadd.f32 %v6586, 1.0
        %v6602 = vadd.f32 %v6588, 1.0
        %v6603 = vadd.f32 %v6590, 1.0
        %v6604 = vrcp.pop %v6591
        %v6605 = vrcp.pop %v6592
        %v6606 = vrcp.pop %v6593
        %v6607 = vrcp.pop %v6594
        %v6608 = vrcp.pop %v6595
        %v6609 = vrcp.pop %v6596
        %v6610 = vrcp.pop %v6597
        %v6611 = vrcp.pop %v6598
        %v6612 = vrcp.pop %v6599
        %v6613 = vrcp.pop %v6600
        %v6614 = vrcp.pop %v6601
        %v6615 = vrcp.pop %v6602
        %v6616 = vrcp.pop %v6603
        %6630 = vrot.lane.b32.xlu0 %v6476, 64
        %v6631 = vpop.permute.xlu0 %6630
        %6632 = vrot.lane.b32.xlu0 %v6481, 64
        %v6633 = vpop.permute.xlu0 %6632
        %6634 = vrot.lane.b32.xlu0 %v6486, 64
        %v6635 = vpop.permute.xlu0 %6634
        %6636 = vrot.lane.b32.xlu0 %v6491, 64
        %v6637 = vpop.permute.xlu0 %6636
        %6638 = vrot.lane.b32.xlu0 %v6496, 64
        %v6639 = vpop.permute.xlu0 %6638
        %6640 = vrot.lane.b32.xlu0 %v6501, 64
        %v6641 = vpop.permute.xlu0 %6640
        %6642 = vrot.lane.b32.xlu0 %v6506, 64
        %v6643 = vpop.permute.xlu0 %6642
        %6644 = vrot.lane.b32.xlu0 %v6511, 64
        %v6645 = vpop.permute.xlu0 %6644
        %6646 = vrot.lane.b32.xlu0 %v6516, 64
        %v6647 = vpop.permute.xlu0 %6646
        %6648 = vrot.lane.b32.xlu0 %v6521, 64
        %v6649 = vpop.permute.xlu0 %6648
        %6650 = vrot.lane.b32.xlu0 %v6526, 64
        %v6651 = vpop.permute.xlu0 %6650
        %6652 = vrot.lane.b32.xlu0 %v6531, 64
        %v6653 = vpop.permute.xlu0 %6652
        %6654 = vrot.lane.b32.xlu0 %v6536, 64
        %v6655 = vpop.permute.xlu0 %6654
        %v6669 = vmul.f32 %v6604, %v6631
        %v6670 = vmul.f32 %v6605, %v6633
        %v6671 = vmul.f32 %v6606, %v6635
        %v6672 = vmul.f32 %v6607, %v6637
        %v6673 = vmul.f32 %v6608, %v6639
        %v6674 = vmul.f32 %v6609, %v6641
        %v6675 = vmul.f32 %v6610, %v6643
        %v6676 = vmul.f32 %v6611, %v6645
        %v6677 = vmul.f32 %v6612, %v6647
        %v6678 = vmul.f32 %v6613, %v6649
        %v6679 = vmul.f32 %v6614, %v6651
        %v6680 = vmul.f32 %v6615, %v6653
        %v6681 = vmul.f32 %v6616, %v6655
        %6695 = vrot.lane.b32.xlu0 %v6669, 64
        %v6696 = vpop.permute.xlu0 %6695
        %6697 = vrot.lane.b32.xlu0 %v6670, 64
        %v6698 = vpop.permute.xlu0 %6697
        %6699 = vrot.lane.b32.xlu0 %v6671, 64
        %v6700 = vpop.permute.xlu0 %6699
        %6701 = vrot.lane.b32.xlu0 %v6672, 64
        %v6702 = vpop.permute.xlu0 %6701
        %6703 = vrot.lane.b32.xlu0 %v6673, 64
        %v6704 = vpop.permute.xlu0 %6703
        %6705 = vrot.lane.b32.xlu0 %v6674, 64
        %v6706 = vpop.permute.xlu0 %6705
        %6707 = vrot.lane.b32.xlu0 %v6675, 64
        %v6708 = vpop.permute.xlu0 %6707
        %6709 = vrot.lane.b32.xlu0 %v6676, 64
        %v6710 = vpop.permute.xlu0 %6709
        %6711 = vrot.lane.b32.xlu0 %v6677, 64
        %v6712 = vpop.permute.xlu0 %6711
        %6713 = vrot.lane.b32.xlu0 %v6678, 64
        %v6714 = vpop.permute.xlu0 %6713
        %6715 = vrot.lane.b32.xlu0 %v6679, 64
        %v6716 = vpop.permute.xlu0 %6715
        %6717 = vrot.lane.b32.xlu0 %v6680, 64
        %v6718 = vpop.permute.xlu0 %6717
        %6719 = vrot.lane.b32.xlu0 %v6681, 64
        %v6720 = vpop.permute.xlu0 %6719
        %v6734 = vadd.f32 %v1897, %v6696
        %v6735 = vadd.f32 %v1902, %v6698
        %v6736 = vadd.f32 %v1907, %v6700
        %v6737 = vadd.f32 %v1912, %v6702
        %v6738 = vadd.f32 %v1917, %v6704
        %v6739 = vadd.f32 %v1922, %v6706
        %v6740 = vadd.f32 %v1927, %v6708
        %v6741 = vadd.f32 %v1932, %v6710
        %v6742 = vadd.f32 %v1937, %v6712
        %v6743 = vadd.f32 %v1942, %v6714
        %v6744 = vadd.f32 %v1947, %v6716
        %v6745 = vadd.f32 %v1952, %v6718
        %v6746 = vadd.f32 %v1957, %v6720
        %v6747 = vtanh.pop %v6734
        %v6748 = vtanh.pop %v6735
        %v6749 = vtanh.pop %v6736
        %v6750 = vtanh.pop %v6737
        %v6751 = vtanh.pop %v6738
        %v6752 = vtanh.pop %v6739
        %v6753 = vtanh.pop %v6740
        %v6754 = vtanh.pop %v6741
        %v6755 = vtanh.pop %v6742
        %v6756 = vtanh.pop %v6743
        %v6757 = vtanh.pop %v6744
        %v6758 = vtanh.pop %v6745
        %v6759 = vtanh.pop %v6746
        %v6760 = vsub.f32 1.0, %v6604
        %v6761 = vsub.f32 1.0, %v6605
        %v6762 = vsub.f32 1.0, %v6606
        %v6763 = vsub.f32 1.0, %v6607
        %v6764 = vsub.f32 1.0, %v6608
        %v6765 = vsub.f32 1.0, %v6609
        %v6766 = vsub.f32 1.0, %v6610
        %v6767 = vsub.f32 1.0, %v6611
        %v6768 = vsub.f32 1.0, %v6612
        %v6769 = vsub.f32 1.0, %v6613
        %v6770 = vsub.f32 1.0, %v6614
        %v6771 = vsub.f32 1.0, %v6615
        %v6772 = vsub.f32 1.0, %v6616
        %6786 = vrot.lane.b32.xlu0 %v6747, 96
        %v6787 = vpop.permute.xlu0 %6786
        %6788 = vrot.lane.b32.xlu0 %v6748, 96
        %v6789 = vpop.permute.xlu0 %6788
        %6790 = vrot.lane.b32.xlu0 %v6749, 96
        %v6791 = vpop.permute.xlu0 %6790
        %6792 = vrot.lane.b32.xlu0 %v6750, 96
        %v6793 = vpop.permute.xlu0 %6792
        %6794 = vrot.lane.b32.xlu0 %v6751, 96
        %v6795 = vpop.permute.xlu0 %6794
        %6796 = vrot.lane.b32.xlu0 %v6752, 96
        %v6797 = vpop.permute.xlu0 %6796
        %6798 = vrot.lane.b32.xlu0 %v6753, 96
        %v6799 = vpop.permute.xlu0 %6798
        %6800 = vrot.lane.b32.xlu0 %v6754, 96
        %v6801 = vpop.permute.xlu0 %6800
        %6802 = vrot.lane.b32.xlu0 %v6755, 96
        %v6803 = vpop.permute.xlu0 %6802
        %6804 = vrot.lane.b32.xlu0 %v6756, 96
        %v6805 = vpop.permute.xlu0 %6804
        %6806 = vrot.lane.b32.xlu0 %v6757, 96
        %v6807 = vpop.permute.xlu0 %6806
        %6808 = vrot.lane.b32.xlu0 %v6758, 96
        %v6809 = vpop.permute.xlu0 %6808
        %6810 = vrot.lane.b32.xlu0 %v6759, 96
        %v6811 = vpop.permute.xlu0 %6810
        %v6825 = vmul.f32 %v6760, %v6787
        %v6826 = vmul.f32 %v6761, %v6789
        %v6827 = vmul.f32 %v6762, %v6791
        %v6828 = vmul.f32 %v6763, %v6793
        %v6829 = vmul.f32 %v6764, %v6795
        %v6830 = vmul.f32 %v6765, %v6797
        %v6831 = vmul.f32 %v6766, %v6799
        %v6832 = vmul.f32 %v6767, %v6801
        %v6833 = vmul.f32 %v6768, %v6803
        %v6834 = vmul.f32 %v6769, %v6805
        %v6835 = vmul.f32 %v6770, %v6807
        %v6836 = vmul.f32 %v6771, %v6809
        %v6837 = vmul.f32 %v6772, %v6811
        %v6838 = vmul.f32 %v6604, %v6304
        %v6839 = vmul.f32 %v6605, %v6305
        %v6840 = vmul.f32 %v6606, %v6306
        %v6841 = vmul.f32 %v6607, %v6307
        %v6842 = vmul.f32 %v6608, %v6308
        %v6843 = vmul.f32 %v6609, %v6309
        %v6844 = vmul.f32 %v6610, %v6310
        %v6845 = vmul.f32 %v6611, %v6311
        %v6846 = vmul.f32 %v6612, %v6312
        %v6847 = vmul.f32 %v6613, %v6313
        %v6848 = vmul.f32 %v6614, %v6314
        %v6849 = vmul.f32 %v6615, %v6315
        %v6850 = vmul.f32 %v6616, %v6316
        %v6851 = vadd.f32 %v6825, %v6838
        %v6852 = vadd.f32 %v6826, %v6839
        %v6853 = vadd.f32 %v6827, %v6840
        %v6854 = vadd.f32 %v6828, %v6841
        %v6855 = vadd.f32 %v6829, %v6842
        %v6856 = vadd.f32 %v6830, %v6843
        %v6857 = vadd.f32 %v6831, %v6844
        %v6858 = vadd.f32 %v6832, %v6845
        %v6859 = vadd.f32 %v6833, %v6846
        %v6860 = vadd.f32 %v6834, %v6847
        %v6861 = vadd.f32 %v6835, %v6848
        %v6862 = vadd.f32 %v6836, %v6849
        %v6863 = vadd.f32 %v6837, %v6850
        %6877 = vrot.lane.b32.xlu0 %v6851, 96
        %v6878 = vpop.permute.xlu0 %6877
        %6879 = vrot.lane.b32.xlu0 %v6852, 96
        %v6880 = vpop.permute.xlu0 %6879
        %6881 = vrot.lane.b32.xlu0 %v6853, 96
        %v6882 = vpop.permute.xlu0 %6881
        %6883 = vrot.lane.b32.xlu0 %v6854, 96
        %v6884 = vpop.permute.xlu0 %6883
        %6885 = vrot.lane.b32.xlu0 %v6855, 96
        %v6886 = vpop.permute.xlu0 %6885
        %6887 = vrot.lane.b32.xlu0 %v6856, 96
        %v6888 = vpop.permute.xlu0 %6887
        %6889 = vrot.lane.b32.xlu0 %v6857, 96
        %v6890 = vpop.permute.xlu0 %6889
        %6891 = vrot.lane.b32.xlu0 %v6858, 96
        %v6892 = vpop.permute.xlu0 %6891
        %6893 = vrot.lane.b32.xlu0 %v6859, 96
        %v6894 = vpop.permute.xlu0 %6893
        %6895 = vrot.lane.b32.xlu0 %v6860, 96
        %v6896 = vpop.permute.xlu0 %6895
        %6897 = vrot.lane.b32.xlu0 %v6861, 96
        %v6898 = vpop.permute.xlu0 %6897
        %6899 = vrot.lane.b32.xlu0 %v6862, 96
        %v6900 = vpop.permute.xlu0 %6899
        %6901 = vrot.lane.b32.xlu0 %v6863, 96
        %v6902 = vpop.permute.xlu0 %6901
        %s6916 = scalar_lea.vmem %s770, 832 [#allocation3]
        %6917 = vst.msk [vmem:[%s6916] sm:$0xff] %vm919, %v6878
        %6918 = vst.msk [vmem:[%s6916 + $0x8] sm:$0xff] %vm919, %v6880
        %6919 = vst.msk [vmem:[%s6916 + $0x10] sm:$0xff] %vm919, %v6882
        %6920 = vst.msk [vmem:[%s6916 + $0x18] sm:$0xff] %vm919, %v6884
        %6921 = vst.msk [vmem:[%s6916 + $0x20] sm:$0xff] %vm919, %v6886
        %6922 = vst.msk [vmem:[%s6916 + $0x28] sm:$0xff] %vm919, %v6888
        %6923 = vst.msk [vmem:[%s6916 + $0x30] sm:$0xff] %vm919, %v6890
        %6924 = vst.msk [vmem:[%s6916 + $0x38] sm:$0xff] %vm919, %v6892
        %6925 = vst.msk [vmem:[%s6916 + $0x40] sm:$0xff] %vm919, %v6894
        %6926 = vst.msk [vmem:[%s6916 + $0x48] sm:$0xff] %vm919, %v6896
        %6927 = vst.msk [vmem:[%s6916 + $0x50] sm:$0xff] %vm919, %v6898
        %6928 = vst.msk [vmem:[%s6916 + $0x58] sm:$0xff] %vm919, %v6900
        %6929 = vst.msk [vmem:[%s6916 + $0x60] sm:$0xff] %vm919, %v6902
        %v6930 = vsel %vm919, %v6878, 0
        %v6932 = vsel %vm919, %v6880, 0
        %v6934 = vsel %vm919, %v6882, 0
        %v6936 = vsel %vm919, %v6884, 0
        %v6938 = vsel %vm919, %v6886, 0
        %v6940 = vsel %vm919, %v6888, 0
        %v6942 = vsel %vm919, %v6890, 0
        %v6944 = vsel %vm919, %v6892, 0
        %v6946 = vsel %vm919, %v6894, 0
        %v6948 = vsel %vm919, %v6896, 0
        %v6950 = vsel %vm919, %v6898, 0
        %v6952 = vsel %vm919, %v6900, 0
        %v6954 = vsel %vm919, %v6902, 0
        %6956 = vmatprep.subr.mxu0 0.0
        %6957 = vmatpush1.msra.mxu0 0.0
        %6958 = vmatprep.subr.mxu0 0.0
        %6959 = vmatpush1.msra.mxu0 0.0
        %6960 = vmatprep.subr.mxu0 0.0
        %6961 = vmatpush1.msra.mxu0 0.0
        %6962 = vmatprep.subr.mxu0 0.0
        %6963 = vmatpush1.msra.mxu0 0.0
        %6964 = vmatprep.subr.mxu0 0.0
        %6965 = vmatpush1.msra.mxu0 0.0
        %6966 = vmatprep.subr.mxu0 0.0
        %6967 = vmatpush1.msra.mxu0 0.0
        %6968 = vmatprep.subr.mxu0 0.0
        %6969 = vmatpush1.msra.mxu0 0.0
        %6970 = vmatprep.subr.mxu0 0.0
        %6971 = vmatpush1.msra.mxu0 0.0
        %6972 = vmatprep.subr.mxu0 0.0
        %6973 = vmatpush1.msra.mxu0 0.0
        %6974 = vmatprep.subr.mxu0 0.0
        %6975 = vmatpush1.msra.mxu0 0.0
        %6976 = vmatprep.subr.mxu0 0.0
        %6977 = vmatpush1.msra.mxu0 0.0
        %6978 = vmatprep.subr.mxu0 0.0
        %6979 = vmatpush1.msra.mxu0 0.0
        %6980 = vmatprep.subr.mxu0 0.0
        %6981 = vmatpush1.msra.mxu0 %v780
        %6982 = vmatprep.subr.mxu0 0.0
        %6983 = vmatpush1.msra.mxu0 %v779
        %6984 = vmatprep.subr.mxu0 0.0
        %6985 = vmatpush1.msra.mxu0 %v778
        %6986 = vmatprep.subr.mxu0 0.0
        %6987 = vmatpush1.msra.mxu0 %v777
        %6988 = vmatprep.subr.mxu0 0.0
        %6989 = vmatpush2.msra.mxu0 0.0
        %6990 = vmatprep.subr.mxu0 0.0
        %6991 = vmatpush2.msra.mxu0 0.0
        %6992 = vmatprep.subr.mxu0 0.0
        %6993 = vmatpush2.msra.mxu0 0.0
        %6994 = vmatprep.subr.mxu0 0.0
        %6995 = vmatpush2.msra.mxu0 0.0
        %6996 = vmatprep.subr.mxu0 0.0
        %6997 = vmatpush2.msra.mxu0 0.0
        %6998 = vmatprep.subr.mxu0 0.0
        %6999 = vmatpush2.msra.mxu0 0.0
        %7000 = vmatprep.subr.mxu0 0.0
        %7001 = vmatpush2.msra.mxu0 0.0
        %7002 = vmatprep.subr.mxu0 0.0
        %7003 = vmatpush2.msra.mxu0 0.0
        %7004 = vmatprep.subr.mxu0 0.0
        %7005 = vmatpush2.msra.mxu0 0.0
        %7006 = vmatprep.subr.mxu0 0.0
        %7007 = vmatpush2.msra.mxu0 0.0
        %7008 = vmatprep.subr.mxu0 0.0
        %7009 = vmatpush2.msra.mxu0 0.0
        %7010 = vmatprep.subr.mxu0 0.0
        %7011 = vmatpush2.msra.mxu0 0.0
        %7012 = vmatprep.subr.mxu0 0.0
        %7013 = vmatpush2.msra.mxu0 0.0
        %7014 = vmatprep.subr.mxu0 0.0
        %7015 = vmatpush2.msra.mxu0 0.0
        %7016 = vmatprep.subr.mxu0 0.0
        %7017 = vmatpush2.msra.mxu0 0.0
        %7018 = vmatprep.subr.mxu0 0.0
        %7019 = vmatpush2.msra.mxu0 0.0
        %7020 = vmatprep.mubr.f32.mxu0 0.0
        %7021 = vmatmul.mubr.f32.gmra.mxu0 %v6930
        %v7022 = vpop.f32.mrf.mxu0
        %v7023 = vadd.f32 %v2029, %v7022
        %v7024 = vpop.f32.mrf.mxu0
        %7025 = vmatprep.mubr.f32.mxu0 0.0
        %7026 = vmatmul.mubr.f32.gmra.mxu0 %v6932
        %v7027 = vpop.f32.mrf.mxu0
        %v7028 = vadd.f32 %v2029, %v7027
        %v7029 = vpop.f32.mrf.mxu0
        %7030 = vmatprep.mubr.f32.mxu0 0.0
        %7031 = vmatmul.mubr.f32.gmra.mxu0 %v6934
        %v7032 = vpop.f32.mrf.mxu0
        %v7033 = vadd.f32 %v2029, %v7032
        %v7034 = vpop.f32.mrf.mxu0
        %7035 = vmatprep.mubr.f32.mxu0 0.0
        %7036 = vmatmul.mubr.f32.gmra.mxu0 %v6936
        %v7037 = vpop.f32.mrf.mxu0
        %v7038 = vadd.f32 %v2029, %v7037
        %v7039 = vpop.f32.mrf.mxu0
        %7040 = vmatprep.mubr.f32.mxu0 0.0
        %7041 = vmatmul.mubr.f32.gmra.mxu0 %v6938
        %v7042 = vpop.f32.mrf.mxu0
        %v7043 = vadd.f32 %v2029, %v7042
        %v7044 = vpop.f32.mrf.mxu0
        %7045 = vmatprep.mubr.f32.mxu0 0.0
        %7046 = vmatmul.mubr.f32.gmra.mxu0 %v6940
        %v7047 = vpop.f32.mrf.mxu0
        %v7048 = vadd.f32 %v2029, %v7047
        %v7049 = vpop.f32.mrf.mxu0
        %7050 = vmatprep.mubr.f32.mxu0 0.0
        %7051 = vmatmul.mubr.f32.gmra.mxu0 %v6942
        %v7052 = vpop.f32.mrf.mxu0
        %v7053 = vadd.f32 %v2029, %v7052
        %v7054 = vpop.f32.mrf.mxu0
        %7055 = vmatprep.mubr.f32.mxu0 0.0
        %7056 = vmatmul.mubr.f32.gmra.mxu0 %v6944
        %v7057 = vpop.f32.mrf.mxu0
        %v7058 = vadd.f32 %v2029, %v7057
        %v7059 = vpop.f32.mrf.mxu0
        %7060 = vmatprep.mubr.f32.mxu0 0.0
        %7061 = vmatmul.mubr.f32.gmra.mxu0 %v6946
        %v7062 = vpop.f32.mrf.mxu0
        %v7063 = vadd.f32 %v2029, %v7062
        %v7064 = vpop.f32.mrf.mxu0
        %7065 = vmatprep.mubr.f32.mxu0 0.0
        %7066 = vmatmul.mubr.f32.gmra.mxu0 %v6948
        %v7067 = vpop.f32.mrf.mxu0
        %v7068 = vadd.f32 %v2029, %v7067
        %v7069 = vpop.f32.mrf.mxu0
        %7070 = vmatprep.mubr.f32.mxu0 0.0
        %7071 = vmatmul.mubr.f32.gmra.mxu0 %v6950
        %v7072 = vpop.f32.mrf.mxu0
        %v7073 = vadd.f32 %v2029, %v7072
        %v7074 = vpop.f32.mrf.mxu0
        %7075 = vmatprep.mubr.f32.mxu0 0.0
        %7076 = vmatmul.mubr.f32.gmra.mxu0 %v6952
        %v7077 = vpop.f32.mrf.mxu0
        %v7078 = vadd.f32 %v2029, %v7077
        %v7079 = vpop.f32.mrf.mxu0
        %7080 = vmatprep.mubr.f32.mxu0 0.0
        %7081 = vmatmul.mubr.f32.gmra.mxu0 %v6954
        %v7082 = vpop.f32.mrf.mxu0
        %v7083 = vadd.f32 %v2029, %v7082
        %v7084 = vpop.f32.mrf.mxu0
        %7085 = vdwg.mxu0
        %v7086 = vadd.f32 %v1962, %v7023
        %v7087 = vadd.f32 %v1967, %v7028
        %v7088 = vadd.f32 %v1972, %v7033
        %v7089 = vadd.f32 %v1977, %v7038
        %v7090 = vadd.f32 %v1982, %v7043
        %v7091 = vadd.f32 %v1987, %v7048
        %v7092 = vadd.f32 %v1992, %v7053
        %v7093 = vadd.f32 %v1997, %v7058
        %v7094 = vadd.f32 %v2002, %v7063
        %v7095 = vadd.f32 %v2007, %v7068
        %v7096 = vadd.f32 %v2012, %v7073
        %v7097 = vadd.f32 %v2017, %v7078
        %v7098 = vadd.f32 %v2022, %v7083
        %v7099 = vsub.f32 0.0, %v7086
        %v7100 = vsub.f32 0.0, %v7087
        %v7101 = vsub.f32 0.0, %v7088
        %v7102 = vsub.f32 0.0, %v7089
        %v7103 = vsub.f32 0.0, %v7090
        %v7104 = vsub.f32 0.0, %v7091
        %v7105 = vsub.f32 0.0, %v7092
        %v7106 = vsub.f32 0.0, %v7093
        %v7107 = vsub.f32 0.0, %v7094
        %v7108 = vsub.f32 0.0, %v7095
        %v7109 = vsub.f32 0.0, %v7096
        %v7110 = vsub.f32 0.0, %v7097
        %v7111 = vsub.f32 0.0, %v7098
        %v7112 = vmul.f32 %v7099, 1.442695
        %v7113 = vpow.pop %v7112
        %v7114 = vmul.f32 %v7100, 1.442695
        %v7115 = vpow.pop %v7114
        %v7116 = vmul.f32 %v7101, 1.442695
        %v7117 = vpow.pop %v7116
        %v7118 = vmul.f32 %v7102, 1.442695
        %v7119 = vpow.pop %v7118
        %v7120 = vmul.f32 %v7103, 1.442695
        %v7121 = vpow.pop %v7120
        %v7122 = vmul.f32 %v7104, 1.442695
        %v7123 = vpow.pop %v7122
        %v7124 = vmul.f32 %v7105, 1.442695
        %v7125 = vpow.pop %v7124
        %v7126 = vmul.f32 %v7106, 1.442695
        %v7127 = vpow.pop %v7126
        %v7128 = vmul.f32 %v7107, 1.442695
        %v7129 = vpow.pop %v7128
        %v7130 = vmul.f32 %v7108, 1.442695
        %v7131 = vpow.pop %v7130
        %v7132 = vmul.f32 %v7109, 1.442695
        %v7133 = vpow.pop %v7132
        %v7134 = vmul.f32 %v7110, 1.442695
        %v7135 = vpow.pop %v7134
        %v7136 = vmul.f32 %v7111, 1.442695
        %v7137 = vpow.pop %v7136
        %v7138 = vadd.f32 %v7113, 1.0
        %v7139 = vadd.f32 %v7115, 1.0
        %v7140 = vadd.f32 %v7117, 1.0
        %v7141 = vadd.f32 %v7119, 1.0
        %v7142 = vadd.f32 %v7121, 1.0
        %v7143 = vadd.f32 %v7123, 1.0
        %v7144 = vadd.f32 %v7125, 1.0
        %v7145 = vadd.f32 %v7127, 1.0
        %v7146 = vadd.f32 %v7129, 1.0
        %v7147 = vadd.f32 %v7131, 1.0
        %v7148 = vadd.f32 %v7133, 1.0
        %v7149 = vadd.f32 %v7135, 1.0
        %v7150 = vadd.f32 %v7137, 1.0
        %v7151 = vrcp.pop %v7138
        %v7152 = vrcp.pop %v7139
        %v7153 = vrcp.pop %v7140
        %v7154 = vrcp.pop %v7141
        %v7155 = vrcp.pop %v7142
        %v7156 = vrcp.pop %v7143
        %v7157 = vrcp.pop %v7144
        %v7158 = vrcp.pop %v7145
        %v7159 = vrcp.pop %v7146
        %v7160 = vrcp.pop %v7147
        %v7161 = vrcp.pop %v7148
        %v7162 = vrcp.pop %v7149
        %v7163 = vrcp.pop %v7150
        %7177 = vrot.lane.b32.xlu0 %v7023, 64
        %v7178 = vpop.permute.xlu0 %7177
        %7179 = vrot.lane.b32.xlu0 %v7028, 64
        %v7180 = vpop.permute.xlu0 %7179
        %7181 = vrot.lane.b32.xlu0 %v7033, 64
        %v7182 = vpop.permute.xlu0 %7181
        %7183 = vrot.lane.b32.xlu0 %v7038, 64
        %v7184 = vpop.permute.xlu0 %7183
        %7185 = vrot.lane.b32.xlu0 %v7043, 64
        %v7186 = vpop.permute.xlu0 %7185
        %7187 = vrot.lane.b32.xlu0 %v7048, 64
        %v7188 = vpop.permute.xlu0 %7187
        %7189 = vrot.lane.b32.xlu0 %v7053, 64
        %v7190 = vpop.permute.xlu0 %7189
        %7191 = vrot.lane.b32.xlu0 %v7058, 64
        %v7192 = vpop.permute.xlu0 %7191
        %7193 = vrot.lane.b32.xlu0 %v7063, 64
        %v7194 = vpop.permute.xlu0 %7193
        %7195 = vrot.lane.b32.xlu0 %v7068, 64
        %v7196 = vpop.permute.xlu0 %7195
        %7197 = vrot.lane.b32.xlu0 %v7073, 64
        %v7198 = vpop.permute.xlu0 %7197
        %7199 = vrot.lane.b32.xlu0 %v7078, 64
        %v7200 = vpop.permute.xlu0 %7199
        %7201 = vrot.lane.b32.xlu0 %v7083, 64
        %v7202 = vpop.permute.xlu0 %7201
        %v7216 = vmul.f32 %v7151, %v7178
        %v7217 = vmul.f32 %v7152, %v7180
        %v7218 = vmul.f32 %v7153, %v7182
        %v7219 = vmul.f32 %v7154, %v7184
        %v7220 = vmul.f32 %v7155, %v7186
        %v7221 = vmul.f32 %v7156, %v7188
        %v7222 = vmul.f32 %v7157, %v7190
        %v7223 = vmul.f32 %v7158, %v7192
        %v7224 = vmul.f32 %v7159, %v7194
        %v7225 = vmul.f32 %v7160, %v7196
        %v7226 = vmul.f32 %v7161, %v7198
        %v7227 = vmul.f32 %v7162, %v7200
        %v7228 = vmul.f32 %v7163, %v7202
        %7242 = vrot.lane.b32.xlu0 %v7216, 64
        %v7243 = vpop.permute.xlu0 %7242
        %7244 = vrot.lane.b32.xlu0 %v7217, 64
        %v7245 = vpop.permute.xlu0 %7244
        %7246 = vrot.lane.b32.xlu0 %v7218, 64
        %v7247 = vpop.permute.xlu0 %7246
        %7248 = vrot.lane.b32.xlu0 %v7219, 64
        %v7249 = vpop.permute.xlu0 %7248
        %7250 = vrot.lane.b32.xlu0 %v7220, 64
        %v7251 = vpop.permute.xlu0 %7250
        %7252 = vrot.lane.b32.xlu0 %v7221, 64
        %v7253 = vpop.permute.xlu0 %7252
        %7254 = vrot.lane.b32.xlu0 %v7222, 64
        %v7255 = vpop.permute.xlu0 %7254
        %7256 = vrot.lane.b32.xlu0 %v7223, 64
        %v7257 = vpop.permute.xlu0 %7256
        %7258 = vrot.lane.b32.xlu0 %v7224, 64
        %v7259 = vpop.permute.xlu0 %7258
        %7260 = vrot.lane.b32.xlu0 %v7225, 64
        %v7261 = vpop.permute.xlu0 %7260
        %7262 = vrot.lane.b32.xlu0 %v7226, 64
        %v7263 = vpop.permute.xlu0 %7262
        %7264 = vrot.lane.b32.xlu0 %v7227, 64
        %v7265 = vpop.permute.xlu0 %7264
        %7266 = vrot.lane.b32.xlu0 %v7228, 64
        %v7267 = vpop.permute.xlu0 %7266
        %v7281 = vadd.f32 %v1962, %v7243
        %v7282 = vadd.f32 %v1967, %v7245
        %v7283 = vadd.f32 %v1972, %v7247
        %v7284 = vadd.f32 %v1977, %v7249
        %v7285 = vadd.f32 %v1982, %v7251
        %v7286 = vadd.f32 %v1987, %v7253
        %v7287 = vadd.f32 %v1992, %v7255
        %v7288 = vadd.f32 %v1997, %v7257
        %v7289 = vadd.f32 %v2002, %v7259
        %v7290 = vadd.f32 %v2007, %v7261
        %v7291 = vadd.f32 %v2012, %v7263
        %v7292 = vadd.f32 %v2017, %v7265
        %v7293 = vadd.f32 %v2022, %v7267
        %v7294 = vtanh.pop %v7281
        %v7295 = vtanh.pop %v7282
        %v7296 = vtanh.pop %v7283
        %v7297 = vtanh.pop %v7284
        %v7298 = vtanh.pop %v7285
        %v7299 = vtanh.pop %v7286
        %v7300 = vtanh.pop %v7287
        %v7301 = vtanh.pop %v7288
        %v7302 = vtanh.pop %v7289
        %v7303 = vtanh.pop %v7290
        %v7304 = vtanh.pop %v7291
        %v7305 = vtanh.pop %v7292
        %v7306 = vtanh.pop %v7293
        %v7307 = vsub.f32 1.0, %v7151
        %v7308 = vsub.f32 1.0, %v7152
        %v7309 = vsub.f32 1.0, %v7153
        %v7310 = vsub.f32 1.0, %v7154
        %v7311 = vsub.f32 1.0, %v7155
        %v7312 = vsub.f32 1.0, %v7156
        %v7313 = vsub.f32 1.0, %v7157
        %v7314 = vsub.f32 1.0, %v7158
        %v7315 = vsub.f32 1.0, %v7159
        %v7316 = vsub.f32 1.0, %v7160
        %v7317 = vsub.f32 1.0, %v7161
        %v7318 = vsub.f32 1.0, %v7162
        %v7319 = vsub.f32 1.0, %v7163
        %7333 = vrot.lane.b32.xlu0 %v7294, 96
        %v7334 = vpop.permute.xlu0 %7333
        %7335 = vrot.lane.b32.xlu0 %v7295, 96
        %v7336 = vpop.permute.xlu0 %7335
        %7337 = vrot.lane.b32.xlu0 %v7296, 96
        %v7338 = vpop.permute.xlu0 %7337
        %7339 = vrot.lane.b32.xlu0 %v7297, 96
        %v7340 = vpop.permute.xlu0 %7339
        %7341 = vrot.lane.b32.xlu0 %v7298, 96
        %v7342 = vpop.permute.xlu0 %7341
        %7343 = vrot.lane.b32.xlu0 %v7299, 96
        %v7344 = vpop.permute.xlu0 %7343
        %7345 = vrot.lane.b32.xlu0 %v7300, 96
        %v7346 = vpop.permute.xlu0 %7345
        %7347 = vrot.lane.b32.xlu0 %v7301, 96
        %v7348 = vpop.permute.xlu0 %7347
        %7349 = vrot.lane.b32.xlu0 %v7302, 96
        %v7350 = vpop.permute.xlu0 %7349
        %7351 = vrot.lane.b32.xlu0 %v7303, 96
        %v7352 = vpop.permute.xlu0 %7351
        %7353 = vrot.lane.b32.xlu0 %v7304, 96
        %v7354 = vpop.permute.xlu0 %7353
        %7355 = vrot.lane.b32.xlu0 %v7305, 96
        %v7356 = vpop.permute.xlu0 %7355
        %7357 = vrot.lane.b32.xlu0 %v7306, 96
        %v7358 = vpop.permute.xlu0 %7357
        %v7372 = vmul.f32 %v7307, %v7334
        %v7373 = vmul.f32 %v7308, %v7336
        %v7374 = vmul.f32 %v7309, %v7338
        %v7375 = vmul.f32 %v7310, %v7340
        %v7376 = vmul.f32 %v7311, %v7342
        %v7377 = vmul.f32 %v7312, %v7344
        %v7378 = vmul.f32 %v7313, %v7346
        %v7379 = vmul.f32 %v7314, %v7348
        %v7380 = vmul.f32 %v7315, %v7350
        %v7381 = vmul.f32 %v7316, %v7352
        %v7382 = vmul.f32 %v7317, %v7354
        %v7383 = vmul.f32 %v7318, %v7356
        %v7384 = vmul.f32 %v7319, %v7358
        %v7385 = vmul.f32 %v7151, %v6851
        %v7386 = vmul.f32 %v7152, %v6852
        %v7387 = vmul.f32 %v7153, %v6853
        %v7388 = vmul.f32 %v7154, %v6854
        %v7389 = vmul.f32 %v7155, %v6855
        %v7390 = vmul.f32 %v7156, %v6856
        %v7391 = vmul.f32 %v7157, %v6857
        %v7392 = vmul.f32 %v7158, %v6858
        %v7393 = vmul.f32 %v7159, %v6859
        %v7394 = vmul.f32 %v7160, %v6860
        %v7395 = vmul.f32 %v7161, %v6861
        %v7396 = vmul.f32 %v7162, %v6862
        %v7397 = vmul.f32 %v7163, %v6863
        %v7398 = vadd.f32 %v7372, %v7385
        %v7399 = vadd.f32 %v7373, %v7386
        %v7400 = vadd.f32 %v7374, %v7387
        %v7401 = vadd.f32 %v7375, %v7388
        %v7402 = vadd.f32 %v7376, %v7389
        %v7403 = vadd.f32 %v7377, %v7390
        %v7404 = vadd.f32 %v7378, %v7391
        %v7405 = vadd.f32 %v7379, %v7392
        %v7406 = vadd.f32 %v7380, %v7393
        %v7407 = vadd.f32 %v7381, %v7394
        %v7408 = vadd.f32 %v7382, %v7395
        %v7409 = vadd.f32 %v7383, %v7396
        %v7410 = vadd.f32 %v7384, %v7397
        %7424 = vrot.lane.b32.xlu0 %v7398, 96
        %v7425 = vpop.permute.xlu0 %7424
        %7426 = vrot.lane.b32.xlu0 %v7399, 96
        %v7427 = vpop.permute.xlu0 %7426
        %7428 = vrot.lane.b32.xlu0 %v7400, 96
        %v7429 = vpop.permute.xlu0 %7428
        %7430 = vrot.lane.b32.xlu0 %v7401, 96
        %v7431 = vpop.permute.xlu0 %7430
        %7432 = vrot.lane.b32.xlu0 %v7402, 96
        %v7433 = vpop.permute.xlu0 %7432
        %7434 = vrot.lane.b32.xlu0 %v7403, 96
        %v7435 = vpop.permute.xlu0 %7434
        %7436 = vrot.lane.b32.xlu0 %v7404, 96
        %v7437 = vpop.permute.xlu0 %7436
        %7438 = vrot.lane.b32.xlu0 %v7405, 96
        %v7439 = vpop.permute.xlu0 %7438
        %7440 = vrot.lane.b32.xlu0 %v7406, 96
        %v7441 = vpop.permute.xlu0 %7440
        %7442 = vrot.lane.b32.xlu0 %v7407, 96
        %v7443 = vpop.permute.xlu0 %7442
        %7444 = vrot.lane.b32.xlu0 %v7408, 96
        %v7445 = vpop.permute.xlu0 %7444
        %7446 = vrot.lane.b32.xlu0 %v7409, 96
        %v7447 = vpop.permute.xlu0 %7446
        %7448 = vrot.lane.b32.xlu0 %v7410, 96
        %v7449 = vpop.permute.xlu0 %7448
        %s7463 = scalar_lea.vmem %s770, 936 [#allocation3]
        %7464 = vst.msk [vmem:[%s7463] sm:$0xff] %vm919, %v7425
        %7465 = vst.msk [vmem:[%s7463 + $0x8] sm:$0xff] %vm919, %v7427
        %7466 = vst.msk [vmem:[%s7463 + $0x10] sm:$0xff] %vm919, %v7429
        %7467 = vst.msk [vmem:[%s7463 + $0x18] sm:$0xff] %vm919, %v7431
        %7468 = vst.msk [vmem:[%s7463 + $0x20] sm:$0xff] %vm919, %v7433
        %7469 = vst.msk [vmem:[%s7463 + $0x28] sm:$0xff] %vm919, %v7435
        %7470 = vst.msk [vmem:[%s7463 + $0x30] sm:$0xff] %vm919, %v7437
        %7471 = vst.msk [vmem:[%s7463 + $0x38] sm:$0xff] %vm919, %v7439
        %7472 = vst.msk [vmem:[%s7463 + $0x40] sm:$0xff] %vm919, %v7441
        %7473 = vst.msk [vmem:[%s7463 + $0x48] sm:$0xff] %vm919, %v7443
        %7474 = vst.msk [vmem:[%s7463 + $0x50] sm:$0xff] %vm919, %v7445
        %7475 = vst.msk [vmem:[%s7463 + $0x58] sm:$0xff] %vm919, %v7447
        %7476 = vst.msk [vmem:[%s7463 + $0x60] sm:$0xff] %vm919, %v7449
        %s7477 = sand.u32 %s134, 1
        %s7478 = sand.u32 %s134, 1
        %s7479 = smul.addr %s7478, 1040
        %s7480 = scalar_lea.vmem [#allocation3], %s7479
        // Predicated region
        $region79: #{tpu_custom_call.1} parent=73 // pred_check
          %p7481 = pneg %p144
        $region80: #{tpu_custom_call.1} parent=73 // pred_check_branch
          %7483 = sbr.rel (%p7481) target = $region82
        $region81: #{tpu_custom_call.1} parent=73 // pred_region
          %s7484 = smul.u32 13, %s16
          %s7485 = smul.addr %s7484, 8
          %s7486 = scalar_lea.vmem %s5, %s7485
          // Predicated region
          $region83: #{tpu_custom_call.1} parent=81 // pred_check
            _
          $region84: #{tpu_custom_call.1} parent=81 // pred_check_branch
            %7488 = sbr.rel (0) target = $region86
          $region85: #{tpu_custom_call.1} parent=81 // pred_region
            // Predicated region
            $region87: #{tpu_custom_call.1} parent=85 // pred_check
              _
            $region88: #{tpu_custom_call.1} parent=85 // pred_check_branch
              %7490 = sbr.rel (0) target = $region90
            $region89: #{tpu_custom_call.1} parent=85 // pred_region
              // Predicated region
              $region102: #{tpu_custom_call.1} parent=89 // pred_check
                _
              $region103: #{tpu_custom_call.1} parent=89 // pred_check_branch
                %7764 = sbr.rel (0) target = $region105
              $region104: #{tpu_custom_call.1} parent=89 // pred_region
                loop: start=0, step=1, limit=1
                $region106: #{tpu_custom_call.1} parent=104 // loop_pre_header
                  _
                $region107: #{tpu_custom_call.1} parent=104 // loop_header
                  %s7766 = sphi 0, %s7770
                  %p7767 = scmp.ge.s32.totalorder %s7766, 1
                  %s7771 = sphi %s7480, %s7480
                  %s7772 = sphi %s7486, %s7486
                $region108: #{tpu_custom_call.1} parent=104 // loop_header_branch
                  %7769 = sbr.rel (%p7767) target = $region112
                $region109: #{tpu_custom_call.1} parent=104 // loop_body
                  %v7773 = vld [vmem:[%s7771] sm:$0xff]
                  %7774 = vst [vmem:[%s7772] sm:$0xff] %v7773
                  %v7775 = vld [vmem:[%s7771 + $0x8] sm:$0xff]
                  %7776 = vst [vmem:[%s7772 + $0x8] sm:$0xff] %v7775
                  %v7777 = vld [vmem:[%s7771 + $0x10] sm:$0xff]
                  %7778 = vst [vmem:[%s7772 + $0x10] sm:$0xff] %v7777
                  %v7779 = vld [vmem:[%s7771 + $0x18] sm:$0xff]
                  %7780 = vst [vmem:[%s7772 + $0x18] sm:$0xff] %v7779
                  %v7781 = vld [vmem:[%s7771 + $0x20] sm:$0xff]
                  %7782 = vst [vmem:[%s7772 + $0x20] sm:$0xff] %v7781
                  %v7783 = vld [vmem:[%s7771 + $0x28] sm:$0xff]
                  %7784 = vst [vmem:[%s7772 + $0x28] sm:$0xff] %v7783
                  %v7785 = vld [vmem:[%s7771 + $0x30] sm:$0xff]
                  %7786 = vst [vmem:[%s7772 + $0x30] sm:$0xff] %v7785
                  %v7787 = vld [vmem:[%s7771 + $0x38] sm:$0xff]
                  %7788 = vst [vmem:[%s7772 + $0x38] sm:$0xff] %v7787
                  %v7789 = vld [vmem:[%s7771 + $0x40] sm:$0xff]
                  %7790 = vst [vmem:[%s7772 + $0x40] sm:$0xff] %v7789
                  %v7791 = vld [vmem:[%s7771 + $0x48] sm:$0xff]
                  %7792 = vst [vmem:[%s7772 + $0x48] sm:$0xff] %v7791
                  %v7793 = vld [vmem:[%s7771 + $0x50] sm:$0xff]
                  %7794 = vst [vmem:[%s7772 + $0x50] sm:$0xff] %v7793
                  %v7795 = vld [vmem:[%s7771 + $0x58] sm:$0xff]
                  %7796 = vst [vmem:[%s7772 + $0x58] sm:$0xff] %v7795
                  %v7797 = vld [vmem:[%s7771 + $0x60] sm:$0xff]
                  %7798 = vst [vmem:[%s7772 + $0x60] sm:$0xff] %v7797
                  %v7799 = vld [vmem:[%s7771 + $0x68] sm:$0xff]
                  %7800 = vst [vmem:[%s7772 + $0xd0] sm:$0xff] %v7799
                  %v7801 = vld [vmem:[%s7771 + $0x70] sm:$0xff]
                  %7802 = vst [vmem:[%s7772 + $0xd8] sm:$0xff] %v7801
                  %v7803 = vld [vmem:[%s7771 + $0x78] sm:$0xff]
                  %7804 = vst [vmem:[%s7772 + $0xe0] sm:$0xff] %v7803
                  %v7805 = vld [vmem:[%s7771 + $0x80] sm:$0xff]
                  %7806 = vst [vmem:[%s7772 + $0xe8] sm:$0xff] %v7805
                  %v7807 = vld [vmem:[%s7771 + $0x88] sm:$0xff]
                  %7808 = vst [vmem:[%s7772 + $0xf0] sm:$0xff] %v7807
                  %v7809 = vld [vmem:[%s7771 + $0x90] sm:$0xff]
                  %7810 = vst [vmem:[%s7772 + $0xf8] sm:$0xff] %v7809
                  %v7811 = vld [vmem:[%s7771 + $0x98] sm:$0xff]
                  %7812 = vst [vmem:[%s7772 + $0x100] sm:$0xff] %v7811
                  %v7813 = vld [vmem:[%s7771 + $0xa0] sm:$0xff]
                  %7814 = vst [vmem:[%s7772 + $0x108] sm:$0xff] %v7813
                  %v7815 = vld [vmem:[%s7771 + $0xa8] sm:$0xff]
                  %7816 = vst [vmem:[%s7772 + $0x110] sm:$0xff] %v7815
                  %v7817 = vld [vmem:[%s7771 + $0xb0] sm:$0xff]
                  %7818 = vst [vmem:[%s7772 + $0x118] sm:$0xff] %v7817
                  %v7819 = vld [vmem:[%s7771 + $0xb8] sm:$0xff]
                  %7820 = vst [vmem:[%s7772 + $0x120] sm:$0xff] %v7819
                  %v7821 = vld [vmem:[%s7771 + $0xc0] sm:$0xff]
                  %7822 = vst [vmem:[%s7772 + $0x128] sm:$0xff] %v7821
                  %v7823 = vld [vmem:[%s7771 + $0xc8] sm:$0xff]
                  %7824 = vst [vmem:[%s7772 + $0x130] sm:$0xff] %v7823
                  %v7825 = vld [vmem:[%s7771 + $0xd0] sm:$0xff]
                  %7826 = vst [vmem:[%s7772 + $0x1a0] sm:$0xff] %v7825
                  %v7827 = vld [vmem:[%s7771 + $0xd8] sm:$0xff]
                  %7828 = vst [vmem:[%s7772 + $0x1a8] sm:$0xff] %v7827
                  %v7829 = vld [vmem:[%s7771 + $0xe0] sm:$0xff]
                  %7830 = vst [vmem:[%s7772 + $0x1b0] sm:$0xff] %v7829
                  %v7831 = vld [vmem:[%s7771 + $0xe8] sm:$0xff]
                  %7832 = vst [vmem:[%s7772 + $0x1b8] sm:$0xff] %v7831
                  %v7833 = vld [vmem:[%s7771 + $0xf0] sm:$0xff]
                  %7834 = vst [vmem:[%s7772 + $0x1c0] sm:$0xff] %v7833
                  %v7835 = vld [vmem:[%s7771 + $0xf8] sm:$0xff]
                  %7836 = vst [vmem:[%s7772 + $0x1c8] sm:$0xff] %v7835
                  %v7837 = vld [vmem:[%s7771 + $0x100] sm:$0xff]
                  %7838 = vst [vmem:[%s7772 + $0x1d0] sm:$0xff] %v7837
                  %v7839 = vld [vmem:[%s7771 + $0x108] sm:$0xff]
                  %7840 = vst [vmem:[%s7772 + $0x1d8] sm:$0xff] %v7839
                  %v7841 = vld [vmem:[%s7771 + $0x110] sm:$0xff]
                  %7842 = vst [vmem:[%s7772 + $0x1e0] sm:$0xff] %v7841
                  %v7843 = vld [vmem:[%s7771 + $0x118] sm:$0xff]
                  %7844 = vst [vmem:[%s7772 + $0x1e8] sm:$0xff] %v7843
                  %v7845 = vld [vmem:[%s7771 + $0x120] sm:$0xff]
                  %7846 = vst [vmem:[%s7772 + $0x1f0] sm:$0xff] %v7845
                  %v7847 = vld [vmem:[%s7771 + $0x128] sm:$0xff]
                  %7848 = vst [vmem:[%s7772 + $0x1f8] sm:$0xff] %v7847
                  %v7849 = vld [vmem:[%s7771 + $0x130] sm:$0xff]
                  %7850 = vst [vmem:[%s7772 + $0x200] sm:$0xff] %v7849
                  %v7851 = vld [vmem:[%s7771 + $0x138] sm:$0xff]
                  %7852 = vst [vmem:[%s7772 + $0x270] sm:$0xff] %v7851
                  %v7853 = vld [vmem:[%s7771 + $0x140] sm:$0xff]
                  %7854 = vst [vmem:[%s7772 + $0x278] sm:$0xff] %v7853
                  %v7855 = vld [vmem:[%s7771 + $0x148] sm:$0xff]
                  %7856 = vst [vmem:[%s7772 + $0x280] sm:$0xff] %v7855
                  %v7857 = vld [vmem:[%s7771 + $0x150] sm:$0xff]
                  %7858 = vst [vmem:[%s7772 + $0x288] sm:$0xff] %v7857
                  %v7859 = vld [vmem:[%s7771 + $0x158] sm:$0xff]
                  %7860 = vst [vmem:[%s7772 + $0x290] sm:$0xff] %v7859
                  %v7861 = vld [vmem:[%s7771 + $0x160] sm:$0xff]
                  %7862 = vst [vmem:[%s7772 + $0x298] sm:$0xff] %v7861
                  %v7863 = vld [vmem:[%s7771 + $0x168] sm:$0xff]
                  %7864 = vst [vmem:[%s7772 + $0x2a0] sm:$0xff] %v7863
                  %v7865 = vld [vmem:[%s7771 + $0x170] sm:$0xff]
                  %7866 = vst [vmem:[%s7772 + $0x2a8] sm:$0xff] %v7865
                  %v7867 = vld [vmem:[%s7771 + $0x178] sm:$0xff]
                  %7868 = vst [vmem:[%s7772 + $0x2b0] sm:$0xff] %v7867
                  %v7869 = vld [vmem:[%s7771 + $0x180] sm:$0xff]
                  %7870 = vst [vmem:[%s7772 + $0x2b8] sm:$0xff] %v7869
                  %v7871 = vld [vmem:[%s7771 + $0x188] sm:$0xff]
                  %7872 = vst [vmem:[%s7772 + $0x2c0] sm:$0xff] %v7871
                  %v7873 = vld [vmem:[%s7771 + $0x190] sm:$0xff]
                  %7874 = vst [vmem:[%s7772 + $0x2c8] sm:$0xff] %v7873
                  %v7875 = vld [vmem:[%s7771 + $0x198] sm:$0xff]
                  %7876 = vst [vmem:[%s7772 + $0x2d0] sm:$0xff] %v7875
                  %v7877 = vld [vmem:[%s7771 + $0x1a0] sm:$0xff]
                  %7878 = vst [vmem:[%s7772 + $0x340] sm:$0xff] %v7877
                  %v7879 = vld [vmem:[%s7771 + $0x1a8] sm:$0xff]
                  %7880 = vst [vmem:[%s7772 + $0x348] sm:$0xff] %v7879
                  %v7881 = vld [vmem:[%s7771 + $0x1b0] sm:$0xff]
                  %7882 = vst [vmem:[%s7772 + $0x350] sm:$0xff] %v7881
                  %v7883 = vld [vmem:[%s7771 + $0x1b8] sm:$0xff]
                  %7884 = vst [vmem:[%s7772 + $0x358] sm:$0xff] %v7883
                  %v7885 = vld [vmem:[%s7771 + $0x1c0] sm:$0xff]
                  %7886 = vst [vmem:[%s7772 + $0x360] sm:$0xff] %v7885
                  %v7887 = vld [vmem:[%s7771 + $0x1c8] sm:$0xff]
                  %7888 = vst [vmem:[%s7772 + $0x368] sm:$0xff] %v7887
                  %v7889 = vld [vmem:[%s7771 + $0x1d0] sm:$0xff]
                  %7890 = vst [vmem:[%s7772 + $0x370] sm:$0xff] %v7889
                  %v7891 = vld [vmem:[%s7771 + $0x1d8] sm:$0xff]
                  %7892 = vst [vmem:[%s7772 + $0x378] sm:$0xff] %v7891
                  %v7893 = vld [vmem:[%s7771 + $0x1e0] sm:$0xff]
                  %7894 = vst [vmem:[%s7772 + $0x380] sm:$0xff] %v7893
                  %v7895 = vld [vmem:[%s7771 + $0x1e8] sm:$0xff]
                  %7896 = vst [vmem:[%s7772 + $0x388] sm:$0xff] %v7895
                  %v7897 = vld [vmem:[%s7771 + $0x1f0] sm:$0xff]
                  %7898 = vst [vmem:[%s7772 + $0x390] sm:$0xff] %v7897
                  %v7899 = vld [vmem:[%s7771 + $0x1f8] sm:$0xff]
                  %7900 = vst [vmem:[%s7772 + $0x398] sm:$0xff] %v7899
                  %v7901 = vld [vmem:[%s7771 + $0x200] sm:$0xff]
                  %7902 = vst [vmem:[%s7772 + $0x3a0] sm:$0xff] %v7901
                  %v7903 = vld [vmem:[%s7771 + $0x208] sm:$0xff]
                  %7904 = vst [vmem:[%s7772 + $0x410] sm:$0xff] %v7903
                  %v7905 = vld [vmem:[%s7771 + $0x210] sm:$0xff]
                  %7906 = vst [vmem:[%s7772 + $0x418] sm:$0xff] %v7905
                  %v7907 = vld [vmem:[%s7771 + $0x218] sm:$0xff]
                  %7908 = vst [vmem:[%s7772 + $0x420] sm:$0xff] %v7907
                  %v7909 = vld [vmem:[%s7771 + $0x220] sm:$0xff]
                  %7910 = vst [vmem:[%s7772 + $0x428] sm:$0xff] %v7909
                  %v7911 = vld [vmem:[%s7771 + $0x228] sm:$0xff]
                  %7912 = vst [vmem:[%s7772 + $0x430] sm:$0xff] %v7911
                  %v7913 = vld [vmem:[%s7771 + $0x230] sm:$0xff]
                  %7914 = vst [vmem:[%s7772 + $0x438] sm:$0xff] %v7913
                  %v7915 = vld [vmem:[%s7771 + $0x238] sm:$0xff]
                  %7916 = vst [vmem:[%s7772 + $0x440] sm:$0xff] %v7915
                  %v7917 = vld [vmem:[%s7771 + $0x240] sm:$0xff]
                  %7918 = vst [vmem:[%s7772 + $0x448] sm:$0xff] %v7917
                  %v7919 = vld [vmem:[%s7771 + $0x248] sm:$0xff]
                  %7920 = vst [vmem:[%s7772 + $0x450] sm:$0xff] %v7919
                  %v7921 = vld [vmem:[%s7771 + $0x250] sm:$0xff]
                  %7922 = vst [vmem:[%s7772 + $0x458] sm:$0xff] %v7921
                  %v7923 = vld [vmem:[%s7771 + $0x258] sm:$0xff]
                  %7924 = vst [vmem:[%s7772 + $0x460] sm:$0xff] %v7923
                  %v7925 = vld [vmem:[%s7771 + $0x260] sm:$0xff]
                  %7926 = vst [vmem:[%s7772 + $0x468] sm:$0xff] %v7925
                  %v7927 = vld [vmem:[%s7771 + $0x268] sm:$0xff]
                  %7928 = vst [vmem:[%s7772 + $0x470] sm:$0xff] %v7927
                  %v7929 = vld [vmem:[%s7771 + $0x270] sm:$0xff]
                  %7930 = vst [vmem:[%s7772 + $0x4e0] sm:$0xff] %v7929
                  %v7931 = vld [vmem:[%s7771 + $0x278] sm:$0xff]
                  %7932 = vst [vmem:[%s7772 + $0x4e8] sm:$0xff] %v7931
                  %v7933 = vld [vmem:[%s7771 + $0x280] sm:$0xff]
                  %7934 = vst [vmem:[%s7772 + $0x4f0] sm:$0xff] %v7933
                  %v7935 = vld [vmem:[%s7771 + $0x288] sm:$0xff]
                  %7936 = vst [vmem:[%s7772 + $0x4f8] sm:$0xff] %v7935
                  %v7937 = vld [vmem:[%s7771 + $0x290] sm:$0xff]
                  %7938 = vst [vmem:[%s7772 + $0x500] sm:$0xff] %v7937
                  %v7939 = vld [vmem:[%s7771 + $0x298] sm:$0xff]
                  %7940 = vst [vmem:[%s7772 + $0x508] sm:$0xff] %v7939
                  %v7941 = vld [vmem:[%s7771 + $0x2a0] sm:$0xff]
                  %7942 = vst [vmem:[%s7772 + $0x510] sm:$0xff] %v7941
                  %v7943 = vld [vmem:[%s7771 + $0x2a8] sm:$0xff]
                  %7944 = vst [vmem:[%s7772 + $0x518] sm:$0xff] %v7943
                  %v7945 = vld [vmem:[%s7771 + $0x2b0] sm:$0xff]
                  %7946 = vst [vmem:[%s7772 + $0x520] sm:$0xff] %v7945
                  %v7947 = vld [vmem:[%s7771 + $0x2b8] sm:$0xff]
                  %7948 = vst [vmem:[%s7772 + $0x528] sm:$0xff] %v7947
                  %v7949 = vld [vmem:[%s7771 + $0x2c0] sm:$0xff]
                  %7950 = vst [vmem:[%s7772 + $0x530] sm:$0xff] %v7949
                  %v7951 = vld [vmem:[%s7771 + $0x2c8] sm:$0xff]
                  %7952 = vst [vmem:[%s7772 + $0x538] sm:$0xff] %v7951
                  %v7953 = vld [vmem:[%s7771 + $0x2d0] sm:$0xff]
                  %7954 = vst [vmem:[%s7772 + $0x540] sm:$0xff] %v7953
                  %v7955 = vld [vmem:[%s7771 + $0x2d8] sm:$0xff]
                  %7956 = vst [vmem:[%s7772 + $0x5b0] sm:$0xff] %v7955
                  %v7957 = vld [vmem:[%s7771 + $0x2e0] sm:$0xff]
                  %7958 = vst [vmem:[%s7772 + $0x5b8] sm:$0xff] %v7957
                  %v7959 = vld [vmem:[%s7771 + $0x2e8] sm:$0xff]
                  %7960 = vst [vmem:[%s7772 + $0x5c0] sm:$0xff] %v7959
                  %v7961 = vld [vmem:[%s7771 + $0x2f0] sm:$0xff]
                  %7962 = vst [vmem:[%s7772 + $0x5c8] sm:$0xff] %v7961
                  %v7963 = vld [vmem:[%s7771 + $0x2f8] sm:$0xff]
                  %7964 = vst [vmem:[%s7772 + $0x5d0] sm:$0xff] %v7963
                  %v7965 = vld [vmem:[%s7771 + $0x300] sm:$0xff]
                  %7966 = vst [vmem:[%s7772 + $0x5d8] sm:$0xff] %v7965
                  %v7967 = vld [vmem:[%s7771 + $0x308] sm:$0xff]
                  %7968 = vst [vmem:[%s7772 + $0x5e0] sm:$0xff] %v7967
                  %v7969 = vld [vmem:[%s7771 + $0x310] sm:$0xff]
                  %7970 = vst [vmem:[%s7772 + $0x5e8] sm:$0xff] %v7969
                  %v7971 = vld [vmem:[%s7771 + $0x318] sm:$0xff]
                  %7972 = vst [vmem:[%s7772 + $0x5f0] sm:$0xff] %v7971
                  %v7973 = vld [vmem:[%s7771 + $0x320] sm:$0xff]
                  %7974 = vst [vmem:[%s7772 + $0x5f8] sm:$0xff] %v7973
                  %v7975 = vld [vmem:[%s7771 + $0x328] sm:$0xff]
                  %7976 = vst [vmem:[%s7772 + $0x600] sm:$0xff] %v7975
                  %v7977 = vld [vmem:[%s7771 + $0x330] sm:$0xff]
                  %7978 = vst [vmem:[%s7772 + $0x608] sm:$0xff] %v7977
                  %v7979 = vld [vmem:[%s7771 + $0x338] sm:$0xff]
                  %7980 = vst [vmem:[%s7772 + $0x610] sm:$0xff] %v7979
                  %v7981 = vld [vmem:[%s7771 + $0x340] sm:$0xff]
                  %7982 = vst [vmem:[%s7772 + $0x680] sm:$0xff] %v7981
                  %v7983 = vld [vmem:[%s7771 + $0x348] sm:$0xff]
                  %7984 = vst [vmem:[%s7772 + $0x688] sm:$0xff] %v7983
                  %v7985 = vld [vmem:[%s7771 + $0x350] sm:$0xff]
                  %7986 = vst [vmem:[%s7772 + $0x690] sm:$0xff] %v7985
                  %v7987 = vld [vmem:[%s7771 + $0x358] sm:$0xff]
                  %7988 = vst [vmem:[%s7772 + $0x698] sm:$0xff] %v7987
                  %v7989 = vld [vmem:[%s7771 + $0x360] sm:$0xff]
                  %7990 = vst [vmem:[%s7772 + $0x6a0] sm:$0xff] %v7989
                  %v7991 = vld [vmem:[%s7771 + $0x368] sm:$0xff]
                  %7992 = vst [vmem:[%s7772 + $0x6a8] sm:$0xff] %v7991
                  %v7993 = vld [vmem:[%s7771 + $0x370] sm:$0xff]
                  %7994 = vst [vmem:[%s7772 + $0x6b0] sm:$0xff] %v7993
                  %v7995 = vld [vmem:[%s7771 + $0x378] sm:$0xff]
                  %7996 = vst [vmem:[%s7772 + $0x6b8] sm:$0xff] %v7995
                  %v7997 = vld [vmem:[%s7771 + $0x380] sm:$0xff]
                  %7998 = vst [vmem:[%s7772 + $0x6c0] sm:$0xff] %v7997
                  %v7999 = vld [vmem:[%s7771 + $0x388] sm:$0xff]
                  %8000 = vst [vmem:[%s7772 + $0x6c8] sm:$0xff] %v7999
                  %v8001 = vld [vmem:[%s7771 + $0x390] sm:$0xff]
                  %8002 = vst [vmem:[%s7772 + $0x6d0] sm:$0xff] %v8001
                  %v8003 = vld [vmem:[%s7771 + $0x398] sm:$0xff]
                  %8004 = vst [vmem:[%s7772 + $0x6d8] sm:$0xff] %v8003
                  %v8005 = vld [vmem:[%s7771 + $0x3a0] sm:$0xff]
                  %8006 = vst [vmem:[%s7772 + $0x6e0] sm:$0xff] %v8005
                  %v8007 = vld [vmem:[%s7771 + $0x3a8] sm:$0xff]
                  %8008 = vst [vmem:[%s7772 + $0x750] sm:$0xff] %v8007
                  %v8009 = vld [vmem:[%s7771 + $0x3b0] sm:$0xff]
                  %8010 = vst [vmem:[%s7772 + $0x758] sm:$0xff] %v8009
                  %v8011 = vld [vmem:[%s7771 + $0x3b8] sm:$0xff]
                  %8012 = vst [vmem:[%s7772 + $0x760] sm:$0xff] %v8011
                  %v8013 = vld [vmem:[%s7771 + $0x3c0] sm:$0xff]
                  %8014 = vst [vmem:[%s7772 + $0x768] sm:$0xff] %v8013
                  %v8015 = vld [vmem:[%s7771 + $0x3c8] sm:$0xff]
                  %8016 = vst [vmem:[%s7772 + $0x770] sm:$0xff] %v8015
                  %v8017 = vld [vmem:[%s7771 + $0x3d0] sm:$0xff]
                  %8018 = vst [vmem:[%s7772 + $0x778] sm:$0xff] %v8017
                  %v8019 = vld [vmem:[%s7771 + $0x3d8] sm:$0xff]
                  %8020 = vst [vmem:[%s7772 + $0x780] sm:$0xff] %v8019
                  %v8021 = vld [vmem:[%s7771 + $0x3e0] sm:$0xff]
                  %8022 = vst [vmem:[%s7772 + $0x788] sm:$0xff] %v8021
                  %v8023 = vld [vmem:[%s7771 + $0x3e8] sm:$0xff]
                  %8024 = vst [vmem:[%s7772 + $0x790] sm:$0xff] %v8023
                  %v8025 = vld [vmem:[%s7771 + $0x3f0] sm:$0xff]
                  %8026 = vst [vmem:[%s7772 + $0x798] sm:$0xff] %v8025
                  %v8027 = vld [vmem:[%s7771 + $0x3f8] sm:$0xff]
                  %8028 = vst [vmem:[%s7772 + $0x7a0] sm:$0xff] %v8027
                  %v8029 = vld [vmem:[%s7771 + $0x400] sm:$0xff]
                  %8030 = vst [vmem:[%s7772 + $0x7a8] sm:$0xff] %v8029
                  %v8031 = vld [vmem:[%s7771 + $0x408] sm:$0xff]
                  %8032 = vst [vmem:[%s7772 + $0x7b0] sm:$0xff] %v8031
                $region110: #{tpu_custom_call.1} parent=104 // loop_footer
                  %s7770 = sadd.s32 1, %s7766
                $region111: #{tpu_custom_call.1} parent=104 // loop_footer_branch
                  %7765 = sbr.rel target = $region107
                $region112: #{tpu_custom_call.1} parent=104 // loop_exit
                  _
              $region105: #{tpu_custom_call.1} parent=89 // pred_fallthru
                _
              // Predicated region
              $region113: #{tpu_custom_call.1} parent=89 // pred_check
                _
              $region114: #{tpu_custom_call.1} parent=89 // pred_check_branch
                %8034 = sbr.rel target = $region116
              $region115: #{tpu_custom_call.1} parent=89 // pred_region
                _
              $region116: #{tpu_custom_call.1} parent=89 // pred_fallthru
                _
            $region90: #{tpu_custom_call.1} parent=85 // pred_fallthru
              _
            // Predicated region
            $region91: #{tpu_custom_call.1} parent=85 // pred_check
              _
            $region92: #{tpu_custom_call.1} parent=85 // pred_check_branch
              %7492 = sbr.rel target = $region94
            $region93: #{tpu_custom_call.1} parent=85 // pred_region
              %s7494 = ssub.s32 256, 1
              loop: start=0, step=1, limit=1
              $region95: #{tpu_custom_call.1} parent=93 // loop_pre_header
                _
              $region96: #{tpu_custom_call.1} parent=93 // loop_header
                %s7496 = sphi 0, %s7500
                %p7497 = scmp.ge.s32.totalorder %s7496, 1
                %s7501 = sphi %s7480, %s7480
                %s7502 = sphi %s7486, %s7486
              $region97: #{tpu_custom_call.1} parent=93 // loop_header_branch
                %7499 = sbr.rel (%p7497) target = $region101
              $region98: #{tpu_custom_call.1} parent=93 // loop_body
                %v7503 = vld [vmem:[%s7501] sm:%s7494]
                %7504 = vst [vmem:[%s7502] sm:%s7494] %v7503
                %v7505 = vld [vmem:[%s7501 + $0x8] sm:%s7494]
                %7506 = vst [vmem:[%s7502 + $0x8] sm:%s7494] %v7505
                %v7507 = vld [vmem:[%s7501 + $0x10] sm:%s7494]
                %7508 = vst [vmem:[%s7502 + $0x10] sm:%s7494] %v7507
                %v7509 = vld [vmem:[%s7501 + $0x18] sm:%s7494]
                %7510 = vst [vmem:[%s7502 + $0x18] sm:%s7494] %v7509
                %v7511 = vld [vmem:[%s7501 + $0x20] sm:%s7494]
                %7512 = vst [vmem:[%s7502 + $0x20] sm:%s7494] %v7511
                %v7513 = vld [vmem:[%s7501 + $0x28] sm:%s7494]
                %7514 = vst [vmem:[%s7502 + $0x28] sm:%s7494] %v7513
                %v7515 = vld [vmem:[%s7501 + $0x30] sm:%s7494]
                %7516 = vst [vmem:[%s7502 + $0x30] sm:%s7494] %v7515
                %v7517 = vld [vmem:[%s7501 + $0x38] sm:%s7494]
                %7518 = vst [vmem:[%s7502 + $0x38] sm:%s7494] %v7517
                %v7519 = vld [vmem:[%s7501 + $0x40] sm:%s7494]
                %7520 = vst [vmem:[%s7502 + $0x40] sm:%s7494] %v7519
                %v7521 = vld [vmem:[%s7501 + $0x48] sm:%s7494]
                %7522 = vst [vmem:[%s7502 + $0x48] sm:%s7494] %v7521
                %v7523 = vld [vmem:[%s7501 + $0x50] sm:%s7494]
                %7524 = vst [vmem:[%s7502 + $0x50] sm:%s7494] %v7523
                %v7525 = vld [vmem:[%s7501 + $0x58] sm:%s7494]
                %7526 = vst [vmem:[%s7502 + $0x58] sm:%s7494] %v7525
                %v7527 = vld [vmem:[%s7501 + $0x60] sm:%s7494]
                %7528 = vst [vmem:[%s7502 + $0x60] sm:%s7494] %v7527
                %v7529 = vld [vmem:[%s7501 + $0x68] sm:%s7494]
                %7530 = vst [vmem:[%s7502 + $0xd0] sm:%s7494] %v7529
                %v7531 = vld [vmem:[%s7501 + $0x70] sm:%s7494]
                %7532 = vst [vmem:[%s7502 + $0xd8] sm:%s7494] %v7531
                %v7533 = vld [vmem:[%s7501 + $0x78] sm:%s7494]
                %7534 = vst [vmem:[%s7502 + $0xe0] sm:%s7494] %v7533
                %v7535 = vld [vmem:[%s7501 + $0x80] sm:%s7494]
                %7536 = vst [vmem:[%s7502 + $0xe8] sm:%s7494] %v7535
                %v7537 = vld [vmem:[%s7501 + $0x88] sm:%s7494]
                %7538 = vst [vmem:[%s7502 + $0xf0] sm:%s7494] %v7537
                %v7539 = vld [vmem:[%s7501 + $0x90] sm:%s7494]
                %7540 = vst [vmem:[%s7502 + $0xf8] sm:%s7494] %v7539
                %v7541 = vld [vmem:[%s7501 + $0x98] sm:%s7494]
                %7542 = vst [vmem:[%s7502 + $0x100] sm:%s7494] %v7541
                %v7543 = vld [vmem:[%s7501 + $0xa0] sm:%s7494]
                %7544 = vst [vmem:[%s7502 + $0x108] sm:%s7494] %v7543
                %v7545 = vld [vmem:[%s7501 + $0xa8] sm:%s7494]
                %7546 = vst [vmem:[%s7502 + $0x110] sm:%s7494] %v7545
                %v7547 = vld [vmem:[%s7501 + $0xb0] sm:%s7494]
                %7548 = vst [vmem:[%s7502 + $0x118] sm:%s7494] %v7547
                %v7549 = vld [vmem:[%s7501 + $0xb8] sm:%s7494]
                %7550 = vst [vmem:[%s7502 + $0x120] sm:%s7494] %v7549
                %v7551 = vld [vmem:[%s7501 + $0xc0] sm:%s7494]
                %7552 = vst [vmem:[%s7502 + $0x128] sm:%s7494] %v7551
                %v7553 = vld [vmem:[%s7501 + $0xc8] sm:%s7494]
                %7554 = vst [vmem:[%s7502 + $0x130] sm:%s7494] %v7553
                %v7555 = vld [vmem:[%s7501 + $0xd0] sm:%s7494]
                %7556 = vst [vmem:[%s7502 + $0x1a0] sm:%s7494] %v7555
                %v7557 = vld [vmem:[%s7501 + $0xd8] sm:%s7494]
                %7558 = vst [vmem:[%s7502 + $0x1a8] sm:%s7494] %v7557
                %v7559 = vld [vmem:[%s7501 + $0xe0] sm:%s7494]
                %7560 = vst [vmem:[%s7502 + $0x1b0] sm:%s7494] %v7559
                %v7561 = vld [vmem:[%s7501 + $0xe8] sm:%s7494]
                %7562 = vst [vmem:[%s7502 + $0x1b8] sm:%s7494] %v7561
                %v7563 = vld [vmem:[%s7501 + $0xf0] sm:%s7494]
                %7564 = vst [vmem:[%s7502 + $0x1c0] sm:%s7494] %v7563
                %v7565 = vld [vmem:[%s7501 + $0xf8] sm:%s7494]
                %7566 = vst [vmem:[%s7502 + $0x1c8] sm:%s7494] %v7565
                %v7567 = vld [vmem:[%s7501 + $0x100] sm:%s7494]
                %7568 = vst [vmem:[%s7502 + $0x1d0] sm:%s7494] %v7567
                %v7569 = vld [vmem:[%s7501 + $0x108] sm:%s7494]
                %7570 = vst [vmem:[%s7502 + $0x1d8] sm:%s7494] %v7569
                %v7571 = vld [vmem:[%s7501 + $0x110] sm:%s7494]
                %7572 = vst [vmem:[%s7502 + $0x1e0] sm:%s7494] %v7571
                %v7573 = vld [vmem:[%s7501 + $0x118] sm:%s7494]
                %7574 = vst [vmem:[%s7502 + $0x1e8] sm:%s7494] %v7573
                %v7575 = vld [vmem:[%s7501 + $0x120] sm:%s7494]
                %7576 = vst [vmem:[%s7502 + $0x1f0] sm:%s7494] %v7575
                %v7577 = vld [vmem:[%s7501 + $0x128] sm:%s7494]
                %7578 = vst [vmem:[%s7502 + $0x1f8] sm:%s7494] %v7577
                %v7579 = vld [vmem:[%s7501 + $0x130] sm:%s7494]
                %7580 = vst [vmem:[%s7502 + $0x200] sm:%s7494] %v7579
                %v7581 = vld [vmem:[%s7501 + $0x138] sm:%s7494]
                %7582 = vst [vmem:[%s7502 + $0x270] sm:%s7494] %v7581
                %v7583 = vld [vmem:[%s7501 + $0x140] sm:%s7494]
                %7584 = vst [vmem:[%s7502 + $0x278] sm:%s7494] %v7583
                %v7585 = vld [vmem:[%s7501 + $0x148] sm:%s7494]
                %7586 = vst [vmem:[%s7502 + $0x280] sm:%s7494] %v7585
                %v7587 = vld [vmem:[%s7501 + $0x150] sm:%s7494]
                %7588 = vst [vmem:[%s7502 + $0x288] sm:%s7494] %v7587
                %v7589 = vld [vmem:[%s7501 + $0x158] sm:%s7494]
                %7590 = vst [vmem:[%s7502 + $0x290] sm:%s7494] %v7589
                %v7591 = vld [vmem:[%s7501 + $0x160] sm:%s7494]
                %7592 = vst [vmem:[%s7502 + $0x298] sm:%s7494] %v7591
                %v7593 = vld [vmem:[%s7501 + $0x168] sm:%s7494]
                %7594 = vst [vmem:[%s7502 + $0x2a0] sm:%s7494] %v7593
                %v7595 = vld [vmem:[%s7501 + $0x170] sm:%s7494]
                %7596 = vst [vmem:[%s7502 + $0x2a8] sm:%s7494] %v7595
                %v7597 = vld [vmem:[%s7501 + $0x178] sm:%s7494]
                %7598 = vst [vmem:[%s7502 + $0x2b0] sm:%s7494] %v7597
                %v7599 = vld [vmem:[%s7501 + $0x180] sm:%s7494]
                %7600 = vst [vmem:[%s7502 + $0x2b8] sm:%s7494] %v7599
                %v7601 = vld [vmem:[%s7501 + $0x188] sm:%s7494]
                %7602 = vst [vmem:[%s7502 + $0x2c0] sm:%s7494] %v7601
                %v7603 = vld [vmem:[%s7501 + $0x190] sm:%s7494]
                %7604 = vst [vmem:[%s7502 + $0x2c8] sm:%s7494] %v7603
                %v7605 = vld [vmem:[%s7501 + $0x198] sm:%s7494]
                %7606 = vst [vmem:[%s7502 + $0x2d0] sm:%s7494] %v7605
                %v7607 = vld [vmem:[%s7501 + $0x1a0] sm:%s7494]
                %7608 = vst [vmem:[%s7502 + $0x340] sm:%s7494] %v7607
                %v7609 = vld [vmem:[%s7501 + $0x1a8] sm:%s7494]
                %7610 = vst [vmem:[%s7502 + $0x348] sm:%s7494] %v7609
                %v7611 = vld [vmem:[%s7501 + $0x1b0] sm:%s7494]
                %7612 = vst [vmem:[%s7502 + $0x350] sm:%s7494] %v7611
                %v7613 = vld [vmem:[%s7501 + $0x1b8] sm:%s7494]
                %7614 = vst [vmem:[%s7502 + $0x358] sm:%s7494] %v7613
                %v7615 = vld [vmem:[%s7501 + $0x1c0] sm:%s7494]
                %7616 = vst [vmem:[%s7502 + $0x360] sm:%s7494] %v7615
                %v7617 = vld [vmem:[%s7501 + $0x1c8] sm:%s7494]
                %7618 = vst [vmem:[%s7502 + $0x368] sm:%s7494] %v7617
                %v7619 = vld [vmem:[%s7501 + $0x1d0] sm:%s7494]
                %7620 = vst [vmem:[%s7502 + $0x370] sm:%s7494] %v7619
                %v7621 = vld [vmem:[%s7501 + $0x1d8] sm:%s7494]
                %7622 = vst [vmem:[%s7502 + $0x378] sm:%s7494] %v7621
                %v7623 = vld [vmem:[%s7501 + $0x1e0] sm:%s7494]
                %7624 = vst [vmem:[%s7502 + $0x380] sm:%s7494] %v7623
                %v7625 = vld [vmem:[%s7501 + $0x1e8] sm:%s7494]
                %7626 = vst [vmem:[%s7502 + $0x388] sm:%s7494] %v7625
                %v7627 = vld [vmem:[%s7501 + $0x1f0] sm:%s7494]
                %7628 = vst [vmem:[%s7502 + $0x390] sm:%s7494] %v7627
                %v7629 = vld [vmem:[%s7501 + $0x1f8] sm:%s7494]
                %7630 = vst [vmem:[%s7502 + $0x398] sm:%s7494] %v7629
                %v7631 = vld [vmem:[%s7501 + $0x200] sm:%s7494]
                %7632 = vst [vmem:[%s7502 + $0x3a0] sm:%s7494] %v7631
                %v7633 = vld [vmem:[%s7501 + $0x208] sm:%s7494]
                %7634 = vst [vmem:[%s7502 + $0x410] sm:%s7494] %v7633
                %v7635 = vld [vmem:[%s7501 + $0x210] sm:%s7494]
                %7636 = vst [vmem:[%s7502 + $0x418] sm:%s7494] %v7635
                %v7637 = vld [vmem:[%s7501 + $0x218] sm:%s7494]
                %7638 = vst [vmem:[%s7502 + $0x420] sm:%s7494] %v7637
                %v7639 = vld [vmem:[%s7501 + $0x220] sm:%s7494]
                %7640 = vst [vmem:[%s7502 + $0x428] sm:%s7494] %v7639
                %v7641 = vld [vmem:[%s7501 + $0x228] sm:%s7494]
                %7642 = vst [vmem:[%s7502 + $0x430] sm:%s7494] %v7641
                %v7643 = vld [vmem:[%s7501 + $0x230] sm:%s7494]
                %7644 = vst [vmem:[%s7502 + $0x438] sm:%s7494] %v7643
                %v7645 = vld [vmem:[%s7501 + $0x238] sm:%s7494]
                %7646 = vst [vmem:[%s7502 + $0x440] sm:%s7494] %v7645
                %v7647 = vld [vmem:[%s7501 + $0x240] sm:%s7494]
                %7648 = vst [vmem:[%s7502 + $0x448] sm:%s7494] %v7647
                %v7649 = vld [vmem:[%s7501 + $0x248] sm:%s7494]
                %7650 = vst [vmem:[%s7502 + $0x450] sm:%s7494] %v7649
                %v7651 = vld [vmem:[%s7501 + $0x250] sm:%s7494]
                %7652 = vst [vmem:[%s7502 + $0x458] sm:%s7494] %v7651
                %v7653 = vld [vmem:[%s7501 + $0x258] sm:%s7494]
                %7654 = vst [vmem:[%s7502 + $0x460] sm:%s7494] %v7653
                %v7655 = vld [vmem:[%s7501 + $0x260] sm:%s7494]
                %7656 = vst [vmem:[%s7502 + $0x468] sm:%s7494] %v7655
                %v7657 = vld [vmem:[%s7501 + $0x268] sm:%s7494]
                %7658 = vst [vmem:[%s7502 + $0x470] sm:%s7494] %v7657
                %v7659 = vld [vmem:[%s7501 + $0x270] sm:%s7494]
                %7660 = vst [vmem:[%s7502 + $0x4e0] sm:%s7494] %v7659
                %v7661 = vld [vmem:[%s7501 + $0x278] sm:%s7494]
                %7662 = vst [vmem:[%s7502 + $0x4e8] sm:%s7494] %v7661
                %v7663 = vld [vmem:[%s7501 + $0x280] sm:%s7494]
                %7664 = vst [vmem:[%s7502 + $0x4f0] sm:%s7494] %v7663
                %v7665 = vld [vmem:[%s7501 + $0x288] sm:%s7494]
                %7666 = vst [vmem:[%s7502 + $0x4f8] sm:%s7494] %v7665
                %v7667 = vld [vmem:[%s7501 + $0x290] sm:%s7494]
                %7668 = vst [vmem:[%s7502 + $0x500] sm:%s7494] %v7667
                %v7669 = vld [vmem:[%s7501 + $0x298] sm:%s7494]
                %7670 = vst [vmem:[%s7502 + $0x508] sm:%s7494] %v7669
                %v7671 = vld [vmem:[%s7501 + $0x2a0] sm:%s7494]
                %7672 = vst [vmem:[%s7502 + $0x510] sm:%s7494] %v7671
                %v7673 = vld [vmem:[%s7501 + $0x2a8] sm:%s7494]
                %7674 = vst [vmem:[%s7502 + $0x518] sm:%s7494] %v7673
                %v7675 = vld [vmem:[%s7501 + $0x2b0] sm:%s7494]
                %7676 = vst [vmem:[%s7502 + $0x520] sm:%s7494] %v7675
                %v7677 = vld [vmem:[%s7501 + $0x2b8] sm:%s7494]
                %7678 = vst [vmem:[%s7502 + $0x528] sm:%s7494] %v7677
                %v7679 = vld [vmem:[%s7501 + $0x2c0] sm:%s7494]
                %7680 = vst [vmem:[%s7502 + $0x530] sm:%s7494] %v7679
                %v7681 = vld [vmem:[%s7501 + $0x2c8] sm:%s7494]
                %7682 = vst [vmem:[%s7502 + $0x538] sm:%s7494] %v7681
                %v7683 = vld [vmem:[%s7501 + $0x2d0] sm:%s7494]
                %7684 = vst [vmem:[%s7502 + $0x540] sm:%s7494] %v7683
                %v7685 = vld [vmem:[%s7501 + $0x2d8] sm:%s7494]
                %7686 = vst [vmem:[%s7502 + $0x5b0] sm:%s7494] %v7685
                %v7687 = vld [vmem:[%s7501 + $0x2e0] sm:%s7494]
                %7688 = vst [vmem:[%s7502 + $0x5b8] sm:%s7494] %v7687
                %v7689 = vld [vmem:[%s7501 + $0x2e8] sm:%s7494]
                %7690 = vst [vmem:[%s7502 + $0x5c0] sm:%s7494] %v7689
                %v7691 = vld [vmem:[%s7501 + $0x2f0] sm:%s7494]
                %7692 = vst [vmem:[%s7502 + $0x5c8] sm:%s7494] %v7691
                %v7693 = vld [vmem:[%s7501 + $0x2f8] sm:%s7494]
                %7694 = vst [vmem:[%s7502 + $0x5d0] sm:%s7494] %v7693
                %v7695 = vld [vmem:[%s7501 + $0x300] sm:%s7494]
                %7696 = vst [vmem:[%s7502 + $0x5d8] sm:%s7494] %v7695
                %v7697 = vld [vmem:[%s7501 + $0x308] sm:%s7494]
                %7698 = vst [vmem:[%s7502 + $0x5e0] sm:%s7494] %v7697
                %v7699 = vld [vmem:[%s7501 + $0x310] sm:%s7494]
                %7700 = vst [vmem:[%s7502 + $0x5e8] sm:%s7494] %v7699
                %v7701 = vld [vmem:[%s7501 + $0x318] sm:%s7494]
                %7702 = vst [vmem:[%s7502 + $0x5f0] sm:%s7494] %v7701
                %v7703 = vld [vmem:[%s7501 + $0x320] sm:%s7494]
                %7704 = vst [vmem:[%s7502 + $0x5f8] sm:%s7494] %v7703
                %v7705 = vld [vmem:[%s7501 + $0x328] sm:%s7494]
                %7706 = vst [vmem:[%s7502 + $0x600] sm:%s7494] %v7705
                %v7707 = vld [vmem:[%s7501 + $0x330] sm:%s7494]
                %7708 = vst [vmem:[%s7502 + $0x608] sm:%s7494] %v7707
                %v7709 = vld [vmem:[%s7501 + $0x338] sm:%s7494]
                %7710 = vst [vmem:[%s7502 + $0x610] sm:%s7494] %v7709
                %v7711 = vld [vmem:[%s7501 + $0x340] sm:%s7494]
                %7712 = vst [vmem:[%s7502 + $0x680] sm:%s7494] %v7711
                %v7713 = vld [vmem:[%s7501 + $0x348] sm:%s7494]
                %7714 = vst [vmem:[%s7502 + $0x688] sm:%s7494] %v7713
                %v7715 = vld [vmem:[%s7501 + $0x350] sm:%s7494]
                %7716 = vst [vmem:[%s7502 + $0x690] sm:%s7494] %v7715
                %v7717 = vld [vmem:[%s7501 + $0x358] sm:%s7494]
                %7718 = vst [vmem:[%s7502 + $0x698] sm:%s7494] %v7717
                %v7719 = vld [vmem:[%s7501 + $0x360] sm:%s7494]
                %7720 = vst [vmem:[%s7502 + $0x6a0] sm:%s7494] %v7719
                %v7721 = vld [vmem:[%s7501 + $0x368] sm:%s7494]
                %7722 = vst [vmem:[%s7502 + $0x6a8] sm:%s7494] %v7721
                %v7723 = vld [vmem:[%s7501 + $0x370] sm:%s7494]
                %7724 = vst [vmem:[%s7502 + $0x6b0] sm:%s7494] %v7723
                %v7725 = vld [vmem:[%s7501 + $0x378] sm:%s7494]
                %7726 = vst [vmem:[%s7502 + $0x6b8] sm:%s7494] %v7725
                %v7727 = vld [vmem:[%s7501 + $0x380] sm:%s7494]
                %7728 = vst [vmem:[%s7502 + $0x6c0] sm:%s7494] %v7727
                %v7729 = vld [vmem:[%s7501 + $0x388] sm:%s7494]
                %7730 = vst [vmem:[%s7502 + $0x6c8] sm:%s7494] %v7729
                %v7731 = vld [vmem:[%s7501 + $0x390] sm:%s7494]
                %7732 = vst [vmem:[%s7502 + $0x6d0] sm:%s7494] %v7731
                %v7733 = vld [vmem:[%s7501 + $0x398] sm:%s7494]
                %7734 = vst [vmem:[%s7502 + $0x6d8] sm:%s7494] %v7733
                %v7735 = vld [vmem:[%s7501 + $0x3a0] sm:%s7494]
                %7736 = vst [vmem:[%s7502 + $0x6e0] sm:%s7494] %v7735
                %v7737 = vld [vmem:[%s7501 + $0x3a8] sm:%s7494]
                %7738 = vst [vmem:[%s7502 + $0x750] sm:%s7494] %v7737
                %v7739 = vld [vmem:[%s7501 + $0x3b0] sm:%s7494]
                %7740 = vst [vmem:[%s7502 + $0x758] sm:%s7494] %v7739
                %v7741 = vld [vmem:[%s7501 + $0x3b8] sm:%s7494]
                %7742 = vst [vmem:[%s7502 + $0x760] sm:%s7494] %v7741
                %v7743 = vld [vmem:[%s7501 + $0x3c0] sm:%s7494]
                %7744 = vst [vmem:[%s7502 + $0x768] sm:%s7494] %v7743
                %v7745 = vld [vmem:[%s7501 + $0x3c8] sm:%s7494]
                %7746 = vst [vmem:[%s7502 + $0x770] sm:%s7494] %v7745
                %v7747 = vld [vmem:[%s7501 + $0x3d0] sm:%s7494]
                %7748 = vst [vmem:[%s7502 + $0x778] sm:%s7494] %v7747
                %v7749 = vld [vmem:[%s7501 + $0x3d8] sm:%s7494]
                %7750 = vst [vmem:[%s7502 + $0x780] sm:%s7494] %v7749
                %v7751 = vld [vmem:[%s7501 + $0x3e0] sm:%s7494]
                %7752 = vst [vmem:[%s7502 + $0x788] sm:%s7494] %v7751
                %v7753 = vld [vmem:[%s7501 + $0x3e8] sm:%s7494]
                %7754 = vst [vmem:[%s7502 + $0x790] sm:%s7494] %v7753
                %v7755 = vld [vmem:[%s7501 + $0x3f0] sm:%s7494]
                %7756 = vst [vmem:[%s7502 + $0x798] sm:%s7494] %v7755
                %v7757 = vld [vmem:[%s7501 + $0x3f8] sm:%s7494]
                %7758 = vst [vmem:[%s7502 + $0x7a0] sm:%s7494] %v7757
                %v7759 = vld [vmem:[%s7501 + $0x400] sm:%s7494]
                %7760 = vst [vmem:[%s7502 + $0x7a8] sm:%s7494] %v7759
                %v7761 = vld [vmem:[%s7501 + $0x408] sm:%s7494]
                %7762 = vst [vmem:[%s7502 + $0x7b0] sm:%s7494] %v7761
              $region99: #{tpu_custom_call.1} parent=93 // loop_footer
                %s7500 = sadd.s32 1, %s7496
              $region100: #{tpu_custom_call.1} parent=93 // loop_footer_branch
                %7495 = sbr.rel target = $region96
              $region101: #{tpu_custom_call.1} parent=93 // loop_exit
                _
            $region94: #{tpu_custom_call.1} parent=85 // pred_fallthru
              _
          $region86: #{tpu_custom_call.1} parent=81 // pred_fallthru
            _
          %8035 = vnop
        $region82: #{tpu_custom_call.1} parent=73 // pred_fallthru
          _
      $region74: #{tpu_custom_call.1} parent=5 // pred_fallthru
        _
      %p8036 = scmp.le.s32.totalorder 2, %s11
      // Predicated region
      $region117: #{tpu_custom_call.1} parent=5 // pred_check
        %p8037 = pneg %p8036
      $region118: #{tpu_custom_call.1} parent=5 // pred_check_branch
        %8039 = sbr.rel (%p8037) target = $region120
      $region119: #{tpu_custom_call.1} parent=5 // pred_region
        %s8040 = ssub.s32 %s11, 2
        // Predicated region
        $region121: #{tpu_custom_call.1} parent=119 // pred_check
          %p8041 = pneg %p150
        $region122: #{tpu_custom_call.1} parent=119 // pred_check_branch
          %8043 = sbr.rel (%p8041) target = $region124
        $region123: #{tpu_custom_call.1} parent=119 // pred_region
          %s8044 = sand.u32 %s135, 1
          %s8045 = sand.u32 %s135, 1
          %s8046 = smul.addr %s8045, 1040
          %s8047 = scalar_lea.vmem [#allocation3], %s8046
        $region124: #{tpu_custom_call.1} parent=119 // pred_fallthru
          _
      $region120: #{tpu_custom_call.1} parent=5 // pred_fallthru
        _
    $region6: #{tpu_custom_call.1} parent=1 // loop_footer
      %s15 = sadd.s32 1, %s11
    $region7: #{tpu_custom_call.1} parent=1 // loop_footer_branch
      %10 = sbr.rel target = $region3
    $region8: #{tpu_custom_call.1} parent=1 // loop_exit
      _

</llo_original>
